<compile_context>
chip_gen: v6e
topology: v6e:2x2x1
jax: 0.10.0
libtpu: 0.0.40
codegen_flags: <defaults>
</compile_context>

<pallas_src>
import functools

import jax
import jax.numpy as jnp
from jax.experimental import pallas as pl
from jax.experimental.pallas import tpu as pltpu

_VMEM_LIMIT = 32 * 1024 * 1024        # explicit VMEM budget; safe on v5e/v6e/v7x


# ---------------------------------------------------------------------------
# Kernel 1: fused conv3x3(pad=1) + bias + ReLU + maxpool2x2, one image/step.
# Input arrives as 4 parity slabs of the zero-padded image, flattened to rows
# so each tap (dh,dw) of each pooling quadrant (ay,ax) is one contiguous
# shifted window — no reshapes or strided reads inside the kernel.
# ---------------------------------------------------------------------------
def _conv_relu_pool_kernel(x_ref, w_ref, b_ref, o_ref, *,
                           acc_rows, wq, slab_rows, use_mxu):
    # x_ref: [1, 4*slab_rows, Cin]  parity slabs (f32 for VPU path, bf16 MXU)
    # w_ref: [9, Cin, O]            tap-major weights
    # b_ref: [1, O] f32
    # o_ref: [1, acc_rows, O] f32   pooled rows q = ho*wq + wo (wo>=Wo is junk)
    bias = b_ref[...]
    pooled = None
    for ay in range(2):                       # pooling-window row offset
        for ax in range(2):                   # pooling-window col offset
            acc = None
            for dh in range(3):
                for dw in range(3):
                    u, v = ay + dh, ax + dw
                    slab = (u % 2) * 2 + (v % 2)
                    off = (u // 2) * wq + (v // 2)
                    base = slab * slab_rows + off
                    win = x_ref[0, pl.ds(base, acc_rows), :]   # [acc_rows, Cin]
                    wk = w_ref[dh * 3 + dw]                    # [Cin, O]
                    if use_mxu:
                        part = jnp.dot(win, wk,
                                       preferred_element_type=jnp.float32)
                    else:
                        part = win * wk        # Cin==1: VPU outer-product tap
                    acc = part if acc is None else acc + part
            quad = jnp.maximum(acc + bias, 0.0)                # bias + ReLU
            pooled = quad if pooled is None else jnp.maximum(pooled, quad)
    o_ref[0] = pooled.astype(o_ref.dtype)


def _parity_slabs(x_nhwc):
    """Zero-pad H,W by 1, split the padded image into its four (row,col)
    parity slabs and flatten each to rows (zero-padded so every in-kernel
    shifted window stays in bounds).  Returns [B, 4*slab_rows, C]."""
    B, H, W, C = x_nhwc.shape                 # H, W even
    Hp, Wp = H + 2, W + 2
    Hq, Wq = Hp // 2, Wp // 2
    Ho, Wo = H // 2, W // 2                   # pooled output size
    acc_rows = Ho * Wq                        # accumulator rows (Wq-Wo junk/row)
    slab_rows = ((acc_rows + Wq + 1 + 7) // 8) * 8
    xp = jnp.pad(x_nhwc, ((0, 0), (1, 1), (1, 1), (0, 0)))
    slabs = [xp[:, pi::2, pj::2, :].reshape(B, Hq * Wq, C)
             for pi in range(2) for pj in range(2)]
    s = jnp.stack(slabs, axis=1)                                # [B,4,Hq*Wq,C]
    s = jnp.pad(s, ((0, 0), (0, 0), (0, slab_rows - Hq * Wq), (0, 0)))
    s = s.reshape(B, 4 * slab_rows, C)
    return s, (Ho, Wo, Wq, acc_rows, slab_rows)


def conv3x3_relu_pool(x_nhwc, w9, bias, *, use_mxu):
    """Conv2d(k=3, pad=1) + bias + ReLU + MaxPool2d(2,2) on NHWC input."""
    B, H, W, Cin = x_nhwc.shape
    O = w9.shape[-1]
    slabs, (Ho, Wo, Wq, acc_rows, slab_rows) = _parity_slabs(x_nhwc)
    if use_mxu:
        slabs = slabs.astype(jnp.bfloat16)     # bf16 MXU operands, f32 acc
    kernel = functools.partial(_conv_relu_pool_kernel, acc_rows=acc_rows,
                               wq=Wq, slab_rows=slab_rows, use_mxu=use_mxu)
    flops = 2 * B * 4 * 9 * acc_rows * Cin * O
    bytes_accessed = int(slabs.size * slabs.dtype.itemsize
                         + w9.size * w9.dtype.itemsize
                         + B * acc_rows * O * 4)
    out = pl.pallas_call(
        kernel,
        out_shape=jax.ShapeDtypeStruct((B, acc_rows, O), jnp.float32),
        grid=(B,),
        in_specs=[
            pl.BlockSpec((1, 4 * slab_rows, Cin), lambda b: (b, 0, 0)),
            pl.BlockSpec((9, Cin, O), lambda b: (0, 0, 0)),
            pl.BlockSpec((1, O), lambda b: (0, 0)),
        ],
        out_specs=pl.BlockSpec((1, acc_rows, O), lambda b: (b, 0, 0)),
        compiler_params=pltpu.CompilerParams(
            dimension_semantics=("parallel",),     # v7x: images across both TCs
            vmem_limit_bytes=_VMEM_LIMIT),
        cost_estimate=pl.CostEstimate(flops=flops, transcendentals=0,
                                      bytes_accessed=bytes_accessed),
    )(slabs, w9, bias)
    # rows are q = ho*Wq + wo; columns wo >= Wo are junk -> slice them away.
    return out.reshape(B, Ho, Wq, O)[:, :, :Wo, :]              # pooled NHWC


# ---------------------------------------------------------------------------
# Kernel 2: M-tiled matmul + bias (+ ReLU) for the FC layers (lane-dense N).
# ---------------------------------------------------------------------------
def _matmul_bias_kernel(x_ref, w_ref, b_ref, o_ref, *, relu):
    acc = jnp.dot(x_ref[...], w_ref[...], preferred_element_type=jnp.float32)
    acc = acc + b_ref[...]
    if relu:
        acc = jnp.maximum(acc, 0.0)
    o_ref[...] = acc.astype(o_ref.dtype)


def matmul_bias(x, w, b, *, relu, tm=512):
    """x:[M,K] @ w:[K,N] + b:[1,N], optional ReLU.  K/N untiled (they fit);
    M tiled so BlockSpec double-buffers HBM->VMEM DMA against MXU compute.
    Callers pad N to a multiple of 128 for unmasked stores."""
    M, K = x.shape
    _, N = w.shape
    if M <= tm:
        tm = M                                  # single full-extent block
    grid = (pl.cdiv(M, tm),)
    kernel = functools.partial(_matmul_bias_kernel, relu=relu)
    bytes_accessed = int(M * K * x.dtype.itemsize + K * N * w.dtype.itemsize
                         + N * 4 + M * N * 4)
    return pl.pallas_call(
        kernel,
        out_shape=jax.ShapeDtypeStruct((M, N), jnp.float32),
        grid=grid,
        in_specs=[
            pl.BlockSpec((tm, K), lambda i: (i, 0)),
            pl.BlockSpec((K, N), lambda i: (0, 0)),
            pl.BlockSpec((1, N), lambda i: (0, 0)),
        ],
        out_specs=pl.BlockSpec((tm, N), lambda i: (i, 0)),
        compiler_params=pltpu.CompilerParams(
            dimension_semantics=("parallel",),
            vmem_limit_bytes=_VMEM_LIMIT),
        cost_estimate=pl.CostEstimate(flops=2 * M * K * N, transcendentals=0,
                                      bytes_accessed=bytes_accessed),
    )(x, w, b)


# ---------------------------------------------------------------------------
# Parameters (PyTorch layout) and one-time (outside-jit) layout preparation.
# ---------------------------------------------------------------------------
def init_params(key):
    ks = jax.random.split(key, 8)
    def nrm(k, shape, fan_in):
        return jax.random.normal(k, shape, jnp.float32) * (1.0 / jnp.sqrt(fan_in))
    return {
        "conv1_w": nrm(ks[0], (32, 1, 3, 3), 1 * 9),
        "conv1_b": nrm(ks[1], (32,), 1 * 9),
        "conv2_w": nrm(ks[2], (64, 32, 3, 3), 32 * 9),
        "conv2_b": nrm(ks[3], (64,), 32 * 9),
        "fc1_w":   nrm(ks[4], (128, 64 * 7 * 7), 64 * 7 * 7),
        "fc1_b":   nrm(ks[5], (128,), 64 * 7 * 7),
        "fc2_w":   nrm(ks[6], (10, 128), 128),
        "fc2_b":   nrm(ks[7], (10,), 128),
    }


def prepare_params(p):
    """One-time layout conversion of the PyTorch-style weights (outside jit)."""
    def conv_tap_major(w_oihw):                     # [O,Cin,3,3] -> [9,Cin,O]
        O, Cin = w_oihw.shape[0], w_oihw.shape[1]
        return jnp.transpose(w_oihw, (2, 3, 1, 0)).reshape(9, Cin, O)
    # fc1: PyTorch flattens NCHW (k = c*49 + h*7 + w); reorder its K axis to the
    # NHWC flatten (k = (h*7 + w)*64 + c) so the forward needs no transpose.
    fc1_kn = jnp.transpose(p["fc1_w"].reshape(128, 64, 7, 7),
                           (2, 3, 1, 0)).reshape(64 * 7 * 7, 128)
    fc2_kn = jnp.pad(p["fc2_w"].T, ((0, 0), (0, 128 - 10)))     # lane-dense N
    fc2_b = jnp.pad(p["fc2_b"], (0, 128 - 10))
    return {
        "conv1_w9": conv_tap_major(p["conv1_w"]).astype(jnp.float32),  # VPU path
        "conv1_b":  p["conv1_b"].reshape(1, 32).astype(jnp.float32),
        "conv2_w9": conv_tap_major(p["conv2_w"]).astype(jnp.bfloat16), # MXU path
        "conv2_b":  p["conv2_b"].reshape(1, 64).astype(jnp.float32),
        "fc1_w":    fc1_kn.astype(jnp.bfloat16),
        "fc1_b":    p["fc1_b"].reshape(1, 128).astype(jnp.float32),
        "fc2_w":    fc2_kn.astype(jnp.bfloat16),
        "fc2_b":    fc2_b.reshape(1, 128).astype(jnp.float32),
    }


def simple_model_forward(prepped, x_nchw):
    """SimpleModel forward. x_nchw: [B,1,28,28] f32 -> logits [B,10] f32."""
    B = x_nchw.shape[0]
    x = jnp.transpose(x_nchw, (0, 2, 3, 1))                      # NCHW -> NHWC
    x = conv3x3_relu_pool(x, prepped["conv1_w9"], prepped["conv1_b"],
                          use_mxu=False)                         # [B,14,14,32]
    x = conv3x3_relu_pool(x, prepped["conv2_w9"], prepped["conv2_b"],
                          use_mxu=True)                          # [B, 7, 7,64]
    x = x.reshape(B, 7 * 7 * 64)            # NHWC flatten (fc1_w pre-reordered)
    x = matmul_bias(x.astype(jnp.bfloat16), prepped["fc1_w"], prepped["fc1_b"],
                    relu=True)                                   # [B,128]
    x = matmul_bias(x.astype(jnp.bfloat16), prepped["fc2_w"], prepped["fc2_b"],
                    relu=False)                                  # [B,128] padded
    return x[:, :10]


if __name__ == "__main__":
    # 28x28 input is required so the 64*7*7 flatten before fc1 is consistent.
    x = jax.random.normal(jax.random.PRNGKey(0), (2, 1, 28, 28), jnp.float32)
    prepped = prepare_params(init_params(jax.random.PRNGKey(42)))

    fwd = jax.jit(simple_model_forward)
    out = jax.block_until_ready(fwd(prepped, x))

    assert out.shape == (2, 10) and out.dtype == jnp.float32
    assert bool(jnp.all(jnp.isfinite(out)))
    print("KERNEL_OK")
</pallas_src>

<mosaic_0001>
module attributes {stable_mosaic.version = 11 : i64} {
  func.func @_conv_relu_pool_kernel(%arg0: i32, %arg1: memref<1x928x1xf32, #tpu.memory_space<vmem>>, %arg2: memref<9x1x32xf32, #tpu.memory_space<vmem>>, %arg3: memref<1x32xf32, #tpu.memory_space<vmem>>, %arg4: memref<1x210x32xf32, #tpu.memory_space<vmem>>) attributes {dimension_semantics = [#tpu.dimension_semantics<parallel>], iteration_bounds = array<i64: 2>, scalar_prefetch = 0 : i64, scratch_operands = 0 : i64, tpu.core_type = #tpu.core_type<tc>, window_params = [{transform_indices = @transform_0, window_bounds = array<i64: 1, 928, 1>}, {pipeline_mode = #tpu.pipeline_mode<synchronous>, transform_indices = @transform_1, window_bounds = array<i64: 9, 1, 32>}, {pipeline_mode = #tpu.pipeline_mode<synchronous>, transform_indices = @transform_2, window_bounds = array<i64: 1, 32>}, {transform_indices = @transform_3, window_bounds = array<i64: 1, 210, 32>}]} {
    %c0 = arith.constant 0 : index
    %c0_0 = arith.constant 0 : index
    %0 = vector.load %arg3[%c0, %c0_0] : memref<1x32xf32, #tpu.memory_space<vmem>>, vector<1x32xf32>
    %c0_1 = arith.constant 0 : index
    %c0_2 = arith.constant 0 : index
    %c0_3 = arith.constant 0 : index
    %1 = vector.load %arg1[%c0_1, %c0_2, %c0_3] : memref<1x928x1xf32, #tpu.memory_space<vmem>>, vector<1x210x1xf32>
    %2 = vector.shape_cast %1 : vector<1x210x1xf32> to vector<210x1xf32>
    %c0_4 = arith.constant 0 : index
    %c0_5 = arith.constant 0 : index
    %c0_6 = arith.constant 0 : index
    %3 = vector.load %arg2[%c0_4, %c0_5, %c0_6] : memref<9x1x32xf32, #tpu.memory_space<vmem>>, vector<1x1x32xf32>
    %4 = vector.shape_cast %3 : vector<1x1x32xf32> to vector<1x32xf32>
    %5 = vector.broadcast %2 : vector<210x1xf32> to vector<210x32xf32>
    %6 = vector.broadcast %4 : vector<1x32xf32> to vector<210x32xf32>
    %7 = arith.mulf %5, %6 : vector<210x32xf32>
    %c0_7 = arith.constant 0 : index
    %c232 = arith.constant 232 : index
    %c0_8 = arith.constant 0 : index
    %8 = vector.load %arg1[%c0_7, %c232, %c0_8] : memref<1x928x1xf32, #tpu.memory_space<vmem>>, vector<1x210x1xf32>
    %9 = vector.shape_cast %8 : vector<1x210x1xf32> to vector<210x1xf32>
    %c1 = arith.constant 1 : index
    %c0_9 = arith.constant 0 : index
    %c0_10 = arith.constant 0 : index
    %10 = vector.load %arg2[%c1, %c0_9, %c0_10] : memref<9x1x32xf32, #tpu.memory_space<vmem>>, vector<1x1x32xf32>
    %11 = vector.shape_cast %10 : vector<1x1x32xf32> to vector<1x32xf32>
    %12 = vector.broadcast %9 : vector<210x1xf32> to vector<210x32xf32>
    %13 = vector.broadcast %11 : vector<1x32xf32> to vector<210x32xf32>
    %14 = arith.mulf %12, %13 : vector<210x32xf32>
    %15 = arith.addf %7, %14 : vector<210x32xf32>
    %c0_11 = arith.constant 0 : index
    %c1_12 = arith.constant 1 : index
    %c0_13 = arith.constant 0 : index
    %16 = vector.load %arg1[%c0_11, %c1_12, %c0_13] : memref<1x928x1xf32, #tpu.memory_space<vmem>>, vector<1x210x1xf32>
    %17 = vector.shape_cast %16 : vector<1x210x1xf32> to vector<210x1xf32>
    %c2 = arith.constant 2 : index
    %c0_14 = arith.constant 0 : index
    %c0_15 = arith.constant 0 : index
    %18 = vector.load %arg2[%c2, %c0_14, %c0_15] : memref<9x1x32xf32, #tpu.memory_space<vmem>>, vector<1x1x32xf32>
    %19 = vector.shape_cast %18 : vector<1x1x32xf32> to vector<1x32xf32>
    %20 = vector.broadcast %17 : vector<210x1xf32> to vector<210x32xf32>
    %21 = vector.broadcast %19 : vector<1x32xf32> to vector<210x32xf32>
    %22 = arith.mulf %20, %21 : vector<210x32xf32>
    %23 = arith.addf %15, %22 : vector<210x32xf32>
    %c0_16 = arith.constant 0 : index
    %c464 = arith.constant 464 : index
    %c0_17 = arith.constant 0 : index
    %24 = vector.load %arg1[%c0_16, %c464, %c0_17] : memref<1x928x1xf32, #tpu.memory_space<vmem>>, vector<1x210x1xf32>
    %25 = vector.shape_cast %24 : vector<1x210x1xf32> to vector<210x1xf32>
    %c3 = arith.constant 3 : index
    %c0_18 = arith.constant 0 : index
    %c0_19 = arith.constant 0 : index
    %26 = vector.load %arg2[%c3, %c0_18, %c0_19] : memref<9x1x32xf32, #tpu.memory_space<vmem>>, vector<1x1x32xf32>
    %27 = vector.shape_cast %26 : vector<1x1x32xf32> to vector<1x32xf32>
    %28 = vector.broadcast %25 : vector<210x1xf32> to vector<210x32xf32>
    %29 = vector.broadcast %27 : vector<1x32xf32> to vector<210x32xf32>
    %30 = arith.mulf %28, %29 : vector<210x32xf32>
    %31 = arith.addf %23, %30 : vector<210x32xf32>
    %c0_20 = arith.constant 0 : index
    %c696 = arith.constant 696 : index
    %c0_21 = arith.constant 0 : index
    %32 = vector.load %arg1[%c0_20, %c696, %c0_21] : memref<1x928x1xf32, #tpu.memory_space<vmem>>, vector<1x210x1xf32>
    %33 = vector.shape_cast %32 : vector<1x210x1xf32> to vector<210x1xf32>
    %c4 = arith.constant 4 : index
    %c0_22 = arith.constant 0 : index
    %c0_23 = arith.constant 0 : index
    %34 = vector.load %arg2[%c4, %c0_22, %c0_23] : memref<9x1x32xf32, #tpu.memory_space<vmem>>, vector<1x1x32xf32>
    %35 = vector.shape_cast %34 : vector<1x1x32xf32> to vector<1x32xf32>
    %36 = vector.broadcast %33 : vector<210x1xf32> to vector<210x32xf32>
    %37 = vector.broadcast %35 : vector<1x32xf32> to vector<210x32xf32>
    %38 = arith.mulf %36, %37 : vector<210x32xf32>
    %39 = arith.addf %31, %38 : vector<210x32xf32>
    %c0_24 = arith.constant 0 : index
    %c465 = arith.constant 465 : index
    %c0_25 = arith.constant 0 : index
    %40 = vector.load %arg1[%c0_24, %c465, %c0_25] : memref<1x928x1xf32, #tpu.memory_space<vmem>>, vector<1x210x1xf32>
    %41 = vector.shape_cast %40 : vector<1x210x1xf32> to vector<210x1xf32>
    %c5 = arith.constant 5 : index
    %c0_26 = arith.constant 0 : index
    %c0_27 = arith.constant 0 : index
    %42 = vector.load %arg2[%c5, %c0_26, %c0_27] : memref<9x1x32xf32, #tpu.memory_space<vmem>>, vector<1x1x32xf32>
    %43 = vector.shape_cast %42 : vector<1x1x32xf32> to vector<1x32xf32>
    %44 = vector.broadcast %41 : vector<210x1xf32> to vector<210x32xf32>
    %45 = vector.broadcast %43 : vector<1x32xf32> to vector<210x32xf32>
    %46 = arith.mulf %44, %45 : vector<210x32xf32>
    %47 = arith.addf %39, %46 : vector<210x32xf32>
    %c0_28 = arith.constant 0 : index
    %c15 = arith.constant 15 : index
    %c0_29 = arith.constant 0 : index
    %48 = vector.load %arg1[%c0_28, %c15, %c0_29] : memref<1x928x1xf32, #tpu.memory_space<vmem>>, vector<1x210x1xf32>
    %49 = vector.shape_cast %48 : vector<1x210x1xf32> to vector<210x1xf32>
    %c6 = arith.constant 6 : index
    %c0_30 = arith.constant 0 : index
    %c0_31 = arith.constant 0 : index
    %50 = vector.load %arg2[%c6, %c0_30, %c0_31] : memref<9x1x32xf32, #tpu.memory_space<vmem>>, vector<1x1x32xf32>
    %51 = vector.shape_cast %50 : vector<1x1x32xf32> to vector<1x32xf32>
    %52 = vector.broadcast %49 : vector<210x1xf32> to vector<210x32xf32>
    %53 = vector.broadcast %51 : vector<1x32xf32> to vector<210x32xf32>
    %54 = arith.mulf %52, %53 : vector<210x32xf32>
    %55 = arith.addf %47, %54 : vector<210x32xf32>
    %c0_32 = arith.constant 0 : index
    %c247 = arith.constant 247 : index
    %c0_33 = arith.constant 0 : index
    %56 = vector.load %arg1[%c0_32, %c247, %c0_33] : memref<1x928x1xf32, #tpu.memory_space<vmem>>, vector<1x210x1xf32>
    %57 = vector.shape_cast %56 : vector<1x210x1xf32> to vector<210x1xf32>
    %c7 = arith.constant 7 : index
    %c0_34 = arith.constant 0 : index
    %c0_35 = arith.constant 0 : index
    %58 = vector.load %arg2[%c7, %c0_34, %c0_35] : memref<9x1x32xf32, #tpu.memory_space<vmem>>, vector<1x1x32xf32>
    %59 = vector.shape_cast %58 : vector<1x1x32xf32> to vector<1x32xf32>
    %60 = vector.broadcast %57 : vector<210x1xf32> to vector<210x32xf32>
    %61 = vector.broadcast %59 : vector<1x32xf32> to vector<210x32xf32>
    %62 = arith.mulf %60, %61 : vector<210x32xf32>
    %63 = arith.addf %55, %62 : vector<210x32xf32>
    %c0_36 = arith.constant 0 : index
    %c16 = arith.constant 16 : index
    %c0_37 = arith.constant 0 : index
    %64 = vector.load %arg1[%c0_36, %c16, %c0_37] : memref<1x928x1xf32, #tpu.memory_space<vmem>>, vector<1x210x1xf32>
    %65 = vector.shape_cast %64 : vector<1x210x1xf32> to vector<210x1xf32>
    %c8 = arith.constant 8 : index
    %c0_38 = arith.constant 0 : index
    %c0_39 = arith.constant 0 : index
    %66 = vector.load %arg2[%c8, %c0_38, %c0_39] : memref<9x1x32xf32, #tpu.memory_space<vmem>>, vector<1x1x32xf32>
    %67 = vector.shape_cast %66 : vector<1x1x32xf32> to vector<1x32xf32>
    %68 = vector.broadcast %65 : vector<210x1xf32> to vector<210x32xf32>
    %69 = vector.broadcast %67 : vector<1x32xf32> to vector<210x32xf32>
    %70 = arith.mulf %68, %69 : vector<210x32xf32>
    %71 = arith.addf %63, %70 : vector<210x32xf32>
    %72 = vector.broadcast %0 : vector<1x32xf32> to vector<210x32xf32>
    %73 = arith.addf %71, %72 : vector<210x32xf32>
    %cst = arith.constant 0.000000e+00 : f32
    %74 = vector.broadcast %cst : f32 to vector<210x32xf32>
    %75 = arith.maximumf %73, %74 : vector<210x32xf32>
    %c0_40 = arith.constant 0 : index
    %c232_41 = arith.constant 232 : index
    %c0_42 = arith.constant 0 : index
    %76 = vector.load %arg1[%c0_40, %c232_41, %c0_42] : memref<1x928x1xf32, #tpu.memory_space<vmem>>, vector<1x210x1xf32>
    %77 = vector.shape_cast %76 : vector<1x210x1xf32> to vector<210x1xf32>
    %c0_43 = arith.constant 0 : index
    %c0_44 = arith.constant 0 : index
    %c0_45 = arith.constant 0 : index
    %78 = vector.load %arg2[%c0_43, %c0_44, %c0_45] : memref<9x1x32xf32, #tpu.memory_space<vmem>>, vector<1x1x32xf32>
    %79 = vector.shape_cast %78 : vector<1x1x32xf32> to vector<1x32xf32>
    %80 = vector.broadcast %77 : vector<210x1xf32> to vector<210x32xf32>
    %81 = vector.broadcast %79 : vector<1x32xf32> to vector<210x32xf32>
    %82 = arith.mulf %80, %81 : vector<210x32xf32>
    %c0_46 = arith.constant 0 : index
    %c1_47 = arith.constant 1 : index
    %c0_48 = arith.constant 0 : index
    %83 = vector.load %arg1[%c0_46, %c1_47, %c0_48] : memref<1x928x1xf32, #tpu.memory_space<vmem>>, vector<1x210x1xf32>
    %84 = vector.shape_cast %83 : vector<1x210x1xf32> to vector<210x1xf32>
    %c1_49 = arith.constant 1 : index
    %c0_50 = arith.constant 0 : index
    %c0_51 = arith.constant 0 : index
    %85 = vector.load %arg2[%c1_49, %c0_50, %c0_51] : memref<9x1x32xf32, #tpu.memory_space<vmem>>, vector<1x1x32xf32>
    %86 = vector.shape_cast %85 : vector<1x1x32xf32> to vector<1x32xf32>
    %87 = vector.broadcast %84 : vector<210x1xf32> to vector<210x32xf32>
    %88 = vector.broadcast %86 : vector<1x32xf32> to vector<210x32xf32>
    %89 = arith.mulf %87, %88 : vector<210x32xf32>
    %90 = arith.addf %82, %89 : vector<210x32xf32>
    %c0_52 = arith.constant 0 : index
    %c233 = arith.constant 233 : index
    %c0_53 = arith.constant 0 : index
    %91 = vector.load %arg1[%c0_52, %c233, %c0_53] : memref<1x928x1xf32, #tpu.memory_space<vmem>>, vector<1x210x1xf32>
    %92 = vector.shape_cast %91 : vector<1x210x1xf32> to vector<210x1xf32>
    %c2_54 = arith.constant 2 : index
    %c0_55 = arith.constant 0 : index
    %c0_56 = arith.constant 0 : index
    %93 = vector.load %arg2[%c2_54, %c0_55, %c0_56] : memref<9x1x32xf32, #tpu.memory_space<vmem>>, vector<1x1x32xf32>
    %94 = vector.shape_cast %93 : vector<1x1x32xf32> to vector<1x32xf32>
    %95 = vector.broadcast %92 : vector<210x1xf32> to vector<210x32xf32>
    %96 = vector.broadcast %94 : vector<1x32xf32> to vector<210x32xf32>
    %97 = arith.mulf %95, %96 : vector<210x32xf32>
    %98 = arith.addf %90, %97 : vector<210x32xf32>
    %c0_57 = arith.constant 0 : index
    %c696_58 = arith.constant 696 : index
    %c0_59 = arith.constant 0 : index
    %99 = vector.load %arg1[%c0_57, %c696_58, %c0_59] : memref<1x928x1xf32, #tpu.memory_space<vmem>>, vector<1x210x1xf32>
    %100 = vector.shape_cast %99 : vector<1x210x1xf32> to vector<210x1xf32>
    %c3_60 = arith.constant 3 : index
    %c0_61 = arith.constant 0 : index
    %c0_62 = arith.constant 0 : index
    %101 = vector.load %arg2[%c3_60, %c0_61, %c0_62] : memref<9x1x32xf32, #tpu.memory_space<vmem>>, vector<1x1x32xf32>
    %102 = vector.shape_cast %101 : vector<1x1x32xf32> to vector<1x32xf32>
    %103 = vector.broadcast %100 : vector<210x1xf32> to vector<210x32xf32>
    %104 = vector.broadcast %102 : vector<1x32xf32> to vector<210x32xf32>
    %105 = arith.mulf %103, %104 : vector<210x32xf32>
    %106 = arith.addf %98, %105 : vector<210x32xf32>
    %c0_63 = arith.constant 0 : index
    %c465_64 = arith.constant 465 : index
    %c0_65 = arith.constant 0 : index
    %107 = vector.load %arg1[%c0_63, %c465_64, %c0_65] : memref<1x928x1xf32, #tpu.memory_space<vmem>>, vector<1x210x1xf32>
    %108 = vector.shape_cast %107 : vector<1x210x1xf32> to vector<210x1xf32>
    %c4_66 = arith.constant 4 : index
    %c0_67 = arith.constant 0 : index
    %c0_68 = arith.constant 0 : index
    %109 = vector.load %arg2[%c4_66, %c0_67, %c0_68] : memref<9x1x32xf32, #tpu.memory_space<vmem>>, vector<1x1x32xf32>
    %110 = vector.shape_cast %109 : vector<1x1x32xf32> to vector<1x32xf32>
    %111 = vector.broadcast %108 : vector<210x1xf32> to vector<210x32xf32>
    %112 = vector.broadcast %110 : vector<1x32xf32> to vector<210x32xf32>
    %113 = arith.mulf %111, %112 : vector<210x32xf32>
    %114 = arith.addf %106, %113 : vector<210x32xf32>
    %c0_69 = arith.constant 0 : index
    %c697 = arith.constant 697 : index
    %c0_70 = arith.constant 0 : index
    %115 = vector.load %arg1[%c0_69, %c697, %c0_70] : memref<1x928x1xf32, #tpu.memory_space<vmem>>, vector<1x210x1xf32>
    %116 = vector.shape_cast %115 : vector<1x210x1xf32> to vector<210x1xf32>
    %c5_71 = arith.constant 5 : index
    %c0_72 = arith.constant 0 : index
    %c0_73 = arith.constant 0 : index
    %117 = vector.load %arg2[%c5_71, %c0_72, %c0_73] : memref<9x1x32xf32, #tpu.memory_space<vmem>>, vector<1x1x32xf32>
    %118 = vector.shape_cast %117 : vector<1x1x32xf32> to vector<1x32xf32>
    %119 = vector.broadcast %116 : vector<210x1xf32> to vector<210x32xf32>
    %120 = vector.broadcast %118 : vector<1x32xf32> to vector<210x32xf32>
    %121 = arith.mulf %119, %120 : vector<210x32xf32>
    %122 = arith.addf %114, %121 : vector<210x32xf32>
    %c0_74 = arith.constant 0 : index
    %c247_75 = arith.constant 247 : index
    %c0_76 = arith.constant 0 : index
    %123 = vector.load %arg1[%c0_74, %c247_75, %c0_76] : memref<1x928x1xf32, #tpu.memory_space<vmem>>, vector<1x210x1xf32>
    %124 = vector.shape_cast %123 : vector<1x210x1xf32> to vector<210x1xf32>
    %c6_77 = arith.constant 6 : index
    %c0_78 = arith.constant 0 : index
    %c0_79 = arith.constant 0 : index
    %125 = vector.load %arg2[%c6_77, %c0_78, %c0_79] : memref<9x1x32xf32, #tpu.memory_space<vmem>>, vector<1x1x32xf32>
    %126 = vector.shape_cast %125 : vector<1x1x32xf32> to vector<1x32xf32>
    %127 = vector.broadcast %124 : vector<210x1xf32> to vector<210x32xf32>
    %128 = vector.broadcast %126 : vector<1x32xf32> to vector<210x32xf32>
    %129 = arith.mulf %127, %128 : vector<210x32xf32>
    %130 = arith.addf %122, %129 : vector<210x32xf32>
    %c0_80 = arith.constant 0 : index
    %c16_81 = arith.constant 16 : index
    %c0_82 = arith.constant 0 : index
    %131 = vector.load %arg1[%c0_80, %c16_81, %c0_82] : memref<1x928x1xf32, #tpu.memory_space<vmem>>, vector<1x210x1xf32>
    %132 = vector.shape_cast %131 : vector<1x210x1xf32> to vector<210x1xf32>
    %c7_83 = arith.constant 7 : index
    %c0_84 = arith.constant 0 : index
    %c0_85 = arith.constant 0 : index
    %133 = vector.load %arg2[%c7_83, %c0_84, %c0_85] : memref<9x1x32xf32, #tpu.memory_space<vmem>>, vector<1x1x32xf32>
    %134 = vector.shape_cast %133 : vector<1x1x32xf32> to vector<1x32xf32>
    %135 = vector.broadcast %132 : vector<210x1xf32> to vector<210x32xf32>
    %136 = vector.broadcast %134 : vector<1x32xf32> to vector<210x32xf32>
    %137 = arith.mulf %135, %136 : vector<210x32xf32>
    %138 = arith.addf %130, %137 : vector<210x32xf32>
    %c0_86 = arith.constant 0 : index
    %c248 = arith.constant 248 : index
    %c0_87 = arith.constant 0 : index
    %139 = vector.load %arg1[%c0_86, %c248, %c0_87] : memref<1x928x1xf32, #tpu.memory_space<vmem>>, vector<1x210x1xf32>
    %140 = vector.shape_cast %139 : vector<1x210x1xf32> to vector<210x1xf32>
    %c8_88 = arith.constant 8 : index
    %c0_89 = arith.constant 0 : index
    %c0_90 = arith.constant 0 : index
    %141 = vector.load %arg2[%c8_88, %c0_89, %c0_90] : memref<9x1x32xf32, #tpu.memory_space<vmem>>, vector<1x1x32xf32>
    %142 = vector.shape_cast %141 : vector<1x1x32xf32> to vector<1x32xf32>
    %143 = vector.broadcast %140 : vector<210x1xf32> to vector<210x32xf32>
    %144 = vector.broadcast %142 : vector<1x32xf32> to vector<210x32xf32>
    %145 = arith.mulf %143, %144 : vector<210x32xf32>
    %146 = arith.addf %138, %145 : vector<210x32xf32>
    %147 = vector.broadcast %0 : vector<1x32xf32> to vector<210x32xf32>
    %148 = arith.addf %146, %147 : vector<210x32xf32>
    %cst_91 = arith.constant 0.000000e+00 : f32
    %149 = vector.broadcast %cst_91 : f32 to vector<210x32xf32>
    %150 = arith.maximumf %148, %149 : vector<210x32xf32>
    %151 = arith.maximumf %75, %150 : vector<210x32xf32>
    %c0_92 = arith.constant 0 : index
    %c464_93 = arith.constant 464 : index
    %c0_94 = arith.constant 0 : index
    %152 = vector.load %arg1[%c0_92, %c464_93, %c0_94] : memref<1x928x1xf32, #tpu.memory_space<vmem>>, vector<1x210x1xf32>
    %153 = vector.shape_cast %152 : vector<1x210x1xf32> to vector<210x1xf32>
    %c0_95 = arith.constant 0 : index
    %c0_96 = arith.constant 0 : index
    %c0_97 = arith.constant 0 : index
    %154 = vector.load %arg2[%c0_95, %c0_96, %c0_97] : memref<9x1x32xf32, #tpu.memory_space<vmem>>, vector<1x1x32xf32>
    %155 = vector.shape_cast %154 : vector<1x1x32xf32> to vector<1x32xf32>
    %156 = vector.broadcast %153 : vector<210x1xf32> to vector<210x32xf32>
    %157 = vector.broadcast %155 : vector<1x32xf32> to vector<210x32xf32>
    %158 = arith.mulf %156, %157 : vector<210x32xf32>
    %c0_98 = arith.constant 0 : index
    %c696_99 = arith.constant 696 : index
    %c0_100 = arith.constant 0 : index
    %159 = vector.load %arg1[%c0_98, %c696_99, %c0_100] : memref<1x928x1xf32, #tpu.memory_space<vmem>>, vector<1x210x1xf32>
    %160 = vector.shape_cast %159 : vector<1x210x1xf32> to vector<210x1xf32>
    %c1_101 = arith.constant 1 : index
    %c0_102 = arith.constant 0 : index
    %c0_103 = arith.constant 0 : index
    %161 = vector.load %arg2[%c1_101, %c0_102, %c0_103] : memref<9x1x32xf32, #tpu.memory_space<vmem>>, vector<1x1x32xf32>
    %162 = vector.shape_cast %161 : vector<1x1x32xf32> to vector<1x32xf32>
    %163 = vector.broadcast %160 : vector<210x1xf32> to vector<210x32xf32>
    %164 = vector.broadcast %162 : vector<1x32xf32> to vector<210x32xf32>
    %165 = arith.mulf %163, %164 : vector<210x32xf32>
    %166 = arith.addf %158, %165 : vector<210x32xf32>
    %c0_104 = arith.constant 0 : index
    %c465_105 = arith.constant 465 : index
    %c0_106 = arith.constant 0 : index
    %167 = vector.load %arg1[%c0_104, %c465_105, %c0_106] : memref<1x928x1xf32, #tpu.memory_space<vmem>>, vector<1x210x1xf32>
    %168 = vector.shape_cast %167 : vector<1x210x1xf32> to vector<210x1xf32>
    %c2_107 = arith.constant 2 : index
    %c0_108 = arith.constant 0 : index
    %c0_109 = arith.constant 0 : index
    %169 = vector.load %arg2[%c2_107, %c0_108, %c0_109] : memref<9x1x32xf32, #tpu.memory_space<vmem>>, vector<1x1x32xf32>
    %170 = vector.shape_cast %169 : vector<1x1x32xf32> to vector<1x32xf32>
    %171 = vector.broadcast %168 : vector<210x1xf32> to vector<210x32xf32>
    %172 = vector.broadcast %170 : vector<1x32xf32> to vector<210x32xf32>
    %173 = arith.mulf %171, %172 : vector<210x32xf32>
    %174 = arith.addf %166, %173 : vector<210x32xf32>
    %c0_110 = arith.constant 0 : index
    %c15_111 = arith.constant 15 : index
    %c0_112 = arith.constant 0 : index
    %175 = vector.load %arg1[%c0_110, %c15_111, %c0_112] : memref<1x928x1xf32, #tpu.memory_space<vmem>>, vector<1x210x1xf32>
    %176 = vector.shape_cast %175 : vector<1x210x1xf32> to vector<210x1xf32>
    %c3_113 = arith.constant 3 : index
    %c0_114 = arith.constant 0 : index
    %c0_115 = arith.constant 0 : index
    %177 = vector.load %arg2[%c3_113, %c0_114, %c0_115] : memref<9x1x32xf32, #tpu.memory_space<vmem>>, vector<1x1x32xf32>
    %178 = vector.shape_cast %177 : vector<1x1x32xf32> to vector<1x32xf32>
    %179 = vector.broadcast %176 : vector<210x1xf32> to vector<210x32xf32>
    %180 = vector.broadcast %178 : vector<1x32xf32> to vector<210x32xf32>
    %181 = arith.mulf %179, %180 : vector<210x32xf32>
    %182 = arith.addf %174, %181 : vector<210x32xf32>
    %c0_116 = arith.constant 0 : index
    %c247_117 = arith.constant 247 : index
    %c0_118 = arith.constant 0 : index
    %183 = vector.load %arg1[%c0_116, %c247_117, %c0_118] : memref<1x928x1xf32, #tpu.memory_space<vmem>>, vector<1x210x1xf32>
    %184 = vector.shape_cast %183 : vector<1x210x1xf32> to vector<210x1xf32>
    %c4_119 = arith.constant 4 : index
    %c0_120 = arith.constant 0 : index
    %c0_121 = arith.constant 0 : index
    %185 = vector.load %arg2[%c4_119, %c0_120, %c0_121] : memref<9x1x32xf32, #tpu.memory_space<vmem>>, vector<1x1x32xf32>
    %186 = vector.shape_cast %185 : vector<1x1x32xf32> to vector<1x32xf32>
    %187 = vector.broadcast %184 : vector<210x1xf32> to vector<210x32xf32>
    %188 = vector.broadcast %186 : vector<1x32xf32> to vector<210x32xf32>
    %189 = arith.mulf %187, %188 : vector<210x32xf32>
    %190 = arith.addf %182, %189 : vector<210x32xf32>
    %c0_122 = arith.constant 0 : index
    %c16_123 = arith.constant 16 : index
    %c0_124 = arith.constant 0 : index
    %191 = vector.load %arg1[%c0_122, %c16_123, %c0_124] : memref<1x928x1xf32, #tpu.memory_space<vmem>>, vector<1x210x1xf32>
    %192 = vector.shape_cast %191 : vector<1x210x1xf32> to vector<210x1xf32>
    %c5_125 = arith.constant 5 : index
    %c0_126 = arith.constant 0 : index
    %c0_127 = arith.constant 0 : index
    %193 = vector.load %arg2[%c5_125, %c0_126, %c0_127] : memref<9x1x32xf32, #tpu.memory_space<vmem>>, vector<1x1x32xf32>
    %194 = vector.shape_cast %193 : vector<1x1x32xf32> to vector<1x32xf32>
    %195 = vector.broadcast %192 : vector<210x1xf32> to vector<210x32xf32>
    %196 = vector.broadcast %194 : vector<1x32xf32> to vector<210x32xf32>
    %197 = arith.mulf %195, %196 : vector<210x32xf32>
    %198 = arith.addf %190, %197 : vector<210x32xf32>
    %c0_128 = arith.constant 0 : index
    %c479 = arith.constant 479 : index
    %c0_129 = arith.constant 0 : index
    %199 = vector.load %arg1[%c0_128, %c479, %c0_129] : memref<1x928x1xf32, #tpu.memory_space<vmem>>, vector<1x210x1xf32>
    %200 = vector.shape_cast %199 : vector<1x210x1xf32> to vector<210x1xf32>
    %c6_130 = arith.constant 6 : index
    %c0_131 = arith.constant 0 : index
    %c0_132 = arith.constant 0 : index
    %201 = vector.load %arg2[%c6_130, %c0_131, %c0_132] : memref<9x1x32xf32, #tpu.memory_space<vmem>>, vector<1x1x32xf32>
    %202 = vector.shape_cast %201 : vector<1x1x32xf32> to vector<1x32xf32>
    %203 = vector.broadcast %200 : vector<210x1xf32> to vector<210x32xf32>
    %204 = vector.broadcast %202 : vector<1x32xf32> to vector<210x32xf32>
    %205 = arith.mulf %203, %204 : vector<210x32xf32>
    %206 = arith.addf %198, %205 : vector<210x32xf32>
    %c0_133 = arith.constant 0 : index
    %c711 = arith.constant 711 : index
    %c0_134 = arith.constant 0 : index
    %207 = vector.load %arg1[%c0_133, %c711, %c0_134] : memref<1x928x1xf32, #tpu.memory_space<vmem>>, vector<1x210x1xf32>
    %208 = vector.shape_cast %207 : vector<1x210x1xf32> to vector<210x1xf32>
    %c7_135 = arith.constant 7 : index
    %c0_136 = arith.constant 0 : index
    %c0_137 = arith.constant 0 : index
    %209 = vector.load %arg2[%c7_135, %c0_136, %c0_137] : memref<9x1x32xf32, #tpu.memory_space<vmem>>, vector<1x1x32xf32>
    %210 = vector.shape_cast %209 : vector<1x1x32xf32> to vector<1x32xf32>
    %211 = vector.broadcast %208 : vector<210x1xf32> to vector<210x32xf32>
    %212 = vector.broadcast %210 : vector<1x32xf32> to vector<210x32xf32>
    %213 = arith.mulf %211, %212 : vector<210x32xf32>
    %214 = arith.addf %206, %213 : vector<210x32xf32>
    %c0_138 = arith.constant 0 : index
    %c480 = arith.constant 480 : index
    %c0_139 = arith.constant 0 : index
    %215 = vector.load %arg1[%c0_138, %c480, %c0_139] : memref<1x928x1xf32, #tpu.memory_space<vmem>>, vector<1x210x1xf32>
    %216 = vector.shape_cast %215 : vector<1x210x1xf32> to vector<210x1xf32>
    %c8_140 = arith.constant 8 : index
    %c0_141 = arith.constant 0 : index
    %c0_142 = arith.constant 0 : index
    %217 = vector.load %arg2[%c8_140, %c0_141, %c0_142] : memref<9x1x32xf32, #tpu.memory_space<vmem>>, vector<1x1x32xf32>
    %218 = vector.shape_cast %217 : vector<1x1x32xf32> to vector<1x32xf32>
    %219 = vector.broadcast %216 : vector<210x1xf32> to vector<210x32xf32>
    %220 = vector.broadcast %218 : vector<1x32xf32> to vector<210x32xf32>
    %221 = arith.mulf %219, %220 : vector<210x32xf32>
    %222 = arith.addf %214, %221 : vector<210x32xf32>
    %223 = vector.broadcast %0 : vector<1x32xf32> to vector<210x32xf32>
    %224 = arith.addf %222, %223 : vector<210x32xf32>
    %cst_143 = arith.constant 0.000000e+00 : f32
    %225 = vector.broadcast %cst_143 : f32 to vector<210x32xf32>
    %226 = arith.maximumf %224, %225 : vector<210x32xf32>
    %227 = arith.maximumf %151, %226 : vector<210x32xf32>
    %c0_144 = arith.constant 0 : index
    %c696_145 = arith.constant 696 : index
    %c0_146 = arith.constant 0 : index
    %228 = vector.load %arg1[%c0_144, %c696_145, %c0_146] : memref<1x928x1xf32, #tpu.memory_space<vmem>>, vector<1x210x1xf32>
    %229 = vector.shape_cast %228 : vector<1x210x1xf32> to vector<210x1xf32>
    %c0_147 = arith.constant 0 : index
    %c0_148 = arith.constant 0 : index
    %c0_149 = arith.constant 0 : index
    %230 = vector.load %arg2[%c0_147, %c0_148, %c0_149] : memref<9x1x32xf32, #tpu.memory_space<vmem>>, vector<1x1x32xf32>
    %231 = vector.shape_cast %230 : vector<1x1x32xf32> to vector<1x32xf32>
    %232 = vector.broadcast %229 : vector<210x1xf32> to vector<210x32xf32>
    %233 = vector.broadcast %231 : vector<1x32xf32> to vector<210x32xf32>
    %234 = arith.mulf %232, %233 : vector<210x32xf32>
    %c0_150 = arith.constant 0 : index
    %c465_151 = arith.constant 465 : index
    %c0_152 = arith.constant 0 : index
    %235 = vector.load %arg1[%c0_150, %c465_151, %c0_152] : memref<1x928x1xf32, #tpu.memory_space<vmem>>, vector<1x210x1xf32>
    %236 = vector.shape_cast %235 : vector<1x210x1xf32> to vector<210x1xf32>
    %c1_153 = arith.constant 1 : index
    %c0_154 = arith.constant 0 : index
    %c0_155 = arith.constant 0 : index
    %237 = vector.load %arg2[%c1_153, %c0_154, %c0_155] : memref<9x1x32xf32, #tpu.memory_space<vmem>>, vector<1x1x32xf32>
    %238 = vector.shape_cast %237 : vector<1x1x32xf32> to vector<1x32xf32>
    %239 = vector.broadcast %236 : vector<210x1xf32> to vector<210x32xf32>
    %240 = vector.broadcast %238 : vector<1x32xf32> to vector<210x32xf32>
    %241 = arith.mulf %239, %240 : vector<210x32xf32>
    %242 = arith.addf %234, %241 : vector<210x32xf32>
    %c0_156 = arith.constant 0 : index
    %c697_157 = arith.constant 697 : index
    %c0_158 = arith.constant 0 : index
    %243 = vector.load %arg1[%c0_156, %c697_157, %c0_158] : memref<1x928x1xf32, #tpu.memory_space<vmem>>, vector<1x210x1xf32>
    %244 = vector.shape_cast %243 : vector<1x210x1xf32> to vector<210x1xf32>
    %c2_159 = arith.constant 2 : index
    %c0_160 = arith.constant 0 : index
    %c0_161 = arith.constant 0 : index
    %245 = vector.load %arg2[%c2_159, %c0_160, %c0_161] : memref<9x1x32xf32, #tpu.memory_space<vmem>>, vector<1x1x32xf32>
    %246 = vector.shape_cast %245 : vector<1x1x32xf32> to vector<1x32xf32>
    %247 = vector.broadcast %244 : vector<210x1xf32> to vector<210x32xf32>
    %248 = vector.broadcast %246 : vector<1x32xf32> to vector<210x32xf32>
    %249 = arith.mulf %247, %248 : vector<210x32xf32>
    %250 = arith.addf %242, %249 : vector<210x32xf32>
    %c0_162 = arith.constant 0 : index
    %c247_163 = arith.constant 247 : index
    %c0_164 = arith.constant 0 : index
    %251 = vector.load %arg1[%c0_162, %c247_163, %c0_164] : memref<1x928x1xf32, #tpu.memory_space<vmem>>, vector<1x210x1xf32>
    %252 = vector.shape_cast %251 : vector<1x210x1xf32> to vector<210x1xf32>
    %c3_165 = arith.constant 3 : index
    %c0_166 = arith.constant 0 : index
    %c0_167 = arith.constant 0 : index
    %253 = vector.load %arg2[%c3_165, %c0_166, %c0_167] : memref<9x1x32xf32, #tpu.memory_space<vmem>>, vector<1x1x32xf32>
    %254 = vector.shape_cast %253 : vector<1x1x32xf32> to vector<1x32xf32>
    %255 = vector.broadcast %252 : vector<210x1xf32> to vector<210x32xf32>
    %256 = vector.broadcast %254 : vector<1x32xf32> to vector<210x32xf32>
    %257 = arith.mulf %255, %256 : vector<210x32xf32>
    %258 = arith.addf %250, %257 : vector<210x32xf32>
    %c0_168 = arith.constant 0 : index
    %c16_169 = arith.constant 16 : index
    %c0_170 = arith.constant 0 : index
    %259 = vector.load %arg1[%c0_168, %c16_169, %c0_170] : memref<1x928x1xf32, #tpu.memory_space<vmem>>, vector<1x210x1xf32>
    %260 = vector.shape_cast %259 : vector<1x210x1xf32> to vector<210x1xf32>
    %c4_171 = arith.constant 4 : index
    %c0_172 = arith.constant 0 : index
    %c0_173 = arith.constant 0 : index
    %261 = vector.load %arg2[%c4_171, %c0_172, %c0_173] : memref<9x1x32xf32, #tpu.memory_space<vmem>>, vector<1x1x32xf32>
    %262 = vector.shape_cast %261 : vector<1x1x32xf32> to vector<1x32xf32>
    %263 = vector.broadcast %260 : vector<210x1xf32> to vector<210x32xf32>
    %264 = vector.broadcast %262 : vector<1x32xf32> to vector<210x32xf32>
    %265 = arith.mulf %263, %264 : vector<210x32xf32>
    %266 = arith.addf %258, %265 : vector<210x32xf32>
    %c0_174 = arith.constant 0 : index
    %c248_175 = arith.constant 248 : index
    %c0_176 = arith.constant 0 : index
    %267 = vector.load %arg1[%c0_174, %c248_175, %c0_176] : memref<1x928x1xf32, #tpu.memory_space<vmem>>, vector<1x210x1xf32>
    %268 = vector.shape_cast %267 : vector<1x210x1xf32> to vector<210x1xf32>
    %c5_177 = arith.constant 5 : index
    %c0_178 = arith.constant 0 : index
    %c0_179 = arith.constant 0 : index
    %269 = vector.load %arg2[%c5_177, %c0_178, %c0_179] : memref<9x1x32xf32, #tpu.memory_space<vmem>>, vector<1x1x32xf32>
    %270 = vector.shape_cast %269 : vector<1x1x32xf32> to vector<1x32xf32>
    %271 = vector.broadcast %268 : vector<210x1xf32> to vector<210x32xf32>
    %272 = vector.broadcast %270 : vector<1x32xf32> to vector<210x32xf32>
    %273 = arith.mulf %271, %272 : vector<210x32xf32>
    %274 = arith.addf %266, %273 : vector<210x32xf32>
    %c0_180 = arith.constant 0 : index
    %c711_181 = arith.constant 711 : index
    %c0_182 = arith.constant 0 : index
    %275 = vector.load %arg1[%c0_180, %c711_181, %c0_182] : memref<1x928x1xf32, #tpu.memory_space<vmem>>, vector<1x210x1xf32>
    %276 = vector.shape_cast %275 : vector<1x210x1xf32> to vector<210x1xf32>
    %c6_183 = arith.constant 6 : index
    %c0_184 = arith.constant 0 : index
    %c0_185 = arith.constant 0 : index
    %277 = vector.load %arg2[%c6_183, %c0_184, %c0_185] : memref<9x1x32xf32, #tpu.memory_space<vmem>>, vector<1x1x32xf32>
    %278 = vector.shape_cast %277 : vector<1x1x32xf32> to vector<1x32xf32>
    %279 = vector.broadcast %276 : vector<210x1xf32> to vector<210x32xf32>
    %280 = vector.broadcast %278 : vector<1x32xf32> to vector<210x32xf32>
    %281 = arith.mulf %279, %280 : vector<210x32xf32>
    %282 = arith.addf %274, %281 : vector<210x32xf32>
    %c0_186 = arith.constant 0 : index
    %c480_187 = arith.constant 480 : index
    %c0_188 = arith.constant 0 : index
    %283 = vector.load %arg1[%c0_186, %c480_187, %c0_188] : memref<1x928x1xf32, #tpu.memory_space<vmem>>, vector<1x210x1xf32>
    %284 = vector.shape_cast %283 : vector<1x210x1xf32> to vector<210x1xf32>
    %c7_189 = arith.constant 7 : index
    %c0_190 = arith.constant 0 : index
    %c0_191 = arith.constant 0 : index
    %285 = vector.load %arg2[%c7_189, %c0_190, %c0_191] : memref<9x1x32xf32, #tpu.memory_space<vmem>>, vector<1x1x32xf32>
    %286 = vector.shape_cast %285 : vector<1x1x32xf32> to vector<1x32xf32>
    %287 = vector.broadcast %284 : vector<210x1xf32> to vector<210x32xf32>
    %288 = vector.broadcast %286 : vector<1x32xf32> to vector<210x32xf32>
    %289 = arith.mulf %287, %288 : vector<210x32xf32>
    %290 = arith.addf %282, %289 : vector<210x32xf32>
    %c0_192 = arith.constant 0 : index
    %c712 = arith.constant 712 : index
    %c0_193 = arith.constant 0 : index
    %291 = vector.load %arg1[%c0_192, %c712, %c0_193] : memref<1x928x1xf32, #tpu.memory_space<vmem>>, vector<1x210x1xf32>
    %292 = vector.shape_cast %291 : vector<1x210x1xf32> to vector<210x1xf32>
    %c8_194 = arith.constant 8 : index
    %c0_195 = arith.constant 0 : index
    %c0_196 = arith.constant 0 : index
    %293 = vector.load %arg2[%c8_194, %c0_195, %c0_196] : memref<9x1x32xf32, #tpu.memory_space<vmem>>, vector<1x1x32xf32>
    %294 = vector.shape_cast %293 : vector<1x1x32xf32> to vector<1x32xf32>
    %295 = vector.broadcast %292 : vector<210x1xf32> to vector<210x32xf32>
    %296 = vector.broadcast %294 : vector<1x32xf32> to vector<210x32xf32>
    %297 = arith.mulf %295, %296 : vector<210x32xf32>
    %298 = arith.addf %290, %297 : vector<210x32xf32>
    %299 = vector.broadcast %0 : vector<1x32xf32> to vector<210x32xf32>
    %300 = arith.addf %298, %299 : vector<210x32xf32>
    %cst_197 = arith.constant 0.000000e+00 : f32
    %301 = vector.broadcast %cst_197 : f32 to vector<210x32xf32>
    %302 = arith.maximumf %300, %301 : vector<210x32xf32>
    %303 = arith.maximumf %227, %302 : vector<210x32xf32>
    %c0_198 = arith.constant 0 : index
    %c0_199 = arith.constant 0 : index
    %c0_200 = arith.constant 0 : index
    %304 = vector.load %arg4[%c0_198, %c0_199, %c0_200] : memref<1x210x32xf32, #tpu.memory_space<vmem>>, vector<1x210x32xf32>
    %305 = vector.shape_cast %304 : vector<1x210x32xf32> to vector<210x32xf32>
    %306 = vector.shape_cast %303 : vector<210x32xf32> to vector<1x210x32xf32>
    tpu.vector_store %arg4[%c0_198, %c0_199, %c0_200], %306 {strides = array<i32>} : memref<1x210x32xf32, #tpu.memory_space<vmem>>, vector<1x210x32xf32>,
    return
  }
  func.func @transform_0(%arg0: i32) -> (i32, i32, i32) {
    %c0_i32 = arith.constant 0 : i32
    %c0_i32_0 = arith.constant 0 : i32
    %c0_i32_1 = arith.constant 0 : i32
    return %arg0, %c0_i32, %c0_i32_0 : i32, i32, i32
  }
  func.func @transform_1(%arg0: i32) -> (i32, i32, i32) {
    %c0_i32 = arith.constant 0 : i32
    %c0_i32_0 = arith.constant 0 : i32
    %c0_i32_1 = arith.constant 0 : i32
    %c0_i32_2 = arith.constant 0 : i32
    return %c0_i32, %c0_i32_0, %c0_i32_1 : i32, i32, i32
  }
  func.func @transform_2(%arg0: i32) -> (i32, i32) {
    %c0_i32 = arith.constant 0 : i32
    %c0_i32_0 = arith.constant 0 : i32
    %c0_i32_1 = arith.constant 0 : i32
    return %c0_i32, %c0_i32_0 : i32, i32
  }
  func.func @transform_3(%arg0: i32) -> (i32, i32, i32) {
    %c0_i32 = arith.constant 0 : i32
    %c0_i32_0 = arith.constant 0 : i32
    %c0_i32_1 = arith.constant 0 : i32
    return %arg0, %c0_i32, %c0_i32_0 : i32, i32, i32
  }
}

module attributes {stable_mosaic.version = 11 : i64} {
  func.func @_conv_relu_pool_kernel(%arg0: i32, %arg1: memref<1x288x32xbf16, #tpu.memory_space<vmem>>, %arg2: memref<9x32x64xbf16, #tpu.memory_space<vmem>>, %arg3: memref<1x64xf32, #tpu.memory_space<vmem>>, %arg4: memref<1x56x64xf32, #tpu.memory_space<vmem>>) attributes {dimension_semantics = [#tpu.dimension_semantics<parallel>], iteration_bounds = array<i64: 2>, scalar_prefetch = 0 : i64, scratch_operands = 0 : i64, tpu.core_type = #tpu.core_type<tc>, window_params = [{transform_indices = @transform_0, window_bounds = array<i64: 1, 288, 32>}, {pipeline_mode = #tpu.pipeline_mode<synchronous>, transform_indices = @transform_1, window_bounds = array<i64: 9, 32, 64>}, {pipeline_mode = #tpu.pipeline_mode<synchronous>, transform_indices = @transform_2, window_bounds = array<i64: 1, 64>}, {transform_indices = @transform_3, window_bounds = array<i64: 1, 56, 64>}]} {
    %c0 = arith.constant 0 : index
    %c0_0 = arith.constant 0 : index
    %0 = vector.load %arg3[%c0, %c0_0] : memref<1x64xf32, #tpu.memory_space<vmem>>, vector<1x64xf32>
    %c0_1 = arith.constant 0 : index
    %c0_2 = arith.constant 0 : index
    %c0_3 = arith.constant 0 : index
    %1 = vector.load %arg1[%c0_1, %c0_2, %c0_3] : memref<1x288x32xbf16, #tpu.memory_space<vmem>>, vector<1x56x32xbf16>
    %2 = vector.shape_cast %1 : vector<1x56x32xbf16> to vector<56x32xbf16>
    %c0_4 = arith.constant 0 : index
    %c0_5 = arith.constant 0 : index
    %c0_6 = arith.constant 0 : index
    %3 = vector.load %arg2[%c0_4, %c0_5, %c0_6] : memref<9x32x64xbf16, #tpu.memory_space<vmem>>, vector<1x32x64xbf16>
    %4 = vector.shape_cast %3 : vector<1x32x64xbf16> to vector<32x64xbf16>
    %cst = arith.constant dense<0.000000e+00> : vector<56x64xf32>
    %5 = tpu.matmul %2, %4, %cst {dimension_numbers = #tpu.dot_dimension_numbers<[1], [0], [0], [1], [0, 0, 1, 1], [], []>} : vector<56x32xbf16>, vector<32x64xbf16>, vector<56x64xf32> -> vector<56x64xf32>
    %c0_7 = arith.constant 0 : index
    %c72 = arith.constant 72 : index
    %c0_8 = arith.constant 0 : index
    %6 = vector.load %arg1[%c0_7, %c72, %c0_8] : memref<1x288x32xbf16, #tpu.memory_space<vmem>>, vector<1x56x32xbf16>
    %7 = vector.shape_cast %6 : vector<1x56x32xbf16> to vector<56x32xbf16>
    %c1 = arith.constant 1 : index
    %c0_9 = arith.constant 0 : index
    %c0_10 = arith.constant 0 : index
    %8 = vector.load %arg2[%c1, %c0_9, %c0_10] : memref<9x32x64xbf16, #tpu.memory_space<vmem>>, vector<1x32x64xbf16>
    %9 = vector.shape_cast %8 : vector<1x32x64xbf16> to vector<32x64xbf16>
    %cst_11 = arith.constant dense<0.000000e+00> : vector<56x64xf32>
    %10 = tpu.matmul %7, %9, %cst_11 {dimension_numbers = #tpu.dot_dimension_numbers<[1], [0], [0], [1], [0, 0, 1, 1], [], []>} : vector<56x32xbf16>, vector<32x64xbf16>, vector<56x64xf32> -> vector<56x64xf32>
    %11 = arith.addf %5, %10 : vector<56x64xf32>
    %c0_12 = arith.constant 0 : index
    %c1_13 = arith.constant 1 : index
    %c0_14 = arith.constant 0 : index
    %12 = vector.load %arg1[%c0_12, %c1_13, %c0_14] : memref<1x288x32xbf16, #tpu.memory_space<vmem>>, vector<1x56x32xbf16>
    %13 = vector.shape_cast %12 : vector<1x56x32xbf16> to vector<56x32xbf16>
    %c2 = arith.constant 2 : index
    %c0_15 = arith.constant 0 : index
    %c0_16 = arith.constant 0 : index
    %14 = vector.load %arg2[%c2, %c0_15, %c0_16] : memref<9x32x64xbf16, #tpu.memory_space<vmem>>, vector<1x32x64xbf16>
    %15 = vector.shape_cast %14 : vector<1x32x64xbf16> to vector<32x64xbf16>
    %cst_17 = arith.constant dense<0.000000e+00> : vector<56x64xf32>
    %16 = tpu.matmul %13, %15, %cst_17 {dimension_numbers = #tpu.dot_dimension_numbers<[1], [0], [0], [1], [0, 0, 1, 1], [], []>} : vector<56x32xbf16>, vector<32x64xbf16>, vector<56x64xf32> -> vector<56x64xf32>
    %17 = arith.addf %11, %16 : vector<56x64xf32>
    %c0_18 = arith.constant 0 : index
    %c144 = arith.constant 144 : index
    %c0_19 = arith.constant 0 : index
    %18 = vector.load %arg1[%c0_18, %c144, %c0_19] : memref<1x288x32xbf16, #tpu.memory_space<vmem>>, vector<1x56x32xbf16>
    %19 = vector.shape_cast %18 : vector<1x56x32xbf16> to vector<56x32xbf16>
    %c3 = arith.constant 3 : index
    %c0_20 = arith.constant 0 : index
    %c0_21 = arith.constant 0 : index
    %20 = vector.load %arg2[%c3, %c0_20, %c0_21] : memref<9x32x64xbf16, #tpu.memory_space<vmem>>, vector<1x32x64xbf16>
    %21 = vector.shape_cast %20 : vector<1x32x64xbf16> to vector<32x64xbf16>
    %cst_22 = arith.constant dense<0.000000e+00> : vector<56x64xf32>
    %22 = tpu.matmul %19, %21, %cst_22 {dimension_numbers = #tpu.dot_dimension_numbers<[1], [0], [0], [1], [0, 0, 1, 1], [], []>} : vector<56x32xbf16>, vector<32x64xbf16>, vector<56x64xf32> -> vector<56x64xf32>
    %23 = arith.addf %17, %22 : vector<56x64xf32>
    %c0_23 = arith.constant 0 : index
    %c216 = arith.constant 216 : index
    %c0_24 = arith.constant 0 : index
    %24 = vector.load %arg1[%c0_23, %c216, %c0_24] : memref<1x288x32xbf16, #tpu.memory_space<vmem>>, vector<1x56x32xbf16>
    %25 = vector.shape_cast %24 : vector<1x56x32xbf16> to vector<56x32xbf16>
    %c4 = arith.constant 4 : index
    %c0_25 = arith.constant 0 : index
    %c0_26 = arith.constant 0 : index
    %26 = vector.load %arg2[%c4, %c0_25, %c0_26] : memref<9x32x64xbf16, #tpu.memory_space<vmem>>, vector<1x32x64xbf16>
    %27 = vector.shape_cast %26 : vector<1x32x64xbf16> to vector<32x64xbf16>
    %cst_27 = arith.constant dense<0.000000e+00> : vector<56x64xf32>
    %28 = tpu.matmul %25, %27, %cst_27 {dimension_numbers = #tpu.dot_dimension_numbers<[1], [0], [0], [1], [0, 0, 1, 1], [], []>} : vector<56x32xbf16>, vector<32x64xbf16>, vector<56x64xf32> -> vector<56x64xf32>
    %29 = arith.addf %23, %28 : vector<56x64xf32>
    %c0_28 = arith.constant 0 : index
    %c145 = arith.constant 145 : index
    %c0_29 = arith.constant 0 : index
    %30 = vector.load %arg1[%c0_28, %c145, %c0_29] : memref<1x288x32xbf16, #tpu.memory_space<vmem>>, vector<1x56x32xbf16>
    %31 = vector.shape_cast %30 : vector<1x56x32xbf16> to vector<56x32xbf16>
    %c5 = arith.constant 5 : index
    %c0_30 = arith.constant 0 : index
    %c0_31 = arith.constant 0 : index
    %32 = vector.load %arg2[%c5, %c0_30, %c0_31] : memref<9x32x64xbf16, #tpu.memory_space<vmem>>, vector<1x32x64xbf16>
    %33 = vector.shape_cast %32 : vector<1x32x64xbf16> to vector<32x64xbf16>
    %cst_32 = arith.constant dense<0.000000e+00> : vector<56x64xf32>
    %34 = tpu.matmul %31, %33, %cst_32 {dimension_numbers = #tpu.dot_dimension_numbers<[1], [0], [0], [1], [0, 0, 1, 1], [], []>} : vector<56x32xbf16>, vector<32x64xbf16>, vector<56x64xf32> -> vector<56x64xf32>
    %35 = arith.addf %29, %34 : vector<56x64xf32>
    %c0_33 = arith.constant 0 : index
    %c8 = arith.constant 8 : index
    %c0_34 = arith.constant 0 : index
    %36 = vector.load %arg1[%c0_33, %c8, %c0_34] : memref<1x288x32xbf16, #tpu.memory_space<vmem>>, vector<1x56x32xbf16>
    %37 = vector.shape_cast %36 : vector<1x56x32xbf16> to vector<56x32xbf16>
    %c6 = arith.constant 6 : index
    %c0_35 = arith.constant 0 : index
    %c0_36 = arith.constant 0 : index
    %38 = vector.load %arg2[%c6, %c0_35, %c0_36] : memref<9x32x64xbf16, #tpu.memory_space<vmem>>, vector<1x32x64xbf16>
    %39 = vector.shape_cast %38 : vector<1x32x64xbf16> to vector<32x64xbf16>
    %cst_37 = arith.constant dense<0.000000e+00> : vector<56x64xf32>
    %40 = tpu.matmul %37, %39, %cst_37 {dimension_numbers = #tpu.dot_dimension_numbers<[1], [0], [0], [1], [0, 0, 1, 1], [], []>} : vector<56x32xbf16>, vector<32x64xbf16>, vector<56x64xf32> -> vector<56x64xf32>
    %41 = arith.addf %35, %40 : vector<56x64xf32>
    %c0_38 = arith.constant 0 : index
    %c80 = arith.constant 80 : index
    %c0_39 = arith.constant 0 : index
    %42 = vector.load %arg1[%c0_38, %c80, %c0_39] : memref<1x288x32xbf16, #tpu.memory_space<vmem>>, vector<1x56x32xbf16>
    %43 = vector.shape_cast %42 : vector<1x56x32xbf16> to vector<56x32xbf16>
    %c7 = arith.constant 7 : index
    %c0_40 = arith.constant 0 : index
    %c0_41 = arith.constant 0 : index
    %44 = vector.load %arg2[%c7, %c0_40, %c0_41] : memref<9x32x64xbf16, #tpu.memory_space<vmem>>, vector<1x32x64xbf16>
    %45 = vector.shape_cast %44 : vector<1x32x64xbf16> to vector<32x64xbf16>
    %cst_42 = arith.constant dense<0.000000e+00> : vector<56x64xf32>
    %46 = tpu.matmul %43, %45, %cst_42 {dimension_numbers = #tpu.dot_dimension_numbers<[1], [0], [0], [1], [0, 0, 1, 1], [], []>} : vector<56x32xbf16>, vector<32x64xbf16>, vector<56x64xf32> -> vector<56x64xf32>
    %47 = arith.addf %41, %46 : vector<56x64xf32>
    %c0_43 = arith.constant 0 : index
    %c9 = arith.constant 9 : index
    %c0_44 = arith.constant 0 : index
    %48 = vector.load %arg1[%c0_43, %c9, %c0_44] : memref<1x288x32xbf16, #tpu.memory_space<vmem>>, vector<1x56x32xbf16>
    %49 = vector.shape_cast %48 : vector<1x56x32xbf16> to vector<56x32xbf16>
    %c8_45 = arith.constant 8 : index
    %c0_46 = arith.constant 0 : index
    %c0_47 = arith.constant 0 : index
    %50 = vector.load %arg2[%c8_45, %c0_46, %c0_47] : memref<9x32x64xbf16, #tpu.memory_space<vmem>>, vector<1x32x64xbf16>
    %51 = vector.shape_cast %50 : vector<1x32x64xbf16> to vector<32x64xbf16>
    %cst_48 = arith.constant dense<0.000000e+00> : vector<56x64xf32>
    %52 = tpu.matmul %49, %51, %cst_48 {dimension_numbers = #tpu.dot_dimension_numbers<[1], [0], [0], [1], [0, 0, 1, 1], [], []>} : vector<56x32xbf16>, vector<32x64xbf16>, vector<56x64xf32> -> vector<56x64xf32>
    %53 = arith.addf %47, %52 : vector<56x64xf32>
    %54 = vector.broadcast %0 : vector<1x64xf32> to vector<56x64xf32>
    %55 = arith.addf %53, %54 : vector<56x64xf32>
    %cst_49 = arith.constant 0.000000e+00 : f32
    %56 = vector.broadcast %cst_49 : f32 to vector<56x64xf32>
    %57 = arith.maximumf %55, %56 : vector<56x64xf32>
    %c0_50 = arith.constant 0 : index
    %c72_51 = arith.constant 72 : index
    %c0_52 = arith.constant 0 : index
    %58 = vector.load %arg1[%c0_50, %c72_51, %c0_52] : memref<1x288x32xbf16, #tpu.memory_space<vmem>>, vector<1x56x32xbf16>
    %59 = vector.shape_cast %58 : vector<1x56x32xbf16> to vector<56x32xbf16>
    %c0_53 = arith.constant 0 : index
    %c0_54 = arith.constant 0 : index
    %c0_55 = arith.constant 0 : index
    %60 = vector.load %arg2[%c0_53, %c0_54, %c0_55] : memref<9x32x64xbf16, #tpu.memory_space<vmem>>, vector<1x32x64xbf16>
    %61 = vector.shape_cast %60 : vector<1x32x64xbf16> to vector<32x64xbf16>
    %cst_56 = arith.constant dense<0.000000e+00> : vector<56x64xf32>
    %62 = tpu.matmul %59, %61, %cst_56 {dimension_numbers = #tpu.dot_dimension_numbers<[1], [0], [0], [1], [0, 0, 1, 1], [], []>} : vector<56x32xbf16>, vector<32x64xbf16>, vector<56x64xf32> -> vector<56x64xf32>
    %c0_57 = arith.constant 0 : index
    %c1_58 = arith.constant 1 : index
    %c0_59 = arith.constant 0 : index
    %63 = vector.load %arg1[%c0_57, %c1_58, %c0_59] : memref<1x288x32xbf16, #tpu.memory_space<vmem>>, vector<1x56x32xbf16>
    %64 = vector.shape_cast %63 : vector<1x56x32xbf16> to vector<56x32xbf16>
    %c1_60 = arith.constant 1 : index
    %c0_61 = arith.constant 0 : index
    %c0_62 = arith.constant 0 : index
    %65 = vector.load %arg2[%c1_60, %c0_61, %c0_62] : memref<9x32x64xbf16, #tpu.memory_space<vmem>>, vector<1x32x64xbf16>
    %66 = vector.shape_cast %65 : vector<1x32x64xbf16> to vector<32x64xbf16>
    %cst_63 = arith.constant dense<0.000000e+00> : vector<56x64xf32>
    %67 = tpu.matmul %64, %66, %cst_63 {dimension_numbers = #tpu.dot_dimension_numbers<[1], [0], [0], [1], [0, 0, 1, 1], [], []>} : vector<56x32xbf16>, vector<32x64xbf16>, vector<56x64xf32> -> vector<56x64xf32>
    %68 = arith.addf %62, %67 : vector<56x64xf32>
    %c0_64 = arith.constant 0 : index
    %c73 = arith.constant 73 : index
    %c0_65 = arith.constant 0 : index
    %69 = vector.load %arg1[%c0_64, %c73, %c0_65] : memref<1x288x32xbf16, #tpu.memory_space<vmem>>, vector<1x56x32xbf16>
    %70 = vector.shape_cast %69 : vector<1x56x32xbf16> to vector<56x32xbf16>
    %c2_66 = arith.constant 2 : index
    %c0_67 = arith.constant 0 : index
    %c0_68 = arith.constant 0 : index
    %71 = vector.load %arg2[%c2_66, %c0_67, %c0_68] : memref<9x32x64xbf16, #tpu.memory_space<vmem>>, vector<1x32x64xbf16>
    %72 = vector.shape_cast %71 : vector<1x32x64xbf16> to vector<32x64xbf16>
    %cst_69 = arith.constant dense<0.000000e+00> : vector<56x64xf32>
    %73 = tpu.matmul %70, %72, %cst_69 {dimension_numbers = #tpu.dot_dimension_numbers<[1], [0], [0], [1], [0, 0, 1, 1], [], []>} : vector<56x32xbf16>, vector<32x64xbf16>, vector<56x64xf32> -> vector<56x64xf32>
    %74 = arith.addf %68, %73 : vector<56x64xf32>
    %c0_70 = arith.constant 0 : index
    %c216_71 = arith.constant 216 : index
    %c0_72 = arith.constant 0 : index
    %75 = vector.load %arg1[%c0_70, %c216_71, %c0_72] : memref<1x288x32xbf16, #tpu.memory_space<vmem>>, vector<1x56x32xbf16>
    %76 = vector.shape_cast %75 : vector<1x56x32xbf16> to vector<56x32xbf16>
    %c3_73 = arith.constant 3 : index
    %c0_74 = arith.constant 0 : index
    %c0_75 = arith.constant 0 : index
    %77 = vector.load %arg2[%c3_73, %c0_74, %c0_75] : memref<9x32x64xbf16, #tpu.memory_space<vmem>>, vector<1x32x64xbf16>
    %78 = vector.shape_cast %77 : vector<1x32x64xbf16> to vector<32x64xbf16>
    %cst_76 = arith.constant dense<0.000000e+00> : vector<56x64xf32>
    %79 = tpu.matmul %76, %78, %cst_76 {dimension_numbers = #tpu.dot_dimension_numbers<[1], [0], [0], [1], [0, 0, 1, 1], [], []>} : vector<56x32xbf16>, vector<32x64xbf16>, vector<56x64xf32> -> vector<56x64xf32>
    %80 = arith.addf %74, %79 : vector<56x64xf32>
    %c0_77 = arith.constant 0 : index
    %c145_78 = arith.constant 145 : index
    %c0_79 = arith.constant 0 : index
    %81 = vector.load %arg1[%c0_77, %c145_78, %c0_79] : memref<1x288x32xbf16, #tpu.memory_space<vmem>>, vector<1x56x32xbf16>
    %82 = vector.shape_cast %81 : vector<1x56x32xbf16> to vector<56x32xbf16>
    %c4_80 = arith.constant 4 : index
    %c0_81 = arith.constant 0 : index
    %c0_82 = arith.constant 0 : index
    %83 = vector.load %arg2[%c4_80, %c0_81, %c0_82] : memref<9x32x64xbf16, #tpu.memory_space<vmem>>, vector<1x32x64xbf16>
    %84 = vector.shape_cast %83 : vector<1x32x64xbf16> to vector<32x64xbf16>
    %cst_83 = arith.constant dense<0.000000e+00> : vector<56x64xf32>
    %85 = tpu.matmul %82, %84, %cst_83 {dimension_numbers = #tpu.dot_dimension_numbers<[1], [0], [0], [1], [0, 0, 1, 1], [], []>} : vector<56x32xbf16>, vector<32x64xbf16>, vector<56x64xf32> -> vector<56x64xf32>
    %86 = arith.addf %80, %85 : vector<56x64xf32>
    %c0_84 = arith.constant 0 : index
    %c217 = arith.constant 217 : index
    %c0_85 = arith.constant 0 : index
    %87 = vector.load %arg1[%c0_84, %c217, %c0_85] : memref<1x288x32xbf16, #tpu.memory_space<vmem>>, vector<1x56x32xbf16>
    %88 = vector.shape_cast %87 : vector<1x56x32xbf16> to vector<56x32xbf16>
    %c5_86 = arith.constant 5 : index
    %c0_87 = arith.constant 0 : index
    %c0_88 = arith.constant 0 : index
    %89 = vector.load %arg2[%c5_86, %c0_87, %c0_88] : memref<9x32x64xbf16, #tpu.memory_space<vmem>>, vector<1x32x64xbf16>
    %90 = vector.shape_cast %89 : vector<1x32x64xbf16> to vector<32x64xbf16>
    %cst_89 = arith.constant dense<0.000000e+00> : vector<56x64xf32>
    %91 = tpu.matmul %88, %90, %cst_89 {dimension_numbers = #tpu.dot_dimension_numbers<[1], [0], [0], [1], [0, 0, 1, 1], [], []>} : vector<56x32xbf16>, vector<32x64xbf16>, vector<56x64xf32> -> vector<56x64xf32>
    %92 = arith.addf %86, %91 : vector<56x64xf32>
    %c0_90 = arith.constant 0 : index
    %c80_91 = arith.constant 80 : index
    %c0_92 = arith.constant 0 : index
    %93 = vector.load %arg1[%c0_90, %c80_91, %c0_92] : memref<1x288x32xbf16, #tpu.memory_space<vmem>>, vector<1x56x32xbf16>
    %94 = vector.shape_cast %93 : vector<1x56x32xbf16> to vector<56x32xbf16>
    %c6_93 = arith.constant 6 : index
    %c0_94 = arith.constant 0 : index
    %c0_95 = arith.constant 0 : index
    %95 = vector.load %arg2[%c6_93, %c0_94, %c0_95] : memref<9x32x64xbf16, #tpu.memory_space<vmem>>, vector<1x32x64xbf16>
    %96 = vector.shape_cast %95 : vector<1x32x64xbf16> to vector<32x64xbf16>
    %cst_96 = arith.constant dense<0.000000e+00> : vector<56x64xf32>
    %97 = tpu.matmul %94, %96, %cst_96 {dimension_numbers = #tpu.dot_dimension_numbers<[1], [0], [0], [1], [0, 0, 1, 1], [], []>} : vector<56x32xbf16>, vector<32x64xbf16>, vector<56x64xf32> -> vector<56x64xf32>
    %98 = arith.addf %92, %97 : vector<56x64xf32>
    %c0_97 = arith.constant 0 : index
    %c9_98 = arith.constant 9 : index
    %c0_99 = arith.constant 0 : index
    %99 = vector.load %arg1[%c0_97, %c9_98, %c0_99] : memref<1x288x32xbf16, #tpu.memory_space<vmem>>, vector<1x56x32xbf16>
    %100 = vector.shape_cast %99 : vector<1x56x32xbf16> to vector<56x32xbf16>
    %c7_100 = arith.constant 7 : index
    %c0_101 = arith.constant 0 : index
    %c0_102 = arith.constant 0 : index
    %101 = vector.load %arg2[%c7_100, %c0_101, %c0_102] : memref<9x32x64xbf16, #tpu.memory_space<vmem>>, vector<1x32x64xbf16>
    %102 = vector.shape_cast %101 : vector<1x32x64xbf16> to vector<32x64xbf16>
    %cst_103 = arith.constant dense<0.000000e+00> : vector<56x64xf32>
    %103 = tpu.matmul %100, %102, %cst_103 {dimension_numbers = #tpu.dot_dimension_numbers<[1], [0], [0], [1], [0, 0, 1, 1], [], []>} : vector<56x32xbf16>, vector<32x64xbf16>, vector<56x64xf32> -> vector<56x64xf32>
    %104 = arith.addf %98, %103 : vector<56x64xf32>
    %c0_104 = arith.constant 0 : index
    %c81 = arith.constant 81 : index
    %c0_105 = arith.constant 0 : index
    %105 = vector.load %arg1[%c0_104, %c81, %c0_105] : memref<1x288x32xbf16, #tpu.memory_space<vmem>>, vector<1x56x32xbf16>
    %106 = vector.shape_cast %105 : vector<1x56x32xbf16> to vector<56x32xbf16>
    %c8_106 = arith.constant 8 : index
    %c0_107 = arith.constant 0 : index
    %c0_108 = arith.constant 0 : index
    %107 = vector.load %arg2[%c8_106, %c0_107, %c0_108] : memref<9x32x64xbf16, #tpu.memory_space<vmem>>, vector<1x32x64xbf16>
    %108 = vector.shape_cast %107 : vector<1x32x64xbf16> to vector<32x64xbf16>
    %cst_109 = arith.constant dense<0.000000e+00> : vector<56x64xf32>
    %109 = tpu.matmul %106, %108, %cst_109 {dimension_numbers = #tpu.dot_dimension_numbers<[1], [0], [0], [1], [0, 0, 1, 1], [], []>} : vector<56x32xbf16>, vector<32x64xbf16>, vector<56x64xf32> -> vector<56x64xf32>
    %110 = arith.addf %104, %109 : vector<56x64xf32>
    %111 = vector.broadcast %0 : vector<1x64xf32> to vector<56x64xf32>
    %112 = arith.addf %110, %111 : vector<56x64xf32>
    %cst_110 = arith.constant 0.000000e+00 : f32
    %113 = vector.broadcast %cst_110 : f32 to vector<56x64xf32>
    %114 = arith.maximumf %112, %113 : vector<56x64xf32>
    %115 = arith.maximumf %57, %114 : vector<56x64xf32>
    %c0_111 = arith.constant 0 : index
    %c144_112 = arith.constant 144 : index
    %c0_113 = arith.constant 0 : index
    %116 = vector.load %arg1[%c0_111, %c144_112, %c0_113] : memref<1x288x32xbf16, #tpu.memory_space<vmem>>, vector<1x56x32xbf16>
    %117 = vector.shape_cast %116 : vector<1x56x32xbf16> to vector<56x32xbf16>
    %c0_114 = arith.constant 0 : index
    %c0_115 = arith.constant 0 : index
    %c0_116 = arith.constant 0 : index
    %118 = vector.load %arg2[%c0_114, %c0_115, %c0_116] : memref<9x32x64xbf16, #tpu.memory_space<vmem>>, vector<1x32x64xbf16>
    %119 = vector.shape_cast %118 : vector<1x32x64xbf16> to vector<32x64xbf16>
    %cst_117 = arith.constant dense<0.000000e+00> : vector<56x64xf32>
    %120 = tpu.matmul %117, %119, %cst_117 {dimension_numbers = #tpu.dot_dimension_numbers<[1], [0], [0], [1], [0, 0, 1, 1], [], []>} : vector<56x32xbf16>, vector<32x64xbf16>, vector<56x64xf32> -> vector<56x64xf32>
    %c0_118 = arith.constant 0 : index
    %c216_119 = arith.constant 216 : index
    %c0_120 = arith.constant 0 : index
    %121 = vector.load %arg1[%c0_118, %c216_119, %c0_120] : memref<1x288x32xbf16, #tpu.memory_space<vmem>>, vector<1x56x32xbf16>
    %122 = vector.shape_cast %121 : vector<1x56x32xbf16> to vector<56x32xbf16>
    %c1_121 = arith.constant 1 : index
    %c0_122 = arith.constant 0 : index
    %c0_123 = arith.constant 0 : index
    %123 = vector.load %arg2[%c1_121, %c0_122, %c0_123] : memref<9x32x64xbf16, #tpu.memory_space<vmem>>, vector<1x32x64xbf16>
    %124 = vector.shape_cast %123 : vector<1x32x64xbf16> to vector<32x64xbf16>
    %cst_124 = arith.constant dense<0.000000e+00> : vector<56x64xf32>
    %125 = tpu.matmul %122, %124, %cst_124 {dimension_numbers = #tpu.dot_dimension_numbers<[1], [0], [0], [1], [0, 0, 1, 1], [], []>} : vector<56x32xbf16>, vector<32x64xbf16>, vector<56x64xf32> -> vector<56x64xf32>
    %126 = arith.addf %120, %125 : vector<56x64xf32>
    %c0_125 = arith.constant 0 : index
    %c145_126 = arith.constant 145 : index
    %c0_127 = arith.constant 0 : index
    %127 = vector.load %arg1[%c0_125, %c145_126, %c0_127] : memref<1x288x32xbf16, #tpu.memory_space<vmem>>, vector<1x56x32xbf16>
    %128 = vector.shape_cast %127 : vector<1x56x32xbf16> to vector<56x32xbf16>
    %c2_128 = arith.constant 2 : index
    %c0_129 = arith.constant 0 : index
    %c0_130 = arith.constant 0 : index
    %129 = vector.load %arg2[%c2_128, %c0_129, %c0_130] : memref<9x32x64xbf16, #tpu.memory_space<vmem>>, vector<1x32x64xbf16>
    %130 = vector.shape_cast %129 : vector<1x32x64xbf16> to vector<32x64xbf16>
    %cst_131 = arith.constant dense<0.000000e+00> : vector<56x64xf32>
    %131 = tpu.matmul %128, %130, %cst_131 {dimension_numbers = #tpu.dot_dimension_numbers<[1], [0], [0], [1], [0, 0, 1, 1], [], []>} : vector<56x32xbf16>, vector<32x64xbf16>, vector<56x64xf32> -> vector<56x64xf32>
    %132 = arith.addf %126, %131 : vector<56x64xf32>
    %c0_132 = arith.constant 0 : index
    %c8_133 = arith.constant 8 : index
    %c0_134 = arith.constant 0 : index
    %133 = vector.load %arg1[%c0_132, %c8_133, %c0_134] : memref<1x288x32xbf16, #tpu.memory_space<vmem>>, vector<1x56x32xbf16>
    %134 = vector.shape_cast %133 : vector<1x56x32xbf16> to vector<56x32xbf16>
    %c3_135 = arith.constant 3 : index
    %c0_136 = arith.constant 0 : index
    %c0_137 = arith.constant 0 : index
    %135 = vector.load %arg2[%c3_135, %c0_136, %c0_137] : memref<9x32x64xbf16, #tpu.memory_space<vmem>>, vector<1x32x64xbf16>
    %136 = vector.shape_cast %135 : vector<1x32x64xbf16> to vector<32x64xbf16>
    %cst_138 = arith.constant dense<0.000000e+00> : vector<56x64xf32>
    %137 = tpu.matmul %134, %136, %cst_138 {dimension_numbers = #tpu.dot_dimension_numbers<[1], [0], [0], [1], [0, 0, 1, 1], [], []>} : vector<56x32xbf16>, vector<32x64xbf16>, vector<56x64xf32> -> vector<56x64xf32>
    %138 = arith.addf %132, %137 : vector<56x64xf32>
    %c0_139 = arith.constant 0 : index
    %c80_140 = arith.constant 80 : index
    %c0_141 = arith.constant 0 : index
    %139 = vector.load %arg1[%c0_139, %c80_140, %c0_141] : memref<1x288x32xbf16, #tpu.memory_space<vmem>>, vector<1x56x32xbf16>
    %140 = vector.shape_cast %139 : vector<1x56x32xbf16> to vector<56x32xbf16>
    %c4_142 = arith.constant 4 : index
    %c0_143 = arith.constant 0 : index
    %c0_144 = arith.constant 0 : index
    %141 = vector.load %arg2[%c4_142, %c0_143, %c0_144] : memref<9x32x64xbf16, #tpu.memory_space<vmem>>, vector<1x32x64xbf16>
    %142 = vector.shape_cast %141 : vector<1x32x64xbf16> to vector<32x64xbf16>
    %cst_145 = arith.constant dense<0.000000e+00> : vector<56x64xf32>
    %143 = tpu.matmul %140, %142, %cst_145 {dimension_numbers = #tpu.dot_dimension_numbers<[1], [0], [0], [1], [0, 0, 1, 1], [], []>} : vector<56x32xbf16>, vector<32x64xbf16>, vector<56x64xf32> -> vector<56x64xf32>
    %144 = arith.addf %138, %143 : vector<56x64xf32>
    %c0_146 = arith.constant 0 : index
    %c9_147 = arith.constant 9 : index
    %c0_148 = arith.constant 0 : index
    %145 = vector.load %arg1[%c0_146, %c9_147, %c0_148] : memref<1x288x32xbf16, #tpu.memory_space<vmem>>, vector<1x56x32xbf16>
    %146 = vector.shape_cast %145 : vector<1x56x32xbf16> to vector<56x32xbf16>
    %c5_149 = arith.constant 5 : index
    %c0_150 = arith.constant 0 : index
    %c0_151 = arith.constant 0 : index
    %147 = vector.load %arg2[%c5_149, %c0_150, %c0_151] : memref<9x32x64xbf16, #tpu.memory_space<vmem>>, vector<1x32x64xbf16>
    %148 = vector.shape_cast %147 : vector<1x32x64xbf16> to vector<32x64xbf16>
    %cst_152 = arith.constant dense<0.000000e+00> : vector<56x64xf32>
    %149 = tpu.matmul %146, %148, %cst_152 {dimension_numbers = #tpu.dot_dimension_numbers<[1], [0], [0], [1], [0, 0, 1, 1], [], []>} : vector<56x32xbf16>, vector<32x64xbf16>, vector<56x64xf32> -> vector<56x64xf32>
    %150 = arith.addf %144, %149 : vector<56x64xf32>
    %c0_153 = arith.constant 0 : index
    %c152 = arith.constant 152 : index
    %c0_154 = arith.constant 0 : index
    %151 = vector.load %arg1[%c0_153, %c152, %c0_154] : memref<1x288x32xbf16, #tpu.memory_space<vmem>>, vector<1x56x32xbf16>
    %152 = vector.shape_cast %151 : vector<1x56x32xbf16> to vector<56x32xbf16>
    %c6_155 = arith.constant 6 : index
    %c0_156 = arith.constant 0 : index
    %c0_157 = arith.constant 0 : index
    %153 = vector.load %arg2[%c6_155, %c0_156, %c0_157] : memref<9x32x64xbf16, #tpu.memory_space<vmem>>, vector<1x32x64xbf16>
    %154 = vector.shape_cast %153 : vector<1x32x64xbf16> to vector<32x64xbf16>
    %cst_158 = arith.constant dense<0.000000e+00> : vector<56x64xf32>
    %155 = tpu.matmul %152, %154, %cst_158 {dimension_numbers = #tpu.dot_dimension_numbers<[1], [0], [0], [1], [0, 0, 1, 1], [], []>} : vector<56x32xbf16>, vector<32x64xbf16>, vector<56x64xf32> -> vector<56x64xf32>
    %156 = arith.addf %150, %155 : vector<56x64xf32>
    %c0_159 = arith.constant 0 : index
    %c224 = arith.constant 224 : index
    %c0_160 = arith.constant 0 : index
    %157 = vector.load %arg1[%c0_159, %c224, %c0_160] : memref<1x288x32xbf16, #tpu.memory_space<vmem>>, vector<1x56x32xbf16>
    %158 = vector.shape_cast %157 : vector<1x56x32xbf16> to vector<56x32xbf16>
    %c7_161 = arith.constant 7 : index
    %c0_162 = arith.constant 0 : index
    %c0_163 = arith.constant 0 : index
    %159 = vector.load %arg2[%c7_161, %c0_162, %c0_163] : memref<9x32x64xbf16, #tpu.memory_space<vmem>>, vector<1x32x64xbf16>
    %160 = vector.shape_cast %159 : vector<1x32x64xbf16> to vector<32x64xbf16>
    %cst_164 = arith.constant dense<0.000000e+00> : vector<56x64xf32>
    %161 = tpu.matmul %158, %160, %cst_164 {dimension_numbers = #tpu.dot_dimension_numbers<[1], [0], [0], [1], [0, 0, 1, 1], [], []>} : vector<56x32xbf16>, vector<32x64xbf16>, vector<56x64xf32> -> vector<56x64xf32>
    %162 = arith.addf %156, %161 : vector<56x64xf32>
    %c0_165 = arith.constant 0 : index
    %c153 = arith.constant 153 : index
    %c0_166 = arith.constant 0 : index
    %163 = vector.load %arg1[%c0_165, %c153, %c0_166] : memref<1x288x32xbf16, #tpu.memory_space<vmem>>, vector<1x56x32xbf16>
    %164 = vector.shape_cast %163 : vector<1x56x32xbf16> to vector<56x32xbf16>
    %c8_167 = arith.constant 8 : index
    %c0_168 = arith.constant 0 : index
    %c0_169 = arith.constant 0 : index
    %165 = vector.load %arg2[%c8_167, %c0_168, %c0_169] : memref<9x32x64xbf16, #tpu.memory_space<vmem>>, vector<1x32x64xbf16>
    %166 = vector.shape_cast %165 : vector<1x32x64xbf16> to vector<32x64xbf16>
    %cst_170 = arith.constant dense<0.000000e+00> : vector<56x64xf32>
    %167 = tpu.matmul %164, %166, %cst_170 {dimension_numbers = #tpu.dot_dimension_numbers<[1], [0], [0], [1], [0, 0, 1, 1], [], []>} : vector<56x32xbf16>, vector<32x64xbf16>, vector<56x64xf32> -> vector<56x64xf32>
    %168 = arith.addf %162, %167 : vector<56x64xf32>
    %169 = vector.broadcast %0 : vector<1x64xf32> to vector<56x64xf32>
    %170 = arith.addf %168, %169 : vector<56x64xf32>
    %cst_171 = arith.constant 0.000000e+00 : f32
    %171 = vector.broadcast %cst_171 : f32 to vector<56x64xf32>
    %172 = arith.maximumf %170, %171 : vector<56x64xf32>
    %173 = arith.maximumf %115, %172 : vector<56x64xf32>
    %c0_172 = arith.constant 0 : index
    %c216_173 = arith.constant 216 : index
    %c0_174 = arith.constant 0 : index
    %174 = vector.load %arg1[%c0_172, %c216_173, %c0_174] : memref<1x288x32xbf16, #tpu.memory_space<vmem>>, vector<1x56x32xbf16>
    %175 = vector.shape_cast %174 : vector<1x56x32xbf16> to vector<56x32xbf16>
    %c0_175 = arith.constant 0 : index
    %c0_176 = arith.constant 0 : index
    %c0_177 = arith.constant 0 : index
    %176 = vector.load %arg2[%c0_175, %c0_176, %c0_177] : memref<9x32x64xbf16, #tpu.memory_space<vmem>>, vector<1x32x64xbf16>
    %177 = vector.shape_cast %176 : vector<1x32x64xbf16> to vector<32x64xbf16>
    %cst_178 = arith.constant dense<0.000000e+00> : vector<56x64xf32>
    %178 = tpu.matmul %175, %177, %cst_178 {dimension_numbers = #tpu.dot_dimension_numbers<[1], [0], [0], [1], [0, 0, 1, 1], [], []>} : vector<56x32xbf16>, vector<32x64xbf16>, vector<56x64xf32> -> vector<56x64xf32>
    %c0_179 = arith.constant 0 : index
    %c145_180 = arith.constant 145 : index
    %c0_181 = arith.constant 0 : index
    %179 = vector.load %arg1[%c0_179, %c145_180, %c0_181] : memref<1x288x32xbf16, #tpu.memory_space<vmem>>, vector<1x56x32xbf16>
    %180 = vector.shape_cast %179 : vector<1x56x32xbf16> to vector<56x32xbf16>
    %c1_182 = arith.constant 1 : index
    %c0_183 = arith.constant 0 : index
    %c0_184 = arith.constant 0 : index
    %181 = vector.load %arg2[%c1_182, %c0_183, %c0_184] : memref<9x32x64xbf16, #tpu.memory_space<vmem>>, vector<1x32x64xbf16>
    %182 = vector.shape_cast %181 : vector<1x32x64xbf16> to vector<32x64xbf16>
    %cst_185 = arith.constant dense<0.000000e+00> : vector<56x64xf32>
    %183 = tpu.matmul %180, %182, %cst_185 {dimension_numbers = #tpu.dot_dimension_numbers<[1], [0], [0], [1], [0, 0, 1, 1], [], []>} : vector<56x32xbf16>, vector<32x64xbf16>, vector<56x64xf32> -> vector<56x64xf32>
    %184 = arith.addf %178, %183 : vector<56x64xf32>
    %c0_186 = arith.constant 0 : index
    %c217_187 = arith.constant 217 : index
    %c0_188 = arith.constant 0 : index
    %185 = vector.load %arg1[%c0_186, %c217_187, %c0_188] : memref<1x288x32xbf16, #tpu.memory_space<vmem>>, vector<1x56x32xbf16>
    %186 = vector.shape_cast %185 : vector<1x56x32xbf16> to vector<56x32xbf16>
    %c2_189 = arith.constant 2 : index
    %c0_190 = arith.constant 0 : index
    %c0_191 = arith.constant 0 : index
    %187 = vector.load %arg2[%c2_189, %c0_190, %c0_191] : memref<9x32x64xbf16, #tpu.memory_space<vmem>>, vector<1x32x64xbf16>
    %188 = vector.shape_cast %187 : vector<1x32x64xbf16> to vector<32x64xbf16>
    %cst_192 = arith.constant dense<0.000000e+00> : vector<56x64xf32>
    %189 = tpu.matmul %186, %188, %cst_192 {dimension_numbers = #tpu.dot_dimension_numbers<[1], [0], [0], [1], [0, 0, 1, 1], [], []>} : vector<56x32xbf16>, vector<32x64xbf16>, vector<56x64xf32> -> vector<56x64xf32>
    %190 = arith.addf %184, %189 : vector<56x64xf32>
    %c0_193 = arith.constant 0 : index
    %c80_194 = arith.constant 80 : index
    %c0_195 = arith.constant 0 : index
    %191 = vector.load %arg1[%c0_193, %c80_194, %c0_195] : memref<1x288x32xbf16, #tpu.memory_space<vmem>>, vector<1x56x32xbf16>
    %192 = vector.shape_cast %191 : vector<1x56x32xbf16> to vector<56x32xbf16>
    %c3_196 = arith.constant 3 : index
    %c0_197 = arith.constant 0 : index
    %c0_198 = arith.constant 0 : index
    %193 = vector.load %arg2[%c3_196, %c0_197, %c0_198] : memref<9x32x64xbf16, #tpu.memory_space<vmem>>, vector<1x32x64xbf16>
    %194 = vector.shape_cast %193 : vector<1x32x64xbf16> to vector<32x64xbf16>
    %cst_199 = arith.constant dense<0.000000e+00> : vector<56x64xf32>
    %195 = tpu.matmul %192, %194, %cst_199 {dimension_numbers = #tpu.dot_dimension_numbers<[1], [0], [0], [1], [0, 0, 1, 1], [], []>} : vector<56x32xbf16>, vector<32x64xbf16>, vector<56x64xf32> -> vector<56x64xf32>
    %196 = arith.addf %190, %195 : vector<56x64xf32>
    %c0_200 = arith.constant 0 : index
    %c9_201 = arith.constant 9 : index
    %c0_202 = arith.constant 0 : index
    %197 = vector.load %arg1[%c0_200, %c9_201, %c0_202] : memref<1x288x32xbf16, #tpu.memory_space<vmem>>, vector<1x56x32xbf16>
    %198 = vector.shape_cast %197 : vector<1x56x32xbf16> to vector<56x32xbf16>
    %c4_203 = arith.constant 4 : index
    %c0_204 = arith.constant 0 : index
    %c0_205 = arith.constant 0 : index
    %199 = vector.load %arg2[%c4_203, %c0_204, %c0_205] : memref<9x32x64xbf16, #tpu.memory_space<vmem>>, vector<1x32x64xbf16>
    %200 = vector.shape_cast %199 : vector<1x32x64xbf16> to vector<32x64xbf16>
    %cst_206 = arith.constant dense<0.000000e+00> : vector<56x64xf32>
    %201 = tpu.matmul %198, %200, %cst_206 {dimension_numbers = #tpu.dot_dimension_numbers<[1], [0], [0], [1], [0, 0, 1, 1], [], []>} : vector<56x32xbf16>, vector<32x64xbf16>, vector<56x64xf32> -> vector<56x64xf32>
    %202 = arith.addf %196, %201 : vector<56x64xf32>
    %c0_207 = arith.constant 0 : index
    %c81_208 = arith.constant 81 : index
    %c0_209 = arith.constant 0 : index
    %203 = vector.load %arg1[%c0_207, %c81_208, %c0_209] : memref<1x288x32xbf16, #tpu.memory_space<vmem>>, vector<1x56x32xbf16>
    %204 = vector.shape_cast %203 : vector<1x56x32xbf16> to vector<56x32xbf16>
    %c5_210 = arith.constant 5 : index
    %c0_211 = arith.constant 0 : index
    %c0_212 = arith.constant 0 : index
    %205 = vector.load %arg2[%c5_210, %c0_211, %c0_212] : memref<9x32x64xbf16, #tpu.memory_space<vmem>>, vector<1x32x64xbf16>
    %206 = vector.shape_cast %205 : vector<1x32x64xbf16> to vector<32x64xbf16>
    %cst_213 = arith.constant dense<0.000000e+00> : vector<56x64xf32>
    %207 = tpu.matmul %204, %206, %cst_213 {dimension_numbers = #tpu.dot_dimension_numbers<[1], [0], [0], [1], [0, 0, 1, 1], [], []>} : vector<56x32xbf16>, vector<32x64xbf16>, vector<56x64xf32> -> vector<56x64xf32>
    %208 = arith.addf %202, %207 : vector<56x64xf32>
    %c0_214 = arith.constant 0 : index
    %c224_215 = arith.constant 224 : index
    %c0_216 = arith.constant 0 : index
    %209 = vector.load %arg1[%c0_214, %c224_215, %c0_216] : memref<1x288x32xbf16, #tpu.memory_space<vmem>>, vector<1x56x32xbf16>
    %210 = vector.shape_cast %209 : vector<1x56x32xbf16> to vector<56x32xbf16>
    %c6_217 = arith.constant 6 : index
    %c0_218 = arith.constant 0 : index
    %c0_219 = arith.constant 0 : index
    %211 = vector.load %arg2[%c6_217, %c0_218, %c0_219] : memref<9x32x64xbf16, #tpu.memory_space<vmem>>, vector<1x32x64xbf16>
    %212 = vector.shape_cast %211 : vector<1x32x64xbf16> to vector<32x64xbf16>
    %cst_220 = arith.constant dense<0.000000e+00> : vector<56x64xf32>
    %213 = tpu.matmul %210, %212, %cst_220 {dimension_numbers = #tpu.dot_dimension_numbers<[1], [0], [0], [1], [0, 0, 1, 1], [], []>} : vector<56x32xbf16>, vector<32x64xbf16>, vector<56x64xf32> -> vector<56x64xf32>
    %214 = arith.addf %208, %213 : vector<56x64xf32>
    %c0_221 = arith.constant 0 : index
    %c153_222 = arith.constant 153 : index
    %c0_223 = arith.constant 0 : index
    %215 = vector.load %arg1[%c0_221, %c153_222, %c0_223] : memref<1x288x32xbf16, #tpu.memory_space<vmem>>, vector<1x56x32xbf16>
    %216 = vector.shape_cast %215 : vector<1x56x32xbf16> to vector<56x32xbf16>
    %c7_224 = arith.constant 7 : index
    %c0_225 = arith.constant 0 : index
    %c0_226 = arith.constant 0 : index
    %217 = vector.load %arg2[%c7_224, %c0_225, %c0_226] : memref<9x32x64xbf16, #tpu.memory_space<vmem>>, vector<1x32x64xbf16>
    %218 = vector.shape_cast %217 : vector<1x32x64xbf16> to vector<32x64xbf16>
    %cst_227 = arith.constant dense<0.000000e+00> : vector<56x64xf32>
    %219 = tpu.matmul %216, %218, %cst_227 {dimension_numbers = #tpu.dot_dimension_numbers<[1], [0], [0], [1], [0, 0, 1, 1], [], []>} : vector<56x32xbf16>, vector<32x64xbf16>, vector<56x64xf32> -> vector<56x64xf32>
    %220 = arith.addf %214, %219 : vector<56x64xf32>
    %c0_228 = arith.constant 0 : index
    %c225 = arith.constant 225 : index
    %c0_229 = arith.constant 0 : index
    %221 = vector.load %arg1[%c0_228, %c225, %c0_229] : memref<1x288x32xbf16, #tpu.memory_space<vmem>>, vector<1x56x32xbf16>
    %222 = vector.shape_cast %221 : vector<1x56x32xbf16> to vector<56x32xbf16>
    %c8_230 = arith.constant 8 : index
    %c0_231 = arith.constant 0 : index
    %c0_232 = arith.constant 0 : index
    %223 = vector.load %arg2[%c8_230, %c0_231, %c0_232] : memref<9x32x64xbf16, #tpu.memory_space<vmem>>, vector<1x32x64xbf16>
    %224 = vector.shape_cast %223 : vector<1x32x64xbf16> to vector<32x64xbf16>
    %cst_233 = arith.constant dense<0.000000e+00> : vector<56x64xf32>
    %225 = tpu.matmul %222, %224, %cst_233 {dimension_numbers = #tpu.dot_dimension_numbers<[1], [0], [0], [1], [0, 0, 1, 1], [], []>} : vector<56x32xbf16>, vector<32x64xbf16>, vector<56x64xf32> -> vector<56x64xf32>
    %226 = arith.addf %220, %225 : vector<56x64xf32>
    %227 = vector.broadcast %0 : vector<1x64xf32> to vector<56x64xf32>
    %228 = arith.addf %226, %227 : vector<56x64xf32>
    %cst_234 = arith.constant 0.000000e+00 : f32
    %229 = vector.broadcast %cst_234 : f32 to vector<56x64xf32>
    %230 = arith.maximumf %228, %229 : vector<56x64xf32>
    %231 = arith.maximumf %173, %230 : vector<56x64xf32>
    %c0_235 = arith.constant 0 : index
    %c0_236 = arith.constant 0 : index
    %c0_237 = arith.constant 0 : index
    %232 = vector.load %arg4[%c0_235, %c0_236, %c0_237] : memref<1x56x64xf32, #tpu.memory_space<vmem>>, vector<1x56x64xf32>
    %233 = vector.shape_cast %232 : vector<1x56x64xf32> to vector<56x64xf32>
    %234 = vector.shape_cast %231 : vector<56x64xf32> to vector<1x56x64xf32>
    tpu.vector_store %arg4[%c0_235, %c0_236, %c0_237], %234 {strides = array<i32>} : memref<1x56x64xf32, #tpu.memory_space<vmem>>, vector<1x56x64xf32>,
    return
  }
  func.func @transform_0(%arg0: i32) -> (i32, i32, i32) {
    %c0_i32 = arith.constant 0 : i32
    %c0_i32_0 = arith.constant 0 : i32
    %c0_i32_1 = arith.constant 0 : i32
    return %arg0, %c0_i32, %c0_i32_0 : i32, i32, i32
  }
  func.func @transform_1(%arg0: i32) -> (i32, i32, i32) {
    %c0_i32 = arith.constant 0 : i32
    %c0_i32_0 = arith.constant 0 : i32
    %c0_i32_1 = arith.constant 0 : i32
    %c0_i32_2 = arith.constant 0 : i32
    return %c0_i32, %c0_i32_0, %c0_i32_1 : i32, i32, i32
  }
  func.func @transform_2(%arg0: i32) -> (i32, i32) {
    %c0_i32 = arith.constant 0 : i32
    %c0_i32_0 = arith.constant 0 : i32
    %c0_i32_1 = arith.constant 0 : i32
    return %c0_i32, %c0_i32_0 : i32, i32
  }
  func.func @transform_3(%arg0: i32) -> (i32, i32, i32) {
    %c0_i32 = arith.constant 0 : i32
    %c0_i32_0 = arith.constant 0 : i32
    %c0_i32_1 = arith.constant 0 : i32
    return %arg0, %c0_i32, %c0_i32_0 : i32, i32, i32
  }
}

module attributes {stable_mosaic.version = 11 : i64} {
  func.func @_matmul_bias_kernel(%arg0: i32, %arg1: memref<2x3136xbf16, #tpu.memory_space<vmem>>, %arg2: memref<3136x128xbf16, #tpu.memory_space<vmem>>, %arg3: memref<1x128xf32, #tpu.memory_space<vmem>>, %arg4: memref<2x128xf32, #tpu.memory_space<vmem>>) attributes {dimension_semantics = [#tpu.dimension_semantics<parallel>], iteration_bounds = array<i64: 1>, scalar_prefetch = 0 : i64, scratch_operands = 0 : i64, tpu.core_type = #tpu.core_type<tc>, window_params = [{transform_indices = @transform_0, window_bounds = array<i64: 2, 3136>}, {pipeline_mode = #tpu.pipeline_mode<synchronous>, transform_indices = @transform_1, window_bounds = array<i64: 3136, 128>}, {pipeline_mode = #tpu.pipeline_mode<synchronous>, transform_indices = @transform_2, window_bounds = array<i64: 1, 128>}, {transform_indices = @transform_3, window_bounds = array<i64: 2, 128>}]} {
    %c0 = arith.constant 0 : index
    %c0_0 = arith.constant 0 : index
    %0 = vector.load %arg1[%c0, %c0_0] : memref<2x3136xbf16, #tpu.memory_space<vmem>>, vector<2x3136xbf16>
    %c0_1 = arith.constant 0 : index
    %c0_2 = arith.constant 0 : index
    %1 = vector.load %arg2[%c0_1, %c0_2] : memref<3136x128xbf16, #tpu.memory_space<vmem>>, vector<3136x128xbf16>
    %cst = arith.constant dense<0.000000e+00> : vector<2x128xf32>
    %2 = tpu.matmul %0, %1, %cst {dimension_numbers = #tpu.dot_dimension_numbers<[1], [0], [0], [1], [0, 0, 1, 1], [], []>} : vector<2x3136xbf16>, vector<3136x128xbf16>, vector<2x128xf32> -> vector<2x128xf32>
    %c0_3 = arith.constant 0 : index
    %c0_4 = arith.constant 0 : index
    %3 = vector.load %arg3[%c0_3, %c0_4] : memref<1x128xf32, #tpu.memory_space<vmem>>, vector<1x128xf32>
    %4 = vector.broadcast %3 : vector<1x128xf32> to vector<2x128xf32>
    %5 = arith.addf %2, %4 : vector<2x128xf32>
    %cst_5 = arith.constant 0.000000e+00 : f32
    %6 = vector.broadcast %cst_5 : f32 to vector<2x128xf32>
    %7 = arith.maximumf %5, %6 : vector<2x128xf32>
    %c0_6 = arith.constant 0 : index
    %c0_7 = arith.constant 0 : index
    %8 = vector.load %arg4[%c0_6, %c0_7] : memref<2x128xf32, #tpu.memory_space<vmem>>, vector<2x128xf32>
    tpu.vector_store %arg4[%c0_6, %c0_7], %7 {strides = array<i32>} : memref<2x128xf32, #tpu.memory_space<vmem>>, vector<2x128xf32>,
    return
  }
  func.func @transform_0(%arg0: i32) -> (i32, i32) {
    %c0_i32 = arith.constant 0 : i32
    %c0_i32_0 = arith.constant 0 : i32
    return %arg0, %c0_i32 : i32, i32
  }
  func.func @transform_1(%arg0: i32) -> (i32, i32) {
    %c0_i32 = arith.constant 0 : i32
    %c0_i32_0 = arith.constant 0 : i32
    %c0_i32_1 = arith.constant 0 : i32
    return %c0_i32, %c0_i32_0 : i32, i32
  }
  func.func @transform_2(%arg0: i32) -> (i32, i32) {
    %c0_i32 = arith.constant 0 : i32
    %c0_i32_0 = arith.constant 0 : i32
    %c0_i32_1 = arith.constant 0 : i32
    return %c0_i32, %c0_i32_0 : i32, i32
  }
  func.func @transform_3(%arg0: i32) -> (i32, i32) {
    %c0_i32 = arith.constant 0 : i32
    %c0_i32_0 = arith.constant 0 : i32
    return %arg0, %c0_i32 : i32, i32
  }
}

module attributes {stable_mosaic.version = 11 : i64} {
  func.func @_matmul_bias_kernel(%arg0: i32, %arg1: memref<2x128xbf16, #tpu.memory_space<vmem>>, %arg2: memref<128x128xbf16, #tpu.memory_space<vmem>>, %arg3: memref<1x128xf32, #tpu.memory_space<vmem>>, %arg4: memref<2x128xf32, #tpu.memory_space<vmem>>) attributes {dimension_semantics = [#tpu.dimension_semantics<parallel>], iteration_bounds = array<i64: 1>, scalar_prefetch = 0 : i64, scratch_operands = 0 : i64, tpu.core_type = #tpu.core_type<tc>, window_params = [{transform_indices = @transform_0, window_bounds = array<i64: 2, 128>}, {pipeline_mode = #tpu.pipeline_mode<synchronous>, transform_indices = @transform_1, window_bounds = array<i64: 128, 128>}, {pipeline_mode = #tpu.pipeline_mode<synchronous>, transform_indices = @transform_2, window_bounds = array<i64: 1, 128>}, {transform_indices = @transform_3, window_bounds = array<i64: 2, 128>}]} {
    %c0 = arith.constant 0 : index
    %c0_0 = arith.constant 0 : index
    %0 = vector.load %arg1[%c0, %c0_0] : memref<2x128xbf16, #tpu.memory_space<vmem>>, vector<2x128xbf16>
    %c0_1 = arith.constant 0 : index
    %c0_2 = arith.constant 0 : index
    %1 = vector.load %arg2[%c0_1, %c0_2] : memref<128x128xbf16, #tpu.memory_space<vmem>>, vector<128x128xbf16>
    %cst = arith.constant dense<0.000000e+00> : vector<2x128xf32>
    %2 = tpu.matmul %0, %1, %cst {dimension_numbers = #tpu.dot_dimension_numbers<[1], [0], [0], [1], [0, 0, 1, 1], [], []>} : vector<2x128xbf16>, vector<128x128xbf16>, vector<2x128xf32> -> vector<2x128xf32>
    %c0_3 = arith.constant 0 : index
    %c0_4 = arith.constant 0 : index
    %3 = vector.load %arg3[%c0_3, %c0_4] : memref<1x128xf32, #tpu.memory_space<vmem>>, vector<1x128xf32>
    %4 = vector.broadcast %3 : vector<1x128xf32> to vector<2x128xf32>
    %5 = arith.addf %2, %4 : vector<2x128xf32>
    %c0_5 = arith.constant 0 : index
    %c0_6 = arith.constant 0 : index
    %6 = vector.load %arg4[%c0_5, %c0_6] : memref<2x128xf32, #tpu.memory_space<vmem>>, vector<2x128xf32>
    tpu.vector_store %arg4[%c0_5, %c0_6], %5 {strides = array<i32>} : memref<2x128xf32, #tpu.memory_space<vmem>>, vector<2x128xf32>,
    return
  }
  func.func @transform_0(%arg0: i32) -> (i32, i32) {
    %c0_i32 = arith.constant 0 : i32
    %c0_i32_0 = arith.constant 0 : i32
    return %arg0, %c0_i32 : i32, i32
  }
  func.func @transform_1(%arg0: i32) -> (i32, i32) {
    %c0_i32 = arith.constant 0 : i32
    %c0_i32_0 = arith.constant 0 : i32
    %c0_i32_1 = arith.constant 0 : i32
    return %c0_i32, %c0_i32_0 : i32, i32
  }
  func.func @transform_2(%arg0: i32) -> (i32, i32) {
    %c0_i32 = arith.constant 0 : i32
    %c0_i32_0 = arith.constant 0 : i32
    %c0_i32_1 = arith.constant 0 : i32
    return %c0_i32, %c0_i32_0 : i32, i32
  }
  func.func @transform_3(%arg0: i32) -> (i32, i32) {
    %c0_i32 = arith.constant 0 : i32
    %c0_i32_0 = arith.constant 0 : i32
    return %arg0, %c0_i32 : i32, i32
  }
}

</mosaic_0001>

<llo_original>
// kernel: simple_model_forward.7
$region0: #{simple_model_forward.7}
  #allocation0 [shape = 'u32[]', space=smem, size = 0x4, offset = 0x4, fixed_abs, tag = 'smem constant byte address 0x4 - core index']
  #allocation1 [shape = 'u32[144,128]{1,0:T(1,128)}', space=vmem, size = 0x12000, scoped, tag = 'internal scratch']
  %s0 = inlined_call_operand.vmem [shape: bf16[2,128], index: 0, kind: input, shape index: {}]
  %s1 = inlined_call_operand.vmem [shape: bf16[128,128], index: 1, kind: input, shape index: {}]
  %s2 = inlined_call_operand.vmem [shape: f32[1,128], index: 2, kind: input, shape index: {}]
  %s3 = inlined_call_operand.hbm [shape: f32[2,128], index: 3, kind: output, shape index: {}]
  %s4 = sld [smem:[#allocation0]]
  $region22: #{simple_model_forward.7} parent=0
    _
  %s6 = ssub.s32 1, %s4
  %s7 = scalar_select 0, %s6, %s4
  $region1: #{simple_model_forward.7} parent=0
    #allocation2 [shape = 'u8[1024]{0}', space=vmem, size = 0x400, scoped, tag = 'output window, operand 0, single buffered']
    #allocation3 [shape = 's32[1]{0}', space=sflag, size = 0x4, scoped, tag = 'scoped memory for simple_model_forward.7']
    %8 = vsyncpa [#allocation3], 0
    // Predicated region
    $region2: #{simple_model_forward.7} parent=1 // pred_check
      _
    $region3: #{simple_model_forward.7} parent=1 // pred_check_branch
      %10 = sbr.rel (0) target = $region5
    $region4: #{simple_model_forward.7} parent=1 // pred_region
      _
    $region5: #{simple_model_forward.7} parent=1 // pred_fallthru
      _
    // Predicated region
    $region6: #{simple_model_forward.7} parent=1 // pred_check
      _
    $region7: #{simple_model_forward.7} parent=1 // pred_check_branch
      %12 = sbr.rel (0) target = $region9
    $region8: #{simple_model_forward.7} parent=1 // pred_region
      _
    $region9: #{simple_model_forward.7} parent=1 // pred_fallthru
      _
    // Predicated region
    $region10: #{simple_model_forward.7} parent=1 // pred_check
      _
    $region11: #{simple_model_forward.7} parent=1 // pred_check_branch
      %14 = sbr.rel (0) target = $region13
    $region12: #{simple_model_forward.7} parent=1 // pred_region
      _
    $region13: #{simple_model_forward.7} parent=1 // pred_fallthru
      _
    %v16 = vld [vmem:[%s0] sm:$0x1]
    %v17 = vld [vmem:[%s1] sm:$0xf]
    %v18 = vld [vmem:[%s1 + $0x4] sm:$0xf]
    %v19 = vld [vmem:[%s1 + $0x8] sm:$0xf]
    %v20 = vld [vmem:[%s1 + $0xc] sm:$0xf]
    %v21 = vld [vmem:[%s1 + $0x10] sm:$0xf]
    %v22 = vld [vmem:[%s1 + $0x14] sm:$0xf]
    %v23 = vld [vmem:[%s1 + $0x18] sm:$0xf]
    %v24 = vld [vmem:[%s1 + $0x1c] sm:$0xf]
    %v25 = vld [vmem:[%s1 + $0x20] sm:$0xf]
    %v26 = vld [vmem:[%s1 + $0x24] sm:$0xf]
    %v27 = vld [vmem:[%s1 + $0x28] sm:$0xf]
    %v28 = vld [vmem:[%s1 + $0x2c] sm:$0xf]
    %v29 = vld [vmem:[%s1 + $0x30] sm:$0xf]
    %v30 = vld [vmem:[%s1 + $0x34] sm:$0xf]
    %v31 = vld [vmem:[%s1 + $0x38] sm:$0xf]
    %v32 = vld [vmem:[%s1 + $0x3c] sm:$0xf]
    %v33 = vld [vmem:[%s2] sm:$0x1]
    %v35 = vlaneseq
    %v36 = vshrl.u32 %v35, 7
    %v37 = vsub.s32 0, %v36
    %v38 = vrot.slane %v33, %v37
    %v56 = vunpack.c.l.b16 %v17
    %v57 = vunpack.c.l.b16 %v18
    %v58 = vunpack.c.l.b16 %v19
    %v59 = vunpack.c.l.b16 %v20
    %v60 = vunpack.c.l.b16 %v21
    %v61 = vunpack.c.l.b16 %v22
    %v62 = vunpack.c.l.b16 %v23
    %v63 = vunpack.c.l.b16 %v24
    %v64 = vunpack.c.l.b16 %v25
    %v65 = vunpack.c.l.b16 %v26
    %v66 = vunpack.c.l.b16 %v27
    %v67 = vunpack.c.l.b16 %v28
    %v68 = vunpack.c.l.b16 %v29
    %v69 = vunpack.c.l.b16 %v30
    %v70 = vunpack.c.l.b16 %v31
    %v71 = vunpack.c.l.b16 %v32
    %v72 = vpack.c.b16 %v57, %v56
    %v73 = vpack.c.b16 %v59, %v58
    %v74 = vpack.c.b16 %v61, %v60
    %v75 = vpack.c.b16 %v63, %v62
    %v76 = vpack.c.b16 %v65, %v64
    %v77 = vpack.c.b16 %v67, %v66
    %v78 = vpack.c.b16 %v69, %v68
    %v79 = vpack.c.b16 %v71, %v70
    %88 = vmatprep.subr.bf16.mxu0 0
    %89 = vmatpush1.bf16.msra.mxu0 %v79
    %90 = vmatprep.subr.bf16.mxu0 0
    %91 = vmatpush1.bf16.msra.mxu0 %v78
    %92 = vmatprep.subr.bf16.mxu0 0
    %93 = vmatpush1.bf16.msra.mxu0 %v77
    %94 = vmatprep.subr.bf16.mxu0 0
    %95 = vmatpush1.bf16.msra.mxu0 %v76
    %96 = vmatprep.subr.bf16.mxu0 0
    %97 = vmatpush1.bf16.msra.mxu0 %v75
    %98 = vmatprep.subr.bf16.mxu0 0
    %99 = vmatpush1.bf16.msra.mxu0 %v74
    %100 = vmatprep.subr.bf16.mxu0 0
    %101 = vmatpush1.bf16.msra.mxu0 %v73
    %102 = vmatprep.subr.bf16.mxu0 0
    %103 = vmatpush1.bf16.msra.mxu0 %v72
    %104 = vmatprep.subr.bf16.mxu0 0
    %105 = vmatpush2.bf16.msra.mxu0 0
    %106 = vmatprep.subr.bf16.mxu0 0
    %107 = vmatpush2.bf16.msra.mxu0 0
    %108 = vmatprep.subr.bf16.mxu0 0
    %109 = vmatpush2.bf16.msra.mxu0 0
    %110 = vmatprep.subr.bf16.mxu0 0
    %111 = vmatpush2.bf16.msra.mxu0 0
    %112 = vmatprep.subr.bf16.mxu0 0
    %113 = vmatpush2.bf16.msra.mxu0 0
    %114 = vmatprep.subr.bf16.mxu0 0
    %115 = vmatpush2.bf16.msra.mxu0 0
    %116 = vmatprep.subr.bf16.mxu0 0
    %117 = vmatpush2.bf16.msra.mxu0 0
    %118 = vmatprep.subr.bf16.mxu0 0
    %119 = vmatpush2.bf16.msra.mxu0 0
    %120 = vmatprep.mubr.bf16.mxu0 0
    %121 = vmatmul.mubr.bf16.gmra.mxu0 %v16
    %v122 = vpop.f32.mrf.mxu0
    %v123 = vadd.f32 %v38, %v122
    %v124 = vpop.f32.mrf.mxu0
    %v125 = vpop.f32.mrf.mxu0
    %v126 = vpop.f32.mrf.mxu0
    %127 = vdwg.mxu0
    %128 = vst [vmem:[#allocation2] sm:$0x3] %v123
    // Predicated region
    $region14: #{simple_model_forward.7} parent=1 // pred_check
      _
    $region15: #{simple_model_forward.7} parent=1 // pred_check_branch
      %130 = sbr.rel (0) target = $region17
    $region16: #{simple_model_forward.7} parent=1 // pred_region
      %s132 = ssub.s32 32, 32
      %133 = vsyncadd [#allocation3], %s132
      %s135 = sshll.u32 [#allocation2], 4
      %s136 = int_to_ptr.vmem [resolvable:$true] %s135
      %138 = dma.vmem_to_hbm [thread:$0]  %s136, 32, %s3, [#allocation3]
    $region17: #{simple_model_forward.7} parent=1 // pred_fallthru
      _
    // Predicated region
    $region18: #{simple_model_forward.7} parent=1 // pred_check
      _
    $region19: #{simple_model_forward.7} parent=1 // pred_check_branch
      %140 = sbr.rel (0) target = $region21
    $region20: #{simple_model_forward.7} parent=1 // pred_region
      %141 = dma.done [#allocation3], 32
    $region21: #{simple_model_forward.7} parent=1 // pred_fallthru
      _
    %142 = vsyncpa [#allocation3], 1

// kernel: simple_model_forward.6
$region0: #{simple_model_forward.6}
  #allocation0 [shape = 'u32[]', space=smem, size = 0x4, offset = 0x4, fixed_abs, tag = 'smem constant byte address 0x4 - core index']
  #allocation1 [shape = 'u32[144,128]{1,0:T(1,128)}', space=vmem, size = 0x12000, scoped, tag = 'internal scratch']
  %s0 = inlined_call_operand.vmem [shape: bf16[2,3136], index: 0, kind: input, shape index: {}]
  %s1 = inlined_call_operand.vmem [shape: bf16[3136,128], index: 1, kind: input, shape index: {}]
  %s2 = inlined_call_operand.vmem [shape: f32[1,128], index: 2, kind: input, shape index: {}]
  %s3 = inlined_call_operand.vmem [shape: f32[2,128], index: 3, kind: output, shape index: {}]
  %s4 = sld [smem:[#allocation0]]
  $region22: #{simple_model_forward.6} parent=0
    _
  %s6 = ssub.s32 1, %s4
  %s7 = scalar_select 0, %s6, %s4
  // Predicated region
  $region2: #{simple_model_forward.6} parent=0 // pred_check
    _
  $region3: #{simple_model_forward.6} parent=0 // pred_check_branch
    %9 = sbr.rel (0) target = $region5
  $region4: #{simple_model_forward.6} parent=0 // pred_region
    _
  $region5: #{simple_model_forward.6} parent=0 // pred_fallthru
    _
  // Predicated region
  $region6: #{simple_model_forward.6} parent=0 // pred_check
    _
  $region7: #{simple_model_forward.6} parent=0 // pred_check_branch
    %11 = sbr.rel (0) target = $region9
  $region8: #{simple_model_forward.6} parent=0 // pred_region
    _
  $region9: #{simple_model_forward.6} parent=0 // pred_fallthru
    _
  // Predicated region
  $region10: #{simple_model_forward.6} parent=0 // pred_check
    _
  $region11: #{simple_model_forward.6} parent=0 // pred_check_branch
    %13 = sbr.rel (0) target = $region13
  $region12: #{simple_model_forward.6} parent=0 // pred_region
    _
  $region13: #{simple_model_forward.6} parent=0 // pred_fallthru
    _
  %v15 = vld [vmem:[%s0] sm:$0xff]
  %v16 = vld [vmem:[%s0 + $0x8] sm:$0xff]
  %v17 = vld [vmem:[%s0 + $0x10] sm:$0xff]
  %v18 = vld [vmem:[%s0 + $0x18] sm:$0x1]
  %v19 = vld [vmem:[%s1] sm:$0xf]
  %v20 = vld [vmem:[%s1 + $0x4] sm:$0xf]
  %v21 = vld [vmem:[%s1 + $0x8] sm:$0xf]
  %v22 = vld [vmem:[%s1 + $0xc] sm:$0xf]
  %v23 = vld [vmem:[%s1 + $0x10] sm:$0xf]
  %v24 = vld [vmem:[%s1 + $0x14] sm:$0xf]
  %v25 = vld [vmem:[%s1 + $0x18] sm:$0xf]
  %v26 = vld [vmem:[%s1 + $0x1c] sm:$0xf]
  %v27 = vld [vmem:[%s1 + $0x20] sm:$0xf]
  %v28 = vld [vmem:[%s1 + $0x24] sm:$0xf]
  %v29 = vld [vmem:[%s1 + $0x28] sm:$0xf]
  %v30 = vld [vmem:[%s1 + $0x2c] sm:$0xf]
  %v31 = vld [vmem:[%s1 + $0x30] sm:$0xf]
  %v32 = vld [vmem:[%s1 + $0x34] sm:$0xf]
  %v33 = vld [vmem:[%s1 + $0x38] sm:$0xf]
  %v34 = vld [vmem:[%s1 + $0x3c] sm:$0xf]
  %v35 = vld [vmem:[%s1 + $0x40] sm:$0xf]
  %v36 = vld [vmem:[%s1 + $0x44] sm:$0xf]
  %v37 = vld [vmem:[%s1 + $0x48] sm:$0xf]
  %v38 = vld [vmem:[%s1 + $0x4c] sm:$0xf]
  %v39 = vld [vmem:[%s1 + $0x50] sm:$0xf]
  %v40 = vld [vmem:[%s1 + $0x54] sm:$0xf]
  %v41 = vld [vmem:[%s1 + $0x58] sm:$0xf]
  %v42 = vld [vmem:[%s1 + $0x5c] sm:$0xf]
  %v43 = vld [vmem:[%s1 + $0x60] sm:$0xf]
  %v44 = vld [vmem:[%s1 + $0x64] sm:$0xf]
  %v45 = vld [vmem:[%s1 + $0x68] sm:$0xf]
  %v46 = vld [vmem:[%s1 + $0x6c] sm:$0xf]
  %v47 = vld [vmem:[%s1 + $0x70] sm:$0xf]
  %v48 = vld [vmem:[%s1 + $0x74] sm:$0xf]
  %v49 = vld [vmem:[%s1 + $0x78] sm:$0xf]
  %v50 = vld [vmem:[%s1 + $0x7c] sm:$0xf]
  %v51 = vld [vmem:[%s1 + $0x80] sm:$0xf]
  %v52 = vld [vmem:[%s1 + $0x84] sm:$0xf]
  %v53 = vld [vmem:[%s1 + $0x88] sm:$0xf]
  %v54 = vld [vmem:[%s1 + $0x8c] sm:$0xf]
  %v55 = vld [vmem:[%s1 + $0x90] sm:$0xf]
  %v56 = vld [vmem:[%s1 + $0x94] sm:$0xf]
  %v57 = vld [vmem:[%s1 + $0x98] sm:$0xf]
  %v58 = vld [vmem:[%s1 + $0x9c] sm:$0xf]
  %v59 = vld [vmem:[%s1 + $0xa0] sm:$0xf]
  %v60 = vld [vmem:[%s1 + $0xa4] sm:$0xf]
  %v61 = vld [vmem:[%s1 + $0xa8] sm:$0xf]
  %v62 = vld [vmem:[%s1 + $0xac] sm:$0xf]
  %v63 = vld [vmem:[%s1 + $0xb0] sm:$0xf]
  %v64 = vld [vmem:[%s1 + $0xb4] sm:$0xf]
  %v65 = vld [vmem:[%s1 + $0xb8] sm:$0xf]
  %v66 = vld [vmem:[%s1 + $0xbc] sm:$0xf]
  %v67 = vld [vmem:[%s1 + $0xc0] sm:$0xf]
  %v68 = vld [vmem:[%s1 + $0xc4] sm:$0xf]
  %v69 = vld [vmem:[%s1 + $0xc8] sm:$0xf]
  %v70 = vld [vmem:[%s1 + $0xcc] sm:$0xf]
  %v71 = vld [vmem:[%s1 + $0xd0] sm:$0xf]
  %v72 = vld [vmem:[%s1 + $0xd4] sm:$0xf]
  %v73 = vld [vmem:[%s1 + $0xd8] sm:$0xf]
  %v74 = vld [vmem:[%s1 + $0xdc] sm:$0xf]
  %v75 = vld [vmem:[%s1 + $0xe0] sm:$0xf]
  %v76 = vld [vmem:[%s1 + $0xe4] sm:$0xf]
  %v77 = vld [vmem:[%s1 + $0xe8] sm:$0xf]
  %v78 = vld [vmem:[%s1 + $0xec] sm:$0xf]
  %v79 = vld [vmem:[%s1 + $0xf0] sm:$0xf]
  %v80 = vld [vmem:[%s1 + $0xf4] sm:$0xf]
  %v81 = vld [vmem:[%s1 + $0xf8] sm:$0xf]
  %v82 = vld [vmem:[%s1 + $0xfc] sm:$0xf]
  %v83 = vld [vmem:[%s1 + $0x100] sm:$0xf]
  %v84 = vld [vmem:[%s1 + $0x104] sm:$0xf]
  %v85 = vld [vmem:[%s1 + $0x108] sm:$0xf]
  %v86 = vld [vmem:[%s1 + $0x10c] sm:$0xf]
  %v87 = vld [vmem:[%s1 + $0x110] sm:$0xf]
  %v88 = vld [vmem:[%s1 + $0x114] sm:$0xf]
  %v89 = vld [vmem:[%s1 + $0x118] sm:$0xf]
  %v90 = vld [vmem:[%s1 + $0x11c] sm:$0xf]
  %v91 = vld [vmem:[%s1 + $0x120] sm:$0xf]
  %v92 = vld [vmem:[%s1 + $0x124] sm:$0xf]
  %v93 = vld [vmem:[%s1 + $0x128] sm:$0xf]
  %v94 = vld [vmem:[%s1 + $0x12c] sm:$0xf]
  %v95 = vld [vmem:[%s1 + $0x130] sm:$0xf]
  %v96 = vld [vmem:[%s1 + $0x134] sm:$0xf]
  %v97 = vld [vmem:[%s1 + $0x138] sm:$0xf]
  %v98 = vld [vmem:[%s1 + $0x13c] sm:$0xf]
  %v99 = vld [vmem:[%s1 + $0x140] sm:$0xf]
  %v100 = vld [vmem:[%s1 + $0x144] sm:$0xf]
  %v101 = vld [vmem:[%s1 + $0x148] sm:$0xf]
  %v102 = vld [vmem:[%s1 + $0x14c] sm:$0xf]
  %v103 = vld [vmem:[%s1 + $0x150] sm:$0xf]
  %v104 = vld [vmem:[%s1 + $0x154] sm:$0xf]
  %v105 = vld [vmem:[%s1 + $0x158] sm:$0xf]
  %v106 = vld [vmem:[%s1 + $0x15c] sm:$0xf]
  %v107 = vld [vmem:[%s1 + $0x160] sm:$0xf]
  %v108 = vld [vmem:[%s1 + $0x164] sm:$0xf]
  %v109 = vld [vmem:[%s1 + $0x168] sm:$0xf]
  %v110 = vld [vmem:[%s1 + $0x16c] sm:$0xf]
  %v111 = vld [vmem:[%s1 + $0x170] sm:$0xf]
  %v112 = vld [vmem:[%s1 + $0x174] sm:$0xf]
  %v113 = vld [vmem:[%s1 + $0x178] sm:$0xf]
  %v114 = vld [vmem:[%s1 + $0x17c] sm:$0xf]
  %v115 = vld [vmem:[%s1 + $0x180] sm:$0xf]
  %v116 = vld [vmem:[%s1 + $0x184] sm:$0xf]
  %v117 = vld [vmem:[%s1 + $0x188] sm:$0xf]
  %v118 = vld [vmem:[%s1 + $0x18c] sm:$0xf]
  %v119 = vld [vmem:[%s1 + $0x190] sm:$0xf]
  %v120 = vld [vmem:[%s1 + $0x194] sm:$0xf]
  %v121 = vld [vmem:[%s1 + $0x198] sm:$0xf]
  %v122 = vld [vmem:[%s1 + $0x19c] sm:$0xf]
  %v123 = vld [vmem:[%s1 + $0x1a0] sm:$0xf]
  %v124 = vld [vmem:[%s1 + $0x1a4] sm:$0xf]
  %v125 = vld [vmem:[%s1 + $0x1a8] sm:$0xf]
  %v126 = vld [vmem:[%s1 + $0x1ac] sm:$0xf]
  %v127 = vld [vmem:[%s1 + $0x1b0] sm:$0xf]
  %v128 = vld [vmem:[%s1 + $0x1b4] sm:$0xf]
  %v129 = vld [vmem:[%s1 + $0x1b8] sm:$0xf]
  %v130 = vld [vmem:[%s1 + $0x1bc] sm:$0xf]
  %v131 = vld [vmem:[%s1 + $0x1c0] sm:$0xf]
  %v132 = vld [vmem:[%s1 + $0x1c4] sm:$0xf]
  %v133 = vld [vmem:[%s1 + $0x1c8] sm:$0xf]
  %v134 = vld [vmem:[%s1 + $0x1cc] sm:$0xf]
  %v135 = vld [vmem:[%s1 + $0x1d0] sm:$0xf]
  %v136 = vld [vmem:[%s1 + $0x1d4] sm:$0xf]
  %v137 = vld [vmem:[%s1 + $0x1d8] sm:$0xf]
  %v138 = vld [vmem:[%s1 + $0x1dc] sm:$0xf]
  %v139 = vld [vmem:[%s1 + $0x1e0] sm:$0xf]
  %v140 = vld [vmem:[%s1 + $0x1e4] sm:$0xf]
  %v141 = vld [vmem:[%s1 + $0x1e8] sm:$0xf]
  %v142 = vld [vmem:[%s1 + $0x1ec] sm:$0xf]
  %v143 = vld [vmem:[%s1 + $0x1f0] sm:$0xf]
  %v144 = vld [vmem:[%s1 + $0x1f4] sm:$0xf]
  %v145 = vld [vmem:[%s1 + $0x1f8] sm:$0xf]
  %v146 = vld [vmem:[%s1 + $0x1fc] sm:$0xf]
  %v147 = vld [vmem:[%s1 + $0x200] sm:$0xf]
  %v148 = vld [vmem:[%s1 + $0x204] sm:$0xf]
  %v149 = vld [vmem:[%s1 + $0x208] sm:$0xf]
  %v150 = vld [vmem:[%s1 + $0x20c] sm:$0xf]
  %v151 = vld [vmem:[%s1 + $0x210] sm:$0xf]
  %v152 = vld [vmem:[%s1 + $0x214] sm:$0xf]
  %v153 = vld [vmem:[%s1 + $0x218] sm:$0xf]
  %v154 = vld [vmem:[%s1 + $0x21c] sm:$0xf]
  %v155 = vld [vmem:[%s1 + $0x220] sm:$0xf]
  %v156 = vld [vmem:[%s1 + $0x224] sm:$0xf]
  %v157 = vld [vmem:[%s1 + $0x228] sm:$0xf]
  %v158 = vld [vmem:[%s1 + $0x22c] sm:$0xf]
  %v159 = vld [vmem:[%s1 + $0x230] sm:$0xf]
  %v160 = vld [vmem:[%s1 + $0x234] sm:$0xf]
  %v161 = vld [vmem:[%s1 + $0x238] sm:$0xf]
  %v162 = vld [vmem:[%s1 + $0x23c] sm:$0xf]
  %v163 = vld [vmem:[%s1 + $0x240] sm:$0xf]
  %v164 = vld [vmem:[%s1 + $0x244] sm:$0xf]
  %v165 = vld [vmem:[%s1 + $0x248] sm:$0xf]
  %v166 = vld [vmem:[%s1 + $0x24c] sm:$0xf]
  %v167 = vld [vmem:[%s1 + $0x250] sm:$0xf]
  %v168 = vld [vmem:[%s1 + $0x254] sm:$0xf]
  %v169 = vld [vmem:[%s1 + $0x258] sm:$0xf]
  %v170 = vld [vmem:[%s1 + $0x25c] sm:$0xf]
  %v171 = vld [vmem:[%s1 + $0x260] sm:$0xf]
  %v172 = vld [vmem:[%s1 + $0x264] sm:$0xf]
  %v173 = vld [vmem:[%s1 + $0x268] sm:$0xf]
  %v174 = vld [vmem:[%s1 + $0x26c] sm:$0xf]
  %v175 = vld [vmem:[%s1 + $0x270] sm:$0xf]
  %v176 = vld [vmem:[%s1 + $0x274] sm:$0xf]
  %v177 = vld [vmem:[%s1 + $0x278] sm:$0xf]
  %v178 = vld [vmem:[%s1 + $0x27c] sm:$0xf]
  %v179 = vld [vmem:[%s1 + $0x280] sm:$0xf]
  %v180 = vld [vmem:[%s1 + $0x284] sm:$0xf]
  %v181 = vld [vmem:[%s1 + $0x288] sm:$0xf]
  %v182 = vld [vmem:[%s1 + $0x28c] sm:$0xf]
  %v183 = vld [vmem:[%s1 + $0x290] sm:$0xf]
  %v184 = vld [vmem:[%s1 + $0x294] sm:$0xf]
  %v185 = vld [vmem:[%s1 + $0x298] sm:$0xf]
  %v186 = vld [vmem:[%s1 + $0x29c] sm:$0xf]
  %v187 = vld [vmem:[%s1 + $0x2a0] sm:$0xf]
  %v188 = vld [vmem:[%s1 + $0x2a4] sm:$0xf]
  %v189 = vld [vmem:[%s1 + $0x2a8] sm:$0xf]
  %v190 = vld [vmem:[%s1 + $0x2ac] sm:$0xf]
  %v191 = vld [vmem:[%s1 + $0x2b0] sm:$0xf]
  %v192 = vld [vmem:[%s1 + $0x2b4] sm:$0xf]
  %v193 = vld [vmem:[%s1 + $0x2b8] sm:$0xf]
  %v194 = vld [vmem:[%s1 + $0x2bc] sm:$0xf]
  %v195 = vld [vmem:[%s1 + $0x2c0] sm:$0xf]
  %v196 = vld [vmem:[%s1 + $0x2c4] sm:$0xf]
  %v197 = vld [vmem:[%s1 + $0x2c8] sm:$0xf]
  %v198 = vld [vmem:[%s1 + $0x2cc] sm:$0xf]
  %v199 = vld [vmem:[%s1 + $0x2d0] sm:$0xf]
  %v200 = vld [vmem:[%s1 + $0x2d4] sm:$0xf]
  %v201 = vld [vmem:[%s1 + $0x2d8] sm:$0xf]
  %v202 = vld [vmem:[%s1 + $0x2dc] sm:$0xf]
  %v203 = vld [vmem:[%s1 + $0x2e0] sm:$0xf]
  %v204 = vld [vmem:[%s1 + $0x2e4] sm:$0xf]
  %v205 = vld [vmem:[%s1 + $0x2e8] sm:$0xf]
  %v206 = vld [vmem:[%s1 + $0x2ec] sm:$0xf]
  %v207 = vld [vmem:[%s1 + $0x2f0] sm:$0xf]
  %v208 = vld [vmem:[%s1 + $0x2f4] sm:$0xf]
  %v209 = vld [vmem:[%s1 + $0x2f8] sm:$0xf]
  %v210 = vld [vmem:[%s1 + $0x2fc] sm:$0xf]
  %v211 = vld [vmem:[%s1 + $0x300] sm:$0xf]
  %v212 = vld [vmem:[%s1 + $0x304] sm:$0xf]
  %v213 = vld [vmem:[%s1 + $0x308] sm:$0xf]
  %v214 = vld [vmem:[%s1 + $0x30c] sm:$0xf]
  %v215 = vld [vmem:[%s1 + $0x310] sm:$0xf]
  %v216 = vld [vmem:[%s1 + $0x314] sm:$0xf]
  %v217 = vld [vmem:[%s1 + $0x318] sm:$0xf]
  %v218 = vld [vmem:[%s1 + $0x31c] sm:$0xf]
  %v219 = vld [vmem:[%s1 + $0x320] sm:$0xf]
  %v220 = vld [vmem:[%s1 + $0x324] sm:$0xf]
  %v221 = vld [vmem:[%s1 + $0x328] sm:$0xf]
  %v222 = vld [vmem:[%s1 + $0x32c] sm:$0xf]
  %v223 = vld [vmem:[%s1 + $0x330] sm:$0xf]
  %v224 = vld [vmem:[%s1 + $0x334] sm:$0xf]
  %v225 = vld [vmem:[%s1 + $0x338] sm:$0xf]
  %v226 = vld [vmem:[%s1 + $0x33c] sm:$0xf]
  %v227 = vld [vmem:[%s1 + $0x340] sm:$0xf]
  %v228 = vld [vmem:[%s1 + $0x344] sm:$0xf]
  %v229 = vld [vmem:[%s1 + $0x348] sm:$0xf]
  %v230 = vld [vmem:[%s1 + $0x34c] sm:$0xf]
  %v231 = vld [vmem:[%s1 + $0x350] sm:$0xf]
  %v232 = vld [vmem:[%s1 + $0x354] sm:$0xf]
  %v233 = vld [vmem:[%s1 + $0x358] sm:$0xf]
  %v234 = vld [vmem:[%s1 + $0x35c] sm:$0xf]
  %v235 = vld [vmem:[%s1 + $0x360] sm:$0xf]
  %v236 = vld [vmem:[%s1 + $0x364] sm:$0xf]
  %v237 = vld [vmem:[%s1 + $0x368] sm:$0xf]
  %v238 = vld [vmem:[%s1 + $0x36c] sm:$0xf]
  %v239 = vld [vmem:[%s1 + $0x370] sm:$0xf]
  %v240 = vld [vmem:[%s1 + $0x374] sm:$0xf]
  %v241 = vld [vmem:[%s1 + $0x378] sm:$0xf]
  %v242 = vld [vmem:[%s1 + $0x37c] sm:$0xf]
  %v243 = vld [vmem:[%s1 + $0x380] sm:$0xf]
  %v244 = vld [vmem:[%s1 + $0x384] sm:$0xf]
  %v245 = vld [vmem:[%s1 + $0x388] sm:$0xf]
  %v246 = vld [vmem:[%s1 + $0x38c] sm:$0xf]
  %v247 = vld [vmem:[%s1 + $0x390] sm:$0xf]
  %v248 = vld [vmem:[%s1 + $0x394] sm:$0xf]
  %v249 = vld [vmem:[%s1 + $0x398] sm:$0xf]
  %v250 = vld [vmem:[%s1 + $0x39c] sm:$0xf]
  %v251 = vld [vmem:[%s1 + $0x3a0] sm:$0xf]
  %v252 = vld [vmem:[%s1 + $0x3a4] sm:$0xf]
  %v253 = vld [vmem:[%s1 + $0x3a8] sm:$0xf]
  %v254 = vld [vmem:[%s1 + $0x3ac] sm:$0xf]
  %v255 = vld [vmem:[%s1 + $0x3b0] sm:$0xf]
  %v256 = vld [vmem:[%s1 + $0x3b4] sm:$0xf]
  %v257 = vld [vmem:[%s1 + $0x3b8] sm:$0xf]
  %v258 = vld [vmem:[%s1 + $0x3bc] sm:$0xf]
  %v259 = vld [vmem:[%s1 + $0x3c0] sm:$0xf]
  %v260 = vld [vmem:[%s1 + $0x3c4] sm:$0xf]
  %v261 = vld [vmem:[%s1 + $0x3c8] sm:$0xf]
  %v262 = vld [vmem:[%s1 + $0x3cc] sm:$0xf]
  %v263 = vld [vmem:[%s1 + $0x3d0] sm:$0xf]
  %v264 = vld [vmem:[%s1 + $0x3d4] sm:$0xf]
  %v265 = vld [vmem:[%s1 + $0x3d8] sm:$0xf]
  %v266 = vld [vmem:[%s1 + $0x3dc] sm:$0xf]
  %v267 = vld [vmem:[%s1 + $0x3e0] sm:$0xf]
  %v268 = vld [vmem:[%s1 + $0x3e4] sm:$0xf]
  %v269 = vld [vmem:[%s1 + $0x3e8] sm:$0xf]
  %v270 = vld [vmem:[%s1 + $0x3ec] sm:$0xf]
  %v271 = vld [vmem:[%s1 + $0x3f0] sm:$0xf]
  %v272 = vld [vmem:[%s1 + $0x3f4] sm:$0xf]
  %v273 = vld [vmem:[%s1 + $0x3f8] sm:$0xf]
  %v274 = vld [vmem:[%s1 + $0x3fc] sm:$0xf]
  %v275 = vld [vmem:[%s1 + $0x400] sm:$0xf]
  %v276 = vld [vmem:[%s1 + $0x404] sm:$0xf]
  %v277 = vld [vmem:[%s1 + $0x408] sm:$0xf]
  %v278 = vld [vmem:[%s1 + $0x40c] sm:$0xf]
  %v279 = vld [vmem:[%s1 + $0x410] sm:$0xf]
  %v280 = vld [vmem:[%s1 + $0x414] sm:$0xf]
  %v281 = vld [vmem:[%s1 + $0x418] sm:$0xf]
  %v282 = vld [vmem:[%s1 + $0x41c] sm:$0xf]
  %v283 = vld [vmem:[%s1 + $0x420] sm:$0xf]
  %v284 = vld [vmem:[%s1 + $0x424] sm:$0xf]
  %v285 = vld [vmem:[%s1 + $0x428] sm:$0xf]
  %v286 = vld [vmem:[%s1 + $0x42c] sm:$0xf]
  %v287 = vld [vmem:[%s1 + $0x430] sm:$0xf]
  %v288 = vld [vmem:[%s1 + $0x434] sm:$0xf]
  %v289 = vld [vmem:[%s1 + $0x438] sm:$0xf]
  %v290 = vld [vmem:[%s1 + $0x43c] sm:$0xf]
  %v291 = vld [vmem:[%s1 + $0x440] sm:$0xf]
  %v292 = vld [vmem:[%s1 + $0x444] sm:$0xf]
  %v293 = vld [vmem:[%s1 + $0x448] sm:$0xf]
  %v294 = vld [vmem:[%s1 + $0x44c] sm:$0xf]
  %v295 = vld [vmem:[%s1 + $0x450] sm:$0xf]
  %v296 = vld [vmem:[%s1 + $0x454] sm:$0xf]
  %v297 = vld [vmem:[%s1 + $0x458] sm:$0xf]
  %v298 = vld [vmem:[%s1 + $0x45c] sm:$0xf]
  %v299 = vld [vmem:[%s1 + $0x460] sm:$0xf]
  %v300 = vld [vmem:[%s1 + $0x464] sm:$0xf]
  %v301 = vld [vmem:[%s1 + $0x468] sm:$0xf]
  %v302 = vld [vmem:[%s1 + $0x46c] sm:$0xf]
  %v303 = vld [vmem:[%s1 + $0x470] sm:$0xf]
  %v304 = vld [vmem:[%s1 + $0x474] sm:$0xf]
  %v305 = vld [vmem:[%s1 + $0x478] sm:$0xf]
  %v306 = vld [vmem:[%s1 + $0x47c] sm:$0xf]
  %v307 = vld [vmem:[%s1 + $0x480] sm:$0xf]
  %v308 = vld [vmem:[%s1 + $0x484] sm:$0xf]
  %v309 = vld [vmem:[%s1 + $0x488] sm:$0xf]
  %v310 = vld [vmem:[%s1 + $0x48c] sm:$0xf]
  %v311 = vld [vmem:[%s1 + $0x490] sm:$0xf]
  %v312 = vld [vmem:[%s1 + $0x494] sm:$0xf]
  %v313 = vld [vmem:[%s1 + $0x498] sm:$0xf]
  %v314 = vld [vmem:[%s1 + $0x49c] sm:$0xf]
  %v315 = vld [vmem:[%s1 + $0x4a0] sm:$0xf]
  %v316 = vld [vmem:[%s1 + $0x4a4] sm:$0xf]
  %v317 = vld [vmem:[%s1 + $0x4a8] sm:$0xf]
  %v318 = vld [vmem:[%s1 + $0x4ac] sm:$0xf]
  %v319 = vld [vmem:[%s1 + $0x4b0] sm:$0xf]
  %v320 = vld [vmem:[%s1 + $0x4b4] sm:$0xf]
  %v321 = vld [vmem:[%s1 + $0x4b8] sm:$0xf]
  %v322 = vld [vmem:[%s1 + $0x4bc] sm:$0xf]
  %v323 = vld [vmem:[%s1 + $0x4c0] sm:$0xf]
  %v324 = vld [vmem:[%s1 + $0x4c4] sm:$0xf]
  %v325 = vld [vmem:[%s1 + $0x4c8] sm:$0xf]
  %v326 = vld [vmem:[%s1 + $0x4cc] sm:$0xf]
  %v327 = vld [vmem:[%s1 + $0x4d0] sm:$0xf]
  %v328 = vld [vmem:[%s1 + $0x4d4] sm:$0xf]
  %v329 = vld [vmem:[%s1 + $0x4d8] sm:$0xf]
  %v330 = vld [vmem:[%s1 + $0x4dc] sm:$0xf]
  %v331 = vld [vmem:[%s1 + $0x4e0] sm:$0xf]
  %v332 = vld [vmem:[%s1 + $0x4e4] sm:$0xf]
  %v333 = vld [vmem:[%s1 + $0x4e8] sm:$0xf]
  %v334 = vld [vmem:[%s1 + $0x4ec] sm:$0xf]
  %v335 = vld [vmem:[%s1 + $0x4f0] sm:$0xf]
  %v336 = vld [vmem:[%s1 + $0x4f4] sm:$0xf]
  %v337 = vld [vmem:[%s1 + $0x4f8] sm:$0xf]
  %v338 = vld [vmem:[%s1 + $0x4fc] sm:$0xf]
  %v339 = vld [vmem:[%s1 + $0x500] sm:$0xf]
  %v340 = vld [vmem:[%s1 + $0x504] sm:$0xf]
  %v341 = vld [vmem:[%s1 + $0x508] sm:$0xf]
  %v342 = vld [vmem:[%s1 + $0x50c] sm:$0xf]
  %v343 = vld [vmem:[%s1 + $0x510] sm:$0xf]
  %v344 = vld [vmem:[%s1 + $0x514] sm:$0xf]
  %v345 = vld [vmem:[%s1 + $0x518] sm:$0xf]
  %v346 = vld [vmem:[%s1 + $0x51c] sm:$0xf]
  %v347 = vld [vmem:[%s1 + $0x520] sm:$0xf]
  %v348 = vld [vmem:[%s1 + $0x524] sm:$0xf]
  %v349 = vld [vmem:[%s1 + $0x528] sm:$0xf]
  %v350 = vld [vmem:[%s1 + $0x52c] sm:$0xf]
  %v351 = vld [vmem:[%s1 + $0x530] sm:$0xf]
  %v352 = vld [vmem:[%s1 + $0x534] sm:$0xf]
  %v353 = vld [vmem:[%s1 + $0x538] sm:$0xf]
  %v354 = vld [vmem:[%s1 + $0x53c] sm:$0xf]
  %v355 = vld [vmem:[%s1 + $0x540] sm:$0xf]
  %v356 = vld [vmem:[%s1 + $0x544] sm:$0xf]
  %v357 = vld [vmem:[%s1 + $0x548] sm:$0xf]
  %v358 = vld [vmem:[%s1 + $0x54c] sm:$0xf]
  %v359 = vld [vmem:[%s1 + $0x550] sm:$0xf]
  %v360 = vld [vmem:[%s1 + $0x554] sm:$0xf]
  %v361 = vld [vmem:[%s1 + $0x558] sm:$0xf]
  %v362 = vld [vmem:[%s1 + $0x55c] sm:$0xf]
  %v363 = vld [vmem:[%s1 + $0x560] sm:$0xf]
  %v364 = vld [vmem:[%s1 + $0x564] sm:$0xf]
  %v365 = vld [vmem:[%s1 + $0x568] sm:$0xf]
  %v366 = vld [vmem:[%s1 + $0x56c] sm:$0xf]
  %v367 = vld [vmem:[%s1 + $0x570] sm:$0xf]
  %v368 = vld [vmem:[%s1 + $0x574] sm:$0xf]
  %v369 = vld [vmem:[%s1 + $0x578] sm:$0xf]
  %v370 = vld [vmem:[%s1 + $0x57c] sm:$0xf]
  %v371 = vld [vmem:[%s1 + $0x580] sm:$0xf]
  %v372 = vld [vmem:[%s1 + $0x584] sm:$0xf]
  %v373 = vld [vmem:[%s1 + $0x588] sm:$0xf]
  %v374 = vld [vmem:[%s1 + $0x58c] sm:$0xf]
  %v375 = vld [vmem:[%s1 + $0x590] sm:$0xf]
  %v376 = vld [vmem:[%s1 + $0x594] sm:$0xf]
  %v377 = vld [vmem:[%s1 + $0x598] sm:$0xf]
  %v378 = vld [vmem:[%s1 + $0x59c] sm:$0xf]
  %v379 = vld [vmem:[%s1 + $0x5a0] sm:$0xf]
  %v380 = vld [vmem:[%s1 + $0x5a4] sm:$0xf]
  %v381 = vld [vmem:[%s1 + $0x5a8] sm:$0xf]
  %v382 = vld [vmem:[%s1 + $0x5ac] sm:$0xf]
  %v383 = vld [vmem:[%s1 + $0x5b0] sm:$0xf]
  %v384 = vld [vmem:[%s1 + $0x5b4] sm:$0xf]
  %v385 = vld [vmem:[%s1 + $0x5b8] sm:$0xf]
  %v386 = vld [vmem:[%s1 + $0x5bc] sm:$0xf]
  %v387 = vld [vmem:[%s1 + $0x5c0] sm:$0xf]
  %v388 = vld [vmem:[%s1 + $0x5c4] sm:$0xf]
  %v389 = vld [vmem:[%s1 + $0x5c8] sm:$0xf]
  %v390 = vld [vmem:[%s1 + $0x5cc] sm:$0xf]
  %v391 = vld [vmem:[%s1 + $0x5d0] sm:$0xf]
  %v392 = vld [vmem:[%s1 + $0x5d4] sm:$0xf]
  %v393 = vld [vmem:[%s1 + $0x5d8] sm:$0xf]
  %v394 = vld [vmem:[%s1 + $0x5dc] sm:$0xf]
  %v395 = vld [vmem:[%s1 + $0x5e0] sm:$0xf]
  %v396 = vld [vmem:[%s1 + $0x5e4] sm:$0xf]
  %v397 = vld [vmem:[%s1 + $0x5e8] sm:$0xf]
  %v398 = vld [vmem:[%s1 + $0x5ec] sm:$0xf]
  %v399 = vld [vmem:[%s1 + $0x5f0] sm:$0xf]
  %v400 = vld [vmem:[%s1 + $0x5f4] sm:$0xf]
  %v401 = vld [vmem:[%s1 + $0x5f8] sm:$0xf]
  %v402 = vld [vmem:[%s1 + $0x5fc] sm:$0xf]
  %v403 = vld [vmem:[%s1 + $0x600] sm:$0xf]
  %v404 = vld [vmem:[%s1 + $0x604] sm:$0xf]
  %v405 = vld [vmem:[%s1 + $0x608] sm:$0xf]
  %v406 = vld [vmem:[%s1 + $0x60c] sm:$0xf]
  %v407 = vld [vmem:[%s1 + $0x610] sm:$0xf]
  %v408 = vld [vmem:[%s1 + $0x614] sm:$0xf]
  %v409 = vld [vmem:[%s1 + $0x618] sm:$0xf]
  %v410 = vld [vmem:[%s1 + $0x61c] sm:$0xf]
  %v411 = vld [vmem:[%s2] sm:$0x1]
  %v413 = vlaneseq
  %v414 = vshrl.u32 %v413, 7
  %v415 = vsub.s32 0, %v414
  %v416 = vrot.slane %v411, %v415
  %v422 = vcombine.high %v15, %v15
  %v424 = vunpack.c.l.s4 1966171168
  %v425 = vunpack.c.0.s8 %v424
  %v426 = vlaneseq
  %v427 = vshrl.u32 %v426, 7
  %v428 = vsub.s32 %v425, %v427
  %v429 = vrot.slane %v15, %v428
  %v431 = vunpack.c.l.s4 1966171168
  %v432 = vunpack.c.0.s8 %v431
  %v433 = vlaneseq
  %v434 = vshrl.u32 %v433, 7
  %v435 = vsub.s32 %v432, %v434
  %v436 = vrot.slane %v422, %v435
  %v437 = vcombine.high %v429, %v429
  %v438 = vcombine.high %v436, %v436
  %v440 = vunpack.c.l.s4 1966171168
  %v441 = vunpack.c.0.s8 %v440
  %v442 = vlaneseq
  %v443 = vshrl.u32 %v442, 7
  %v444 = vsub.s32 %v441, %v443
  %v445 = vrot.slane %v429, %v444
  %v447 = vunpack.c.l.s4 1966171168
  %v448 = vunpack.c.0.s8 %v447
  %v449 = vlaneseq
  %v450 = vshrl.u32 %v449, 7
  %v451 = vsub.s32 %v448, %v450
  %v452 = vrot.slane %v436, %v451
  %v454 = vunpack.c.l.s4 1966171168
  %v455 = vunpack.c.0.s8 %v454
  %v456 = vlaneseq
  %v457 = vshrl.u32 %v456, 7
  %v458 = vsub.s32 %v455, %v457
  %v459 = vrot.slane %v437, %v458
  %v461 = vunpack.c.l.s4 1966171168
  %v462 = vunpack.c.0.s8 %v461
  %v463 = vlaneseq
  %v464 = vshrl.u32 %v463, 7
  %v465 = vsub.s32 %v462, %v464
  %v466 = vrot.slane %v438, %v465
  %v467 = vcombine.high %v445, %v445
  %v468 = vcombine.high %v452, %v452
  %v469 = vcombine.high %v459, %v459
  %v470 = vcombine.high %v466, %v466
  %v471 = vcombine.high %v16, %v16
  %v473 = vunpack.c.l.s4 1966171168
  %v474 = vunpack.c.0.s8 %v473
  %v475 = vlaneseq
  %v476 = vshrl.u32 %v475, 7
  %v477 = vsub.s32 %v474, %v476
  %v478 = vrot.slane %v16, %v477
  %v480 = vunpack.c.l.s4 1966171168
  %v481 = vunpack.c.0.s8 %v480
  %v482 = vlaneseq
  %v483 = vshrl.u32 %v482, 7
  %v484 = vsub.s32 %v481, %v483
  %v485 = vrot.slane %v471, %v484
  %v486 = vcombine.high %v478, %v478
  %v487 = vcombine.high %v485, %v485
  %v489 = vunpack.c.l.s4 1966171168
  %v490 = vunpack.c.0.s8 %v489
  %v491 = vlaneseq
  %v492 = vshrl.u32 %v491, 7
  %v493 = vsub.s32 %v490, %v492
  %v494 = vrot.slane %v478, %v493
  %v496 = vunpack.c.l.s4 1966171168
  %v497 = vunpack.c.0.s8 %v496
  %v498 = vlaneseq
  %v499 = vshrl.u32 %v498, 7
  %v500 = vsub.s32 %v497, %v499
  %v501 = vrot.slane %v485, %v500
  %v503 = vunpack.c.l.s4 1966171168
  %v504 = vunpack.c.0.s8 %v503
  %v505 = vlaneseq
  %v506 = vshrl.u32 %v505, 7
  %v507 = vsub.s32 %v504, %v506
  %v508 = vrot.slane %v486, %v507
  %v510 = vunpack.c.l.s4 1966171168
  %v511 = vunpack.c.0.s8 %v510
  %v512 = vlaneseq
  %v513 = vshrl.u32 %v512, 7
  %v514 = vsub.s32 %v511, %v513
  %v515 = vrot.slane %v487, %v514
  %v516 = vcombine.high %v494, %v494
  %v517 = vcombine.high %v501, %v501
  %v518 = vcombine.high %v508, %v508
  %v519 = vcombine.high %v515, %v515
  %v520 = vcombine.high %v17, %v17
  %v522 = vunpack.c.l.s4 1966171168
  %v523 = vunpack.c.0.s8 %v522
  %v524 = vlaneseq
  %v525 = vshrl.u32 %v524, 7
  %v526 = vsub.s32 %v523, %v525
  %v527 = vrot.slane %v17, %v526
  %v529 = vunpack.c.l.s4 1966171168
  %v530 = vunpack.c.0.s8 %v529
  %v531 = vlaneseq
  %v532 = vshrl.u32 %v531, 7
  %v533 = vsub.s32 %v530, %v532
  %v534 = vrot.slane %v520, %v533
  %v535 = vcombine.high %v527, %v527
  %v536 = vcombine.high %v534, %v534
  %v538 = vunpack.c.l.s4 1966171168
  %v539 = vunpack.c.0.s8 %v538
  %v540 = vlaneseq
  %v541 = vshrl.u32 %v540, 7
  %v542 = vsub.s32 %v539, %v541
  %v543 = vrot.slane %v527, %v542
  %v545 = vunpack.c.l.s4 1966171168
  %v546 = vunpack.c.0.s8 %v545
  %v547 = vlaneseq
  %v548 = vshrl.u32 %v547, 7
  %v549 = vsub.s32 %v546, %v548
  %v550 = vrot.slane %v534, %v549
  %v552 = vunpack.c.l.s4 1966171168
  %v553 = vunpack.c.0.s8 %v552
  %v554 = vlaneseq
  %v555 = vshrl.u32 %v554, 7
  %v556 = vsub.s32 %v553, %v555
  %v557 = vrot.slane %v535, %v556
  %v559 = vunpack.c.l.s4 1966171168
  %v560 = vunpack.c.0.s8 %v559
  %v561 = vlaneseq
  %v562 = vshrl.u32 %v561, 7
  %v563 = vsub.s32 %v560, %v562
  %v564 = vrot.slane %v536, %v563
  %v565 = vcombine.high %v543, %v543
  %v566 = vcombine.high %v550, %v550
  %v567 = vcombine.high %v557, %v557
  %v568 = vcombine.high %v564, %v564
  %v570 = vunpack.c.l.s4 1966171168
  %v571 = vunpack.c.0.s8 %v570
  %v572 = vlaneseq
  %v573 = vshrl.u32 %v572, 7
  %v574 = vsub.s32 %v571, %v573
  %v575 = vrot.slane %v18, %v574
  %v577 = vunpack.c.l.s4 1966171168
  %v578 = vunpack.c.0.s8 %v577
  %v579 = vlaneseq
  %v580 = vshrl.u32 %v579, 7
  %v581 = vsub.s32 %v578, %v580
  %v582 = vrot.slane %v575, %v581
  %v999 = vunpack.c.l.b16 %v19
  %v1000 = vunpack.c.l.b16 %v20
  %v1001 = vunpack.c.l.b16 %v21
  %v1002 = vunpack.c.l.b16 %v22
  %v1003 = vunpack.c.l.b16 %v23
  %v1004 = vunpack.c.l.b16 %v24
  %v1005 = vunpack.c.l.b16 %v25
  %v1006 = vunpack.c.l.b16 %v26
  %v1007 = vunpack.c.l.b16 %v27
  %v1008 = vunpack.c.l.b16 %v28
  %v1009 = vunpack.c.l.b16 %v29
  %v1010 = vunpack.c.l.b16 %v30
  %v1011 = vunpack.c.l.b16 %v31
  %v1012 = vunpack.c.l.b16 %v32
  %v1013 = vunpack.c.l.b16 %v33
  %v1014 = vunpack.c.l.b16 %v34
  %v1015 = vunpack.c.l.b16 %v35
  %v1016 = vunpack.c.l.b16 %v36
  %v1017 = vunpack.c.l.b16 %v37
  %v1018 = vunpack.c.l.b16 %v38
  %v1019 = vunpack.c.l.b16 %v39
  %v1020 = vunpack.c.l.b16 %v40
  %v1021 = vunpack.c.l.b16 %v41
  %v1022 = vunpack.c.l.b16 %v42
  %v1023 = vunpack.c.l.b16 %v43
  %v1024 = vunpack.c.l.b16 %v44
  %v1025 = vunpack.c.l.b16 %v45
  %v1026 = vunpack.c.l.b16 %v46
  %v1027 = vunpack.c.l.b16 %v47
  %v1028 = vunpack.c.l.b16 %v48
  %v1029 = vunpack.c.l.b16 %v49
  %v1030 = vunpack.c.l.b16 %v50
  %v1031 = vunpack.c.l.b16 %v51
  %v1032 = vunpack.c.l.b16 %v52
  %v1033 = vunpack.c.l.b16 %v53
  %v1034 = vunpack.c.l.b16 %v54
  %v1035 = vunpack.c.l.b16 %v55
  %v1036 = vunpack.c.l.b16 %v56
  %v1037 = vunpack.c.l.b16 %v57
  %v1038 = vunpack.c.l.b16 %v58
  %v1039 = vunpack.c.l.b16 %v59
  %v1040 = vunpack.c.l.b16 %v60
  %v1041 = vunpack.c.l.b16 %v61
  %v1042 = vunpack.c.l.b16 %v62
  %v1043 = vunpack.c.l.b16 %v63
  %v1044 = vunpack.c.l.b16 %v64
  %v1045 = vunpack.c.l.b16 %v65
  %v1046 = vunpack.c.l.b16 %v66
  %v1047 = vunpack.c.l.b16 %v67
  %v1048 = vunpack.c.l.b16 %v68
  %v1049 = vunpack.c.l.b16 %v69
  %v1050 = vunpack.c.l.b16 %v70
  %v1051 = vunpack.c.l.b16 %v71
  %v1052 = vunpack.c.l.b16 %v72
  %v1053 = vunpack.c.l.b16 %v73
  %v1054 = vunpack.c.l.b16 %v74
  %v1055 = vunpack.c.l.b16 %v75
  %v1056 = vunpack.c.l.b16 %v76
  %v1057 = vunpack.c.l.b16 %v77
  %v1058 = vunpack.c.l.b16 %v78
  %v1059 = vunpack.c.l.b16 %v79
  %v1060 = vunpack.c.l.b16 %v80
  %v1061 = vunpack.c.l.b16 %v81
  %v1062 = vunpack.c.l.b16 %v82
  %v1063 = vunpack.c.l.b16 %v83
  %v1064 = vunpack.c.l.b16 %v84
  %v1065 = vunpack.c.l.b16 %v85
  %v1066 = vunpack.c.l.b16 %v86
  %v1067 = vunpack.c.l.b16 %v87
  %v1068 = vunpack.c.l.b16 %v88
  %v1069 = vunpack.c.l.b16 %v89
  %v1070 = vunpack.c.l.b16 %v90
  %v1071 = vunpack.c.l.b16 %v91
  %v1072 = vunpack.c.l.b16 %v92
  %v1073 = vunpack.c.l.b16 %v93
  %v1074 = vunpack.c.l.b16 %v94
  %v1075 = vunpack.c.l.b16 %v95
  %v1076 = vunpack.c.l.b16 %v96
  %v1077 = vunpack.c.l.b16 %v97
  %v1078 = vunpack.c.l.b16 %v98
  %v1079 = vunpack.c.l.b16 %v99
  %v1080 = vunpack.c.l.b16 %v100
  %v1081 = vunpack.c.l.b16 %v101
  %v1082 = vunpack.c.l.b16 %v102
  %v1083 = vunpack.c.l.b16 %v103
  %v1084 = vunpack.c.l.b16 %v104
  %v1085 = vunpack.c.l.b16 %v105
  %v1086 = vunpack.c.l.b16 %v106
  %v1087 = vunpack.c.l.b16 %v107
  %v1088 = vunpack.c.l.b16 %v108
  %v1089 = vunpack.c.l.b16 %v109
  %v1090 = vunpack.c.l.b16 %v110
  %v1091 = vunpack.c.l.b16 %v111
  %v1092 = vunpack.c.l.b16 %v112
  %v1093 = vunpack.c.l.b16 %v113
  %v1094 = vunpack.c.l.b16 %v114
  %v1095 = vunpack.c.l.b16 %v115
  %v1096 = vunpack.c.l.b16 %v116
  %v1097 = vunpack.c.l.b16 %v117
  %v1098 = vunpack.c.l.b16 %v118
  %v1099 = vunpack.c.l.b16 %v119
  %v1100 = vunpack.c.l.b16 %v120
  %v1101 = vunpack.c.l.b16 %v121
  %v1102 = vunpack.c.l.b16 %v122
  %v1103 = vunpack.c.l.b16 %v123
  %v1104 = vunpack.c.l.b16 %v124
  %v1105 = vunpack.c.l.b16 %v125
  %v1106 = vunpack.c.l.b16 %v126
  %v1107 = vunpack.c.l.b16 %v127
  %v1108 = vunpack.c.l.b16 %v128
  %v1109 = vunpack.c.l.b16 %v129
  %v1110 = vunpack.c.l.b16 %v130
  %v1111 = vunpack.c.l.b16 %v131
  %v1112 = vunpack.c.l.b16 %v132
  %v1113 = vunpack.c.l.b16 %v133
  %v1114 = vunpack.c.l.b16 %v134
  %v1115 = vunpack.c.l.b16 %v135
  %v1116 = vunpack.c.l.b16 %v136
  %v1117 = vunpack.c.l.b16 %v137
  %v1118 = vunpack.c.l.b16 %v138
  %v1119 = vunpack.c.l.b16 %v139
  %v1120 = vunpack.c.l.b16 %v140
  %v1121 = vunpack.c.l.b16 %v141
  %v1122 = vunpack.c.l.b16 %v142
  %v1123 = vunpack.c.l.b16 %v143
  %v1124 = vunpack.c.l.b16 %v144
  %v1125 = vunpack.c.l.b16 %v145
  %v1126 = vunpack.c.l.b16 %v146
  %v1127 = vunpack.c.l.b16 %v147
  %v1128 = vunpack.c.l.b16 %v148
  %v1129 = vunpack.c.l.b16 %v149
  %v1130 = vunpack.c.l.b16 %v150
  %v1131 = vunpack.c.l.b16 %v151
  %v1132 = vunpack.c.l.b16 %v152
  %v1133 = vunpack.c.l.b16 %v153
  %v1134 = vunpack.c.l.b16 %v154
  %v1135 = vunpack.c.l.b16 %v155
  %v1136 = vunpack.c.l.b16 %v156
  %v1137 = vunpack.c.l.b16 %v157
  %v1138 = vunpack.c.l.b16 %v158
  %v1139 = vunpack.c.l.b16 %v159
  %v1140 = vunpack.c.l.b16 %v160
  %v1141 = vunpack.c.l.b16 %v161
  %v1142 = vunpack.c.l.b16 %v162
  %v1143 = vunpack.c.l.b16 %v163
  %v1144 = vunpack.c.l.b16 %v164
  %v1145 = vunpack.c.l.b16 %v165
  %v1146 = vunpack.c.l.b16 %v166
  %v1147 = vunpack.c.l.b16 %v167
  %v1148 = vunpack.c.l.b16 %v168
  %v1149 = vunpack.c.l.b16 %v169
  %v1150 = vunpack.c.l.b16 %v170
  %v1151 = vunpack.c.l.b16 %v171
  %v1152 = vunpack.c.l.b16 %v172
  %v1153 = vunpack.c.l.b16 %v173
  %v1154 = vunpack.c.l.b16 %v174
  %v1155 = vunpack.c.l.b16 %v175
  %v1156 = vunpack.c.l.b16 %v176
  %v1157 = vunpack.c.l.b16 %v177
  %v1158 = vunpack.c.l.b16 %v178
  %v1159 = vunpack.c.l.b16 %v179
  %v1160 = vunpack.c.l.b16 %v180
  %v1161 = vunpack.c.l.b16 %v181
  %v1162 = vunpack.c.l.b16 %v182
  %v1163 = vunpack.c.l.b16 %v183
  %v1164 = vunpack.c.l.b16 %v184
  %v1165 = vunpack.c.l.b16 %v185
  %v1166 = vunpack.c.l.b16 %v186
  %v1167 = vunpack.c.l.b16 %v187
  %v1168 = vunpack.c.l.b16 %v188
  %v1169 = vunpack.c.l.b16 %v189
  %v1170 = vunpack.c.l.b16 %v190
  %v1171 = vunpack.c.l.b16 %v191
  %v1172 = vunpack.c.l.b16 %v192
  %v1173 = vunpack.c.l.b16 %v193
  %v1174 = vunpack.c.l.b16 %v194
  %v1175 = vunpack.c.l.b16 %v195
  %v1176 = vunpack.c.l.b16 %v196
  %v1177 = vunpack.c.l.b16 %v197
  %v1178 = vunpack.c.l.b16 %v198
  %v1179 = vunpack.c.l.b16 %v199
  %v1180 = vunpack.c.l.b16 %v200
  %v1181 = vunpack.c.l.b16 %v201
  %v1182 = vunpack.c.l.b16 %v202
  %v1183 = vunpack.c.l.b16 %v203
  %v1184 = vunpack.c.l.b16 %v204
  %v1185 = vunpack.c.l.b16 %v205
  %v1186 = vunpack.c.l.b16 %v206
  %v1187 = vunpack.c.l.b16 %v207
  %v1188 = vunpack.c.l.b16 %v208
  %v1189 = vunpack.c.l.b16 %v209
  %v1190 = vunpack.c.l.b16 %v210
  %v1191 = vunpack.c.l.b16 %v211
  %v1192 = vunpack.c.l.b16 %v212
  %v1193 = vunpack.c.l.b16 %v213
  %v1194 = vunpack.c.l.b16 %v214
  %v1195 = vunpack.c.l.b16 %v215
  %v1196 = vunpack.c.l.b16 %v216
  %v1197 = vunpack.c.l.b16 %v217
  %v1198 = vunpack.c.l.b16 %v218
  %v1199 = vunpack.c.l.b16 %v219
  %v1200 = vunpack.c.l.b16 %v220
  %v1201 = vunpack.c.l.b16 %v221
  %v1202 = vunpack.c.l.b16 %v222
  %v1203 = vunpack.c.l.b16 %v223
  %v1204 = vunpack.c.l.b16 %v224
  %v1205 = vunpack.c.l.b16 %v225
  %v1206 = vunpack.c.l.b16 %v226
  %v1207 = vunpack.c.l.b16 %v227
  %v1208 = vunpack.c.l.b16 %v228
  %v1209 = vunpack.c.l.b16 %v229
  %v1210 = vunpack.c.l.b16 %v230
  %v1211 = vunpack.c.l.b16 %v231
  %v1212 = vunpack.c.l.b16 %v232
  %v1213 = vunpack.c.l.b16 %v233
  %v1214 = vunpack.c.l.b16 %v234
  %v1215 = vunpack.c.l.b16 %v235
  %v1216 = vunpack.c.l.b16 %v236
  %v1217 = vunpack.c.l.b16 %v237
  %v1218 = vunpack.c.l.b16 %v238
  %v1219 = vunpack.c.l.b16 %v239
  %v1220 = vunpack.c.l.b16 %v240
  %v1221 = vunpack.c.l.b16 %v241
  %v1222 = vunpack.c.l.b16 %v242
  %v1223 = vunpack.c.l.b16 %v243
  %v1224 = vunpack.c.l.b16 %v244
  %v1225 = vunpack.c.l.b16 %v245
  %v1226 = vunpack.c.l.b16 %v246
  %v1227 = vunpack.c.l.b16 %v247
  %v1228 = vunpack.c.l.b16 %v248
  %v1229 = vunpack.c.l.b16 %v249
  %v1230 = vunpack.c.l.b16 %v250
  %v1231 = vunpack.c.l.b16 %v251
  %v1232 = vunpack.c.l.b16 %v252
  %v1233 = vunpack.c.l.b16 %v253
  %v1234 = vunpack.c.l.b16 %v254
  %v1235 = vunpack.c.l.b16 %v255
  %v1236 = vunpack.c.l.b16 %v256
  %v1237 = vunpack.c.l.b16 %v257
  %v1238 = vunpack.c.l.b16 %v258
  %v1239 = vunpack.c.l.b16 %v259
  %v1240 = vunpack.c.l.b16 %v260
  %v1241 = vunpack.c.l.b16 %v261
  %v1242 = vunpack.c.l.b16 %v262
  %v1243 = vunpack.c.l.b16 %v263
  %v1244 = vunpack.c.l.b16 %v264
  %v1245 = vunpack.c.l.b16 %v265
  %v1246 = vunpack.c.l.b16 %v266
  %v1247 = vunpack.c.l.b16 %v267
  %v1248 = vunpack.c.l.b16 %v268
  %v1249 = vunpack.c.l.b16 %v269
  %v1250 = vunpack.c.l.b16 %v270
  %v1251 = vunpack.c.l.b16 %v271
  %v1252 = vunpack.c.l.b16 %v272
  %v1253 = vunpack.c.l.b16 %v273
  %v1254 = vunpack.c.l.b16 %v274
  %v1255 = vunpack.c.l.b16 %v275
  %v1256 = vunpack.c.l.b16 %v276
  %v1257 = vunpack.c.l.b16 %v277
  %v1258 = vunpack.c.l.b16 %v278
  %v1259 = vunpack.c.l.b16 %v279
  %v1260 = vunpack.c.l.b16 %v280
  %v1261 = vunpack.c.l.b16 %v281
  %v1262 = vunpack.c.l.b16 %v282
  %v1263 = vunpack.c.l.b16 %v283
  %v1264 = vunpack.c.l.b16 %v284
  %v1265 = vunpack.c.l.b16 %v285
  %v1266 = vunpack.c.l.b16 %v286
  %v1267 = vunpack.c.l.b16 %v287
  %v1268 = vunpack.c.l.b16 %v288
  %v1269 = vunpack.c.l.b16 %v289
  %v1270 = vunpack.c.l.b16 %v290
  %v1271 = vunpack.c.l.b16 %v291
  %v1272 = vunpack.c.l.b16 %v292
  %v1273 = vunpack.c.l.b16 %v293
  %v1274 = vunpack.c.l.b16 %v294
  %v1275 = vunpack.c.l.b16 %v295
  %v1276 = vunpack.c.l.b16 %v296
  %v1277 = vunpack.c.l.b16 %v297
  %v1278 = vunpack.c.l.b16 %v298
  %v1279 = vunpack.c.l.b16 %v299
  %v1280 = vunpack.c.l.b16 %v300
  %v1281 = vunpack.c.l.b16 %v301
  %v1282 = vunpack.c.l.b16 %v302
  %v1283 = vunpack.c.l.b16 %v303
  %v1284 = vunpack.c.l.b16 %v304
  %v1285 = vunpack.c.l.b16 %v305
  %v1286 = vunpack.c.l.b16 %v306
  %v1287 = vunpack.c.l.b16 %v307
  %v1288 = vunpack.c.l.b16 %v308
  %v1289 = vunpack.c.l.b16 %v309
  %v1290 = vunpack.c.l.b16 %v310
  %v1291 = vunpack.c.l.b16 %v311
  %v1292 = vunpack.c.l.b16 %v312
  %v1293 = vunpack.c.l.b16 %v313
  %v1294 = vunpack.c.l.b16 %v314
  %v1295 = vunpack.c.l.b16 %v315
  %v1296 = vunpack.c.l.b16 %v316
  %v1297 = vunpack.c.l.b16 %v317
  %v1298 = vunpack.c.l.b16 %v318
  %v1299 = vunpack.c.l.b16 %v319
  %v1300 = vunpack.c.l.b16 %v320
  %v1301 = vunpack.c.l.b16 %v321
  %v1302 = vunpack.c.l.b16 %v322
  %v1303 = vunpack.c.l.b16 %v323
  %v1304 = vunpack.c.l.b16 %v324
  %v1305 = vunpack.c.l.b16 %v325
  %v1306 = vunpack.c.l.b16 %v326
  %v1307 = vunpack.c.l.b16 %v327
  %v1308 = vunpack.c.l.b16 %v328
  %v1309 = vunpack.c.l.b16 %v329
  %v1310 = vunpack.c.l.b16 %v330
  %v1311 = vunpack.c.l.b16 %v331
  %v1312 = vunpack.c.l.b16 %v332
  %v1313 = vunpack.c.l.b16 %v333
  %v1314 = vunpack.c.l.b16 %v334
  %v1315 = vunpack.c.l.b16 %v335
  %v1316 = vunpack.c.l.b16 %v336
  %v1317 = vunpack.c.l.b16 %v337
  %v1318 = vunpack.c.l.b16 %v338
  %v1319 = vunpack.c.l.b16 %v339
  %v1320 = vunpack.c.l.b16 %v340
  %v1321 = vunpack.c.l.b16 %v341
  %v1322 = vunpack.c.l.b16 %v342
  %v1323 = vunpack.c.l.b16 %v343
  %v1324 = vunpack.c.l.b16 %v344
  %v1325 = vunpack.c.l.b16 %v345
  %v1326 = vunpack.c.l.b16 %v346
  %v1327 = vunpack.c.l.b16 %v347
  %v1328 = vunpack.c.l.b16 %v348
  %v1329 = vunpack.c.l.b16 %v349
  %v1330 = vunpack.c.l.b16 %v350
  %v1331 = vunpack.c.l.b16 %v351
  %v1332 = vunpack.c.l.b16 %v352
  %v1333 = vunpack.c.l.b16 %v353
  %v1334 = vunpack.c.l.b16 %v354
  %v1335 = vunpack.c.l.b16 %v355
  %v1336 = vunpack.c.l.b16 %v356
  %v1337 = vunpack.c.l.b16 %v357
  %v1338 = vunpack.c.l.b16 %v358
  %v1339 = vunpack.c.l.b16 %v359
  %v1340 = vunpack.c.l.b16 %v360
  %v1341 = vunpack.c.l.b16 %v361
  %v1342 = vunpack.c.l.b16 %v362
  %v1343 = vunpack.c.l.b16 %v363
  %v1344 = vunpack.c.l.b16 %v364
  %v1345 = vunpack.c.l.b16 %v365
  %v1346 = vunpack.c.l.b16 %v366
  %v1347 = vunpack.c.l.b16 %v367
  %v1348 = vunpack.c.l.b16 %v368
  %v1349 = vunpack.c.l.b16 %v369
  %v1350 = vunpack.c.l.b16 %v370
  %v1351 = vunpack.c.l.b16 %v371
  %v1352 = vunpack.c.l.b16 %v372
  %v1353 = vunpack.c.l.b16 %v373
  %v1354 = vunpack.c.l.b16 %v374
  %v1355 = vunpack.c.l.b16 %v375
  %v1356 = vunpack.c.l.b16 %v376
  %v1357 = vunpack.c.l.b16 %v377
  %v1358 = vunpack.c.l.b16 %v378
  %v1359 = vunpack.c.l.b16 %v379
  %v1360 = vunpack.c.l.b16 %v380
  %v1361 = vunpack.c.l.b16 %v381
  %v1362 = vunpack.c.l.b16 %v382
  %v1363 = vunpack.c.l.b16 %v383
  %v1364 = vunpack.c.l.b16 %v384
  %v1365 = vunpack.c.l.b16 %v385
  %v1366 = vunpack.c.l.b16 %v386
  %v1367 = vunpack.c.l.b16 %v387
  %v1368 = vunpack.c.l.b16 %v388
  %v1369 = vunpack.c.l.b16 %v389
  %v1370 = vunpack.c.l.b16 %v390
  %v1371 = vunpack.c.l.b16 %v391
  %v1372 = vunpack.c.l.b16 %v392
  %v1373 = vunpack.c.l.b16 %v393
  %v1374 = vunpack.c.l.b16 %v394
  %v1375 = vunpack.c.l.b16 %v395
  %v1376 = vunpack.c.l.b16 %v396
  %v1377 = vunpack.c.l.b16 %v397
  %v1378 = vunpack.c.l.b16 %v398
  %v1379 = vunpack.c.l.b16 %v399
  %v1380 = vunpack.c.l.b16 %v400
  %v1381 = vunpack.c.l.b16 %v401
  %v1382 = vunpack.c.l.b16 %v402
  %v1383 = vunpack.c.l.b16 %v403
  %v1384 = vunpack.c.l.b16 %v404
  %v1385 = vunpack.c.l.b16 %v405
  %v1386 = vunpack.c.l.b16 %v406
  %v1387 = vunpack.c.l.b16 %v407
  %v1388 = vunpack.c.l.b16 %v408
  %v1389 = vunpack.c.l.b16 %v409
  %v1390 = vunpack.c.l.b16 %v410
  %v1391 = vpack.c.b16 %v1000, %v999
  %v1392 = vpack.c.b16 %v1002, %v1001
  %v1393 = vpack.c.b16 %v1004, %v1003
  %v1394 = vpack.c.b16 %v1006, %v1005
  %v1395 = vpack.c.b16 %v1008, %v1007
  %v1396 = vpack.c.b16 %v1010, %v1009
  %v1397 = vpack.c.b16 %v1012, %v1011
  %v1398 = vpack.c.b16 %v1014, %v1013
  %v1399 = vpack.c.b16 %v1016, %v1015
  %v1400 = vpack.c.b16 %v1018, %v1017
  %v1401 = vpack.c.b16 %v1020, %v1019
  %v1402 = vpack.c.b16 %v1022, %v1021
  %v1403 = vpack.c.b16 %v1024, %v1023
  %v1404 = vpack.c.b16 %v1026, %v1025
  %v1405 = vpack.c.b16 %v1028, %v1027
  %v1406 = vpack.c.b16 %v1030, %v1029
  %v1407 = vpack.c.b16 %v1032, %v1031
  %v1408 = vpack.c.b16 %v1034, %v1033
  %v1409 = vpack.c.b16 %v1036, %v1035
  %v1410 = vpack.c.b16 %v1038, %v1037
  %v1411 = vpack.c.b16 %v1040, %v1039
  %v1412 = vpack.c.b16 %v1042, %v1041
  %v1413 = vpack.c.b16 %v1044, %v1043
  %v1414 = vpack.c.b16 %v1046, %v1045
  %v1415 = vpack.c.b16 %v1048, %v1047
  %v1416 = vpack.c.b16 %v1050, %v1049
  %v1417 = vpack.c.b16 %v1052, %v1051
  %v1418 = vpack.c.b16 %v1054, %v1053
  %v1419 = vpack.c.b16 %v1056, %v1055
  %v1420 = vpack.c.b16 %v1058, %v1057
  %v1421 = vpack.c.b16 %v1060, %v1059
  %v1422 = vpack.c.b16 %v1062, %v1061
  %v1423 = vpack.c.b16 %v1064, %v1063
  %v1424 = vpack.c.b16 %v1066, %v1065
  %v1425 = vpack.c.b16 %v1068, %v1067
  %v1426 = vpack.c.b16 %v1070, %v1069
  %v1427 = vpack.c.b16 %v1072, %v1071
  %v1428 = vpack.c.b16 %v1074, %v1073
  %v1429 = vpack.c.b16 %v1076, %v1075
  %v1430 = vpack.c.b16 %v1078, %v1077
  %v1431 = vpack.c.b16 %v1080, %v1079
  %v1432 = vpack.c.b16 %v1082, %v1081
  %v1433 = vpack.c.b16 %v1084, %v1083
  %v1434 = vpack.c.b16 %v1086, %v1085
  %v1435 = vpack.c.b16 %v1088, %v1087
  %v1436 = vpack.c.b16 %v1090, %v1089
  %v1437 = vpack.c.b16 %v1092, %v1091
  %v1438 = vpack.c.b16 %v1094, %v1093
  %v1439 = vpack.c.b16 %v1096, %v1095
  %v1440 = vpack.c.b16 %v1098, %v1097
  %v1441 = vpack.c.b16 %v1100, %v1099
  %v1442 = vpack.c.b16 %v1102, %v1101
  %v1443 = vpack.c.b16 %v1104, %v1103
  %v1444 = vpack.c.b16 %v1106, %v1105
  %v1445 = vpack.c.b16 %v1108, %v1107
  %v1446 = vpack.c.b16 %v1110, %v1109
  %v1447 = vpack.c.b16 %v1112, %v1111
  %v1448 = vpack.c.b16 %v1114, %v1113
  %v1449 = vpack.c.b16 %v1116, %v1115
  %v1450 = vpack.c.b16 %v1118, %v1117
  %v1451 = vpack.c.b16 %v1120, %v1119
  %v1452 = vpack.c.b16 %v1122, %v1121
  %v1453 = vpack.c.b16 %v1124, %v1123
  %v1454 = vpack.c.b16 %v1126, %v1125
  %v1455 = vpack.c.b16 %v1128, %v1127
  %v1456 = vpack.c.b16 %v1130, %v1129
  %v1457 = vpack.c.b16 %v1132, %v1131
  %v1458 = vpack.c.b16 %v1134, %v1133
  %v1459 = vpack.c.b16 %v1136, %v1135
  %v1460 = vpack.c.b16 %v1138, %v1137
  %v1461 = vpack.c.b16 %v1140, %v1139
  %v1462 = vpack.c.b16 %v1142, %v1141
  %v1463 = vpack.c.b16 %v1144, %v1143
  %v1464 = vpack.c.b16 %v1146, %v1145
  %v1465 = vpack.c.b16 %v1148, %v1147
  %v1466 = vpack.c.b16 %v1150, %v1149
  %v1467 = vpack.c.b16 %v1152, %v1151
  %v1468 = vpack.c.b16 %v1154, %v1153
  %v1469 = vpack.c.b16 %v1156, %v1155
  %v1470 = vpack.c.b16 %v1158, %v1157
  %v1471 = vpack.c.b16 %v1160, %v1159
  %v1472 = vpack.c.b16 %v1162, %v1161
  %v1473 = vpack.c.b16 %v1164, %v1163
  %v1474 = vpack.c.b16 %v1166, %v1165
  %v1475 = vpack.c.b16 %v1168, %v1167
  %v1476 = vpack.c.b16 %v1170, %v1169
  %v1477 = vpack.c.b16 %v1172, %v1171
  %v1478 = vpack.c.b16 %v1174, %v1173
  %v1479 = vpack.c.b16 %v1176, %v1175
  %v1480 = vpack.c.b16 %v1178, %v1177
  %v1481 = vpack.c.b16 %v1180, %v1179
  %v1482 = vpack.c.b16 %v1182, %v1181
  %v1483 = vpack.c.b16 %v1184, %v1183
  %v1484 = vpack.c.b16 %v1186, %v1185
  %v1485 = vpack.c.b16 %v1188, %v1187
  %v1486 = vpack.c.b16 %v1190, %v1189
  %v1487 = vpack.c.b16 %v1192, %v1191
  %v1488 = vpack.c.b16 %v1194, %v1193
  %v1489 = vpack.c.b16 %v1196, %v1195
  %v1490 = vpack.c.b16 %v1198, %v1197
  %v1491 = vpack.c.b16 %v1200, %v1199
  %v1492 = vpack.c.b16 %v1202, %v1201
  %v1493 = vpack.c.b16 %v1204, %v1203
  %v1494 = vpack.c.b16 %v1206, %v1205
  %v1495 = vpack.c.b16 %v1208, %v1207
  %v1496 = vpack.c.b16 %v1210, %v1209
  %v1497 = vpack.c.b16 %v1212, %v1211
  %v1498 = vpack.c.b16 %v1214, %v1213
  %v1499 = vpack.c.b16 %v1216, %v1215
  %v1500 = vpack.c.b16 %v1218, %v1217
  %v1501 = vpack.c.b16 %v1220, %v1219
  %v1502 = vpack.c.b16 %v1222, %v1221
  %v1503 = vpack.c.b16 %v1224, %v1223
  %v1504 = vpack.c.b16 %v1226, %v1225
  %v1505 = vpack.c.b16 %v1228, %v1227
  %v1506 = vpack.c.b16 %v1230, %v1229
  %v1507 = vpack.c.b16 %v1232, %v1231
  %v1508 = vpack.c.b16 %v1234, %v1233
  %v1509 = vpack.c.b16 %v1236, %v1235
  %v1510 = vpack.c.b16 %v1238, %v1237
  %v1511 = vpack.c.b16 %v1240, %v1239
  %v1512 = vpack.c.b16 %v1242, %v1241
  %v1513 = vpack.c.b16 %v1244, %v1243
  %v1514 = vpack.c.b16 %v1246, %v1245
  %v1515 = vpack.c.b16 %v1248, %v1247
  %v1516 = vpack.c.b16 %v1250, %v1249
  %v1517 = vpack.c.b16 %v1252, %v1251
  %v1518 = vpack.c.b16 %v1254, %v1253
  %v1519 = vpack.c.b16 %v1256, %v1255
  %v1520 = vpack.c.b16 %v1258, %v1257
  %v1521 = vpack.c.b16 %v1260, %v1259
  %v1522 = vpack.c.b16 %v1262, %v1261
  %v1523 = vpack.c.b16 %v1264, %v1263
  %v1524 = vpack.c.b16 %v1266, %v1265
  %v1525 = vpack.c.b16 %v1268, %v1267
  %v1526 = vpack.c.b16 %v1270, %v1269
  %v1527 = vpack.c.b16 %v1272, %v1271
  %v1528 = vpack.c.b16 %v1274, %v1273
  %v1529 = vpack.c.b16 %v1276, %v1275
  %v1530 = vpack.c.b16 %v1278, %v1277
  %v1531 = vpack.c.b16 %v1280, %v1279
  %v1532 = vpack.c.b16 %v1282, %v1281
  %v1533 = vpack.c.b16 %v1284, %v1283
  %v1534 = vpack.c.b16 %v1286, %v1285
  %v1535 = vpack.c.b16 %v1288, %v1287
  %v1536 = vpack.c.b16 %v1290, %v1289
  %v1537 = vpack.c.b16 %v1292, %v1291
  %v1538 = vpack.c.b16 %v1294, %v1293
  %v1539 = vpack.c.b16 %v1296, %v1295
  %v1540 = vpack.c.b16 %v1298, %v1297
  %v1541 = vpack.c.b16 %v1300, %v1299
  %v1542 = vpack.c.b16 %v1302, %v1301
  %v1543 = vpack.c.b16 %v1304, %v1303
  %v1544 = vpack.c.b16 %v1306, %v1305
  %v1545 = vpack.c.b16 %v1308, %v1307
  %v1546 = vpack.c.b16 %v1310, %v1309
  %v1547 = vpack.c.b16 %v1312, %v1311
  %v1548 = vpack.c.b16 %v1314, %v1313
  %v1549 = vpack.c.b16 %v1316, %v1315
  %v1550 = vpack.c.b16 %v1318, %v1317
  %v1551 = vpack.c.b16 %v1320, %v1319
  %v1552 = vpack.c.b16 %v1322, %v1321
  %v1553 = vpack.c.b16 %v1324, %v1323
  %v1554 = vpack.c.b16 %v1326, %v1325
  %v1555 = vpack.c.b16 %v1328, %v1327
  %v1556 = vpack.c.b16 %v1330, %v1329
  %v1557 = vpack.c.b16 %v1332, %v1331
  %v1558 = vpack.c.b16 %v1334, %v1333
  %v1559 = vpack.c.b16 %v1336, %v1335
  %v1560 = vpack.c.b16 %v1338, %v1337
  %v1561 = vpack.c.b16 %v1340, %v1339
  %v1562 = vpack.c.b16 %v1342, %v1341
  %v1563 = vpack.c.b16 %v1344, %v1343
  %v1564 = vpack.c.b16 %v1346, %v1345
  %v1565 = vpack.c.b16 %v1348, %v1347
  %v1566 = vpack.c.b16 %v1350, %v1349
  %v1567 = vpack.c.b16 %v1352, %v1351
  %v1568 = vpack.c.b16 %v1354, %v1353
  %v1569 = vpack.c.b16 %v1356, %v1355
  %v1570 = vpack.c.b16 %v1358, %v1357
  %v1571 = vpack.c.b16 %v1360, %v1359
  %v1572 = vpack.c.b16 %v1362, %v1361
  %v1573 = vpack.c.b16 %v1364, %v1363
  %v1574 = vpack.c.b16 %v1366, %v1365
  %v1575 = vpack.c.b16 %v1368, %v1367
  %v1576 = vpack.c.b16 %v1370, %v1369
  %v1577 = vpack.c.b16 %v1372, %v1371
  %v1578 = vpack.c.b16 %v1374, %v1373
  %v1579 = vpack.c.b16 %v1376, %v1375
  %v1580 = vpack.c.b16 %v1378, %v1377
  %v1581 = vpack.c.b16 %v1380, %v1379
  %v1582 = vpack.c.b16 %v1382, %v1381
  %v1583 = vpack.c.b16 %v1384, %v1383
  %v1584 = vpack.c.b16 %v1386, %v1385
  %v1585 = vpack.c.b16 %v1388, %v1387
  %v1586 = vpack.c.b16 %v1390, %v1389
  %vm1783 = vcmask 523264
  %v1785 = vsel %vm1783, %v582, 0
  %1787 = vmatprep.subr.bf16.mxu0 0
  %1788 = vmatpush1.bf16.msra.mxu0 %v1398
  %1789 = vmatprep.subr.bf16.mxu0 0
  %1790 = vmatpush1.bf16.msra.mxu0 %v1397
  %1791 = vmatprep.subr.bf16.mxu0 0
  %1792 = vmatpush1.bf16.msra.mxu0 %v1396
  %1793 = vmatprep.subr.bf16.mxu0 0
  %1794 = vmatpush1.bf16.msra.mxu0 %v1395
  %1795 = vmatprep.subr.bf16.mxu0 0
  %1796 = vmatpush1.bf16.msra.mxu0 %v1394
  %1797 = vmatprep.subr.bf16.mxu0 0
  %1798 = vmatpush1.bf16.msra.mxu0 %v1393
  %1799 = vmatprep.subr.bf16.mxu0 0
  %1800 = vmatpush1.bf16.msra.mxu0 %v1392
  %1801 = vmatprep.subr.bf16.mxu0 0
  %1802 = vmatpush1.bf16.msra.mxu0 %v1391
  %1803 = vmatprep.subr.bf16.mxu0 0
  %1804 = vmatpush2.bf16.msra.mxu0 %v1406
  %1805 = vmatprep.subr.bf16.mxu0 0
  %1806 = vmatpush2.bf16.msra.mxu0 %v1405
  %1807 = vmatprep.subr.bf16.mxu0 0
  %1808 = vmatpush2.bf16.msra.mxu0 %v1404
  %1809 = vmatprep.subr.bf16.mxu0 0
  %1810 = vmatpush2.bf16.msra.mxu0 %v1403
  %1811 = vmatprep.subr.bf16.mxu0 0
  %1812 = vmatpush2.bf16.msra.mxu0 %v1402
  %1813 = vmatprep.subr.bf16.mxu0 0
  %1814 = vmatpush2.bf16.msra.mxu0 %v1401
  %1815 = vmatprep.subr.bf16.mxu0 0
  %1816 = vmatpush2.bf16.msra.mxu0 %v1400
  %1817 = vmatprep.subr.bf16.mxu0 0
  %1818 = vmatpush2.bf16.msra.mxu0 %v1399
  %1819 = vmatprep.mubr.bf16.mxu0 %v459
  %1820 = vmatmul.mubr.bf16.gmra.mxu0 %v445
  %v1821 = vpop.f32.mrf.mxu0
  %v1822 = vadd.f32 %v416, %v1821
  %v1823 = vpop.f32.mrf.mxu0
  %v1824 = vpop.f32.mrf.mxu0
  %v1825 = vpop.f32.mrf.mxu0
  %1826 = vdwg.mxu0
  %1827 = vmatprep.subr.bf16.mxu0 0
  %1828 = vmatpush1.bf16.msra.mxu0 %v1414
  %1829 = vmatprep.subr.bf16.mxu0 0
  %1830 = vmatpush1.bf16.msra.mxu0 %v1413
  %1831 = vmatprep.subr.bf16.mxu0 0
  %1832 = vmatpush1.bf16.msra.mxu0 %v1412
  %1833 = vmatprep.subr.bf16.mxu0 0
  %1834 = vmatpush1.bf16.msra.mxu0 %v1411
  %1835 = vmatprep.subr.bf16.mxu0 0
  %1836 = vmatpush1.bf16.msra.mxu0 %v1410
  %1837 = vmatprep.subr.bf16.mxu0 0
  %1838 = vmatpush1.bf16.msra.mxu0 %v1409
  %1839 = vmatprep.subr.bf16.mxu0 0
  %1840 = vmatpush1.bf16.msra.mxu0 %v1408
  %1841 = vmatprep.subr.bf16.mxu0 0
  %1842 = vmatpush1.bf16.msra.mxu0 %v1407
  %1843 = vmatprep.subr.bf16.mxu0 0
  %1844 = vmatpush2.bf16.msra.mxu0 %v1422
  %1845 = vmatprep.subr.bf16.mxu0 0
  %1846 = vmatpush2.bf16.msra.mxu0 %v1421
  %1847 = vmatprep.subr.bf16.mxu0 0
  %1848 = vmatpush2.bf16.msra.mxu0 %v1420
  %1849 = vmatprep.subr.bf16.mxu0 0
  %1850 = vmatpush2.bf16.msra.mxu0 %v1419
  %1851 = vmatprep.subr.bf16.mxu0 0
  %1852 = vmatpush2.bf16.msra.mxu0 %v1418
  %1853 = vmatprep.subr.bf16.mxu0 0
  %1854 = vmatpush2.bf16.msra.mxu0 %v1417
  %1855 = vmatprep.subr.bf16.mxu0 0
  %1856 = vmatpush2.bf16.msra.mxu0 %v1416
  %1857 = vmatprep.subr.bf16.mxu0 0
  %1858 = vmatpush2.bf16.msra.mxu0 %v1415
  %1859 = vmatprep.mubr.bf16.mxu0 %v469
  %1860 = vmatmul.mubr.bf16.gmra.mxu0 %v467
  %v1861 = vpop.f32.mrf.mxu0
  %v1862 = vadd.f32 %v1822, %v1861
  %v1863 = vpop.f32.mrf.mxu0
  %v1864 = vpop.f32.mrf.mxu0
  %v1865 = vpop.f32.mrf.mxu0
  %1866 = vdwg.mxu0
  %1867 = vmatprep.subr.bf16.mxu0 0
  %1868 = vmatpush1.bf16.msra.mxu0 %v1430
  %1869 = vmatprep.subr.bf16.mxu0 0
  %1870 = vmatpush1.bf16.msra.mxu0 %v1429
  %1871 = vmatprep.subr.bf16.mxu0 0
  %1872 = vmatpush1.bf16.msra.mxu0 %v1428
  %1873 = vmatprep.subr.bf16.mxu0 0
  %1874 = vmatpush1.bf16.msra.mxu0 %v1427
  %1875 = vmatprep.subr.bf16.mxu0 0
  %1876 = vmatpush1.bf16.msra.mxu0 %v1426
  %1877 = vmatprep.subr.bf16.mxu0 0
  %1878 = vmatpush1.bf16.msra.mxu0 %v1425
  %1879 = vmatprep.subr.bf16.mxu0 0
  %1880 = vmatpush1.bf16.msra.mxu0 %v1424
  %1881 = vmatprep.subr.bf16.mxu0 0
  %1882 = vmatpush1.bf16.msra.mxu0 %v1423
  %1883 = vmatprep.subr.bf16.mxu0 0
  %1884 = vmatpush2.bf16.msra.mxu0 %v1438
  %1885 = vmatprep.subr.bf16.mxu0 0
  %1886 = vmatpush2.bf16.msra.mxu0 %v1437
  %1887 = vmatprep.subr.bf16.mxu0 0
  %1888 = vmatpush2.bf16.msra.mxu0 %v1436
  %1889 = vmatprep.subr.bf16.mxu0 0
  %1890 = vmatpush2.bf16.msra.mxu0 %v1435
  %1891 = vmatprep.subr.bf16.mxu0 0
  %1892 = vmatpush2.bf16.msra.mxu0 %v1434
  %1893 = vmatprep.subr.bf16.mxu0 0
  %1894 = vmatpush2.bf16.msra.mxu0 %v1433
  %1895 = vmatprep.subr.bf16.mxu0 0
  %1896 = vmatpush2.bf16.msra.mxu0 %v1432
  %1897 = vmatprep.subr.bf16.mxu0 0
  %1898 = vmatpush2.bf16.msra.mxu0 %v1431
  %1899 = vmatprep.mubr.bf16.mxu0 %v466
  %1900 = vmatmul.mubr.bf16.gmra.mxu0 %v452
  %v1901 = vpop.f32.mrf.mxu0
  %v1902 = vadd.f32 %v1862, %v1901
  %v1903 = vpop.f32.mrf.mxu0
  %v1904 = vpop.f32.mrf.mxu0
  %v1905 = vpop.f32.mrf.mxu0
  %1906 = vdwg.mxu0
  %1907 = vmatprep.subr.bf16.mxu0 0
  %1908 = vmatpush1.bf16.msra.mxu0 %v1446
  %1909 = vmatprep.subr.bf16.mxu0 0
  %1910 = vmatpush1.bf16.msra.mxu0 %v1445
  %1911 = vmatprep.subr.bf16.mxu0 0
  %1912 = vmatpush1.bf16.msra.mxu0 %v1444
  %1913 = vmatprep.subr.bf16.mxu0 0
  %1914 = vmatpush1.bf16.msra.mxu0 %v1443
  %1915 = vmatprep.subr.bf16.mxu0 0
  %1916 = vmatpush1.bf16.msra.mxu0 %v1442
  %1917 = vmatprep.subr.bf16.mxu0 0
  %1918 = vmatpush1.bf16.msra.mxu0 %v1441
  %1919 = vmatprep.subr.bf16.mxu0 0
  %1920 = vmatpush1.bf16.msra.mxu0 %v1440
  %1921 = vmatprep.subr.bf16.mxu0 0
  %1922 = vmatpush1.bf16.msra.mxu0 %v1439
  %1923 = vmatprep.subr.bf16.mxu0 0
  %1924 = vmatpush2.bf16.msra.mxu0 %v1454
  %1925 = vmatprep.subr.bf16.mxu0 0
  %1926 = vmatpush2.bf16.msra.mxu0 %v1453
  %1927 = vmatprep.subr.bf16.mxu0 0
  %1928 = vmatpush2.bf16.msra.mxu0 %v1452
  %1929 = vmatprep.subr.bf16.mxu0 0
  %1930 = vmatpush2.bf16.msra.mxu0 %v1451
  %1931 = vmatprep.subr.bf16.mxu0 0
  %1932 = vmatpush2.bf16.msra.mxu0 %v1450
  %1933 = vmatprep.subr.bf16.mxu0 0
  %1934 = vmatpush2.bf16.msra.mxu0 %v1449
  %1935 = vmatprep.subr.bf16.mxu0 0
  %1936 = vmatpush2.bf16.msra.mxu0 %v1448
  %1937 = vmatprep.subr.bf16.mxu0 0
  %1938 = vmatpush2.bf16.msra.mxu0 %v1447
  %1939 = vmatprep.mubr.bf16.mxu0 %v470
  %1940 = vmatmul.mubr.bf16.gmra.mxu0 %v468
  %v1941 = vpop.f32.mrf.mxu0
  %v1942 = vadd.f32 %v1902, %v1941
  %v1943 = vpop.f32.mrf.mxu0
  %v1944 = vpop.f32.mrf.mxu0
  %v1945 = vpop.f32.mrf.mxu0
  %1946 = vdwg.mxu0
  %1947 = vmatprep.subr.bf16.mxu0 0
  %1948 = vmatpush1.bf16.msra.mxu0 %v1462
  %1949 = vmatprep.subr.bf16.mxu0 0
  %1950 = vmatpush1.bf16.msra.mxu0 %v1461
  %1951 = vmatprep.subr.bf16.mxu0 0
  %1952 = vmatpush1.bf16.msra.mxu0 %v1460
  %1953 = vmatprep.subr.bf16.mxu0 0
  %1954 = vmatpush1.bf16.msra.mxu0 %v1459
  %1955 = vmatprep.subr.bf16.mxu0 0
  %1956 = vmatpush1.bf16.msra.mxu0 %v1458
  %1957 = vmatprep.subr.bf16.mxu0 0
  %1958 = vmatpush1.bf16.msra.mxu0 %v1457
  %1959 = vmatprep.subr.bf16.mxu0 0
  %1960 = vmatpush1.bf16.msra.mxu0 %v1456
  %1961 = vmatprep.subr.bf16.mxu0 0
  %1962 = vmatpush1.bf16.msra.mxu0 %v1455
  %1963 = vmatprep.subr.bf16.mxu0 0
  %1964 = vmatpush2.bf16.msra.mxu0 %v1470
  %1965 = vmatprep.subr.bf16.mxu0 0
  %1966 = vmatpush2.bf16.msra.mxu0 %v1469
  %1967 = vmatprep.subr.bf16.mxu0 0
  %1968 = vmatpush2.bf16.msra.mxu0 %v1468
  %1969 = vmatprep.subr.bf16.mxu0 0
  %1970 = vmatpush2.bf16.msra.mxu0 %v1467
  %1971 = vmatprep.subr.bf16.mxu0 0
  %1972 = vmatpush2.bf16.msra.mxu0 %v1466
  %1973 = vmatprep.subr.bf16.mxu0 0
  %1974 = vmatpush2.bf16.msra.mxu0 %v1465
  %1975 = vmatprep.subr.bf16.mxu0 0
  %1976 = vmatpush2.bf16.msra.mxu0 %v1464
  %1977 = vmatprep.subr.bf16.mxu0 0
  %1978 = vmatpush2.bf16.msra.mxu0 %v1463
  %1979 = vmatprep.mubr.bf16.mxu0 %v508
  %1980 = vmatmul.mubr.bf16.gmra.mxu0 %v494
  %v1981 = vpop.f32.mrf.mxu0
  %v1982 = vadd.f32 %v1942, %v1981
  %v1983 = vpop.f32.mrf.mxu0
  %v1984 = vpop.f32.mrf.mxu0
  %v1985 = vpop.f32.mrf.mxu0
  %1986 = vdwg.mxu0
  %1987 = vmatprep.subr.bf16.mxu0 0
  %1988 = vmatpush1.bf16.msra.mxu0 %v1478
  %1989 = vmatprep.subr.bf16.mxu0 0
  %1990 = vmatpush1.bf16.msra.mxu0 %v1477
  %1991 = vmatprep.subr.bf16.mxu0 0
  %1992 = vmatpush1.bf16.msra.mxu0 %v1476
  %1993 = vmatprep.subr.bf16.mxu0 0
  %1994 = vmatpush1.bf16.msra.mxu0 %v1475
  %1995 = vmatprep.subr.bf16.mxu0 0
  %1996 = vmatpush1.bf16.msra.mxu0 %v1474
  %1997 = vmatprep.subr.bf16.mxu0 0
  %1998 = vmatpush1.bf16.msra.mxu0 %v1473
  %1999 = vmatprep.subr.bf16.mxu0 0
  %2000 = vmatpush1.bf16.msra.mxu0 %v1472
  %2001 = vmatprep.subr.bf16.mxu0 0
  %2002 = vmatpush1.bf16.msra.mxu0 %v1471
  %2003 = vmatprep.subr.bf16.mxu0 0
  %2004 = vmatpush2.bf16.msra.mxu0 %v1486
  %2005 = vmatprep.subr.bf16.mxu0 0
  %2006 = vmatpush2.bf16.msra.mxu0 %v1485
  %2007 = vmatprep.subr.bf16.mxu0 0
  %2008 = vmatpush2.bf16.msra.mxu0 %v1484
  %2009 = vmatprep.subr.bf16.mxu0 0
  %2010 = vmatpush2.bf16.msra.mxu0 %v1483
  %2011 = vmatprep.subr.bf16.mxu0 0
  %2012 = vmatpush2.bf16.msra.mxu0 %v1482
  %2013 = vmatprep.subr.bf16.mxu0 0
  %2014 = vmatpush2.bf16.msra.mxu0 %v1481
  %2015 = vmatprep.subr.bf16.mxu0 0
  %2016 = vmatpush2.bf16.msra.mxu0 %v1480
  %2017 = vmatprep.subr.bf16.mxu0 0
  %2018 = vmatpush2.bf16.msra.mxu0 %v1479
  %2019 = vmatprep.mubr.bf16.mxu0 %v518
  %2020 = vmatmul.mubr.bf16.gmra.mxu0 %v516
  %v2021 = vpop.f32.mrf.mxu0
  %v2022 = vadd.f32 %v1982, %v2021
  %v2023 = vpop.f32.mrf.mxu0
  %v2024 = vpop.f32.mrf.mxu0
  %v2025 = vpop.f32.mrf.mxu0
  %2026 = vdwg.mxu0
  %2027 = vmatprep.subr.bf16.mxu0 0
  %2028 = vmatpush1.bf16.msra.mxu0 %v1494
  %2029 = vmatprep.subr.bf16.mxu0 0
  %2030 = vmatpush1.bf16.msra.mxu0 %v1493
  %2031 = vmatprep.subr.bf16.mxu0 0
  %2032 = vmatpush1.bf16.msra.mxu0 %v1492
  %2033 = vmatprep.subr.bf16.mxu0 0
  %2034 = vmatpush1.bf16.msra.mxu0 %v1491
  %2035 = vmatprep.subr.bf16.mxu0 0
  %2036 = vmatpush1.bf16.msra.mxu0 %v1490
  %2037 = vmatprep.subr.bf16.mxu0 0
  %2038 = vmatpush1.bf16.msra.mxu0 %v1489
  %2039 = vmatprep.subr.bf16.mxu0 0
  %2040 = vmatpush1.bf16.msra.mxu0 %v1488
  %2041 = vmatprep.subr.bf16.mxu0 0
  %2042 = vmatpush1.bf16.msra.mxu0 %v1487
  %2043 = vmatprep.subr.bf16.mxu0 0
  %2044 = vmatpush2.bf16.msra.mxu0 %v1502
  %2045 = vmatprep.subr.bf16.mxu0 0
  %2046 = vmatpush2.bf16.msra.mxu0 %v1501
  %2047 = vmatprep.subr.bf16.mxu0 0
  %2048 = vmatpush2.bf16.msra.mxu0 %v1500
  %2049 = vmatprep.subr.bf16.mxu0 0
  %2050 = vmatpush2.bf16.msra.mxu0 %v1499
  %2051 = vmatprep.subr.bf16.mxu0 0
  %2052 = vmatpush2.bf16.msra.mxu0 %v1498
  %2053 = vmatprep.subr.bf16.mxu0 0
  %2054 = vmatpush2.bf16.msra.mxu0 %v1497
  %2055 = vmatprep.subr.bf16.mxu0 0
  %2056 = vmatpush2.bf16.msra.mxu0 %v1496
  %2057 = vmatprep.subr.bf16.mxu0 0
  %2058 = vmatpush2.bf16.msra.mxu0 %v1495
  %2059 = vmatprep.mubr.bf16.mxu0 %v515
  %2060 = vmatmul.mubr.bf16.gmra.mxu0 %v501
  %v2061 = vpop.f32.mrf.mxu0
  %v2062 = vadd.f32 %v2022, %v2061
  %v2063 = vpop.f32.mrf.mxu0
  %v2064 = vpop.f32.mrf.mxu0
  %v2065 = vpop.f32.mrf.mxu0
  %2066 = vdwg.mxu0
  %2067 = vmatprep.subr.bf16.mxu0 0
  %2068 = vmatpush1.bf16.msra.mxu0 %v1510
  %2069 = vmatprep.subr.bf16.mxu0 0
  %2070 = vmatpush1.bf16.msra.mxu0 %v1509
  %2071 = vmatprep.subr.bf16.mxu0 0
  %2072 = vmatpush1.bf16.msra.mxu0 %v1508
  %2073 = vmatprep.subr.bf16.mxu0 0
  %2074 = vmatpush1.bf16.msra.mxu0 %v1507
  %2075 = vmatprep.subr.bf16.mxu0 0
  %2076 = vmatpush1.bf16.msra.mxu0 %v1506
  %2077 = vmatprep.subr.bf16.mxu0 0
  %2078 = vmatpush1.bf16.msra.mxu0 %v1505
  %2079 = vmatprep.subr.bf16.mxu0 0
  %2080 = vmatpush1.bf16.msra.mxu0 %v1504
  %2081 = vmatprep.subr.bf16.mxu0 0
  %2082 = vmatpush1.bf16.msra.mxu0 %v1503
  %2083 = vmatprep.subr.bf16.mxu0 0
  %2084 = vmatpush2.bf16.msra.mxu0 %v1518
  %2085 = vmatprep.subr.bf16.mxu0 0
  %2086 = vmatpush2.bf16.msra.mxu0 %v1517
  %2087 = vmatprep.subr.bf16.mxu0 0
  %2088 = vmatpush2.bf16.msra.mxu0 %v1516
  %2089 = vmatprep.subr.bf16.mxu0 0
  %2090 = vmatpush2.bf16.msra.mxu0 %v1515
  %2091 = vmatprep.subr.bf16.mxu0 0
  %2092 = vmatpush2.bf16.msra.mxu0 %v1514
  %2093 = vmatprep.subr.bf16.mxu0 0
  %2094 = vmatpush2.bf16.msra.mxu0 %v1513
  %2095 = vmatprep.subr.bf16.mxu0 0
  %2096 = vmatpush2.bf16.msra.mxu0 %v1512
  %2097 = vmatprep.subr.bf16.mxu0 0
  %2098 = vmatpush2.bf16.msra.mxu0 %v1511
  %2099 = vmatprep.mubr.bf16.mxu0 %v519
  %2100 = vmatmul.mubr.bf16.gmra.mxu0 %v517
  %v2101 = vpop.f32.mrf.mxu0
  %v2102 = vadd.f32 %v2062, %v2101
  %v2103 = vpop.f32.mrf.mxu0
  %v2104 = vpop.f32.mrf.mxu0
  %v2105 = vpop.f32.mrf.mxu0
  %2106 = vdwg.mxu0
  %2107 = vmatprep.subr.bf16.mxu0 0
  %2108 = vmatpush1.bf16.msra.mxu0 %v1526
  %2109 = vmatprep.subr.bf16.mxu0 0
  %2110 = vmatpush1.bf16.msra.mxu0 %v1525
  %2111 = vmatprep.subr.bf16.mxu0 0
  %2112 = vmatpush1.bf16.msra.mxu0 %v1524
  %2113 = vmatprep.subr.bf16.mxu0 0
  %2114 = vmatpush1.bf16.msra.mxu0 %v1523
  %2115 = vmatprep.subr.bf16.mxu0 0
  %2116 = vmatpush1.bf16.msra.mxu0 %v1522
  %2117 = vmatprep.subr.bf16.mxu0 0
  %2118 = vmatpush1.bf16.msra.mxu0 %v1521
  %2119 = vmatprep.subr.bf16.mxu0 0
  %2120 = vmatpush1.bf16.msra.mxu0 %v1520
  %2121 = vmatprep.subr.bf16.mxu0 0
  %2122 = vmatpush1.bf16.msra.mxu0 %v1519
  %2123 = vmatprep.subr.bf16.mxu0 0
  %2124 = vmatpush2.bf16.msra.mxu0 %v1534
  %2125 = vmatprep.subr.bf16.mxu0 0
  %2126 = vmatpush2.bf16.msra.mxu0 %v1533
  %2127 = vmatprep.subr.bf16.mxu0 0
  %2128 = vmatpush2.bf16.msra.mxu0 %v1532
  %2129 = vmatprep.subr.bf16.mxu0 0
  %2130 = vmatpush2.bf16.msra.mxu0 %v1531
  %2131 = vmatprep.subr.bf16.mxu0 0
  %2132 = vmatpush2.bf16.msra.mxu0 %v1530
  %2133 = vmatprep.subr.bf16.mxu0 0
  %2134 = vmatpush2.bf16.msra.mxu0 %v1529
  %2135 = vmatprep.subr.bf16.mxu0 0
  %2136 = vmatpush2.bf16.msra.mxu0 %v1528
  %2137 = vmatprep.subr.bf16.mxu0 0
  %2138 = vmatpush2.bf16.msra.mxu0 %v1527
  %2139 = vmatprep.mubr.bf16.mxu0 %v557
  %2140 = vmatmul.mubr.bf16.gmra.mxu0 %v543
  %v2141 = vpop.f32.mrf.mxu0
  %v2142 = vadd.f32 %v2102, %v2141
  %v2143 = vpop.f32.mrf.mxu0
  %v2144 = vpop.f32.mrf.mxu0
  %v2145 = vpop.f32.mrf.mxu0
  %2146 = vdwg.mxu0
  %2147 = vmatprep.subr.bf16.mxu0 0
  %2148 = vmatpush1.bf16.msra.mxu0 %v1542
  %2149 = vmatprep.subr.bf16.mxu0 0
  %2150 = vmatpush1.bf16.msra.mxu0 %v1541
  %2151 = vmatprep.subr.bf16.mxu0 0
  %2152 = vmatpush1.bf16.msra.mxu0 %v1540
  %2153 = vmatprep.subr.bf16.mxu0 0
  %2154 = vmatpush1.bf16.msra.mxu0 %v1539
  %2155 = vmatprep.subr.bf16.mxu0 0
  %2156 = vmatpush1.bf16.msra.mxu0 %v1538
  %2157 = vmatprep.subr.bf16.mxu0 0
  %2158 = vmatpush1.bf16.msra.mxu0 %v1537
  %2159 = vmatprep.subr.bf16.mxu0 0
  %2160 = vmatpush1.bf16.msra.mxu0 %v1536
  %2161 = vmatprep.subr.bf16.mxu0 0
  %2162 = vmatpush1.bf16.msra.mxu0 %v1535
  %2163 = vmatprep.subr.bf16.mxu0 0
  %2164 = vmatpush2.bf16.msra.mxu0 %v1550
  %2165 = vmatprep.subr.bf16.mxu0 0
  %2166 = vmatpush2.bf16.msra.mxu0 %v1549
  %2167 = vmatprep.subr.bf16.mxu0 0
  %2168 = vmatpush2.bf16.msra.mxu0 %v1548
  %2169 = vmatprep.subr.bf16.mxu0 0
  %2170 = vmatpush2.bf16.msra.mxu0 %v1547
  %2171 = vmatprep.subr.bf16.mxu0 0
  %2172 = vmatpush2.bf16.msra.mxu0 %v1546
  %2173 = vmatprep.subr.bf16.mxu0 0
  %2174 = vmatpush2.bf16.msra.mxu0 %v1545
  %2175 = vmatprep.subr.bf16.mxu0 0
  %2176 = vmatpush2.bf16.msra.mxu0 %v1544
  %2177 = vmatprep.subr.bf16.mxu0 0
  %2178 = vmatpush2.bf16.msra.mxu0 %v1543
  %2179 = vmatprep.mubr.bf16.mxu0 %v567
  %2180 = vmatmul.mubr.bf16.gmra.mxu0 %v565
  %v2181 = vpop.f32.mrf.mxu0
  %v2182 = vadd.f32 %v2142, %v2181
  %v2183 = vpop.f32.mrf.mxu0
  %v2184 = vpop.f32.mrf.mxu0
  %v2185 = vpop.f32.mrf.mxu0
  %2186 = vdwg.mxu0
  %2187 = vmatprep.subr.bf16.mxu0 0
  %2188 = vmatpush1.bf16.msra.mxu0 %v1558
  %2189 = vmatprep.subr.bf16.mxu0 0
  %2190 = vmatpush1.bf16.msra.mxu0 %v1557
  %2191 = vmatprep.subr.bf16.mxu0 0
  %2192 = vmatpush1.bf16.msra.mxu0 %v1556
  %2193 = vmatprep.subr.bf16.mxu0 0
  %2194 = vmatpush1.bf16.msra.mxu0 %v1555
  %2195 = vmatprep.subr.bf16.mxu0 0
  %2196 = vmatpush1.bf16.msra.mxu0 %v1554
  %2197 = vmatprep.subr.bf16.mxu0 0
  %2198 = vmatpush1.bf16.msra.mxu0 %v1553
  %2199 = vmatprep.subr.bf16.mxu0 0
  %2200 = vmatpush1.bf16.msra.mxu0 %v1552
  %2201 = vmatprep.subr.bf16.mxu0 0
  %2202 = vmatpush1.bf16.msra.mxu0 %v1551
  %2203 = vmatprep.subr.bf16.mxu0 0
  %2204 = vmatpush2.bf16.msra.mxu0 %v1566
  %2205 = vmatprep.subr.bf16.mxu0 0
  %2206 = vmatpush2.bf16.msra.mxu0 %v1565
  %2207 = vmatprep.subr.bf16.mxu0 0
  %2208 = vmatpush2.bf16.msra.mxu0 %v1564
  %2209 = vmatprep.subr.bf16.mxu0 0
  %2210 = vmatpush2.bf16.msra.mxu0 %v1563
  %2211 = vmatprep.subr.bf16.mxu0 0
  %2212 = vmatpush2.bf16.msra.mxu0 %v1562
  %2213 = vmatprep.subr.bf16.mxu0 0
  %2214 = vmatpush2.bf16.msra.mxu0 %v1561
  %2215 = vmatprep.subr.bf16.mxu0 0
  %2216 = vmatpush2.bf16.msra.mxu0 %v1560
  %2217 = vmatprep.subr.bf16.mxu0 0
  %2218 = vmatpush2.bf16.msra.mxu0 %v1559
  %2219 = vmatprep.mubr.bf16.mxu0 %v564
  %2220 = vmatmul.mubr.bf16.gmra.mxu0 %v550
  %v2221 = vpop.f32.mrf.mxu0
  %v2222 = vadd.f32 %v2182, %v2221
  %v2223 = vpop.f32.mrf.mxu0
  %v2224 = vpop.f32.mrf.mxu0
  %v2225 = vpop.f32.mrf.mxu0
  %2226 = vdwg.mxu0
  %2227 = vmatprep.subr.bf16.mxu0 0
  %2228 = vmatpush1.bf16.msra.mxu0 %v1574
  %2229 = vmatprep.subr.bf16.mxu0 0
  %2230 = vmatpush1.bf16.msra.mxu0 %v1573
  %2231 = vmatprep.subr.bf16.mxu0 0
  %2232 = vmatpush1.bf16.msra.mxu0 %v1572
  %2233 = vmatprep.subr.bf16.mxu0 0
  %2234 = vmatpush1.bf16.msra.mxu0 %v1571
  %2235 = vmatprep.subr.bf16.mxu0 0
  %2236 = vmatpush1.bf16.msra.mxu0 %v1570
  %2237 = vmatprep.subr.bf16.mxu0 0
  %2238 = vmatpush1.bf16.msra.mxu0 %v1569
  %2239 = vmatprep.subr.bf16.mxu0 0
  %2240 = vmatpush1.bf16.msra.mxu0 %v1568
  %2241 = vmatprep.subr.bf16.mxu0 0
  %2242 = vmatpush1.bf16.msra.mxu0 %v1567
  %2243 = vmatprep.subr.bf16.mxu0 0
  %2244 = vmatpush2.bf16.msra.mxu0 %v1582
  %2245 = vmatprep.subr.bf16.mxu0 0
  %2246 = vmatpush2.bf16.msra.mxu0 %v1581
  %2247 = vmatprep.subr.bf16.mxu0 0
  %2248 = vmatpush2.bf16.msra.mxu0 %v1580
  %2249 = vmatprep.subr.bf16.mxu0 0
  %2250 = vmatpush2.bf16.msra.mxu0 %v1579
  %2251 = vmatprep.subr.bf16.mxu0 0
  %2252 = vmatpush2.bf16.msra.mxu0 %v1578
  %2253 = vmatprep.subr.bf16.mxu0 0
  %2254 = vmatpush2.bf16.msra.mxu0 %v1577
  %2255 = vmatprep.subr.bf16.mxu0 0
  %2256 = vmatpush2.bf16.msra.mxu0 %v1576
  %2257 = vmatprep.subr.bf16.mxu0 0
  %2258 = vmatpush2.bf16.msra.mxu0 %v1575
  %2259 = vmatprep.mubr.bf16.mxu0 %v568
  %2260 = vmatmul.mubr.bf16.gmra.mxu0 %v566
  %v2261 = vpop.f32.mrf.mxu0
  %v2262 = vadd.f32 %v2222, %v2261
  %v2263 = vpop.f32.mrf.mxu0
  %v2264 = vpop.f32.mrf.mxu0
  %v2265 = vpop.f32.mrf.mxu0
  %2266 = vdwg.mxu0
  %2267 = vmatprep.subr.bf16.mxu0 0
  %2268 = vmatpush1.bf16.msra.mxu0 0
  %2269 = vmatprep.subr.bf16.mxu0 0
  %2270 = vmatpush1.bf16.msra.mxu0 0
  %2271 = vmatprep.subr.bf16.mxu0 0
  %2272 = vmatpush1.bf16.msra.mxu0 0
  %2273 = vmatprep.subr.bf16.mxu0 0
  %2274 = vmatpush1.bf16.msra.mxu0 0
  %2275 = vmatprep.subr.bf16.mxu0 0
  %2276 = vmatpush1.bf16.msra.mxu0 %v1586
  %2277 = vmatprep.subr.bf16.mxu0 0
  %2278 = vmatpush1.bf16.msra.mxu0 %v1585
  %2279 = vmatprep.subr.bf16.mxu0 0
  %2280 = vmatpush1.bf16.msra.mxu0 %v1584
  %2281 = vmatprep.subr.bf16.mxu0 0
  %2282 = vmatpush1.bf16.msra.mxu0 %v1583
  %2283 = vmatprep.subr.bf16.mxu0 0
  %2284 = vmatpush2.bf16.msra.mxu0 0
  %2285 = vmatprep.subr.bf16.mxu0 0
  %2286 = vmatpush2.bf16.msra.mxu0 0
  %2287 = vmatprep.subr.bf16.mxu0 0
  %2288 = vmatpush2.bf16.msra.mxu0 0
  %2289 = vmatprep.subr.bf16.mxu0 0
  %2290 = vmatpush2.bf16.msra.mxu0 0
  %2291 = vmatprep.subr.bf16.mxu0 0
  %2292 = vmatpush2.bf16.msra.mxu0 0
  %2293 = vmatprep.subr.bf16.mxu0 0
  %2294 = vmatpush2.bf16.msra.mxu0 0
  %2295 = vmatprep.subr.bf16.mxu0 0
  %2296 = vmatpush2.bf16.msra.mxu0 0
  %2297 = vmatprep.subr.bf16.mxu0 0
  %2298 = vmatpush2.bf16.msra.mxu0 0
  %2299 = vmatprep.mubr.bf16.mxu0 0
  %2300 = vmatmul.mubr.bf16.gmra.mxu0 %v1785
  %v2301 = vpop.f32.mrf.mxu0
  %v2302 = vadd.f32 %v2262, %v2301
  %v2303 = vpop.f32.mrf.mxu0
  %v2304 = vpop.f32.mrf.mxu0
  %v2305 = vpop.f32.mrf.mxu0
  %2306 = vdwg.mxu0
  %v2307 = vmax.f32 %v2302, 0.0
  %2308 = vst [vmem:[%s3] sm:$0x3] %v2307
  // Predicated region
  $region14: #{simple_model_forward.6} parent=0 // pred_check
    _
  $region15: #{simple_model_forward.6} parent=0 // pred_check_branch
    %2310 = sbr.rel (0) target = $region17
  $region16: #{simple_model_forward.6} parent=0 // pred_region
    _
  $region17: #{simple_model_forward.6} parent=0 // pred_fallthru
    _
  // Predicated region
  $region18: #{simple_model_forward.6} parent=0 // pred_check
    _
  $region19: #{simple_model_forward.6} parent=0 // pred_check_branch
    %2312 = sbr.rel (0) target = $region21
  $region20: #{simple_model_forward.6} parent=0 // pred_region
    _
  $region21: #{simple_model_forward.6} parent=0 // pred_fallthru
    _

// kernel: simple_model_forward.5
$region0: #{simple_model_forward.5}
  #allocation0 [shape = 'u32[]', space=smem, size = 0x4, offset = 0x4, fixed_abs, tag = 'smem constant byte address 0x4 - core index']
  #allocation1 [shape = 'u32[144,128]{1,0:T(1,128)}', space=vmem, size = 0x12000, scoped, tag = 'internal scratch']
  %s0 = inlined_call_operand.vmem [shape: bf16[2,288,32], index: 0, kind: input, shape index: {}]
  %s1 = inlined_call_operand.vmem [shape: bf16[9,32,64], index: 1, kind: input, shape index: {}]
  %s2 = inlined_call_operand.vmem [shape: f32[1,64], index: 2, kind: input, shape index: {}]
  %s3 = inlined_call_operand.vmem [shape: f32[2,56,64], index: 3, kind: output, shape index: {}]
  %s4 = sld [smem:[#allocation0]]
  $region45: #{simple_model_forward.5} parent=0
    _
  %s6 = ssub.s32 1, %s4
  %s7 = scalar_select 0, %s6, %s4
  loop: start=0, step=1, limit=4
  $region2: #{simple_model_forward.5} parent=0 // loop_pre_header
    _
  $region3: #{simple_model_forward.5} parent=0 // loop_header
    %s9 = sphi 0, %s13
    %p10 = scmp.ge.s32.totalorder %s9, 4
    %s19 = sphi 0, %s21
    %s22 = sphi 0, %s19
    %s23 = sphi 0, %s22
    %s39 = sphi 0, %s23
    %s43 = sphi 0, %s43
    %s45 = sphi 0, %s43
    %s46 = sphi 0, %s45
    %s60 = sphi 0, %s46
    %s64 = sphi 0, %s64
    %s66 = sphi 0, %s64
    %s67 = sphi 0, %s66
    %s81 = sphi 0, %s67
    %s87 = sphi 0, %s89
    %s90 = sphi 0, %s87
    %s91 = sphi 0, %s90
    %s107 = sphi 0, %s91
  $region4: #{simple_model_forward.5} parent=0 // loop_header_branch
    %12 = sbr.rel (%p10) target = $region8
  $region5: #{simple_model_forward.5} parent=0 // loop_body
    %s14 = ssub.s32 %s9, 1
    %s15 = ssub.s32 %s9, 2
    %s16 = sadd.s32 %s9, 1
    %s17 = ssub.s32 %s9, %s16
    %p18 = scmp.eq.s32.totalorder %s17, 0
    %s20 = sadd.s32 %s19, 1
    %s21 = scalar_select %p18, %s19, %s20
    %p24 = pneg %p18
    %p25 = scmp.eq.s32.totalorder %s9, 1
    %p26 = por %p24, %p25
    %p27 = scmp.ne.s32.totalorder %s19, %s22
    %p28 = scmp.eq.s32.totalorder %s9, 0
    %p29 = por %p27, %p28
    %p30 = scmp.ne.s32.totalorder %s19, %s22
    %p31 = scmp.eq.s32.totalorder %s14, 1
    %p32 = por %p30, %p31
    %p33 = scmp.ne.s32.totalorder %s22, %s23
    %p34 = scmp.eq.s32.totalorder %s14, 0
    %p35 = por %p33, %p34
    %p36 = scmp.ne.s32.totalorder %s22, %s23
    %p37 = scmp.eq.s32.totalorder %s15, 1
    %p38 = por %p36, %p37
    %p40 = scmp.ne.s32.totalorder %s23, %s39
    %p41 = scmp.eq.s32.totalorder %s15, 0
    %p42 = por %p40, %p41
    %s44 = sadd.s32 %s43, 1
    %p47 = scmp.eq.s32.totalorder %s9, 1
    %p48 = scmp.ne.s32.totalorder %s43, %s45
    %p49 = scmp.eq.s32.totalorder %s9, 0
    %p50 = por %p48, %p49
    %p51 = scmp.ne.s32.totalorder %s43, %s45
    %p52 = scmp.eq.s32.totalorder %s14, 1
    %p53 = por %p51, %p52
    %p54 = scmp.ne.s32.totalorder %s45, %s46
    %p55 = scmp.eq.s32.totalorder %s14, 0
    %p56 = por %p54, %p55
    %p57 = scmp.ne.s32.totalorder %s45, %s46
    %p58 = scmp.eq.s32.totalorder %s15, 1
    %p59 = por %p57, %p58
    %p61 = scmp.ne.s32.totalorder %s46, %s60
    %p62 = scmp.eq.s32.totalorder %s15, 0
    %p63 = por %p61, %p62
    %s65 = sadd.s32 %s64, 1
    %p68 = scmp.eq.s32.totalorder %s9, 1
    %p69 = scmp.ne.s32.totalorder %s64, %s66
    %p70 = scmp.eq.s32.totalorder %s9, 0
    %p71 = por %p69, %p70
    %p72 = scmp.ne.s32.totalorder %s64, %s66
    %p73 = scmp.eq.s32.totalorder %s14, 1
    %p74 = por %p72, %p73
    %p75 = scmp.ne.s32.totalorder %s66, %s67
    %p76 = scmp.eq.s32.totalorder %s14, 0
    %p77 = por %p75, %p76
    %p78 = scmp.ne.s32.totalorder %s66, %s67
    %p79 = scmp.eq.s32.totalorder %s15, 1
    %p80 = por %p78, %p79
    %p82 = scmp.ne.s32.totalorder %s67, %s81
    %p83 = scmp.eq.s32.totalorder %s15, 0
    %p84 = por %p82, %p83
    %s85 = ssub.s32 %s9, %s16
    %p86 = scmp.eq.s32.totalorder %s85, 0
    %s88 = sadd.s32 %s87, 1
    %s89 = scalar_select %p86, %s87, %s88
    %p92 = pneg %p86
    %p93 = scmp.eq.s32.totalorder %s9, 1
    %p94 = por %p92, %p93
    %p95 = scmp.ne.s32.totalorder %s87, %s90
    %p96 = scmp.eq.s32.totalorder %s9, 0
    %p97 = por %p95, %p96
    %p98 = scmp.ne.s32.totalorder %s87, %s90
    %p99 = scmp.eq.s32.totalorder %s14, 1
    %p100 = por %p98, %p99
    %p101 = scmp.ne.s32.totalorder %s90, %s91
    %p102 = scmp.eq.s32.totalorder %s14, 0
    %p103 = por %p101, %p102
    %p104 = scmp.ne.s32.totalorder %s90, %s91
    %p105 = scmp.eq.s32.totalorder %s15, 1
    %p106 = por %p104, %p105
    %p108 = scmp.ne.s32.totalorder %s91, %s107
    %p109 = scmp.eq.s32.totalorder %s15, 0
    %p110 = por %p108, %p109
    %p111 = scmp.le.s32.totalorder 1, %s9
    %p112 = scmp.lt.s32.totalorder %s9, 3
    %p113 = pnand %p111, %p112
    %p114 = pneg %p113
    // Predicated region
    $region9: #{simple_model_forward.5} parent=5 // pred_check
      _
    $region10: #{simple_model_forward.5} parent=5 // pred_check_branch
      %116 = sbr.rel (%p113) target = $region12
    $region11: #{simple_model_forward.5} parent=5 // pred_region
      %s117 = ssub.s32 %s9, 1
      // Predicated region
      $region13: #{simple_model_forward.5} parent=11 // pred_check
        %p118 = pneg %p56
      $region14: #{simple_model_forward.5} parent=11 // pred_check_branch
        %120 = sbr.rel (%p118) target = $region16
      $region15: #{simple_model_forward.5} parent=11 // pred_region
        _
      $region16: #{simple_model_forward.5} parent=11 // pred_fallthru
        _
      // Predicated region
      $region17: #{simple_model_forward.5} parent=11 // pred_check
        %p121 = pneg %p77
      $region18: #{simple_model_forward.5} parent=11 // pred_check_branch
        %123 = sbr.rel (%p121) target = $region20
      $region19: #{simple_model_forward.5} parent=11 // pred_region
        _
      $region20: #{simple_model_forward.5} parent=11 // pred_fallthru
        _
    $region12: #{simple_model_forward.5} parent=5 // pred_fallthru
      _
    %p124 = scmp.lt.s32.totalorder %s9, 2
    // Predicated region
    $region21: #{simple_model_forward.5} parent=5 // pred_check
      %p125 = pneg %p124
    $region22: #{simple_model_forward.5} parent=5 // pred_check_branch
      %127 = sbr.rel (%p125) target = $region24
    $region23: #{simple_model_forward.5} parent=5 // pred_region
      // Predicated region
      $region25: #{simple_model_forward.5} parent=23 // pred_check
        %p128 = pneg %p29
      $region26: #{simple_model_forward.5} parent=23 // pred_check_branch
        %130 = sbr.rel (%p128) target = $region28
      $region27: #{simple_model_forward.5} parent=23 // pred_region
        %p131 = scmp.lt.s32.totalorder %s9, 1
        %s132 = scalar_select %p131, %s9, 1
        %s133 = smul.addr %s132, 36
        %s134 = smul.addr %s133, 4
        %s135 = scalar_lea.vmem %s0, %s134
      $region28: #{simple_model_forward.5} parent=23 // pred_fallthru
        _
    $region24: #{simple_model_forward.5} parent=5 // pred_fallthru
      _
    %p136 = scmp.le.s32.totalorder 1, %s9
    %p137 = scmp.lt.s32.totalorder %s9, 3
    %p138 = pnand %p136, %p137
    %p139 = pneg %p138
    // Predicated region
    $region29: #{simple_model_forward.5} parent=5 // pred_check
      _
    $region30: #{simple_model_forward.5} parent=5 // pred_check_branch
      %141 = sbr.rel (%p138) target = $region32
    $region31: #{simple_model_forward.5} parent=5 // pred_region
      %s142 = ssub.s32 %s9, 1
      %p143 = scmp.lt.s32.totalorder %s14, 1
      %s144 = scalar_select %p143, %s14, 1
      %s145 = smul.addr %s144, 36
      %s146 = smul.addr %s145, 4
      %s147 = scalar_lea.vmem %s0, %s146
      %p148 = pneg %p35
      %p149 = pneg %p32
      %p150 = pneg %p56
      %p151 = pneg %p53
      %p152 = pneg %p77
      %p153 = pneg %p74
      %p154 = pneg %p103
      %p155 = pneg %p100
      %p156 = scmp.lt.s32.totalorder %s14, 1
      %s157 = scalar_select %p156, %s14, 1
      %s158 = smul.addr %s157, 7
      %s159 = smul.addr %s158, 8
      %s160 = scalar_lea.vmem %s3, %s159
      %p161 = scmp.lt.s32.totalorder %s14, 1
      %s162 = scalar_select %p161, %s14, 1
      %s163 = smul.addr %s162, 36
      %s164 = smul.addr %s163, 4
      %s165 = scalar_lea.vmem %s0, %s164
      %p166 = scmp.lt.s32.totalorder %s14, 1
      %s167 = scalar_select %p166, %s14, 1
      %s168 = smul.addr %s167, 7
      %s169 = smul.addr %s168, 8
      %s170 = scalar_lea.vmem %s3, %s169
      %v172 = vld [vmem:[%s2] sm:$0x1]
      %v173 = vld [vmem:[%s165] sm:$0xf]
      %v174 = vld [vmem:[%s165 + $0x4] sm:$0xf]
      %v175 = vld [vmem:[%s165 + $0x8] sm:$0xf]
      %v176 = vld [vmem:[%s165 + $0xc] sm:$0xf]
      %v177 = vld [vmem:[%s165 + $0x10] sm:$0xf]
      %v178 = vld [vmem:[%s165 + $0x14] sm:$0xf]
      %v179 = vld [vmem:[%s165 + $0x18] sm:$0xf]
      %v180 = vld [vmem:[%s1] sm:$0xf]
      %v181 = vld [vmem:[%s1 + $0x4] sm:$0xf]
      %v182 = vld [vmem:[%s1 + $0x8] sm:$0xf]
      %v183 = vld [vmem:[%s1 + $0xc] sm:$0xf]
      %v184 = vld [vmem:[%s165 + $0x24] sm:$0xf]
      %v185 = vld [vmem:[%s165 + $0x28] sm:$0xf]
      %v186 = vld [vmem:[%s165 + $0x2c] sm:$0xf]
      %v187 = vld [vmem:[%s165 + $0x30] sm:$0xf]
      %v188 = vld [vmem:[%s165 + $0x34] sm:$0xf]
      %v189 = vld [vmem:[%s165 + $0x38] sm:$0xf]
      %v190 = vld [vmem:[%s165 + $0x3c] sm:$0xf]
      %s191 = scalar_lea.vmem %s1, 16
      %v192 = vld [vmem:[%s191] sm:$0xf]
      %v193 = vld [vmem:[%s191 + $0x4] sm:$0xf]
      %v194 = vld [vmem:[%s191 + $0x8] sm:$0xf]
      %v195 = vld [vmem:[%s191 + $0xc] sm:$0xf]
      %v203 = vunpack.c.l.b16 %v184
      %v204 = vunpack.c.l.b16 %v185
      %v205 = vunpack.c.l.b16 %v186
      %v206 = vunpack.c.l.b16 %v187
      %v207 = vunpack.c.l.b16 %v188
      %v208 = vunpack.c.l.b16 %v189
      %v209 = vunpack.c.l.b16 %v190
      %v210 = vpack.c.b16 %v204, %v203
      %v211 = vpack.c.b16 %v206, %v205
      %v212 = vpack.c.b16 %v208, %v207
      %v213 = vpack.c.b16 %v209, %v209
      %v218 = vunpack.c.l.b16 %v192
      %v219 = vunpack.c.l.b16 %v193
      %v220 = vunpack.c.l.b16 %v194
      %v221 = vunpack.c.l.b16 %v195
      %v222 = vpack.c.b16 %v219, %v218
      %v223 = vpack.c.b16 %v221, %v220
      %vm226 = vcmask 261120
      %v228 = vsel %vm226, %v210, 0
      %v231 = vsel %vm226, %v211, 0
      %v234 = vsel %vm226, %v212, 0
      %v237 = vsel %vm226, %v213, 0
      %239 = vmatprep.subr.bf16.mxu0 0
      %240 = vmatpush1.bf16.msra.mxu0 0
      %241 = vmatprep.subr.bf16.mxu0 0
      %242 = vmatpush1.bf16.msra.mxu0 0
      %243 = vmatprep.subr.bf16.mxu0 0
      %244 = vmatpush1.bf16.msra.mxu0 0
      %245 = vmatprep.subr.bf16.mxu0 0
      %246 = vmatpush1.bf16.msra.mxu0 0
      %247 = vmatprep.subr.bf16.mxu0 0
      %248 = vmatpush1.bf16.msra.mxu0 0
      %249 = vmatprep.subr.bf16.mxu0 0
      %250 = vmatpush1.bf16.msra.mxu0 0
      %251 = vmatprep.subr.bf16.mxu0 0
      %252 = vmatpush1.bf16.msra.mxu0 %v223
      %253 = vmatprep.subr.bf16.mxu0 0
      %254 = vmatpush1.bf16.msra.mxu0 %v222
      %255 = vmatprep.subr.bf16.mxu0 0
      %256 = vmatpush2.bf16.msra.mxu0 0
      %257 = vmatprep.subr.bf16.mxu0 0
      %258 = vmatpush2.bf16.msra.mxu0 0
      %259 = vmatprep.subr.bf16.mxu0 0
      %260 = vmatpush2.bf16.msra.mxu0 0
      %261 = vmatprep.subr.bf16.mxu0 0
      %262 = vmatpush2.bf16.msra.mxu0 0
      %263 = vmatprep.subr.bf16.mxu0 0
      %264 = vmatpush2.bf16.msra.mxu0 0
      %265 = vmatprep.subr.bf16.mxu0 0
      %266 = vmatpush2.bf16.msra.mxu0 0
      %267 = vmatprep.subr.bf16.mxu0 0
      %268 = vmatpush2.bf16.msra.mxu0 0
      %269 = vmatprep.subr.bf16.mxu0 0
      %270 = vmatpush2.bf16.msra.mxu0 0
      %271 = vmatprep.mubr.bf16.mxu0 0
      %272 = vmatmul.mubr.bf16.gmra.mxu0 %v228
      %v273 = vpop.f32.mrf.mxu0
      %v274 = vadd.f32 0.0, %v273
      %v275 = vpop.f32.mrf.mxu0
      %v276 = vpop.f32.mrf.mxu0
      %v277 = vadd.f32 0.0, %v276
      %v278 = vpop.f32.mrf.mxu0
      %279 = vmatprep.mubr.bf16.mxu0 0
      %280 = vmatmul.mubr.bf16.gmra.mxu0 %v231
      %v281 = vpop.f32.mrf.mxu0
      %v282 = vadd.f32 0.0, %v281
      %v283 = vpop.f32.mrf.mxu0
      %v284 = vpop.f32.mrf.mxu0
      %v285 = vadd.f32 0.0, %v284
      %v286 = vpop.f32.mrf.mxu0
      %287 = vmatprep.mubr.bf16.mxu0 0
      %288 = vmatmul.mubr.bf16.gmra.mxu0 %v234
      %v289 = vpop.f32.mrf.mxu0
      %v290 = vadd.f32 0.0, %v289
      %v291 = vpop.f32.mrf.mxu0
      %v292 = vpop.f32.mrf.mxu0
      %v293 = vadd.f32 0.0, %v292
      %v294 = vpop.f32.mrf.mxu0
      %295 = vmatprep.mubr.bf16.mxu0 0
      %296 = vmatmul.mubr.bf16.gmra.mxu0 %v237
      %v297 = vpop.f32.mrf.mxu0
      %v298 = vadd.f32 0.0, %v297
      %v299 = vpop.f32.mrf.mxu0
      %v300 = vpop.f32.mrf.mxu0
      %v301 = vpop.f32.mrf.mxu0
      %302 = vdwg.mxu0
      %v310 = vunpack.c.l.b16 %v173
      %v311 = vunpack.c.l.b16 %v174
      %v312 = vunpack.c.l.b16 %v175
      %v313 = vunpack.c.l.b16 %v176
      %v314 = vunpack.c.l.b16 %v177
      %v315 = vunpack.c.l.b16 %v178
      %v316 = vunpack.c.l.b16 %v179
      %v317 = vpack.c.b16 %v311, %v310
      %v318 = vpack.c.b16 %v313, %v312
      %v319 = vpack.c.b16 %v315, %v314
      %v320 = vpack.c.b16 %v316, %v316
      %v325 = vunpack.c.l.b16 %v180
      %v326 = vunpack.c.l.b16 %v181
      %v327 = vunpack.c.l.b16 %v182
      %v328 = vunpack.c.l.b16 %v183
      %v329 = vpack.c.b16 %v326, %v325
      %v330 = vpack.c.b16 %v328, %v327
      %v334 = vsel %vm226, %v317, 0
      %v337 = vsel %vm226, %v318, 0
      %v340 = vsel %vm226, %v319, 0
      %v343 = vsel %vm226, %v320, 0
      %345 = vmatprep.subr.bf16.mxu0 0
      %346 = vmatpush1.bf16.msra.mxu0 0
      %347 = vmatprep.subr.bf16.mxu0 0
      %348 = vmatpush1.bf16.msra.mxu0 0
      %349 = vmatprep.subr.bf16.mxu0 0
      %350 = vmatpush1.bf16.msra.mxu0 0
      %351 = vmatprep.subr.bf16.mxu0 0
      %352 = vmatpush1.bf16.msra.mxu0 0
      %353 = vmatprep.subr.bf16.mxu0 0
      %354 = vmatpush1.bf16.msra.mxu0 0
      %355 = vmatprep.subr.bf16.mxu0 0
      %356 = vmatpush1.bf16.msra.mxu0 0
      %357 = vmatprep.subr.bf16.mxu0 0
      %358 = vmatpush1.bf16.msra.mxu0 %v330
      %359 = vmatprep.subr.bf16.mxu0 0
      %360 = vmatpush1.bf16.msra.mxu0 %v329
      %361 = vmatprep.subr.bf16.mxu0 0
      %362 = vmatpush2.bf16.msra.mxu0 0
      %363 = vmatprep.subr.bf16.mxu0 0
      %364 = vmatpush2.bf16.msra.mxu0 0
      %365 = vmatprep.subr.bf16.mxu0 0
      %366 = vmatpush2.bf16.msra.mxu0 0
      %367 = vmatprep.subr.bf16.mxu0 0
      %368 = vmatpush2.bf16.msra.mxu0 0
      %369 = vmatprep.subr.bf16.mxu0 0
      %370 = vmatpush2.bf16.msra.mxu0 0
      %371 = vmatprep.subr.bf16.mxu0 0
      %372 = vmatpush2.bf16.msra.mxu0 0
      %373 = vmatprep.subr.bf16.mxu0 0
      %374 = vmatpush2.bf16.msra.mxu0 0
      %375 = vmatprep.subr.bf16.mxu0 0
      %376 = vmatpush2.bf16.msra.mxu0 0
      %377 = vmatprep.mubr.bf16.mxu0 0
      %378 = vmatmul.mubr.bf16.gmra.mxu0 %v334
      %v379 = vpop.f32.mrf.mxu0
      %v380 = vadd.f32 %v274, %v379
      %v381 = vpop.f32.mrf.mxu0
      %v382 = vpop.f32.mrf.mxu0
      %v383 = vadd.f32 %v277, %v382
      %v384 = vpop.f32.mrf.mxu0
      %385 = vmatprep.mubr.bf16.mxu0 0
      %386 = vmatmul.mubr.bf16.gmra.mxu0 %v337
      %v387 = vpop.f32.mrf.mxu0
      %v388 = vadd.f32 %v282, %v387
      %v389 = vpop.f32.mrf.mxu0
      %v390 = vpop.f32.mrf.mxu0
      %v391 = vadd.f32 %v285, %v390
      %v392 = vpop.f32.mrf.mxu0
      %393 = vmatprep.mubr.bf16.mxu0 0
      %394 = vmatmul.mubr.bf16.gmra.mxu0 %v340
      %v395 = vpop.f32.mrf.mxu0
      %v396 = vadd.f32 %v290, %v395
      %v397 = vpop.f32.mrf.mxu0
      %v398 = vpop.f32.mrf.mxu0
      %v399 = vadd.f32 %v293, %v398
      %v400 = vpop.f32.mrf.mxu0
      %401 = vmatprep.mubr.bf16.mxu0 0
      %402 = vmatmul.mubr.bf16.gmra.mxu0 %v343
      %v403 = vpop.f32.mrf.mxu0
      %v404 = vadd.f32 %v298, %v403
      %v405 = vpop.f32.mrf.mxu0
      %v406 = vpop.f32.mrf.mxu0
      %v407 = vpop.f32.mrf.mxu0
      %408 = vdwg.mxu0
      %v409 = vld [vmem:[%s165] sm:$0xf]
      %v410 = vld [vmem:[%s165 + $0x4] sm:$0xf]
      %v411 = vld [vmem:[%s165 + $0x8] sm:$0xf]
      %v412 = vld [vmem:[%s165 + $0xc] sm:$0xf]
      %v413 = vld [vmem:[%s165 + $0x10] sm:$0xf]
      %v414 = vld [vmem:[%s165 + $0x14] sm:$0xf]
      %v415 = vld [vmem:[%s165 + $0x18] sm:$0xf]
      %v416 = vld [vmem:[%s165 + $0x1c] sm:$0x1]
      %s417 = scalar_lea.vmem %s1, 32
      %v418 = vld [vmem:[%s417] sm:$0xf]
      %v419 = vld [vmem:[%s417 + $0x4] sm:$0xf]
      %v420 = vld [vmem:[%s417 + $0x8] sm:$0xf]
      %v421 = vld [vmem:[%s417 + $0xc] sm:$0xf]
      %v430 = vunpack.c.l.b16 %v409
      %v431 = vunpack.c.l.b16 %v410
      %v432 = vunpack.c.l.b16 %v411
      %v433 = vunpack.c.l.b16 %v412
      %v434 = vunpack.c.l.b16 %v413
      %v435 = vunpack.c.l.b16 %v414
      %v436 = vunpack.c.l.b16 %v415
      %v437 = vunpack.c.l.b16 %v416
      %v438 = vpack.c.b16 %v431, %v430
      %v439 = vpack.c.b16 %v433, %v432
      %v440 = vpack.c.b16 %v435, %v434
      %v441 = vpack.c.b16 %v437, %v436
      %vm442 = vsmask.f32 7424
      %v444 = vshrl.u32 %v438, 16
      %v446 = vshll.u32 %v438, 16
      %v448 = vrot.slane %v446, 1
      %v449 = vor.u32 %v444, %v448
      %v451 = vshll.u32 %v439, 16
      %v453 = vrot.slane %v451, 1
      %v454 = vsel %vm442, %v449, %v453
      %v455 = vshrl.u32 %v439, 16
      %v457 = vor.u32 %v455, %v453
      %v459 = vshll.u32 %v440, 16
      %v461 = vrot.slane %v459, 1
      %v462 = vsel %vm442, %v457, %v461
      %v463 = vshrl.u32 %v440, 16
      %v465 = vor.u32 %v463, %v461
      %v467 = vshll.u32 %v441, 16
      %v469 = vrot.slane %v467, 1
      %v470 = vsel %vm442, %v465, %v469
      %v471 = vshrl.u32 %v441, 16
      %v473 = vor.u32 %v471, %v469
      %v478 = vunpack.c.l.b16 %v418
      %v479 = vunpack.c.l.b16 %v419
      %v480 = vunpack.c.l.b16 %v420
      %v481 = vunpack.c.l.b16 %v421
      %v482 = vpack.c.b16 %v479, %v478
      %v483 = vpack.c.b16 %v481, %v480
      %v487 = vsel %vm226, %v454, 0
      %v490 = vsel %vm226, %v462, 0
      %v493 = vsel %vm226, %v470, 0
      %v496 = vsel %vm226, %v473, 0
      %498 = vmatprep.subr.bf16.mxu0 0
      %499 = vmatpush1.bf16.msra.mxu0 0
      %500 = vmatprep.subr.bf16.mxu0 0
      %501 = vmatpush1.bf16.msra.mxu0 0
      %502 = vmatprep.subr.bf16.mxu0 0
      %503 = vmatpush1.bf16.msra.mxu0 0
      %504 = vmatprep.subr.bf16.mxu0 0
      %505 = vmatpush1.bf16.msra.mxu0 0
      %506 = vmatprep.subr.bf16.mxu0 0
      %507 = vmatpush1.bf16.msra.mxu0 0
      %508 = vmatprep.subr.bf16.mxu0 0
      %509 = vmatpush1.bf16.msra.mxu0 0
      %510 = vmatprep.subr.bf16.mxu0 0
      %511 = vmatpush1.bf16.msra.mxu0 %v483
      %512 = vmatprep.subr.bf16.mxu0 0
      %513 = vmatpush1.bf16.msra.mxu0 %v482
      %514 = vmatprep.subr.bf16.mxu0 0
      %515 = vmatpush2.bf16.msra.mxu0 0
      %516 = vmatprep.subr.bf16.mxu0 0
      %517 = vmatpush2.bf16.msra.mxu0 0
      %518 = vmatprep.subr.bf16.mxu0 0
      %519 = vmatpush2.bf16.msra.mxu0 0
      %520 = vmatprep.subr.bf16.mxu0 0
      %521 = vmatpush2.bf16.msra.mxu0 0
      %522 = vmatprep.subr.bf16.mxu0 0
      %523 = vmatpush2.bf16.msra.mxu0 0
      %524 = vmatprep.subr.bf16.mxu0 0
      %525 = vmatpush2.bf16.msra.mxu0 0
      %526 = vmatprep.subr.bf16.mxu0 0
      %527 = vmatpush2.bf16.msra.mxu0 0
      %528 = vmatprep.subr.bf16.mxu0 0
      %529 = vmatpush2.bf16.msra.mxu0 0
      %530 = vmatprep.mubr.bf16.mxu0 0
      %531 = vmatmul.mubr.bf16.gmra.mxu0 %v487
      %v532 = vpop.f32.mrf.mxu0
      %v533 = vadd.f32 0.0, %v532
      %v534 = vpop.f32.mrf.mxu0
      %v535 = vpop.f32.mrf.mxu0
      %v536 = vadd.f32 0.0, %v535
      %v537 = vpop.f32.mrf.mxu0
      %538 = vmatprep.mubr.bf16.mxu0 0
      %539 = vmatmul.mubr.bf16.gmra.mxu0 %v490
      %v540 = vpop.f32.mrf.mxu0
      %v541 = vadd.f32 0.0, %v540
      %v542 = vpop.f32.mrf.mxu0
      %v543 = vpop.f32.mrf.mxu0
      %v544 = vadd.f32 0.0, %v543
      %v545 = vpop.f32.mrf.mxu0
      %546 = vmatprep.mubr.bf16.mxu0 0
      %547 = vmatmul.mubr.bf16.gmra.mxu0 %v493
      %v548 = vpop.f32.mrf.mxu0
      %v549 = vadd.f32 0.0, %v548
      %v550 = vpop.f32.mrf.mxu0
      %v551 = vpop.f32.mrf.mxu0
      %v552 = vadd.f32 0.0, %v551
      %v553 = vpop.f32.mrf.mxu0
      %554 = vmatprep.mubr.bf16.mxu0 0
      %555 = vmatmul.mubr.bf16.gmra.mxu0 %v496
      %v556 = vpop.f32.mrf.mxu0
      %v557 = vadd.f32 0.0, %v556
      %v558 = vpop.f32.mrf.mxu0
      %v559 = vpop.f32.mrf.mxu0
      %v560 = vpop.f32.mrf.mxu0
      %561 = vdwg.mxu0
      %v562 = vadd.f32 %v380, %v533
      %v563 = vadd.f32 %v383, %v536
      %v564 = vadd.f32 %v388, %v541
      %v565 = vadd.f32 %v391, %v544
      %v566 = vadd.f32 %v396, %v549
      %v567 = vadd.f32 %v399, %v552
      %v568 = vadd.f32 %v404, %v557
      %v569 = vld [vmem:[%s165 + $0x48] sm:$0xf]
      %v570 = vld [vmem:[%s165 + $0x4c] sm:$0xf]
      %v571 = vld [vmem:[%s165 + $0x50] sm:$0xf]
      %v572 = vld [vmem:[%s165 + $0x54] sm:$0xf]
      %v573 = vld [vmem:[%s165 + $0x58] sm:$0xf]
      %v574 = vld [vmem:[%s165 + $0x5c] sm:$0xf]
      %v575 = vld [vmem:[%s165 + $0x60] sm:$0xf]
      %s576 = scalar_lea.vmem %s1, 48
      %v577 = vld [vmem:[%s576] sm:$0xf]
      %v578 = vld [vmem:[%s576 + $0x4] sm:$0xf]
      %v579 = vld [vmem:[%s576 + $0x8] sm:$0xf]
      %v580 = vld [vmem:[%s576 + $0xc] sm:$0xf]
      %v588 = vunpack.c.l.b16 %v569
      %v589 = vunpack.c.l.b16 %v570
      %v590 = vunpack.c.l.b16 %v571
      %v591 = vunpack.c.l.b16 %v572
      %v592 = vunpack.c.l.b16 %v573
      %v593 = vunpack.c.l.b16 %v574
      %v594 = vunpack.c.l.b16 %v575
      %v595 = vpack.c.b16 %v589, %v588
      %v596 = vpack.c.b16 %v591, %v590
      %v597 = vpack.c.b16 %v593, %v592
      %v598 = vpack.c.b16 %v594, %v594
      %v603 = vunpack.c.l.b16 %v577
      %v604 = vunpack.c.l.b16 %v578
      %v605 = vunpack.c.l.b16 %v579
      %v606 = vunpack.c.l.b16 %v580
      %v607 = vpack.c.b16 %v604, %v603
      %v608 = vpack.c.b16 %v606, %v605
      %v612 = vsel %vm226, %v595, 0
      %v615 = vsel %vm226, %v596, 0
      %v618 = vsel %vm226, %v597, 0
      %v621 = vsel %vm226, %v598, 0
      %623 = vmatprep.subr.bf16.mxu0 0
      %624 = vmatpush1.bf16.msra.mxu0 0
      %625 = vmatprep.subr.bf16.mxu0 0
      %626 = vmatpush1.bf16.msra.mxu0 0
      %627 = vmatprep.subr.bf16.mxu0 0
      %628 = vmatpush1.bf16.msra.mxu0 0
      %629 = vmatprep.subr.bf16.mxu0 0
      %630 = vmatpush1.bf16.msra.mxu0 0
      %631 = vmatprep.subr.bf16.mxu0 0
      %632 = vmatpush1.bf16.msra.mxu0 0
      %633 = vmatprep.subr.bf16.mxu0 0
      %634 = vmatpush1.bf16.msra.mxu0 0
      %635 = vmatprep.subr.bf16.mxu0 0
      %636 = vmatpush1.bf16.msra.mxu0 %v608
      %637 = vmatprep.subr.bf16.mxu0 0
      %638 = vmatpush1.bf16.msra.mxu0 %v607
      %639 = vmatprep.subr.bf16.mxu0 0
      %640 = vmatpush2.bf16.msra.mxu0 0
      %641 = vmatprep.subr.bf16.mxu0 0
      %642 = vmatpush2.bf16.msra.mxu0 0
      %643 = vmatprep.subr.bf16.mxu0 0
      %644 = vmatpush2.bf16.msra.mxu0 0
      %645 = vmatprep.subr.bf16.mxu0 0
      %646 = vmatpush2.bf16.msra.mxu0 0
      %647 = vmatprep.subr.bf16.mxu0 0
      %648 = vmatpush2.bf16.msra.mxu0 0
      %649 = vmatprep.subr.bf16.mxu0 0
      %650 = vmatpush2.bf16.msra.mxu0 0
      %651 = vmatprep.subr.bf16.mxu0 0
      %652 = vmatpush2.bf16.msra.mxu0 0
      %653 = vmatprep.subr.bf16.mxu0 0
      %654 = vmatpush2.bf16.msra.mxu0 0
      %655 = vmatprep.mubr.bf16.mxu0 0
      %656 = vmatmul.mubr.bf16.gmra.mxu0 %v612
      %v657 = vpop.f32.mrf.mxu0
      %v658 = vadd.f32 0.0, %v657
      %v659 = vpop.f32.mrf.mxu0
      %v660 = vpop.f32.mrf.mxu0
      %v661 = vadd.f32 0.0, %v660
      %v662 = vpop.f32.mrf.mxu0
      %663 = vmatprep.mubr.bf16.mxu0 0
      %664 = vmatmul.mubr.bf16.gmra.mxu0 %v615
      %v665 = vpop.f32.mrf.mxu0
      %v666 = vadd.f32 0.0, %v665
      %v667 = vpop.f32.mrf.mxu0
      %v668 = vpop.f32.mrf.mxu0
      %v669 = vadd.f32 0.0, %v668
      %v670 = vpop.f32.mrf.mxu0
      %671 = vmatprep.mubr.bf16.mxu0 0
      %672 = vmatmul.mubr.bf16.gmra.mxu0 %v618
      %v673 = vpop.f32.mrf.mxu0
      %v674 = vadd.f32 0.0, %v673
      %v675 = vpop.f32.mrf.mxu0
      %v676 = vpop.f32.mrf.mxu0
      %v677 = vadd.f32 0.0, %v676
      %v678 = vpop.f32.mrf.mxu0
      %679 = vmatprep.mubr.bf16.mxu0 0
      %680 = vmatmul.mubr.bf16.gmra.mxu0 %v621
      %v681 = vpop.f32.mrf.mxu0
      %v682 = vadd.f32 0.0, %v681
      %v683 = vpop.f32.mrf.mxu0
      %v684 = vpop.f32.mrf.mxu0
      %v685 = vpop.f32.mrf.mxu0
      %686 = vdwg.mxu0
      %v687 = vadd.f32 %v562, %v658
      %v688 = vadd.f32 %v563, %v661
      %v689 = vadd.f32 %v564, %v666
      %v690 = vadd.f32 %v565, %v669
      %v691 = vadd.f32 %v566, %v674
      %v692 = vadd.f32 %v567, %v677
      %v693 = vadd.f32 %v568, %v682
      %v694 = vld [vmem:[%s165 + $0x6c] sm:$0xf]
      %v695 = vld [vmem:[%s165 + $0x70] sm:$0xf]
      %v696 = vld [vmem:[%s165 + $0x74] sm:$0xf]
      %v697 = vld [vmem:[%s165 + $0x78] sm:$0xf]
      %v698 = vld [vmem:[%s165 + $0x7c] sm:$0xf]
      %v699 = vld [vmem:[%s165 + $0x80] sm:$0xf]
      %v700 = vld [vmem:[%s165 + $0x84] sm:$0xf]
      %s701 = scalar_lea.vmem %s1, 64
      %v702 = vld [vmem:[%s701] sm:$0xf]
      %v703 = vld [vmem:[%s701 + $0x4] sm:$0xf]
      %v704 = vld [vmem:[%s701 + $0x8] sm:$0xf]
      %v705 = vld [vmem:[%s701 + $0xc] sm:$0xf]
      %v713 = vunpack.c.l.b16 %v694
      %v714 = vunpack.c.l.b16 %v695
      %v715 = vunpack.c.l.b16 %v696
      %v716 = vunpack.c.l.b16 %v697
      %v717 = vunpack.c.l.b16 %v698
      %v718 = vunpack.c.l.b16 %v699
      %v719 = vunpack.c.l.b16 %v700
      %v720 = vpack.c.b16 %v714, %v713
      %v721 = vpack.c.b16 %v716, %v715
      %v722 = vpack.c.b16 %v718, %v717
      %v723 = vpack.c.b16 %v719, %v719
      %v728 = vunpack.c.l.b16 %v702
      %v729 = vunpack.c.l.b16 %v703
      %v730 = vunpack.c.l.b16 %v704
      %v731 = vunpack.c.l.b16 %v705
      %v732 = vpack.c.b16 %v729, %v728
      %v733 = vpack.c.b16 %v731, %v730
      %v737 = vsel %vm226, %v720, 0
      %v740 = vsel %vm226, %v721, 0
      %v743 = vsel %vm226, %v722, 0
      %v746 = vsel %vm226, %v723, 0
      %748 = vmatprep.subr.bf16.mxu0 0
      %749 = vmatpush1.bf16.msra.mxu0 0
      %750 = vmatprep.subr.bf16.mxu0 0
      %751 = vmatpush1.bf16.msra.mxu0 0
      %752 = vmatprep.subr.bf16.mxu0 0
      %753 = vmatpush1.bf16.msra.mxu0 0
      %754 = vmatprep.subr.bf16.mxu0 0
      %755 = vmatpush1.bf16.msra.mxu0 0
      %756 = vmatprep.subr.bf16.mxu0 0
      %757 = vmatpush1.bf16.msra.mxu0 0
      %758 = vmatprep.subr.bf16.mxu0 0
      %759 = vmatpush1.bf16.msra.mxu0 0
      %760 = vmatprep.subr.bf16.mxu0 0
      %761 = vmatpush1.bf16.msra.mxu0 %v733
      %762 = vmatprep.subr.bf16.mxu0 0
      %763 = vmatpush1.bf16.msra.mxu0 %v732
      %764 = vmatprep.subr.bf16.mxu0 0
      %765 = vmatpush2.bf16.msra.mxu0 0
      %766 = vmatprep.subr.bf16.mxu0 0
      %767 = vmatpush2.bf16.msra.mxu0 0
      %768 = vmatprep.subr.bf16.mxu0 0
      %769 = vmatpush2.bf16.msra.mxu0 0
      %770 = vmatprep.subr.bf16.mxu0 0
      %771 = vmatpush2.bf16.msra.mxu0 0
      %772 = vmatprep.subr.bf16.mxu0 0
      %773 = vmatpush2.bf16.msra.mxu0 0
      %774 = vmatprep.subr.bf16.mxu0 0
      %775 = vmatpush2.bf16.msra.mxu0 0
      %776 = vmatprep.subr.bf16.mxu0 0
      %777 = vmatpush2.bf16.msra.mxu0 0
      %778 = vmatprep.subr.bf16.mxu0 0
      %779 = vmatpush2.bf16.msra.mxu0 0
      %780 = vmatprep.mubr.bf16.mxu0 0
      %781 = vmatmul.mubr.bf16.gmra.mxu0 %v737
      %v782 = vpop.f32.mrf.mxu0
      %v783 = vadd.f32 0.0, %v782
      %v784 = vpop.f32.mrf.mxu0
      %v785 = vpop.f32.mrf.mxu0
      %v786 = vadd.f32 0.0, %v785
      %v787 = vpop.f32.mrf.mxu0
      %788 = vmatprep.mubr.bf16.mxu0 0
      %789 = vmatmul.mubr.bf16.gmra.mxu0 %v740
      %v790 = vpop.f32.mrf.mxu0
      %v791 = vadd.f32 0.0, %v790
      %v792 = vpop.f32.mrf.mxu0
      %v793 = vpop.f32.mrf.mxu0
      %v794 = vadd.f32 0.0, %v793
      %v795 = vpop.f32.mrf.mxu0
      %796 = vmatprep.mubr.bf16.mxu0 0
      %797 = vmatmul.mubr.bf16.gmra.mxu0 %v743
      %v798 = vpop.f32.mrf.mxu0
      %v799 = vadd.f32 0.0, %v798
      %v800 = vpop.f32.mrf.mxu0
      %v801 = vpop.f32.mrf.mxu0
      %v802 = vadd.f32 0.0, %v801
      %v803 = vpop.f32.mrf.mxu0
      %804 = vmatprep.mubr.bf16.mxu0 0
      %805 = vmatmul.mubr.bf16.gmra.mxu0 %v746
      %v806 = vpop.f32.mrf.mxu0
      %v807 = vadd.f32 0.0, %v806
      %v808 = vpop.f32.mrf.mxu0
      %v809 = vpop.f32.mrf.mxu0
      %v810 = vpop.f32.mrf.mxu0
      %811 = vdwg.mxu0
      %v812 = vadd.f32 %v687, %v783
      %v813 = vadd.f32 %v688, %v786
      %v814 = vadd.f32 %v689, %v791
      %v815 = vadd.f32 %v690, %v794
      %v816 = vadd.f32 %v691, %v799
      %v817 = vadd.f32 %v692, %v802
      %v818 = vadd.f32 %v693, %v807
      %v819 = vld [vmem:[%s165 + $0x48] sm:$0xf]
      %v820 = vld [vmem:[%s165 + $0x4c] sm:$0xf]
      %v821 = vld [vmem:[%s165 + $0x50] sm:$0xf]
      %v822 = vld [vmem:[%s165 + $0x54] sm:$0xf]
      %v823 = vld [vmem:[%s165 + $0x58] sm:$0xf]
      %v824 = vld [vmem:[%s165 + $0x5c] sm:$0xf]
      %v825 = vld [vmem:[%s165 + $0x60] sm:$0xf]
      %v826 = vld [vmem:[%s165 + $0x64] sm:$0x1]
      %s827 = scalar_lea.vmem %s1, 80
      %v828 = vld [vmem:[%s827] sm:$0xf]
      %v829 = vld [vmem:[%s827 + $0x4] sm:$0xf]
      %v830 = vld [vmem:[%s827 + $0x8] sm:$0xf]
      %v831 = vld [vmem:[%s827 + $0xc] sm:$0xf]
      %v840 = vunpack.c.l.b16 %v819
      %v841 = vunpack.c.l.b16 %v820
      %v842 = vunpack.c.l.b16 %v821
      %v843 = vunpack.c.l.b16 %v822
      %v844 = vunpack.c.l.b16 %v823
      %v845 = vunpack.c.l.b16 %v824
      %v846 = vunpack.c.l.b16 %v825
      %v847 = vunpack.c.l.b16 %v826
      %v848 = vpack.c.b16 %v841, %v840
      %v849 = vpack.c.b16 %v843, %v842
      %v850 = vpack.c.b16 %v845, %v844
      %v851 = vpack.c.b16 %v847, %v846
      %v853 = vshrl.u32 %v848, 16
      %v855 = vshll.u32 %v848, 16
      %v857 = vrot.slane %v855, 1
      %v858 = vor.u32 %v853, %v857
      %v860 = vshll.u32 %v849, 16
      %v862 = vrot.slane %v860, 1
      %v863 = vsel %vm442, %v858, %v862
      %v864 = vshrl.u32 %v849, 16
      %v866 = vor.u32 %v864, %v862
      %v868 = vshll.u32 %v850, 16
      %v870 = vrot.slane %v868, 1
      %v871 = vsel %vm442, %v866, %v870
      %v872 = vshrl.u32 %v850, 16
      %v874 = vor.u32 %v872, %v870
      %v876 = vshll.u32 %v851, 16
      %v878 = vrot.slane %v876, 1
      %v879 = vsel %vm442, %v874, %v878
      %v880 = vshrl.u32 %v851, 16
      %v882 = vor.u32 %v880, %v878
      %v887 = vunpack.c.l.b16 %v828
      %v888 = vunpack.c.l.b16 %v829
      %v889 = vunpack.c.l.b16 %v830
      %v890 = vunpack.c.l.b16 %v831
      %v891 = vpack.c.b16 %v888, %v887
      %v892 = vpack.c.b16 %v890, %v889
      %v896 = vsel %vm226, %v863, 0
      %v899 = vsel %vm226, %v871, 0
      %v902 = vsel %vm226, %v879, 0
      %v905 = vsel %vm226, %v882, 0
      %907 = vmatprep.subr.bf16.mxu0 0
      %908 = vmatpush1.bf16.msra.mxu0 0
      %909 = vmatprep.subr.bf16.mxu0 0
      %910 = vmatpush1.bf16.msra.mxu0 0
      %911 = vmatprep.subr.bf16.mxu0 0
      %912 = vmatpush1.bf16.msra.mxu0 0
      %913 = vmatprep.subr.bf16.mxu0 0
      %914 = vmatpush1.bf16.msra.mxu0 0
      %915 = vmatprep.subr.bf16.mxu0 0
      %916 = vmatpush1.bf16.msra.mxu0 0
      %917 = vmatprep.subr.bf16.mxu0 0
      %918 = vmatpush1.bf16.msra.mxu0 0
      %919 = vmatprep.subr.bf16.mxu0 0
      %920 = vmatpush1.bf16.msra.mxu0 %v892
      %921 = vmatprep.subr.bf16.mxu0 0
      %922 = vmatpush1.bf16.msra.mxu0 %v891
      %923 = vmatprep.subr.bf16.mxu0 0
      %924 = vmatpush2.bf16.msra.mxu0 0
      %925 = vmatprep.subr.bf16.mxu0 0
      %926 = vmatpush2.bf16.msra.mxu0 0
      %927 = vmatprep.subr.bf16.mxu0 0
      %928 = vmatpush2.bf16.msra.mxu0 0
      %929 = vmatprep.subr.bf16.mxu0 0
      %930 = vmatpush2.bf16.msra.mxu0 0
      %931 = vmatprep.subr.bf16.mxu0 0
      %932 = vmatpush2.bf16.msra.mxu0 0
      %933 = vmatprep.subr.bf16.mxu0 0
      %934 = vmatpush2.bf16.msra.mxu0 0
      %935 = vmatprep.subr.bf16.mxu0 0
      %936 = vmatpush2.bf16.msra.mxu0 0
      %937 = vmatprep.subr.bf16.mxu0 0
      %938 = vmatpush2.bf16.msra.mxu0 0
      %939 = vmatprep.mubr.bf16.mxu0 0
      %940 = vmatmul.mubr.bf16.gmra.mxu0 %v896
      %v941 = vpop.f32.mrf.mxu0
      %v942 = vadd.f32 0.0, %v941
      %v943 = vpop.f32.mrf.mxu0
      %v944 = vpop.f32.mrf.mxu0
      %v945 = vadd.f32 0.0, %v944
      %v946 = vpop.f32.mrf.mxu0
      %947 = vmatprep.mubr.bf16.mxu0 0
      %948 = vmatmul.mubr.bf16.gmra.mxu0 %v899
      %v949 = vpop.f32.mrf.mxu0
      %v950 = vadd.f32 0.0, %v949
      %v951 = vpop.f32.mrf.mxu0
      %v952 = vpop.f32.mrf.mxu0
      %v953 = vadd.f32 0.0, %v952
      %v954 = vpop.f32.mrf.mxu0
      %955 = vmatprep.mubr.bf16.mxu0 0
      %956 = vmatmul.mubr.bf16.gmra.mxu0 %v902
      %v957 = vpop.f32.mrf.mxu0
      %v958 = vadd.f32 0.0, %v957
      %v959 = vpop.f32.mrf.mxu0
      %v960 = vpop.f32.mrf.mxu0
      %v961 = vadd.f32 0.0, %v960
      %v962 = vpop.f32.mrf.mxu0
      %963 = vmatprep.mubr.bf16.mxu0 0
      %964 = vmatmul.mubr.bf16.gmra.mxu0 %v905
      %v965 = vpop.f32.mrf.mxu0
      %v966 = vadd.f32 0.0, %v965
      %v967 = vpop.f32.mrf.mxu0
      %v968 = vpop.f32.mrf.mxu0
      %v969 = vpop.f32.mrf.mxu0
      %970 = vdwg.mxu0
      %v971 = vadd.f32 %v812, %v942
      %v972 = vadd.f32 %v813, %v945
      %v973 = vadd.f32 %v814, %v950
      %v974 = vadd.f32 %v815, %v953
      %v975 = vadd.f32 %v816, %v958
      %v976 = vadd.f32 %v817, %v961
      %v977 = vadd.f32 %v818, %v966
      %v978 = vld [vmem:[%s165 + $0x1c] sm:$0xf]
      %s979 = scalar_lea.vmem %s1, 96
      %v980 = vld [vmem:[%s979] sm:$0xf]
      %v981 = vld [vmem:[%s979 + $0x4] sm:$0xf]
      %v982 = vld [vmem:[%s979 + $0x8] sm:$0xf]
      %v983 = vld [vmem:[%s979 + $0xc] sm:$0xf]
      %v985 = vunpack.c.l.b16 %v978
      %v986 = vpack.c.b16 %v432, %v431
      %v987 = vpack.c.b16 %v434, %v433
      %v988 = vpack.c.b16 %v436, %v435
      %v989 = vpack.c.b16 %v985, %v985
      %v994 = vunpack.c.l.b16 %v980
      %v995 = vunpack.c.l.b16 %v981
      %v996 = vunpack.c.l.b16 %v982
      %v997 = vunpack.c.l.b16 %v983
      %v998 = vpack.c.b16 %v995, %v994
      %v999 = vpack.c.b16 %v997, %v996
      %v1003 = vsel %vm226, %v986, 0
      %v1006 = vsel %vm226, %v987, 0
      %v1009 = vsel %vm226, %v988, 0
      %v1012 = vsel %vm226, %v989, 0
      %1014 = vmatprep.subr.bf16.mxu0 0
      %1015 = vmatpush1.bf16.msra.mxu0 0
      %1016 = vmatprep.subr.bf16.mxu0 0
      %1017 = vmatpush1.bf16.msra.mxu0 0
      %1018 = vmatprep.subr.bf16.mxu0 0
      %1019 = vmatpush1.bf16.msra.mxu0 0
      %1020 = vmatprep.subr.bf16.mxu0 0
      %1021 = vmatpush1.bf16.msra.mxu0 0
      %1022 = vmatprep.subr.bf16.mxu0 0
      %1023 = vmatpush1.bf16.msra.mxu0 0
      %1024 = vmatprep.subr.bf16.mxu0 0
      %1025 = vmatpush1.bf16.msra.mxu0 0
      %1026 = vmatprep.subr.bf16.mxu0 0
      %1027 = vmatpush1.bf16.msra.mxu0 %v999
      %1028 = vmatprep.subr.bf16.mxu0 0
      %1029 = vmatpush1.bf16.msra.mxu0 %v998
      %1030 = vmatprep.subr.bf16.mxu0 0
      %1031 = vmatpush2.bf16.msra.mxu0 0
      %1032 = vmatprep.subr.bf16.mxu0 0
      %1033 = vmatpush2.bf16.msra.mxu0 0
      %1034 = vmatprep.subr.bf16.mxu0 0
      %1035 = vmatpush2.bf16.msra.mxu0 0
      %1036 = vmatprep.subr.bf16.mxu0 0
      %1037 = vmatpush2.bf16.msra.mxu0 0
      %1038 = vmatprep.subr.bf16.mxu0 0
      %1039 = vmatpush2.bf16.msra.mxu0 0
      %1040 = vmatprep.subr.bf16.mxu0 0
      %1041 = vmatpush2.bf16.msra.mxu0 0
      %1042 = vmatprep.subr.bf16.mxu0 0
      %1043 = vmatpush2.bf16.msra.mxu0 0
      %1044 = vmatprep.subr.bf16.mxu0 0
      %1045 = vmatpush2.bf16.msra.mxu0 0
      %1046 = vmatprep.mubr.bf16.mxu0 0
      %1047 = vmatmul.mubr.bf16.gmra.mxu0 %v1003
      %v1048 = vpop.f32.mrf.mxu0
      %v1049 = vadd.f32 0.0, %v1048
      %v1050 = vpop.f32.mrf.mxu0
      %v1051 = vpop.f32.mrf.mxu0
      %v1052 = vadd.f32 0.0, %v1051
      %v1053 = vpop.f32.mrf.mxu0
      %1054 = vmatprep.mubr.bf16.mxu0 0
      %1055 = vmatmul.mubr.bf16.gmra.mxu0 %v1006
      %v1056 = vpop.f32.mrf.mxu0
      %v1057 = vadd.f32 0.0, %v1056
      %v1058 = vpop.f32.mrf.mxu0
      %v1059 = vpop.f32.mrf.mxu0
      %v1060 = vadd.f32 0.0, %v1059
      %v1061 = vpop.f32.mrf.mxu0
      %1062 = vmatprep.mubr.bf16.mxu0 0
      %1063 = vmatmul.mubr.bf16.gmra.mxu0 %v1009
      %v1064 = vpop.f32.mrf.mxu0
      %v1065 = vadd.f32 0.0, %v1064
      %v1066 = vpop.f32.mrf.mxu0
      %v1067 = vpop.f32.mrf.mxu0
      %v1068 = vadd.f32 0.0, %v1067
      %v1069 = vpop.f32.mrf.mxu0
      %1070 = vmatprep.mubr.bf16.mxu0 0
      %1071 = vmatmul.mubr.bf16.gmra.mxu0 %v1012
      %v1072 = vpop.f32.mrf.mxu0
      %v1073 = vadd.f32 0.0, %v1072
      %v1074 = vpop.f32.mrf.mxu0
      %v1075 = vpop.f32.mrf.mxu0
      %v1076 = vpop.f32.mrf.mxu0
      %1077 = vdwg.mxu0
      %v1078 = vadd.f32 %v971, %v1049
      %v1079 = vadd.f32 %v972, %v1052
      %v1080 = vadd.f32 %v973, %v1057
      %v1081 = vadd.f32 %v974, %v1060
      %v1082 = vadd.f32 %v975, %v1065
      %v1083 = vadd.f32 %v976, %v1068
      %v1084 = vadd.f32 %v977, %v1073
      %v1085 = vld [vmem:[%s165 + $0x28] sm:$0xf]
      %v1086 = vld [vmem:[%s165 + $0x2c] sm:$0xf]
      %v1087 = vld [vmem:[%s165 + $0x30] sm:$0xf]
      %v1088 = vld [vmem:[%s165 + $0x34] sm:$0xf]
      %v1089 = vld [vmem:[%s165 + $0x38] sm:$0xf]
      %v1090 = vld [vmem:[%s165 + $0x3c] sm:$0xf]
      %v1091 = vld [vmem:[%s165 + $0x40] sm:$0xf]
      %s1092 = scalar_lea.vmem %s1, 112
      %v1093 = vld [vmem:[%s1092] sm:$0xf]
      %v1094 = vld [vmem:[%s1092 + $0x4] sm:$0xf]
      %v1095 = vld [vmem:[%s1092 + $0x8] sm:$0xf]
      %v1096 = vld [vmem:[%s1092 + $0xc] sm:$0xf]
      %v1104 = vunpack.c.l.b16 %v1085
      %v1105 = vunpack.c.l.b16 %v1086
      %v1106 = vunpack.c.l.b16 %v1087
      %v1107 = vunpack.c.l.b16 %v1088
      %v1108 = vunpack.c.l.b16 %v1089
      %v1109 = vunpack.c.l.b16 %v1090
      %v1110 = vunpack.c.l.b16 %v1091
      %v1111 = vpack.c.b16 %v1105, %v1104
      %v1112 = vpack.c.b16 %v1107, %v1106
      %v1113 = vpack.c.b16 %v1109, %v1108
      %v1114 = vpack.c.b16 %v1110, %v1110
      %v1119 = vunpack.c.l.b16 %v1093
      %v1120 = vunpack.c.l.b16 %v1094
      %v1121 = vunpack.c.l.b16 %v1095
      %v1122 = vunpack.c.l.b16 %v1096
      %v1123 = vpack.c.b16 %v1120, %v1119
      %v1124 = vpack.c.b16 %v1122, %v1121
      %v1128 = vsel %vm226, %v1111, 0
      %v1131 = vsel %vm226, %v1112, 0
      %v1134 = vsel %vm226, %v1113, 0
      %v1137 = vsel %vm226, %v1114, 0
      %1139 = vmatprep.subr.bf16.mxu0 0
      %1140 = vmatpush1.bf16.msra.mxu0 0
      %1141 = vmatprep.subr.bf16.mxu0 0
      %1142 = vmatpush1.bf16.msra.mxu0 0
      %1143 = vmatprep.subr.bf16.mxu0 0
      %1144 = vmatpush1.bf16.msra.mxu0 0
      %1145 = vmatprep.subr.bf16.mxu0 0
      %1146 = vmatpush1.bf16.msra.mxu0 0
      %1147 = vmatprep.subr.bf16.mxu0 0
      %1148 = vmatpush1.bf16.msra.mxu0 0
      %1149 = vmatprep.subr.bf16.mxu0 0
      %1150 = vmatpush1.bf16.msra.mxu0 0
      %1151 = vmatprep.subr.bf16.mxu0 0
      %1152 = vmatpush1.bf16.msra.mxu0 %v1124
      %1153 = vmatprep.subr.bf16.mxu0 0
      %1154 = vmatpush1.bf16.msra.mxu0 %v1123
      %1155 = vmatprep.subr.bf16.mxu0 0
      %1156 = vmatpush2.bf16.msra.mxu0 0
      %1157 = vmatprep.subr.bf16.mxu0 0
      %1158 = vmatpush2.bf16.msra.mxu0 0
      %1159 = vmatprep.subr.bf16.mxu0 0
      %1160 = vmatpush2.bf16.msra.mxu0 0
      %1161 = vmatprep.subr.bf16.mxu0 0
      %1162 = vmatpush2.bf16.msra.mxu0 0
      %1163 = vmatprep.subr.bf16.mxu0 0
      %1164 = vmatpush2.bf16.msra.mxu0 0
      %1165 = vmatprep.subr.bf16.mxu0 0
      %1166 = vmatpush2.bf16.msra.mxu0 0
      %1167 = vmatprep.subr.bf16.mxu0 0
      %1168 = vmatpush2.bf16.msra.mxu0 0
      %1169 = vmatprep.subr.bf16.mxu0 0
      %1170 = vmatpush2.bf16.msra.mxu0 0
      %1171 = vmatprep.mubr.bf16.mxu0 0
      %1172 = vmatmul.mubr.bf16.gmra.mxu0 %v1128
      %v1173 = vpop.f32.mrf.mxu0
      %v1174 = vadd.f32 0.0, %v1173
      %v1175 = vpop.f32.mrf.mxu0
      %v1176 = vpop.f32.mrf.mxu0
      %v1177 = vadd.f32 0.0, %v1176
      %v1178 = vpop.f32.mrf.mxu0
      %1179 = vmatprep.mubr.bf16.mxu0 0
      %1180 = vmatmul.mubr.bf16.gmra.mxu0 %v1131
      %v1181 = vpop.f32.mrf.mxu0
      %v1182 = vadd.f32 0.0, %v1181
      %v1183 = vpop.f32.mrf.mxu0
      %v1184 = vpop.f32.mrf.mxu0
      %v1185 = vadd.f32 0.0, %v1184
      %v1186 = vpop.f32.mrf.mxu0
      %1187 = vmatprep.mubr.bf16.mxu0 0
      %1188 = vmatmul.mubr.bf16.gmra.mxu0 %v1134
      %v1189 = vpop.f32.mrf.mxu0
      %v1190 = vadd.f32 0.0, %v1189
      %v1191 = vpop.f32.mrf.mxu0
      %v1192 = vpop.f32.mrf.mxu0
      %v1193 = vadd.f32 0.0, %v1192
      %v1194 = vpop.f32.mrf.mxu0
      %1195 = vmatprep.mubr.bf16.mxu0 0
      %1196 = vmatmul.mubr.bf16.gmra.mxu0 %v1137
      %v1197 = vpop.f32.mrf.mxu0
      %v1198 = vadd.f32 0.0, %v1197
      %v1199 = vpop.f32.mrf.mxu0
      %v1200 = vpop.f32.mrf.mxu0
      %v1201 = vpop.f32.mrf.mxu0
      %1202 = vdwg.mxu0
      %v1203 = vadd.f32 %v1078, %v1174
      %v1204 = vadd.f32 %v1079, %v1177
      %v1205 = vadd.f32 %v1080, %v1182
      %v1206 = vadd.f32 %v1081, %v1185
      %v1207 = vadd.f32 %v1082, %v1190
      %v1208 = vadd.f32 %v1083, %v1193
      %v1209 = vadd.f32 %v1084, %v1198
      %v1210 = vld [vmem:[%s165 + $0x4] sm:$0xf]
      %v1211 = vld [vmem:[%s165 + $0x8] sm:$0xf]
      %v1212 = vld [vmem:[%s165 + $0xc] sm:$0xf]
      %v1213 = vld [vmem:[%s165 + $0x10] sm:$0xf]
      %v1214 = vld [vmem:[%s165 + $0x14] sm:$0xf]
      %v1215 = vld [vmem:[%s165 + $0x18] sm:$0xf]
      %v1216 = vld [vmem:[%s165 + $0x1c] sm:$0xf]
      %v1217 = vld [vmem:[%s165 + $0x20] sm:$0x1]
      %s1218 = scalar_lea.vmem %s1, 128
      %v1219 = vld [vmem:[%s1218] sm:$0xf]
      %v1220 = vld [vmem:[%s1218 + $0x4] sm:$0xf]
      %v1221 = vld [vmem:[%s1218 + $0x8] sm:$0xf]
      %v1222 = vld [vmem:[%s1218 + $0xc] sm:$0xf]
      %v1231 = vunpack.c.l.b16 %v1210
      %v1232 = vunpack.c.l.b16 %v1211
      %v1233 = vunpack.c.l.b16 %v1212
      %v1234 = vunpack.c.l.b16 %v1213
      %v1235 = vunpack.c.l.b16 %v1214
      %v1236 = vunpack.c.l.b16 %v1215
      %v1237 = vunpack.c.l.b16 %v1216
      %v1238 = vunpack.c.l.b16 %v1217
      %v1239 = vpack.c.b16 %v1232, %v1231
      %v1240 = vpack.c.b16 %v1234, %v1233
      %v1241 = vpack.c.b16 %v1236, %v1235
      %v1242 = vpack.c.b16 %v1238, %v1237
      %v1244 = vshrl.u32 %v1239, 16
      %v1246 = vshll.u32 %v1239, 16
      %v1248 = vrot.slane %v1246, 1
      %v1249 = vor.u32 %v1244, %v1248
      %v1251 = vshll.u32 %v1240, 16
      %v1253 = vrot.slane %v1251, 1
      %v1254 = vsel %vm442, %v1249, %v1253
      %v1255 = vshrl.u32 %v1240, 16
      %v1257 = vor.u32 %v1255, %v1253
      %v1259 = vshll.u32 %v1241, 16
      %v1261 = vrot.slane %v1259, 1
      %v1262 = vsel %vm442, %v1257, %v1261
      %v1263 = vshrl.u32 %v1241, 16
      %v1265 = vor.u32 %v1263, %v1261
      %v1267 = vshll.u32 %v1242, 16
      %v1269 = vrot.slane %v1267, 1
      %v1270 = vsel %vm442, %v1265, %v1269
      %v1271 = vshrl.u32 %v1242, 16
      %v1273 = vor.u32 %v1271, %v1269
      %v1278 = vunpack.c.l.b16 %v1219
      %v1279 = vunpack.c.l.b16 %v1220
      %v1280 = vunpack.c.l.b16 %v1221
      %v1281 = vunpack.c.l.b16 %v1222
      %v1282 = vpack.c.b16 %v1279, %v1278
      %v1283 = vpack.c.b16 %v1281, %v1280
      %v1287 = vsel %vm226, %v1254, 0
      %v1290 = vsel %vm226, %v1262, 0
      %v1293 = vsel %vm226, %v1270, 0
      %v1296 = vsel %vm226, %v1273, 0
      %1298 = vmatprep.subr.bf16.mxu0 0
      %1299 = vmatpush1.bf16.msra.mxu0 0
      %1300 = vmatprep.subr.bf16.mxu0 0
      %1301 = vmatpush1.bf16.msra.mxu0 0
      %1302 = vmatprep.subr.bf16.mxu0 0
      %1303 = vmatpush1.bf16.msra.mxu0 0
      %1304 = vmatprep.subr.bf16.mxu0 0
      %1305 = vmatpush1.bf16.msra.mxu0 0
      %1306 = vmatprep.subr.bf16.mxu0 0
      %1307 = vmatpush1.bf16.msra.mxu0 0
      %1308 = vmatprep.subr.bf16.mxu0 0
      %1309 = vmatpush1.bf16.msra.mxu0 0
      %1310 = vmatprep.subr.bf16.mxu0 0
      %1311 = vmatpush1.bf16.msra.mxu0 %v1283
      %1312 = vmatprep.subr.bf16.mxu0 0
      %1313 = vmatpush1.bf16.msra.mxu0 %v1282
      %1314 = vmatprep.subr.bf16.mxu0 0
      %1315 = vmatpush2.bf16.msra.mxu0 0
      %1316 = vmatprep.subr.bf16.mxu0 0
      %1317 = vmatpush2.bf16.msra.mxu0 0
      %1318 = vmatprep.subr.bf16.mxu0 0
      %1319 = vmatpush2.bf16.msra.mxu0 0
      %1320 = vmatprep.subr.bf16.mxu0 0
      %1321 = vmatpush2.bf16.msra.mxu0 0
      %1322 = vmatprep.subr.bf16.mxu0 0
      %1323 = vmatpush2.bf16.msra.mxu0 0
      %1324 = vmatprep.subr.bf16.mxu0 0
      %1325 = vmatpush2.bf16.msra.mxu0 0
      %1326 = vmatprep.subr.bf16.mxu0 0
      %1327 = vmatpush2.bf16.msra.mxu0 0
      %1328 = vmatprep.subr.bf16.mxu0 0
      %1329 = vmatpush2.bf16.msra.mxu0 0
      %1330 = vmatprep.mubr.bf16.mxu0 0
      %1331 = vmatmul.mubr.bf16.gmra.mxu0 %v1287
      %v1332 = vpop.f32.mrf.mxu0
      %v1333 = vadd.f32 0.0, %v1332
      %v1334 = vpop.f32.mrf.mxu0
      %v1335 = vpop.f32.mrf.mxu0
      %v1336 = vadd.f32 0.0, %v1335
      %v1337 = vpop.f32.mrf.mxu0
      %1338 = vmatprep.mubr.bf16.mxu0 0
      %1339 = vmatmul.mubr.bf16.gmra.mxu0 %v1290
      %v1340 = vpop.f32.mrf.mxu0
      %v1341 = vadd.f32 0.0, %v1340
      %v1342 = vpop.f32.mrf.mxu0
      %v1343 = vpop.f32.mrf.mxu0
      %v1344 = vadd.f32 0.0, %v1343
      %v1345 = vpop.f32.mrf.mxu0
      %1346 = vmatprep.mubr.bf16.mxu0 0
      %1347 = vmatmul.mubr.bf16.gmra.mxu0 %v1293
      %v1348 = vpop.f32.mrf.mxu0
      %v1349 = vadd.f32 0.0, %v1348
      %v1350 = vpop.f32.mrf.mxu0
      %v1351 = vpop.f32.mrf.mxu0
      %v1352 = vadd.f32 0.0, %v1351
      %v1353 = vpop.f32.mrf.mxu0
      %1354 = vmatprep.mubr.bf16.mxu0 0
      %1355 = vmatmul.mubr.bf16.gmra.mxu0 %v1296
      %v1356 = vpop.f32.mrf.mxu0
      %v1357 = vadd.f32 0.0, %v1356
      %v1358 = vpop.f32.mrf.mxu0
      %v1359 = vpop.f32.mrf.mxu0
      %v1360 = vpop.f32.mrf.mxu0
      %1361 = vdwg.mxu0
      %v1362 = vadd.f32 %v1203, %v1333
      %v1363 = vadd.f32 %v1204, %v1336
      %v1364 = vadd.f32 %v1205, %v1341
      %v1365 = vadd.f32 %v1206, %v1344
      %v1366 = vadd.f32 %v1207, %v1349
      %v1367 = vadd.f32 %v1208, %v1352
      %v1368 = vadd.f32 %v1209, %v1357
      %v1370 = vlaneseq
      %v1371 = vshrl.u32 %v1370, 7
      %v1372 = vsub.s32 0, %v1371
      %v1373 = vrot.slane %v172, %v1372
      %v1375 = vadd.f32 %v1362, %v1373
      %v1376 = vadd.f32 %v1363, %v1373
      %v1377 = vadd.f32 %v1364, %v1373
      %v1378 = vadd.f32 %v1365, %v1373
      %v1379 = vadd.f32 %v1366, %v1373
      %v1380 = vadd.f32 %v1367, %v1373
      %v1381 = vadd.f32 %v1368, %v1373
      %v1382 = vmax.f32 %v1375, 0.0
      %v1383 = vmax.f32 %v1376, 0.0
      %v1384 = vmax.f32 %v1377, 0.0
      %v1385 = vmax.f32 %v1378, 0.0
      %v1386 = vmax.f32 %v1379, 0.0
      %v1387 = vmax.f32 %v1380, 0.0
      %v1388 = vmax.f32 %v1381, 0.0
      %1389 = vmatprep.subr.bf16.mxu0 0
      %1390 = vmatpush1.bf16.msra.mxu0 0
      %1391 = vmatprep.subr.bf16.mxu0 0
      %1392 = vmatpush1.bf16.msra.mxu0 0
      %1393 = vmatprep.subr.bf16.mxu0 0
      %1394 = vmatpush1.bf16.msra.mxu0 0
      %1395 = vmatprep.subr.bf16.mxu0 0
      %1396 = vmatpush1.bf16.msra.mxu0 0
      %1397 = vmatprep.subr.bf16.mxu0 0
      %1398 = vmatpush1.bf16.msra.mxu0 0
      %1399 = vmatprep.subr.bf16.mxu0 0
      %1400 = vmatpush1.bf16.msra.mxu0 0
      %1401 = vmatprep.subr.bf16.mxu0 0
      %1402 = vmatpush1.bf16.msra.mxu0 %v223
      %1403 = vmatprep.subr.bf16.mxu0 0
      %1404 = vmatpush1.bf16.msra.mxu0 %v222
      %1405 = vmatprep.subr.bf16.mxu0 0
      %1406 = vmatpush2.bf16.msra.mxu0 0
      %1407 = vmatprep.subr.bf16.mxu0 0
      %1408 = vmatpush2.bf16.msra.mxu0 0
      %1409 = vmatprep.subr.bf16.mxu0 0
      %1410 = vmatpush2.bf16.msra.mxu0 0
      %1411 = vmatprep.subr.bf16.mxu0 0
      %1412 = vmatpush2.bf16.msra.mxu0 0
      %1413 = vmatprep.subr.bf16.mxu0 0
      %1414 = vmatpush2.bf16.msra.mxu0 0
      %1415 = vmatprep.subr.bf16.mxu0 0
      %1416 = vmatpush2.bf16.msra.mxu0 0
      %1417 = vmatprep.subr.bf16.mxu0 0
      %1418 = vmatpush2.bf16.msra.mxu0 0
      %1419 = vmatprep.subr.bf16.mxu0 0
      %1420 = vmatpush2.bf16.msra.mxu0 0
      %1421 = vmatprep.mubr.bf16.mxu0 0
      %1422 = vmatmul.mubr.bf16.gmra.mxu0 %v487
      %v1423 = vpop.f32.mrf.mxu0
      %v1424 = vadd.f32 0.0, %v1423
      %v1425 = vpop.f32.mrf.mxu0
      %v1426 = vpop.f32.mrf.mxu0
      %v1427 = vadd.f32 0.0, %v1426
      %v1428 = vpop.f32.mrf.mxu0
      %1429 = vmatprep.mubr.bf16.mxu0 0
      %1430 = vmatmul.mubr.bf16.gmra.mxu0 %v490
      %v1431 = vpop.f32.mrf.mxu0
      %v1432 = vadd.f32 0.0, %v1431
      %v1433 = vpop.f32.mrf.mxu0
      %v1434 = vpop.f32.mrf.mxu0
      %v1435 = vadd.f32 0.0, %v1434
      %v1436 = vpop.f32.mrf.mxu0
      %1437 = vmatprep.mubr.bf16.mxu0 0
      %1438 = vmatmul.mubr.bf16.gmra.mxu0 %v493
      %v1439 = vpop.f32.mrf.mxu0
      %v1440 = vadd.f32 0.0, %v1439
      %v1441 = vpop.f32.mrf.mxu0
      %v1442 = vpop.f32.mrf.mxu0
      %v1443 = vadd.f32 0.0, %v1442
      %v1444 = vpop.f32.mrf.mxu0
      %1445 = vmatprep.mubr.bf16.mxu0 0
      %1446 = vmatmul.mubr.bf16.gmra.mxu0 %v496
      %v1447 = vpop.f32.mrf.mxu0
      %v1448 = vadd.f32 0.0, %v1447
      %v1449 = vpop.f32.mrf.mxu0
      %v1450 = vpop.f32.mrf.mxu0
      %v1451 = vpop.f32.mrf.mxu0
      %1452 = vdwg.mxu0
      %1453 = vmatprep.subr.bf16.mxu0 0
      %1454 = vmatpush1.bf16.msra.mxu0 0
      %1455 = vmatprep.subr.bf16.mxu0 0
      %1456 = vmatpush1.bf16.msra.mxu0 0
      %1457 = vmatprep.subr.bf16.mxu0 0
      %1458 = vmatpush1.bf16.msra.mxu0 0
      %1459 = vmatprep.subr.bf16.mxu0 0
      %1460 = vmatpush1.bf16.msra.mxu0 0
      %1461 = vmatprep.subr.bf16.mxu0 0
      %1462 = vmatpush1.bf16.msra.mxu0 0
      %1463 = vmatprep.subr.bf16.mxu0 0
      %1464 = vmatpush1.bf16.msra.mxu0 0
      %1465 = vmatprep.subr.bf16.mxu0 0
      %1466 = vmatpush1.bf16.msra.mxu0 %v330
      %1467 = vmatprep.subr.bf16.mxu0 0
      %1468 = vmatpush1.bf16.msra.mxu0 %v329
      %1469 = vmatprep.subr.bf16.mxu0 0
      %1470 = vmatpush2.bf16.msra.mxu0 0
      %1471 = vmatprep.subr.bf16.mxu0 0
      %1472 = vmatpush2.bf16.msra.mxu0 0
      %1473 = vmatprep.subr.bf16.mxu0 0
      %1474 = vmatpush2.bf16.msra.mxu0 0
      %1475 = vmatprep.subr.bf16.mxu0 0
      %1476 = vmatpush2.bf16.msra.mxu0 0
      %1477 = vmatprep.subr.bf16.mxu0 0
      %1478 = vmatpush2.bf16.msra.mxu0 0
      %1479 = vmatprep.subr.bf16.mxu0 0
      %1480 = vmatpush2.bf16.msra.mxu0 0
      %1481 = vmatprep.subr.bf16.mxu0 0
      %1482 = vmatpush2.bf16.msra.mxu0 0
      %1483 = vmatprep.subr.bf16.mxu0 0
      %1484 = vmatpush2.bf16.msra.mxu0 0
      %1485 = vmatprep.mubr.bf16.mxu0 0
      %1486 = vmatmul.mubr.bf16.gmra.mxu0 %v228
      %v1487 = vpop.f32.mrf.mxu0
      %v1488 = vadd.f32 %v1424, %v1487
      %v1489 = vpop.f32.mrf.mxu0
      %v1490 = vpop.f32.mrf.mxu0
      %v1491 = vadd.f32 %v1427, %v1490
      %v1492 = vpop.f32.mrf.mxu0
      %1493 = vmatprep.mubr.bf16.mxu0 0
      %1494 = vmatmul.mubr.bf16.gmra.mxu0 %v231
      %v1495 = vpop.f32.mrf.mxu0
      %v1496 = vadd.f32 %v1432, %v1495
      %v1497 = vpop.f32.mrf.mxu0
      %v1498 = vpop.f32.mrf.mxu0
      %v1499 = vadd.f32 %v1435, %v1498
      %v1500 = vpop.f32.mrf.mxu0
      %1501 = vmatprep.mubr.bf16.mxu0 0
      %1502 = vmatmul.mubr.bf16.gmra.mxu0 %v234
      %v1503 = vpop.f32.mrf.mxu0
      %v1504 = vadd.f32 %v1440, %v1503
      %v1505 = vpop.f32.mrf.mxu0
      %v1506 = vpop.f32.mrf.mxu0
      %v1507 = vadd.f32 %v1443, %v1506
      %v1508 = vpop.f32.mrf.mxu0
      %1509 = vmatprep.mubr.bf16.mxu0 0
      %1510 = vmatmul.mubr.bf16.gmra.mxu0 %v237
      %v1511 = vpop.f32.mrf.mxu0
      %v1512 = vadd.f32 %v1448, %v1511
      %v1513 = vpop.f32.mrf.mxu0
      %v1514 = vpop.f32.mrf.mxu0
      %v1515 = vpop.f32.mrf.mxu0
      %1516 = vdwg.mxu0
      %v1517 = vld [vmem:[%s165 + $0x24] sm:$0xf]
      %v1518 = vld [vmem:[%s165 + $0x40] sm:$0x1]
      %v1521 = vunpack.c.l.b16 %v1517
      %v1522 = vunpack.c.l.b16 %v1518
      %v1523 = vpack.c.b16 %v1104, %v1521
      %v1524 = vpack.c.b16 %v1106, %v1105
      %v1525 = vpack.c.b16 %v1108, %v1107
      %v1526 = vpack.c.b16 %v1522, %v1109
      %v1528 = vshrl.u32 %v1523, 16
      %v1530 = vshll.u32 %v1523, 16
      %v1532 = vrot.slane %v1530, 1
      %v1533 = vor.u32 %v1528, %v1532
      %v1535 = vshll.u32 %v1524, 16
      %v1537 = vrot.slane %v1535, 1
      %v1538 = vsel %vm442, %v1533, %v1537
      %v1539 = vshrl.u32 %v1524, 16
      %v1541 = vor.u32 %v1539, %v1537
      %v1543 = vshll.u32 %v1525, 16
      %v1545 = vrot.slane %v1543, 1
      %v1546 = vsel %vm442, %v1541, %v1545
      %v1547 = vshrl.u32 %v1525, 16
      %v1549 = vor.u32 %v1547, %v1545
      %v1551 = vshll.u32 %v1526, 16
      %v1553 = vrot.slane %v1551, 1
      %v1554 = vsel %vm442, %v1549, %v1553
      %v1555 = vshrl.u32 %v1526, 16
      %v1557 = vor.u32 %v1555, %v1553
      %v1559 = vsel %vm226, %v1538, 0
      %v1562 = vsel %vm226, %v1546, 0
      %v1565 = vsel %vm226, %v1554, 0
      %v1568 = vsel %vm226, %v1557, 0
      %1570 = vmatprep.subr.bf16.mxu0 0
      %1571 = vmatpush1.bf16.msra.mxu0 0
      %1572 = vmatprep.subr.bf16.mxu0 0
      %1573 = vmatpush1.bf16.msra.mxu0 0
      %1574 = vmatprep.subr.bf16.mxu0 0
      %1575 = vmatpush1.bf16.msra.mxu0 0
      %1576 = vmatprep.subr.bf16.mxu0 0
      %1577 = vmatpush1.bf16.msra.mxu0 0
      %1578 = vmatprep.subr.bf16.mxu0 0
      %1579 = vmatpush1.bf16.msra.mxu0 0
      %1580 = vmatprep.subr.bf16.mxu0 0
      %1581 = vmatpush1.bf16.msra.mxu0 0
      %1582 = vmatprep.subr.bf16.mxu0 0
      %1583 = vmatpush1.bf16.msra.mxu0 %v483
      %1584 = vmatprep.subr.bf16.mxu0 0
      %1585 = vmatpush1.bf16.msra.mxu0 %v482
      %1586 = vmatprep.subr.bf16.mxu0 0
      %1587 = vmatpush2.bf16.msra.mxu0 0
      %1588 = vmatprep.subr.bf16.mxu0 0
      %1589 = vmatpush2.bf16.msra.mxu0 0
      %1590 = vmatprep.subr.bf16.mxu0 0
      %1591 = vmatpush2.bf16.msra.mxu0 0
      %1592 = vmatprep.subr.bf16.mxu0 0
      %1593 = vmatpush2.bf16.msra.mxu0 0
      %1594 = vmatprep.subr.bf16.mxu0 0
      %1595 = vmatpush2.bf16.msra.mxu0 0
      %1596 = vmatprep.subr.bf16.mxu0 0
      %1597 = vmatpush2.bf16.msra.mxu0 0
      %1598 = vmatprep.subr.bf16.mxu0 0
      %1599 = vmatpush2.bf16.msra.mxu0 0
      %1600 = vmatprep.subr.bf16.mxu0 0
      %1601 = vmatpush2.bf16.msra.mxu0 0
      %1602 = vmatprep.mubr.bf16.mxu0 0
      %1603 = vmatmul.mubr.bf16.gmra.mxu0 %v1559
      %v1604 = vpop.f32.mrf.mxu0
      %v1605 = vadd.f32 0.0, %v1604
      %v1606 = vpop.f32.mrf.mxu0
      %v1607 = vpop.f32.mrf.mxu0
      %v1608 = vadd.f32 0.0, %v1607
      %v1609 = vpop.f32.mrf.mxu0
      %1610 = vmatprep.mubr.bf16.mxu0 0
      %1611 = vmatmul.mubr.bf16.gmra.mxu0 %v1562
      %v1612 = vpop.f32.mrf.mxu0
      %v1613 = vadd.f32 0.0, %v1612
      %v1614 = vpop.f32.mrf.mxu0
      %v1615 = vpop.f32.mrf.mxu0
      %v1616 = vadd.f32 0.0, %v1615
      %v1617 = vpop.f32.mrf.mxu0
      %1618 = vmatprep.mubr.bf16.mxu0 0
      %1619 = vmatmul.mubr.bf16.gmra.mxu0 %v1565
      %v1620 = vpop.f32.mrf.mxu0
      %v1621 = vadd.f32 0.0, %v1620
      %v1622 = vpop.f32.mrf.mxu0
      %v1623 = vpop.f32.mrf.mxu0
      %v1624 = vadd.f32 0.0, %v1623
      %v1625 = vpop.f32.mrf.mxu0
      %1626 = vmatprep.mubr.bf16.mxu0 0
      %1627 = vmatmul.mubr.bf16.gmra.mxu0 %v1568
      %v1628 = vpop.f32.mrf.mxu0
      %v1629 = vadd.f32 0.0, %v1628
      %v1630 = vpop.f32.mrf.mxu0
      %v1631 = vpop.f32.mrf.mxu0
      %v1632 = vpop.f32.mrf.mxu0
      %1633 = vdwg.mxu0
      %v1634 = vadd.f32 %v1488, %v1605
      %v1635 = vadd.f32 %v1491, %v1608
      %v1636 = vadd.f32 %v1496, %v1613
      %v1637 = vadd.f32 %v1499, %v1616
      %v1638 = vadd.f32 %v1504, %v1621
      %v1639 = vadd.f32 %v1507, %v1624
      %v1640 = vadd.f32 %v1512, %v1629
      %1641 = vmatprep.subr.bf16.mxu0 0
      %1642 = vmatpush1.bf16.msra.mxu0 0
      %1643 = vmatprep.subr.bf16.mxu0 0
      %1644 = vmatpush1.bf16.msra.mxu0 0
      %1645 = vmatprep.subr.bf16.mxu0 0
      %1646 = vmatpush1.bf16.msra.mxu0 0
      %1647 = vmatprep.subr.bf16.mxu0 0
      %1648 = vmatpush1.bf16.msra.mxu0 0
      %1649 = vmatprep.subr.bf16.mxu0 0
      %1650 = vmatpush1.bf16.msra.mxu0 0
      %1651 = vmatprep.subr.bf16.mxu0 0
      %1652 = vmatpush1.bf16.msra.mxu0 0
      %1653 = vmatprep.subr.bf16.mxu0 0
      %1654 = vmatpush1.bf16.msra.mxu0 %v608
      %1655 = vmatprep.subr.bf16.mxu0 0
      %1656 = vmatpush1.bf16.msra.mxu0 %v607
      %1657 = vmatprep.subr.bf16.mxu0 0
      %1658 = vmatpush2.bf16.msra.mxu0 0
      %1659 = vmatprep.subr.bf16.mxu0 0
      %1660 = vmatpush2.bf16.msra.mxu0 0
      %1661 = vmatprep.subr.bf16.mxu0 0
      %1662 = vmatpush2.bf16.msra.mxu0 0
      %1663 = vmatprep.subr.bf16.mxu0 0
      %1664 = vmatpush2.bf16.msra.mxu0 0
      %1665 = vmatprep.subr.bf16.mxu0 0
      %1666 = vmatpush2.bf16.msra.mxu0 0
      %1667 = vmatprep.subr.bf16.mxu0 0
      %1668 = vmatpush2.bf16.msra.mxu0 0
      %1669 = vmatprep.subr.bf16.mxu0 0
      %1670 = vmatpush2.bf16.msra.mxu0 0
      %1671 = vmatprep.subr.bf16.mxu0 0
      %1672 = vmatpush2.bf16.msra.mxu0 0
      %1673 = vmatprep.mubr.bf16.mxu0 0
      %1674 = vmatmul.mubr.bf16.gmra.mxu0 %v737
      %v1675 = vpop.f32.mrf.mxu0
      %v1676 = vadd.f32 0.0, %v1675
      %v1677 = vpop.f32.mrf.mxu0
      %v1678 = vpop.f32.mrf.mxu0
      %v1679 = vadd.f32 0.0, %v1678
      %v1680 = vpop.f32.mrf.mxu0
      %1681 = vmatprep.mubr.bf16.mxu0 0
      %1682 = vmatmul.mubr.bf16.gmra.mxu0 %v740
      %v1683 = vpop.f32.mrf.mxu0
      %v1684 = vadd.f32 0.0, %v1683
      %v1685 = vpop.f32.mrf.mxu0
      %v1686 = vpop.f32.mrf.mxu0
      %v1687 = vadd.f32 0.0, %v1686
      %v1688 = vpop.f32.mrf.mxu0
      %1689 = vmatprep.mubr.bf16.mxu0 0
      %1690 = vmatmul.mubr.bf16.gmra.mxu0 %v743
      %v1691 = vpop.f32.mrf.mxu0
      %v1692 = vadd.f32 0.0, %v1691
      %v1693 = vpop.f32.mrf.mxu0
      %v1694 = vpop.f32.mrf.mxu0
      %v1695 = vadd.f32 0.0, %v1694
      %v1696 = vpop.f32.mrf.mxu0
      %1697 = vmatprep.mubr.bf16.mxu0 0
      %1698 = vmatmul.mubr.bf16.gmra.mxu0 %v746
      %v1699 = vpop.f32.mrf.mxu0
      %v1700 = vadd.f32 0.0, %v1699
      %v1701 = vpop.f32.mrf.mxu0
      %v1702 = vpop.f32.mrf.mxu0
      %v1703 = vpop.f32.mrf.mxu0
      %1704 = vdwg.mxu0
      %v1705 = vadd.f32 %v1634, %v1676
      %v1706 = vadd.f32 %v1635, %v1679
      %v1707 = vadd.f32 %v1636, %v1684
      %v1708 = vadd.f32 %v1637, %v1687
      %v1709 = vadd.f32 %v1638, %v1692
      %v1710 = vadd.f32 %v1639, %v1695
      %v1711 = vadd.f32 %v1640, %v1700
      %1712 = vmatprep.subr.bf16.mxu0 0
      %1713 = vmatpush1.bf16.msra.mxu0 0
      %1714 = vmatprep.subr.bf16.mxu0 0
      %1715 = vmatpush1.bf16.msra.mxu0 0
      %1716 = vmatprep.subr.bf16.mxu0 0
      %1717 = vmatpush1.bf16.msra.mxu0 0
      %1718 = vmatprep.subr.bf16.mxu0 0
      %1719 = vmatpush1.bf16.msra.mxu0 0
      %1720 = vmatprep.subr.bf16.mxu0 0
      %1721 = vmatpush1.bf16.msra.mxu0 0
      %1722 = vmatprep.subr.bf16.mxu0 0
      %1723 = vmatpush1.bf16.msra.mxu0 0
      %1724 = vmatprep.subr.bf16.mxu0 0
      %1725 = vmatpush1.bf16.msra.mxu0 %v733
      %1726 = vmatprep.subr.bf16.mxu0 0
      %1727 = vmatpush1.bf16.msra.mxu0 %v732
      %1728 = vmatprep.subr.bf16.mxu0 0
      %1729 = vmatpush2.bf16.msra.mxu0 0
      %1730 = vmatprep.subr.bf16.mxu0 0
      %1731 = vmatpush2.bf16.msra.mxu0 0
      %1732 = vmatprep.subr.bf16.mxu0 0
      %1733 = vmatpush2.bf16.msra.mxu0 0
      %1734 = vmatprep.subr.bf16.mxu0 0
      %1735 = vmatpush2.bf16.msra.mxu0 0
      %1736 = vmatprep.subr.bf16.mxu0 0
      %1737 = vmatpush2.bf16.msra.mxu0 0
      %1738 = vmatprep.subr.bf16.mxu0 0
      %1739 = vmatpush2.bf16.msra.mxu0 0
      %1740 = vmatprep.subr.bf16.mxu0 0
      %1741 = vmatpush2.bf16.msra.mxu0 0
      %1742 = vmatprep.subr.bf16.mxu0 0
      %1743 = vmatpush2.bf16.msra.mxu0 0
      %1744 = vmatprep.mubr.bf16.mxu0 0
      %1745 = vmatmul.mubr.bf16.gmra.mxu0 %v896
      %v1746 = vpop.f32.mrf.mxu0
      %v1747 = vadd.f32 0.0, %v1746
      %v1748 = vpop.f32.mrf.mxu0
      %v1749 = vpop.f32.mrf.mxu0
      %v1750 = vadd.f32 0.0, %v1749
      %v1751 = vpop.f32.mrf.mxu0
      %1752 = vmatprep.mubr.bf16.mxu0 0
      %1753 = vmatmul.mubr.bf16.gmra.mxu0 %v899
      %v1754 = vpop.f32.mrf.mxu0
      %v1755 = vadd.f32 0.0, %v1754
      %v1756 = vpop.f32.mrf.mxu0
      %v1757 = vpop.f32.mrf.mxu0
      %v1758 = vadd.f32 0.0, %v1757
      %v1759 = vpop.f32.mrf.mxu0
      %1760 = vmatprep.mubr.bf16.mxu0 0
      %1761 = vmatmul.mubr.bf16.gmra.mxu0 %v902
      %v1762 = vpop.f32.mrf.mxu0
      %v1763 = vadd.f32 0.0, %v1762
      %v1764 = vpop.f32.mrf.mxu0
      %v1765 = vpop.f32.mrf.mxu0
      %v1766 = vadd.f32 0.0, %v1765
      %v1767 = vpop.f32.mrf.mxu0
      %1768 = vmatprep.mubr.bf16.mxu0 0
      %1769 = vmatmul.mubr.bf16.gmra.mxu0 %v905
      %v1770 = vpop.f32.mrf.mxu0
      %v1771 = vadd.f32 0.0, %v1770
      %v1772 = vpop.f32.mrf.mxu0
      %v1773 = vpop.f32.mrf.mxu0
      %v1774 = vpop.f32.mrf.mxu0
      %1775 = vdwg.mxu0
      %v1776 = vadd.f32 %v1705, %v1747
      %v1777 = vadd.f32 %v1706, %v1750
      %v1778 = vadd.f32 %v1707, %v1755
      %v1779 = vadd.f32 %v1708, %v1758
      %v1780 = vadd.f32 %v1709, %v1763
      %v1781 = vadd.f32 %v1710, %v1766
      %v1782 = vadd.f32 %v1711, %v1771
      %v1783 = vld [vmem:[%s165 + $0x6c] sm:$0xf]
      %v1784 = vld [vmem:[%s165 + $0x70] sm:$0xf]
      %v1785 = vld [vmem:[%s165 + $0x74] sm:$0xf]
      %v1786 = vld [vmem:[%s165 + $0x78] sm:$0xf]
      %v1787 = vld [vmem:[%s165 + $0x7c] sm:$0xf]
      %v1788 = vld [vmem:[%s165 + $0x80] sm:$0xf]
      %v1789 = vld [vmem:[%s165 + $0x84] sm:$0xf]
      %v1790 = vld [vmem:[%s165 + $0x88] sm:$0x1]
      %v1799 = vunpack.c.l.b16 %v1783
      %v1800 = vunpack.c.l.b16 %v1784
      %v1801 = vunpack.c.l.b16 %v1785
      %v1802 = vunpack.c.l.b16 %v1786
      %v1803 = vunpack.c.l.b16 %v1787
      %v1804 = vunpack.c.l.b16 %v1788
      %v1805 = vunpack.c.l.b16 %v1789
      %v1806 = vunpack.c.l.b16 %v1790
      %v1807 = vpack.c.b16 %v1800, %v1799
      %v1808 = vpack.c.b16 %v1802, %v1801
      %v1809 = vpack.c.b16 %v1804, %v1803
      %v1810 = vpack.c.b16 %v1806, %v1805
      %v1812 = vshrl.u32 %v1807, 16
      %v1814 = vshll.u32 %v1807, 16
      %v1816 = vrot.slane %v1814, 1
      %v1817 = vor.u32 %v1812, %v1816
      %v1819 = vshll.u32 %v1808, 16
      %v1821 = vrot.slane %v1819, 1
      %v1822 = vsel %vm442, %v1817, %v1821
      %v1823 = vshrl.u32 %v1808, 16
      %v1825 = vor.u32 %v1823, %v1821
      %v1827 = vshll.u32 %v1809, 16
      %v1829 = vrot.slane %v1827, 1
      %v1830 = vsel %vm442, %v1825, %v1829
      %v1831 = vshrl.u32 %v1809, 16
      %v1833 = vor.u32 %v1831, %v1829
      %v1835 = vshll.u32 %v1810, 16
      %v1837 = vrot.slane %v1835, 1
      %v1838 = vsel %vm442, %v1833, %v1837
      %v1839 = vshrl.u32 %v1810, 16
      %v1841 = vor.u32 %v1839, %v1837
      %v1843 = vsel %vm226, %v1822, 0
      %v1846 = vsel %vm226, %v1830, 0
      %v1849 = vsel %vm226, %v1838, 0
      %v1852 = vsel %vm226, %v1841, 0
      %1854 = vmatprep.subr.bf16.mxu0 0
      %1855 = vmatpush1.bf16.msra.mxu0 0
      %1856 = vmatprep.subr.bf16.mxu0 0
      %1857 = vmatpush1.bf16.msra.mxu0 0
      %1858 = vmatprep.subr.bf16.mxu0 0
      %1859 = vmatpush1.bf16.msra.mxu0 0
      %1860 = vmatprep.subr.bf16.mxu0 0
      %1861 = vmatpush1.bf16.msra.mxu0 0
      %1862 = vmatprep.subr.bf16.mxu0 0
      %1863 = vmatpush1.bf16.msra.mxu0 0
      %1864 = vmatprep.subr.bf16.mxu0 0
      %1865 = vmatpush1.bf16.msra.mxu0 0
      %1866 = vmatprep.subr.bf16.mxu0 0
      %1867 = vmatpush1.bf16.msra.mxu0 %v892
      %1868 = vmatprep.subr.bf16.mxu0 0
      %1869 = vmatpush1.bf16.msra.mxu0 %v891
      %1870 = vmatprep.subr.bf16.mxu0 0
      %1871 = vmatpush2.bf16.msra.mxu0 0
      %1872 = vmatprep.subr.bf16.mxu0 0
      %1873 = vmatpush2.bf16.msra.mxu0 0
      %1874 = vmatprep.subr.bf16.mxu0 0
      %1875 = vmatpush2.bf16.msra.mxu0 0
      %1876 = vmatprep.subr.bf16.mxu0 0
      %1877 = vmatpush2.bf16.msra.mxu0 0
      %1878 = vmatprep.subr.bf16.mxu0 0
      %1879 = vmatpush2.bf16.msra.mxu0 0
      %1880 = vmatprep.subr.bf16.mxu0 0
      %1881 = vmatpush2.bf16.msra.mxu0 0
      %1882 = vmatprep.subr.bf16.mxu0 0
      %1883 = vmatpush2.bf16.msra.mxu0 0
      %1884 = vmatprep.subr.bf16.mxu0 0
      %1885 = vmatpush2.bf16.msra.mxu0 0
      %1886 = vmatprep.mubr.bf16.mxu0 0
      %1887 = vmatmul.mubr.bf16.gmra.mxu0 %v1843
      %v1888 = vpop.f32.mrf.mxu0
      %v1889 = vadd.f32 0.0, %v1888
      %v1890 = vpop.f32.mrf.mxu0
      %v1891 = vpop.f32.mrf.mxu0
      %v1892 = vadd.f32 0.0, %v1891
      %v1893 = vpop.f32.mrf.mxu0
      %1894 = vmatprep.mubr.bf16.mxu0 0
      %1895 = vmatmul.mubr.bf16.gmra.mxu0 %v1846
      %v1896 = vpop.f32.mrf.mxu0
      %v1897 = vadd.f32 0.0, %v1896
      %v1898 = vpop.f32.mrf.mxu0
      %v1899 = vpop.f32.mrf.mxu0
      %v1900 = vadd.f32 0.0, %v1899
      %v1901 = vpop.f32.mrf.mxu0
      %1902 = vmatprep.mubr.bf16.mxu0 0
      %1903 = vmatmul.mubr.bf16.gmra.mxu0 %v1849
      %v1904 = vpop.f32.mrf.mxu0
      %v1905 = vadd.f32 0.0, %v1904
      %v1906 = vpop.f32.mrf.mxu0
      %v1907 = vpop.f32.mrf.mxu0
      %v1908 = vadd.f32 0.0, %v1907
      %v1909 = vpop.f32.mrf.mxu0
      %1910 = vmatprep.mubr.bf16.mxu0 0
      %1911 = vmatmul.mubr.bf16.gmra.mxu0 %v1852
      %v1912 = vpop.f32.mrf.mxu0
      %v1913 = vadd.f32 0.0, %v1912
      %v1914 = vpop.f32.mrf.mxu0
      %v1915 = vpop.f32.mrf.mxu0
      %v1916 = vpop.f32.mrf.mxu0
      %1917 = vdwg.mxu0
      %v1918 = vadd.f32 %v1776, %v1889
      %v1919 = vadd.f32 %v1777, %v1892
      %v1920 = vadd.f32 %v1778, %v1897
      %v1921 = vadd.f32 %v1779, %v1900
      %v1922 = vadd.f32 %v1780, %v1905
      %v1923 = vadd.f32 %v1781, %v1908
      %v1924 = vadd.f32 %v1782, %v1913
      %1925 = vmatprep.subr.bf16.mxu0 0
      %1926 = vmatpush1.bf16.msra.mxu0 0
      %1927 = vmatprep.subr.bf16.mxu0 0
      %1928 = vmatpush1.bf16.msra.mxu0 0
      %1929 = vmatprep.subr.bf16.mxu0 0
      %1930 = vmatpush1.bf16.msra.mxu0 0
      %1931 = vmatprep.subr.bf16.mxu0 0
      %1932 = vmatpush1.bf16.msra.mxu0 0
      %1933 = vmatprep.subr.bf16.mxu0 0
      %1934 = vmatpush1.bf16.msra.mxu0 0
      %1935 = vmatprep.subr.bf16.mxu0 0
      %1936 = vmatpush1.bf16.msra.mxu0 0
      %1937 = vmatprep.subr.bf16.mxu0 0
      %1938 = vmatpush1.bf16.msra.mxu0 %v999
      %1939 = vmatprep.subr.bf16.mxu0 0
      %1940 = vmatpush1.bf16.msra.mxu0 %v998
      %1941 = vmatprep.subr.bf16.mxu0 0
      %1942 = vmatpush2.bf16.msra.mxu0 0
      %1943 = vmatprep.subr.bf16.mxu0 0
      %1944 = vmatpush2.bf16.msra.mxu0 0
      %1945 = vmatprep.subr.bf16.mxu0 0
      %1946 = vmatpush2.bf16.msra.mxu0 0
      %1947 = vmatprep.subr.bf16.mxu0 0
      %1948 = vmatpush2.bf16.msra.mxu0 0
      %1949 = vmatprep.subr.bf16.mxu0 0
      %1950 = vmatpush2.bf16.msra.mxu0 0
      %1951 = vmatprep.subr.bf16.mxu0 0
      %1952 = vmatpush2.bf16.msra.mxu0 0
      %1953 = vmatprep.subr.bf16.mxu0 0
      %1954 = vmatpush2.bf16.msra.mxu0 0
      %1955 = vmatprep.subr.bf16.mxu0 0
      %1956 = vmatpush2.bf16.msra.mxu0 0
      %1957 = vmatprep.mubr.bf16.mxu0 0
      %1958 = vmatmul.mubr.bf16.gmra.mxu0 %v1128
      %v1959 = vpop.f32.mrf.mxu0
      %v1960 = vadd.f32 0.0, %v1959
      %v1961 = vpop.f32.mrf.mxu0
      %v1962 = vpop.f32.mrf.mxu0
      %v1963 = vadd.f32 0.0, %v1962
      %v1964 = vpop.f32.mrf.mxu0
      %1965 = vmatprep.mubr.bf16.mxu0 0
      %1966 = vmatmul.mubr.bf16.gmra.mxu0 %v1131
      %v1967 = vpop.f32.mrf.mxu0
      %v1968 = vadd.f32 0.0, %v1967
      %v1969 = vpop.f32.mrf.mxu0
      %v1970 = vpop.f32.mrf.mxu0
      %v1971 = vadd.f32 0.0, %v1970
      %v1972 = vpop.f32.mrf.mxu0
      %1973 = vmatprep.mubr.bf16.mxu0 0
      %1974 = vmatmul.mubr.bf16.gmra.mxu0 %v1134
      %v1975 = vpop.f32.mrf.mxu0
      %v1976 = vadd.f32 0.0, %v1975
      %v1977 = vpop.f32.mrf.mxu0
      %v1978 = vpop.f32.mrf.mxu0
      %v1979 = vadd.f32 0.0, %v1978
      %v1980 = vpop.f32.mrf.mxu0
      %1981 = vmatprep.mubr.bf16.mxu0 0
      %1982 = vmatmul.mubr.bf16.gmra.mxu0 %v1137
      %v1983 = vpop.f32.mrf.mxu0
      %v1984 = vadd.f32 0.0, %v1983
      %v1985 = vpop.f32.mrf.mxu0
      %v1986 = vpop.f32.mrf.mxu0
      %v1987 = vpop.f32.mrf.mxu0
      %1988 = vdwg.mxu0
      %v1989 = vadd.f32 %v1918, %v1960
      %v1990 = vadd.f32 %v1919, %v1963
      %v1991 = vadd.f32 %v1920, %v1968
      %v1992 = vadd.f32 %v1921, %v1971
      %v1993 = vadd.f32 %v1922, %v1976
      %v1994 = vadd.f32 %v1923, %v1979
      %v1995 = vadd.f32 %v1924, %v1984
      %1996 = vmatprep.subr.bf16.mxu0 0
      %1997 = vmatpush1.bf16.msra.mxu0 0
      %1998 = vmatprep.subr.bf16.mxu0 0
      %1999 = vmatpush1.bf16.msra.mxu0 0
      %2000 = vmatprep.subr.bf16.mxu0 0
      %2001 = vmatpush1.bf16.msra.mxu0 0
      %2002 = vmatprep.subr.bf16.mxu0 0
      %2003 = vmatpush1.bf16.msra.mxu0 0
      %2004 = vmatprep.subr.bf16.mxu0 0
      %2005 = vmatpush1.bf16.msra.mxu0 0
      %2006 = vmatprep.subr.bf16.mxu0 0
      %2007 = vmatpush1.bf16.msra.mxu0 0
      %2008 = vmatprep.subr.bf16.mxu0 0
      %2009 = vmatpush1.bf16.msra.mxu0 %v1124
      %2010 = vmatprep.subr.bf16.mxu0 0
      %2011 = vmatpush1.bf16.msra.mxu0 %v1123
      %2012 = vmatprep.subr.bf16.mxu0 0
      %2013 = vmatpush2.bf16.msra.mxu0 0
      %2014 = vmatprep.subr.bf16.mxu0 0
      %2015 = vmatpush2.bf16.msra.mxu0 0
      %2016 = vmatprep.subr.bf16.mxu0 0
      %2017 = vmatpush2.bf16.msra.mxu0 0
      %2018 = vmatprep.subr.bf16.mxu0 0
      %2019 = vmatpush2.bf16.msra.mxu0 0
      %2020 = vmatprep.subr.bf16.mxu0 0
      %2021 = vmatpush2.bf16.msra.mxu0 0
      %2022 = vmatprep.subr.bf16.mxu0 0
      %2023 = vmatpush2.bf16.msra.mxu0 0
      %2024 = vmatprep.subr.bf16.mxu0 0
      %2025 = vmatpush2.bf16.msra.mxu0 0
      %2026 = vmatprep.subr.bf16.mxu0 0
      %2027 = vmatpush2.bf16.msra.mxu0 0
      %2028 = vmatprep.mubr.bf16.mxu0 0
      %2029 = vmatmul.mubr.bf16.gmra.mxu0 %v1287
      %v2030 = vpop.f32.mrf.mxu0
      %v2031 = vadd.f32 0.0, %v2030
      %v2032 = vpop.f32.mrf.mxu0
      %v2033 = vpop.f32.mrf.mxu0
      %v2034 = vadd.f32 0.0, %v2033
      %v2035 = vpop.f32.mrf.mxu0
      %2036 = vmatprep.mubr.bf16.mxu0 0
      %2037 = vmatmul.mubr.bf16.gmra.mxu0 %v1290
      %v2038 = vpop.f32.mrf.mxu0
      %v2039 = vadd.f32 0.0, %v2038
      %v2040 = vpop.f32.mrf.mxu0
      %v2041 = vpop.f32.mrf.mxu0
      %v2042 = vadd.f32 0.0, %v2041
      %v2043 = vpop.f32.mrf.mxu0
      %2044 = vmatprep.mubr.bf16.mxu0 0
      %2045 = vmatmul.mubr.bf16.gmra.mxu0 %v1293
      %v2046 = vpop.f32.mrf.mxu0
      %v2047 = vadd.f32 0.0, %v2046
      %v2048 = vpop.f32.mrf.mxu0
      %v2049 = vpop.f32.mrf.mxu0
      %v2050 = vadd.f32 0.0, %v2049
      %v2051 = vpop.f32.mrf.mxu0
      %2052 = vmatprep.mubr.bf16.mxu0 0
      %2053 = vmatmul.mubr.bf16.gmra.mxu0 %v1296
      %v2054 = vpop.f32.mrf.mxu0
      %v2055 = vadd.f32 0.0, %v2054
      %v2056 = vpop.f32.mrf.mxu0
      %v2057 = vpop.f32.mrf.mxu0
      %v2058 = vpop.f32.mrf.mxu0
      %2059 = vdwg.mxu0
      %v2060 = vadd.f32 %v1989, %v2031
      %v2061 = vadd.f32 %v1990, %v2034
      %v2062 = vadd.f32 %v1991, %v2039
      %v2063 = vadd.f32 %v1992, %v2042
      %v2064 = vadd.f32 %v1993, %v2047
      %v2065 = vadd.f32 %v1994, %v2050
      %v2066 = vadd.f32 %v1995, %v2055
      %v2067 = vld [vmem:[%s165 + $0x28] sm:$0xf]
      %v2068 = vld [vmem:[%s165 + $0x2c] sm:$0xf]
      %v2069 = vld [vmem:[%s165 + $0x30] sm:$0xf]
      %v2070 = vld [vmem:[%s165 + $0x34] sm:$0xf]
      %v2071 = vld [vmem:[%s165 + $0x38] sm:$0xf]
      %v2072 = vld [vmem:[%s165 + $0x3c] sm:$0xf]
      %v2073 = vld [vmem:[%s165 + $0x40] sm:$0xf]
      %v2074 = vld [vmem:[%s165 + $0x44] sm:$0x1]
      %v2083 = vunpack.c.l.b16 %v2067
      %v2084 = vunpack.c.l.b16 %v2068
      %v2085 = vunpack.c.l.b16 %v2069
      %v2086 = vunpack.c.l.b16 %v2070
      %v2087 = vunpack.c.l.b16 %v2071
      %v2088 = vunpack.c.l.b16 %v2072
      %v2089 = vunpack.c.l.b16 %v2073
      %v2090 = vunpack.c.l.b16 %v2074
      %v2091 = vpack.c.b16 %v2084, %v2083
      %v2092 = vpack.c.b16 %v2086, %v2085
      %v2093 = vpack.c.b16 %v2088, %v2087
      %v2094 = vpack.c.b16 %v2090, %v2089
      %v2096 = vshrl.u32 %v2091, 16
      %v2098 = vshll.u32 %v2091, 16
      %v2100 = vrot.slane %v2098, 1
      %v2101 = vor.u32 %v2096, %v2100
      %v2103 = vshll.u32 %v2092, 16
      %v2105 = vrot.slane %v2103, 1
      %v2106 = vsel %vm442, %v2101, %v2105
      %v2107 = vshrl.u32 %v2092, 16
      %v2109 = vor.u32 %v2107, %v2105
      %v2111 = vshll.u32 %v2093, 16
      %v2113 = vrot.slane %v2111, 1
      %v2114 = vsel %vm442, %v2109, %v2113
      %v2115 = vshrl.u32 %v2093, 16
      %v2117 = vor.u32 %v2115, %v2113
      %v2119 = vshll.u32 %v2094, 16
      %v2121 = vrot.slane %v2119, 1
      %v2122 = vsel %vm442, %v2117, %v2121
      %v2123 = vshrl.u32 %v2094, 16
      %v2125 = vor.u32 %v2123, %v2121
      %v2127 = vsel %vm226, %v2106, 0
      %v2130 = vsel %vm226, %v2114, 0
      %v2133 = vsel %vm226, %v2122, 0
      %v2136 = vsel %vm226, %v2125, 0
      %2138 = vmatprep.subr.bf16.mxu0 0
      %2139 = vmatpush1.bf16.msra.mxu0 0
      %2140 = vmatprep.subr.bf16.mxu0 0
      %2141 = vmatpush1.bf16.msra.mxu0 0
      %2142 = vmatprep.subr.bf16.mxu0 0
      %2143 = vmatpush1.bf16.msra.mxu0 0
      %2144 = vmatprep.subr.bf16.mxu0 0
      %2145 = vmatpush1.bf16.msra.mxu0 0
      %2146 = vmatprep.subr.bf16.mxu0 0
      %2147 = vmatpush1.bf16.msra.mxu0 0
      %2148 = vmatprep.subr.bf16.mxu0 0
      %2149 = vmatpush1.bf16.msra.mxu0 0
      %2150 = vmatprep.subr.bf16.mxu0 0
      %2151 = vmatpush1.bf16.msra.mxu0 %v1283
      %2152 = vmatprep.subr.bf16.mxu0 0
      %2153 = vmatpush1.bf16.msra.mxu0 %v1282
      %2154 = vmatprep.subr.bf16.mxu0 0
      %2155 = vmatpush2.bf16.msra.mxu0 0
      %2156 = vmatprep.subr.bf16.mxu0 0
      %2157 = vmatpush2.bf16.msra.mxu0 0
      %2158 = vmatprep.subr.bf16.mxu0 0
      %2159 = vmatpush2.bf16.msra.mxu0 0
      %2160 = vmatprep.subr.bf16.mxu0 0
      %2161 = vmatpush2.bf16.msra.mxu0 0
      %2162 = vmatprep.subr.bf16.mxu0 0
      %2163 = vmatpush2.bf16.msra.mxu0 0
      %2164 = vmatprep.subr.bf16.mxu0 0
      %2165 = vmatpush2.bf16.msra.mxu0 0
      %2166 = vmatprep.subr.bf16.mxu0 0
      %2167 = vmatpush2.bf16.msra.mxu0 0
      %2168 = vmatprep.subr.bf16.mxu0 0
      %2169 = vmatpush2.bf16.msra.mxu0 0
      %2170 = vmatprep.mubr.bf16.mxu0 0
      %2171 = vmatmul.mubr.bf16.gmra.mxu0 %v2127
      %v2172 = vpop.f32.mrf.mxu0
      %v2173 = vadd.f32 0.0, %v2172
      %v2174 = vpop.f32.mrf.mxu0
      %v2175 = vpop.f32.mrf.mxu0
      %v2176 = vadd.f32 0.0, %v2175
      %v2177 = vpop.f32.mrf.mxu0
      %2178 = vmatprep.mubr.bf16.mxu0 0
      %2179 = vmatmul.mubr.bf16.gmra.mxu0 %v2130
      %v2180 = vpop.f32.mrf.mxu0
      %v2181 = vadd.f32 0.0, %v2180
      %v2182 = vpop.f32.mrf.mxu0
      %v2183 = vpop.f32.mrf.mxu0
      %v2184 = vadd.f32 0.0, %v2183
      %v2185 = vpop.f32.mrf.mxu0
      %2186 = vmatprep.mubr.bf16.mxu0 0
      %2187 = vmatmul.mubr.bf16.gmra.mxu0 %v2133
      %v2188 = vpop.f32.mrf.mxu0
      %v2189 = vadd.f32 0.0, %v2188
      %v2190 = vpop.f32.mrf.mxu0
      %v2191 = vpop.f32.mrf.mxu0
      %v2192 = vadd.f32 0.0, %v2191
      %v2193 = vpop.f32.mrf.mxu0
      %2194 = vmatprep.mubr.bf16.mxu0 0
      %2195 = vmatmul.mubr.bf16.gmra.mxu0 %v2136
      %v2196 = vpop.f32.mrf.mxu0
      %v2197 = vadd.f32 0.0, %v2196
      %v2198 = vpop.f32.mrf.mxu0
      %v2199 = vpop.f32.mrf.mxu0
      %v2200 = vpop.f32.mrf.mxu0
      %2201 = vdwg.mxu0
      %v2202 = vadd.f32 %v2060, %v2173
      %v2203 = vadd.f32 %v2061, %v2176
      %v2204 = vadd.f32 %v2062, %v2181
      %v2205 = vadd.f32 %v2063, %v2184
      %v2206 = vadd.f32 %v2064, %v2189
      %v2207 = vadd.f32 %v2065, %v2192
      %v2208 = vadd.f32 %v2066, %v2197
      %v2209 = vadd.f32 %v2202, %v1373
      %v2210 = vadd.f32 %v2203, %v1373
      %v2211 = vadd.f32 %v2204, %v1373
      %v2212 = vadd.f32 %v2205, %v1373
      %v2213 = vadd.f32 %v2206, %v1373
      %v2214 = vadd.f32 %v2207, %v1373
      %v2215 = vadd.f32 %v2208, %v1373
      %v2216 = vmax.f32 %v2209, 0.0
      %v2217 = vmax.f32 %v2210, 0.0
      %v2218 = vmax.f32 %v2211, 0.0
      %v2219 = vmax.f32 %v2212, 0.0
      %v2220 = vmax.f32 %v2213, 0.0
      %v2221 = vmax.f32 %v2214, 0.0
      %v2222 = vmax.f32 %v2215, 0.0
      %v2223 = vmax.f32 %v1382, %v2216
      %v2224 = vmax.f32 %v1383, %v2217
      %v2225 = vmax.f32 %v1384, %v2218
      %v2226 = vmax.f32 %v1385, %v2219
      %v2227 = vmax.f32 %v1386, %v2220
      %v2228 = vmax.f32 %v1387, %v2221
      %v2229 = vmax.f32 %v1388, %v2222
      %2230 = vmatprep.subr.bf16.mxu0 0
      %2231 = vmatpush1.bf16.msra.mxu0 0
      %2232 = vmatprep.subr.bf16.mxu0 0
      %2233 = vmatpush1.bf16.msra.mxu0 0
      %2234 = vmatprep.subr.bf16.mxu0 0
      %2235 = vmatpush1.bf16.msra.mxu0 0
      %2236 = vmatprep.subr.bf16.mxu0 0
      %2237 = vmatpush1.bf16.msra.mxu0 0
      %2238 = vmatprep.subr.bf16.mxu0 0
      %2239 = vmatpush1.bf16.msra.mxu0 0
      %2240 = vmatprep.subr.bf16.mxu0 0
      %2241 = vmatpush1.bf16.msra.mxu0 0
      %2242 = vmatprep.subr.bf16.mxu0 0
      %2243 = vmatpush1.bf16.msra.mxu0 %v223
      %2244 = vmatprep.subr.bf16.mxu0 0
      %2245 = vmatpush1.bf16.msra.mxu0 %v222
      %2246 = vmatprep.subr.bf16.mxu0 0
      %2247 = vmatpush2.bf16.msra.mxu0 0
      %2248 = vmatprep.subr.bf16.mxu0 0
      %2249 = vmatpush2.bf16.msra.mxu0 0
      %2250 = vmatprep.subr.bf16.mxu0 0
      %2251 = vmatpush2.bf16.msra.mxu0 0
      %2252 = vmatprep.subr.bf16.mxu0 0
      %2253 = vmatpush2.bf16.msra.mxu0 0
      %2254 = vmatprep.subr.bf16.mxu0 0
      %2255 = vmatpush2.bf16.msra.mxu0 0
      %2256 = vmatprep.subr.bf16.mxu0 0
      %2257 = vmatpush2.bf16.msra.mxu0 0
      %2258 = vmatprep.subr.bf16.mxu0 0
      %2259 = vmatpush2.bf16.msra.mxu0 0
      %2260 = vmatprep.subr.bf16.mxu0 0
      %2261 = vmatpush2.bf16.msra.mxu0 0
      %2262 = vmatprep.mubr.bf16.mxu0 0
      %2263 = vmatmul.mubr.bf16.gmra.mxu0 %v737
      %v2264 = vpop.f32.mrf.mxu0
      %v2265 = vadd.f32 0.0, %v2264
      %v2266 = vpop.f32.mrf.mxu0
      %v2267 = vpop.f32.mrf.mxu0
      %v2268 = vadd.f32 0.0, %v2267
      %v2269 = vpop.f32.mrf.mxu0
      %2270 = vmatprep.mubr.bf16.mxu0 0
      %2271 = vmatmul.mubr.bf16.gmra.mxu0 %v740
      %v2272 = vpop.f32.mrf.mxu0
      %v2273 = vadd.f32 0.0, %v2272
      %v2274 = vpop.f32.mrf.mxu0
      %v2275 = vpop.f32.mrf.mxu0
      %v2276 = vadd.f32 0.0, %v2275
      %v2277 = vpop.f32.mrf.mxu0
      %2278 = vmatprep.mubr.bf16.mxu0 0
      %2279 = vmatmul.mubr.bf16.gmra.mxu0 %v743
      %v2280 = vpop.f32.mrf.mxu0
      %v2281 = vadd.f32 0.0, %v2280
      %v2282 = vpop.f32.mrf.mxu0
      %v2283 = vpop.f32.mrf.mxu0
      %v2284 = vadd.f32 0.0, %v2283
      %v2285 = vpop.f32.mrf.mxu0
      %2286 = vmatprep.mubr.bf16.mxu0 0
      %2287 = vmatmul.mubr.bf16.gmra.mxu0 %v746
      %v2288 = vpop.f32.mrf.mxu0
      %v2289 = vadd.f32 0.0, %v2288
      %v2290 = vpop.f32.mrf.mxu0
      %v2291 = vpop.f32.mrf.mxu0
      %v2292 = vpop.f32.mrf.mxu0
      %2293 = vdwg.mxu0
      %2294 = vmatprep.subr.bf16.mxu0 0
      %2295 = vmatpush1.bf16.msra.mxu0 0
      %2296 = vmatprep.subr.bf16.mxu0 0
      %2297 = vmatpush1.bf16.msra.mxu0 0
      %2298 = vmatprep.subr.bf16.mxu0 0
      %2299 = vmatpush1.bf16.msra.mxu0 0
      %2300 = vmatprep.subr.bf16.mxu0 0
      %2301 = vmatpush1.bf16.msra.mxu0 0
      %2302 = vmatprep.subr.bf16.mxu0 0
      %2303 = vmatpush1.bf16.msra.mxu0 0
      %2304 = vmatprep.subr.bf16.mxu0 0
      %2305 = vmatpush1.bf16.msra.mxu0 0
      %2306 = vmatprep.subr.bf16.mxu0 0
      %2307 = vmatpush1.bf16.msra.mxu0 %v330
      %2308 = vmatprep.subr.bf16.mxu0 0
      %2309 = vmatpush1.bf16.msra.mxu0 %v329
      %2310 = vmatprep.subr.bf16.mxu0 0
      %2311 = vmatpush2.bf16.msra.mxu0 0
      %2312 = vmatprep.subr.bf16.mxu0 0
      %2313 = vmatpush2.bf16.msra.mxu0 0
      %2314 = vmatprep.subr.bf16.mxu0 0
      %2315 = vmatpush2.bf16.msra.mxu0 0
      %2316 = vmatprep.subr.bf16.mxu0 0
      %2317 = vmatpush2.bf16.msra.mxu0 0
      %2318 = vmatprep.subr.bf16.mxu0 0
      %2319 = vmatpush2.bf16.msra.mxu0 0
      %2320 = vmatprep.subr.bf16.mxu0 0
      %2321 = vmatpush2.bf16.msra.mxu0 0
      %2322 = vmatprep.subr.bf16.mxu0 0
      %2323 = vmatpush2.bf16.msra.mxu0 0
      %2324 = vmatprep.subr.bf16.mxu0 0
      %2325 = vmatpush2.bf16.msra.mxu0 0
      %2326 = vmatprep.mubr.bf16.mxu0 0
      %2327 = vmatmul.mubr.bf16.gmra.mxu0 %v612
      %v2328 = vpop.f32.mrf.mxu0
      %v2329 = vadd.f32 %v2265, %v2328
      %v2330 = vpop.f32.mrf.mxu0
      %v2331 = vpop.f32.mrf.mxu0
      %v2332 = vadd.f32 %v2268, %v2331
      %v2333 = vpop.f32.mrf.mxu0
      %2334 = vmatprep.mubr.bf16.mxu0 0
      %2335 = vmatmul.mubr.bf16.gmra.mxu0 %v615
      %v2336 = vpop.f32.mrf.mxu0
      %v2337 = vadd.f32 %v2273, %v2336
      %v2338 = vpop.f32.mrf.mxu0
      %v2339 = vpop.f32.mrf.mxu0
      %v2340 = vadd.f32 %v2276, %v2339
      %v2341 = vpop.f32.mrf.mxu0
      %2342 = vmatprep.mubr.bf16.mxu0 0
      %2343 = vmatmul.mubr.bf16.gmra.mxu0 %v618
      %v2344 = vpop.f32.mrf.mxu0
      %v2345 = vadd.f32 %v2281, %v2344
      %v2346 = vpop.f32.mrf.mxu0
      %v2347 = vpop.f32.mrf.mxu0
      %v2348 = vadd.f32 %v2284, %v2347
      %v2349 = vpop.f32.mrf.mxu0
      %2350 = vmatprep.mubr.bf16.mxu0 0
      %2351 = vmatmul.mubr.bf16.gmra.mxu0 %v621
      %v2352 = vpop.f32.mrf.mxu0
      %v2353 = vadd.f32 %v2289, %v2352
      %v2354 = vpop.f32.mrf.mxu0
      %v2355 = vpop.f32.mrf.mxu0
      %v2356 = vpop.f32.mrf.mxu0
      %2357 = vdwg.mxu0
      %2358 = vmatprep.subr.bf16.mxu0 0
      %2359 = vmatpush1.bf16.msra.mxu0 0
      %2360 = vmatprep.subr.bf16.mxu0 0
      %2361 = vmatpush1.bf16.msra.mxu0 0
      %2362 = vmatprep.subr.bf16.mxu0 0
      %2363 = vmatpush1.bf16.msra.mxu0 0
      %2364 = vmatprep.subr.bf16.mxu0 0
      %2365 = vmatpush1.bf16.msra.mxu0 0
      %2366 = vmatprep.subr.bf16.mxu0 0
      %2367 = vmatpush1.bf16.msra.mxu0 0
      %2368 = vmatprep.subr.bf16.mxu0 0
      %2369 = vmatpush1.bf16.msra.mxu0 0
      %2370 = vmatprep.subr.bf16.mxu0 0
      %2371 = vmatpush1.bf16.msra.mxu0 %v483
      %2372 = vmatprep.subr.bf16.mxu0 0
      %2373 = vmatpush1.bf16.msra.mxu0 %v482
      %2374 = vmatprep.subr.bf16.mxu0 0
      %2375 = vmatpush2.bf16.msra.mxu0 0
      %2376 = vmatprep.subr.bf16.mxu0 0
      %2377 = vmatpush2.bf16.msra.mxu0 0
      %2378 = vmatprep.subr.bf16.mxu0 0
      %2379 = vmatpush2.bf16.msra.mxu0 0
      %2380 = vmatprep.subr.bf16.mxu0 0
      %2381 = vmatpush2.bf16.msra.mxu0 0
      %2382 = vmatprep.subr.bf16.mxu0 0
      %2383 = vmatpush2.bf16.msra.mxu0 0
      %2384 = vmatprep.subr.bf16.mxu0 0
      %2385 = vmatpush2.bf16.msra.mxu0 0
      %2386 = vmatprep.subr.bf16.mxu0 0
      %2387 = vmatpush2.bf16.msra.mxu0 0
      %2388 = vmatprep.subr.bf16.mxu0 0
      %2389 = vmatpush2.bf16.msra.mxu0 0
      %2390 = vmatprep.mubr.bf16.mxu0 0
      %2391 = vmatmul.mubr.bf16.gmra.mxu0 %v896
      %v2392 = vpop.f32.mrf.mxu0
      %v2393 = vadd.f32 0.0, %v2392
      %v2394 = vpop.f32.mrf.mxu0
      %v2395 = vpop.f32.mrf.mxu0
      %v2396 = vadd.f32 0.0, %v2395
      %v2397 = vpop.f32.mrf.mxu0
      %2398 = vmatprep.mubr.bf16.mxu0 0
      %2399 = vmatmul.mubr.bf16.gmra.mxu0 %v899
      %v2400 = vpop.f32.mrf.mxu0
      %v2401 = vadd.f32 0.0, %v2400
      %v2402 = vpop.f32.mrf.mxu0
      %v2403 = vpop.f32.mrf.mxu0
      %v2404 = vadd.f32 0.0, %v2403
      %v2405 = vpop.f32.mrf.mxu0
      %2406 = vmatprep.mubr.bf16.mxu0 0
      %2407 = vmatmul.mubr.bf16.gmra.mxu0 %v902
      %v2408 = vpop.f32.mrf.mxu0
      %v2409 = vadd.f32 0.0, %v2408
      %v2410 = vpop.f32.mrf.mxu0
      %v2411 = vpop.f32.mrf.mxu0
      %v2412 = vadd.f32 0.0, %v2411
      %v2413 = vpop.f32.mrf.mxu0
      %2414 = vmatprep.mubr.bf16.mxu0 0
      %2415 = vmatmul.mubr.bf16.gmra.mxu0 %v905
      %v2416 = vpop.f32.mrf.mxu0
      %v2417 = vadd.f32 0.0, %v2416
      %v2418 = vpop.f32.mrf.mxu0
      %v2419 = vpop.f32.mrf.mxu0
      %v2420 = vpop.f32.mrf.mxu0
      %2421 = vdwg.mxu0
      %v2422 = vadd.f32 %v2329, %v2393
      %v2423 = vadd.f32 %v2332, %v2396
      %v2424 = vadd.f32 %v2337, %v2401
      %v2425 = vadd.f32 %v2340, %v2404
      %v2426 = vadd.f32 %v2345, %v2409
      %v2427 = vadd.f32 %v2348, %v2412
      %v2428 = vadd.f32 %v2353, %v2417
      %2429 = vmatprep.subr.bf16.mxu0 0
      %2430 = vmatpush1.bf16.msra.mxu0 0
      %2431 = vmatprep.subr.bf16.mxu0 0
      %2432 = vmatpush1.bf16.msra.mxu0 0
      %2433 = vmatprep.subr.bf16.mxu0 0
      %2434 = vmatpush1.bf16.msra.mxu0 0
      %2435 = vmatprep.subr.bf16.mxu0 0
      %2436 = vmatpush1.bf16.msra.mxu0 0
      %2437 = vmatprep.subr.bf16.mxu0 0
      %2438 = vmatpush1.bf16.msra.mxu0 0
      %2439 = vmatprep.subr.bf16.mxu0 0
      %2440 = vmatpush1.bf16.msra.mxu0 0
      %2441 = vmatprep.subr.bf16.mxu0 0
      %2442 = vmatpush1.bf16.msra.mxu0 %v608
      %2443 = vmatprep.subr.bf16.mxu0 0
      %2444 = vmatpush1.bf16.msra.mxu0 %v607
      %2445 = vmatprep.subr.bf16.mxu0 0
      %2446 = vmatpush2.bf16.msra.mxu0 0
      %2447 = vmatprep.subr.bf16.mxu0 0
      %2448 = vmatpush2.bf16.msra.mxu0 0
      %2449 = vmatprep.subr.bf16.mxu0 0
      %2450 = vmatpush2.bf16.msra.mxu0 0
      %2451 = vmatprep.subr.bf16.mxu0 0
      %2452 = vmatpush2.bf16.msra.mxu0 0
      %2453 = vmatprep.subr.bf16.mxu0 0
      %2454 = vmatpush2.bf16.msra.mxu0 0
      %2455 = vmatprep.subr.bf16.mxu0 0
      %2456 = vmatpush2.bf16.msra.mxu0 0
      %2457 = vmatprep.subr.bf16.mxu0 0
      %2458 = vmatpush2.bf16.msra.mxu0 0
      %2459 = vmatprep.subr.bf16.mxu0 0
      %2460 = vmatpush2.bf16.msra.mxu0 0
      %2461 = vmatprep.mubr.bf16.mxu0 0
      %2462 = vmatmul.mubr.bf16.gmra.mxu0 %v1003
      %v2463 = vpop.f32.mrf.mxu0
      %v2464 = vadd.f32 0.0, %v2463
      %v2465 = vpop.f32.mrf.mxu0
      %v2466 = vpop.f32.mrf.mxu0
      %v2467 = vadd.f32 0.0, %v2466
      %v2468 = vpop.f32.mrf.mxu0
      %2469 = vmatprep.mubr.bf16.mxu0 0
      %2470 = vmatmul.mubr.bf16.gmra.mxu0 %v1006
      %v2471 = vpop.f32.mrf.mxu0
      %v2472 = vadd.f32 0.0, %v2471
      %v2473 = vpop.f32.mrf.mxu0
      %v2474 = vpop.f32.mrf.mxu0
      %v2475 = vadd.f32 0.0, %v2474
      %v2476 = vpop.f32.mrf.mxu0
      %2477 = vmatprep.mubr.bf16.mxu0 0
      %2478 = vmatmul.mubr.bf16.gmra.mxu0 %v1009
      %v2479 = vpop.f32.mrf.mxu0
      %v2480 = vadd.f32 0.0, %v2479
      %v2481 = vpop.f32.mrf.mxu0
      %v2482 = vpop.f32.mrf.mxu0
      %v2483 = vadd.f32 0.0, %v2482
      %v2484 = vpop.f32.mrf.mxu0
      %2485 = vmatprep.mubr.bf16.mxu0 0
      %2486 = vmatmul.mubr.bf16.gmra.mxu0 %v1012
      %v2487 = vpop.f32.mrf.mxu0
      %v2488 = vadd.f32 0.0, %v2487
      %v2489 = vpop.f32.mrf.mxu0
      %v2490 = vpop.f32.mrf.mxu0
      %v2491 = vpop.f32.mrf.mxu0
      %2492 = vdwg.mxu0
      %v2493 = vadd.f32 %v2422, %v2464
      %v2494 = vadd.f32 %v2423, %v2467
      %v2495 = vadd.f32 %v2424, %v2472
      %v2496 = vadd.f32 %v2425, %v2475
      %v2497 = vadd.f32 %v2426, %v2480
      %v2498 = vadd.f32 %v2427, %v2483
      %v2499 = vadd.f32 %v2428, %v2488
      %2500 = vmatprep.subr.bf16.mxu0 0
      %2501 = vmatpush1.bf16.msra.mxu0 0
      %2502 = vmatprep.subr.bf16.mxu0 0
      %2503 = vmatpush1.bf16.msra.mxu0 0
      %2504 = vmatprep.subr.bf16.mxu0 0
      %2505 = vmatpush1.bf16.msra.mxu0 0
      %2506 = vmatprep.subr.bf16.mxu0 0
      %2507 = vmatpush1.bf16.msra.mxu0 0
      %2508 = vmatprep.subr.bf16.mxu0 0
      %2509 = vmatpush1.bf16.msra.mxu0 0
      %2510 = vmatprep.subr.bf16.mxu0 0
      %2511 = vmatpush1.bf16.msra.mxu0 0
      %2512 = vmatprep.subr.bf16.mxu0 0
      %2513 = vmatpush1.bf16.msra.mxu0 %v733
      %2514 = vmatprep.subr.bf16.mxu0 0
      %2515 = vmatpush1.bf16.msra.mxu0 %v732
      %2516 = vmatprep.subr.bf16.mxu0 0
      %2517 = vmatpush2.bf16.msra.mxu0 0
      %2518 = vmatprep.subr.bf16.mxu0 0
      %2519 = vmatpush2.bf16.msra.mxu0 0
      %2520 = vmatprep.subr.bf16.mxu0 0
      %2521 = vmatpush2.bf16.msra.mxu0 0
      %2522 = vmatprep.subr.bf16.mxu0 0
      %2523 = vmatpush2.bf16.msra.mxu0 0
      %2524 = vmatprep.subr.bf16.mxu0 0
      %2525 = vmatpush2.bf16.msra.mxu0 0
      %2526 = vmatprep.subr.bf16.mxu0 0
      %2527 = vmatpush2.bf16.msra.mxu0 0
      %2528 = vmatprep.subr.bf16.mxu0 0
      %2529 = vmatpush2.bf16.msra.mxu0 0
      %2530 = vmatprep.subr.bf16.mxu0 0
      %2531 = vmatpush2.bf16.msra.mxu0 0
      %2532 = vmatprep.mubr.bf16.mxu0 0
      %2533 = vmatmul.mubr.bf16.gmra.mxu0 %v1128
      %v2534 = vpop.f32.mrf.mxu0
      %v2535 = vadd.f32 0.0, %v2534
      %v2536 = vpop.f32.mrf.mxu0
      %v2537 = vpop.f32.mrf.mxu0
      %v2538 = vadd.f32 0.0, %v2537
      %v2539 = vpop.f32.mrf.mxu0
      %2540 = vmatprep.mubr.bf16.mxu0 0
      %2541 = vmatmul.mubr.bf16.gmra.mxu0 %v1131
      %v2542 = vpop.f32.mrf.mxu0
      %v2543 = vadd.f32 0.0, %v2542
      %v2544 = vpop.f32.mrf.mxu0
      %v2545 = vpop.f32.mrf.mxu0
      %v2546 = vadd.f32 0.0, %v2545
      %v2547 = vpop.f32.mrf.mxu0
      %2548 = vmatprep.mubr.bf16.mxu0 0
      %2549 = vmatmul.mubr.bf16.gmra.mxu0 %v1134
      %v2550 = vpop.f32.mrf.mxu0
      %v2551 = vadd.f32 0.0, %v2550
      %v2552 = vpop.f32.mrf.mxu0
      %v2553 = vpop.f32.mrf.mxu0
      %v2554 = vadd.f32 0.0, %v2553
      %v2555 = vpop.f32.mrf.mxu0
      %2556 = vmatprep.mubr.bf16.mxu0 0
      %2557 = vmatmul.mubr.bf16.gmra.mxu0 %v1137
      %v2558 = vpop.f32.mrf.mxu0
      %v2559 = vadd.f32 0.0, %v2558
      %v2560 = vpop.f32.mrf.mxu0
      %v2561 = vpop.f32.mrf.mxu0
      %v2562 = vpop.f32.mrf.mxu0
      %2563 = vdwg.mxu0
      %v2564 = vadd.f32 %v2493, %v2535
      %v2565 = vadd.f32 %v2494, %v2538
      %v2566 = vadd.f32 %v2495, %v2543
      %v2567 = vadd.f32 %v2496, %v2546
      %v2568 = vadd.f32 %v2497, %v2551
      %v2569 = vadd.f32 %v2498, %v2554
      %v2570 = vadd.f32 %v2499, %v2559
      %2571 = vmatprep.subr.bf16.mxu0 0
      %2572 = vmatpush1.bf16.msra.mxu0 0
      %2573 = vmatprep.subr.bf16.mxu0 0
      %2574 = vmatpush1.bf16.msra.mxu0 0
      %2575 = vmatprep.subr.bf16.mxu0 0
      %2576 = vmatpush1.bf16.msra.mxu0 0
      %2577 = vmatprep.subr.bf16.mxu0 0
      %2578 = vmatpush1.bf16.msra.mxu0 0
      %2579 = vmatprep.subr.bf16.mxu0 0
      %2580 = vmatpush1.bf16.msra.mxu0 0
      %2581 = vmatprep.subr.bf16.mxu0 0
      %2582 = vmatpush1.bf16.msra.mxu0 0
      %2583 = vmatprep.subr.bf16.mxu0 0
      %2584 = vmatpush1.bf16.msra.mxu0 %v892
      %2585 = vmatprep.subr.bf16.mxu0 0
      %2586 = vmatpush1.bf16.msra.mxu0 %v891
      %2587 = vmatprep.subr.bf16.mxu0 0
      %2588 = vmatpush2.bf16.msra.mxu0 0
      %2589 = vmatprep.subr.bf16.mxu0 0
      %2590 = vmatpush2.bf16.msra.mxu0 0
      %2591 = vmatprep.subr.bf16.mxu0 0
      %2592 = vmatpush2.bf16.msra.mxu0 0
      %2593 = vmatprep.subr.bf16.mxu0 0
      %2594 = vmatpush2.bf16.msra.mxu0 0
      %2595 = vmatprep.subr.bf16.mxu0 0
      %2596 = vmatpush2.bf16.msra.mxu0 0
      %2597 = vmatprep.subr.bf16.mxu0 0
      %2598 = vmatpush2.bf16.msra.mxu0 0
      %2599 = vmatprep.subr.bf16.mxu0 0
      %2600 = vmatpush2.bf16.msra.mxu0 0
      %2601 = vmatprep.subr.bf16.mxu0 0
      %2602 = vmatpush2.bf16.msra.mxu0 0
      %2603 = vmatprep.mubr.bf16.mxu0 0
      %2604 = vmatmul.mubr.bf16.gmra.mxu0 %v1287
      %v2605 = vpop.f32.mrf.mxu0
      %v2606 = vadd.f32 0.0, %v2605
      %v2607 = vpop.f32.mrf.mxu0
      %v2608 = vpop.f32.mrf.mxu0
      %v2609 = vadd.f32 0.0, %v2608
      %v2610 = vpop.f32.mrf.mxu0
      %2611 = vmatprep.mubr.bf16.mxu0 0
      %2612 = vmatmul.mubr.bf16.gmra.mxu0 %v1290
      %v2613 = vpop.f32.mrf.mxu0
      %v2614 = vadd.f32 0.0, %v2613
      %v2615 = vpop.f32.mrf.mxu0
      %v2616 = vpop.f32.mrf.mxu0
      %v2617 = vadd.f32 0.0, %v2616
      %v2618 = vpop.f32.mrf.mxu0
      %2619 = vmatprep.mubr.bf16.mxu0 0
      %2620 = vmatmul.mubr.bf16.gmra.mxu0 %v1293
      %v2621 = vpop.f32.mrf.mxu0
      %v2622 = vadd.f32 0.0, %v2621
      %v2623 = vpop.f32.mrf.mxu0
      %v2624 = vpop.f32.mrf.mxu0
      %v2625 = vadd.f32 0.0, %v2624
      %v2626 = vpop.f32.mrf.mxu0
      %2627 = vmatprep.mubr.bf16.mxu0 0
      %2628 = vmatmul.mubr.bf16.gmra.mxu0 %v1296
      %v2629 = vpop.f32.mrf.mxu0
      %v2630 = vadd.f32 0.0, %v2629
      %v2631 = vpop.f32.mrf.mxu0
      %v2632 = vpop.f32.mrf.mxu0
      %v2633 = vpop.f32.mrf.mxu0
      %2634 = vdwg.mxu0
      %v2635 = vadd.f32 %v2564, %v2606
      %v2636 = vadd.f32 %v2565, %v2609
      %v2637 = vadd.f32 %v2566, %v2614
      %v2638 = vadd.f32 %v2567, %v2617
      %v2639 = vadd.f32 %v2568, %v2622
      %v2640 = vadd.f32 %v2569, %v2625
      %v2641 = vadd.f32 %v2570, %v2630
      %v2642 = vld [vmem:[%s165 + $0x64] sm:$0xf]
      %v2644 = vunpack.c.l.b16 %v2642
      %v2645 = vpack.c.b16 %v842, %v841
      %v2646 = vpack.c.b16 %v844, %v843
      %v2647 = vpack.c.b16 %v846, %v845
      %v2648 = vpack.c.b16 %v2644, %v2644
      %v2650 = vsel %vm226, %v2645, 0
      %v2653 = vsel %vm226, %v2646, 0
      %v2656 = vsel %vm226, %v2647, 0
      %v2659 = vsel %vm226, %v2648, 0
      %2661 = vmatprep.subr.bf16.mxu0 0
      %2662 = vmatpush1.bf16.msra.mxu0 0
      %2663 = vmatprep.subr.bf16.mxu0 0
      %2664 = vmatpush1.bf16.msra.mxu0 0
      %2665 = vmatprep.subr.bf16.mxu0 0
      %2666 = vmatpush1.bf16.msra.mxu0 0
      %2667 = vmatprep.subr.bf16.mxu0 0
      %2668 = vmatpush1.bf16.msra.mxu0 0
      %2669 = vmatprep.subr.bf16.mxu0 0
      %2670 = vmatpush1.bf16.msra.mxu0 0
      %2671 = vmatprep.subr.bf16.mxu0 0
      %2672 = vmatpush1.bf16.msra.mxu0 0
      %2673 = vmatprep.subr.bf16.mxu0 0
      %2674 = vmatpush1.bf16.msra.mxu0 %v999
      %2675 = vmatprep.subr.bf16.mxu0 0
      %2676 = vmatpush1.bf16.msra.mxu0 %v998
      %2677 = vmatprep.subr.bf16.mxu0 0
      %2678 = vmatpush2.bf16.msra.mxu0 0
      %2679 = vmatprep.subr.bf16.mxu0 0
      %2680 = vmatpush2.bf16.msra.mxu0 0
      %2681 = vmatprep.subr.bf16.mxu0 0
      %2682 = vmatpush2.bf16.msra.mxu0 0
      %2683 = vmatprep.subr.bf16.mxu0 0
      %2684 = vmatpush2.bf16.msra.mxu0 0
      %2685 = vmatprep.subr.bf16.mxu0 0
      %2686 = vmatpush2.bf16.msra.mxu0 0
      %2687 = vmatprep.subr.bf16.mxu0 0
      %2688 = vmatpush2.bf16.msra.mxu0 0
      %2689 = vmatprep.subr.bf16.mxu0 0
      %2690 = vmatpush2.bf16.msra.mxu0 0
      %2691 = vmatprep.subr.bf16.mxu0 0
      %2692 = vmatpush2.bf16.msra.mxu0 0
      %2693 = vmatprep.mubr.bf16.mxu0 0
      %2694 = vmatmul.mubr.bf16.gmra.mxu0 %v2650
      %v2695 = vpop.f32.mrf.mxu0
      %v2696 = vadd.f32 0.0, %v2695
      %v2697 = vpop.f32.mrf.mxu0
      %v2698 = vpop.f32.mrf.mxu0
      %v2699 = vadd.f32 0.0, %v2698
      %v2700 = vpop.f32.mrf.mxu0
      %2701 = vmatprep.mubr.bf16.mxu0 0
      %2702 = vmatmul.mubr.bf16.gmra.mxu0 %v2653
      %v2703 = vpop.f32.mrf.mxu0
      %v2704 = vadd.f32 0.0, %v2703
      %v2705 = vpop.f32.mrf.mxu0
      %v2706 = vpop.f32.mrf.mxu0
      %v2707 = vadd.f32 0.0, %v2706
      %v2708 = vpop.f32.mrf.mxu0
      %2709 = vmatprep.mubr.bf16.mxu0 0
      %2710 = vmatmul.mubr.bf16.gmra.mxu0 %v2656
      %v2711 = vpop.f32.mrf.mxu0
      %v2712 = vadd.f32 0.0, %v2711
      %v2713 = vpop.f32.mrf.mxu0
      %v2714 = vpop.f32.mrf.mxu0
      %v2715 = vadd.f32 0.0, %v2714
      %v2716 = vpop.f32.mrf.mxu0
      %2717 = vmatprep.mubr.bf16.mxu0 0
      %2718 = vmatmul.mubr.bf16.gmra.mxu0 %v2659
      %v2719 = vpop.f32.mrf.mxu0
      %v2720 = vadd.f32 0.0, %v2719
      %v2721 = vpop.f32.mrf.mxu0
      %v2722 = vpop.f32.mrf.mxu0
      %v2723 = vpop.f32.mrf.mxu0
      %2724 = vdwg.mxu0
      %v2725 = vadd.f32 %v2635, %v2696
      %v2726 = vadd.f32 %v2636, %v2699
      %v2727 = vadd.f32 %v2637, %v2704
      %v2728 = vadd.f32 %v2638, %v2707
      %v2729 = vadd.f32 %v2639, %v2712
      %v2730 = vadd.f32 %v2640, %v2715
      %v2731 = vadd.f32 %v2641, %v2720
      %v2732 = vld [vmem:[%s165 + $0x88] sm:$0xf]
      %v2734 = vunpack.c.l.b16 %v2732
      %v2735 = vpack.c.b16 %v1801, %v1800
      %v2736 = vpack.c.b16 %v1803, %v1802
      %v2737 = vpack.c.b16 %v1805, %v1804
      %v2738 = vpack.c.b16 %v2734, %v2734
      %v2740 = vsel %vm226, %v2735, 0
      %v2743 = vsel %vm226, %v2736, 0
      %v2746 = vsel %vm226, %v2737, 0
      %v2749 = vsel %vm226, %v2738, 0
      %2751 = vmatprep.subr.bf16.mxu0 0
      %2752 = vmatpush1.bf16.msra.mxu0 0
      %2753 = vmatprep.subr.bf16.mxu0 0
      %2754 = vmatpush1.bf16.msra.mxu0 0
      %2755 = vmatprep.subr.bf16.mxu0 0
      %2756 = vmatpush1.bf16.msra.mxu0 0
      %2757 = vmatprep.subr.bf16.mxu0 0
      %2758 = vmatpush1.bf16.msra.mxu0 0
      %2759 = vmatprep.subr.bf16.mxu0 0
      %2760 = vmatpush1.bf16.msra.mxu0 0
      %2761 = vmatprep.subr.bf16.mxu0 0
      %2762 = vmatpush1.bf16.msra.mxu0 0
      %2763 = vmatprep.subr.bf16.mxu0 0
      %2764 = vmatpush1.bf16.msra.mxu0 %v1124
      %2765 = vmatprep.subr.bf16.mxu0 0
      %2766 = vmatpush1.bf16.msra.mxu0 %v1123
      %2767 = vmatprep.subr.bf16.mxu0 0
      %2768 = vmatpush2.bf16.msra.mxu0 0
      %2769 = vmatprep.subr.bf16.mxu0 0
      %2770 = vmatpush2.bf16.msra.mxu0 0
      %2771 = vmatprep.subr.bf16.mxu0 0
      %2772 = vmatpush2.bf16.msra.mxu0 0
      %2773 = vmatprep.subr.bf16.mxu0 0
      %2774 = vmatpush2.bf16.msra.mxu0 0
      %2775 = vmatprep.subr.bf16.mxu0 0
      %2776 = vmatpush2.bf16.msra.mxu0 0
      %2777 = vmatprep.subr.bf16.mxu0 0
      %2778 = vmatpush2.bf16.msra.mxu0 0
      %2779 = vmatprep.subr.bf16.mxu0 0
      %2780 = vmatpush2.bf16.msra.mxu0 0
      %2781 = vmatprep.subr.bf16.mxu0 0
      %2782 = vmatpush2.bf16.msra.mxu0 0
      %2783 = vmatprep.mubr.bf16.mxu0 0
      %2784 = vmatmul.mubr.bf16.gmra.mxu0 %v2740
      %v2785 = vpop.f32.mrf.mxu0
      %v2786 = vadd.f32 0.0, %v2785
      %v2787 = vpop.f32.mrf.mxu0
      %v2788 = vpop.f32.mrf.mxu0
      %v2789 = vadd.f32 0.0, %v2788
      %v2790 = vpop.f32.mrf.mxu0
      %2791 = vmatprep.mubr.bf16.mxu0 0
      %2792 = vmatmul.mubr.bf16.gmra.mxu0 %v2743
      %v2793 = vpop.f32.mrf.mxu0
      %v2794 = vadd.f32 0.0, %v2793
      %v2795 = vpop.f32.mrf.mxu0
      %v2796 = vpop.f32.mrf.mxu0
      %v2797 = vadd.f32 0.0, %v2796
      %v2798 = vpop.f32.mrf.mxu0
      %2799 = vmatprep.mubr.bf16.mxu0 0
      %2800 = vmatmul.mubr.bf16.gmra.mxu0 %v2746
      %v2801 = vpop.f32.mrf.mxu0
      %v2802 = vadd.f32 0.0, %v2801
      %v2803 = vpop.f32.mrf.mxu0
      %v2804 = vpop.f32.mrf.mxu0
      %v2805 = vadd.f32 0.0, %v2804
      %v2806 = vpop.f32.mrf.mxu0
      %2807 = vmatprep.mubr.bf16.mxu0 0
      %2808 = vmatmul.mubr.bf16.gmra.mxu0 %v2749
      %v2809 = vpop.f32.mrf.mxu0
      %v2810 = vadd.f32 0.0, %v2809
      %v2811 = vpop.f32.mrf.mxu0
      %v2812 = vpop.f32.mrf.mxu0
      %v2813 = vpop.f32.mrf.mxu0
      %2814 = vdwg.mxu0
      %v2815 = vadd.f32 %v2725, %v2786
      %v2816 = vadd.f32 %v2726, %v2789
      %v2817 = vadd.f32 %v2727, %v2794
      %v2818 = vadd.f32 %v2728, %v2797
      %v2819 = vadd.f32 %v2729, %v2802
      %v2820 = vadd.f32 %v2730, %v2805
      %v2821 = vadd.f32 %v2731, %v2810
      %v2822 = vld [vmem:[%s165 + $0x4c] sm:$0xf]
      %v2823 = vld [vmem:[%s165 + $0x50] sm:$0xf]
      %v2824 = vld [vmem:[%s165 + $0x54] sm:$0xf]
      %v2825 = vld [vmem:[%s165 + $0x58] sm:$0xf]
      %v2826 = vld [vmem:[%s165 + $0x5c] sm:$0xf]
      %v2827 = vld [vmem:[%s165 + $0x60] sm:$0xf]
      %v2828 = vld [vmem:[%s165 + $0x64] sm:$0xf]
      %v2829 = vld [vmem:[%s165 + $0x68] sm:$0x1]
      %v2838 = vunpack.c.l.b16 %v2822
      %v2839 = vunpack.c.l.b16 %v2823
      %v2840 = vunpack.c.l.b16 %v2824
      %v2841 = vunpack.c.l.b16 %v2825
      %v2842 = vunpack.c.l.b16 %v2826
      %v2843 = vunpack.c.l.b16 %v2827
      %v2844 = vunpack.c.l.b16 %v2828
      %v2845 = vunpack.c.l.b16 %v2829
      %v2846 = vpack.c.b16 %v2839, %v2838
      %v2847 = vpack.c.b16 %v2841, %v2840
      %v2848 = vpack.c.b16 %v2843, %v2842
      %v2849 = vpack.c.b16 %v2845, %v2844
      %v2851 = vshrl.u32 %v2846, 16
      %v2853 = vshll.u32 %v2846, 16
      %v2855 = vrot.slane %v2853, 1
      %v2856 = vor.u32 %v2851, %v2855
      %v2858 = vshll.u32 %v2847, 16
      %v2860 = vrot.slane %v2858, 1
      %v2861 = vsel %vm442, %v2856, %v2860
      %v2862 = vshrl.u32 %v2847, 16
      %v2864 = vor.u32 %v2862, %v2860
      %v2866 = vshll.u32 %v2848, 16
      %v2868 = vrot.slane %v2866, 1
      %v2869 = vsel %vm442, %v2864, %v2868
      %v2870 = vshrl.u32 %v2848, 16
      %v2872 = vor.u32 %v2870, %v2868
      %v2874 = vshll.u32 %v2849, 16
      %v2876 = vrot.slane %v2874, 1
      %v2877 = vsel %vm442, %v2872, %v2876
      %v2878 = vshrl.u32 %v2849, 16
      %v2880 = vor.u32 %v2878, %v2876
      %v2882 = vsel %vm226, %v2861, 0
      %v2885 = vsel %vm226, %v2869, 0
      %v2888 = vsel %vm226, %v2877, 0
      %v2891 = vsel %vm226, %v2880, 0
      %2893 = vmatprep.subr.bf16.mxu0 0
      %2894 = vmatpush1.bf16.msra.mxu0 0
      %2895 = vmatprep.subr.bf16.mxu0 0
      %2896 = vmatpush1.bf16.msra.mxu0 0
      %2897 = vmatprep.subr.bf16.mxu0 0
      %2898 = vmatpush1.bf16.msra.mxu0 0
      %2899 = vmatprep.subr.bf16.mxu0 0
      %2900 = vmatpush1.bf16.msra.mxu0 0
      %2901 = vmatprep.subr.bf16.mxu0 0
      %2902 = vmatpush1.bf16.msra.mxu0 0
      %2903 = vmatprep.subr.bf16.mxu0 0
      %2904 = vmatpush1.bf16.msra.mxu0 0
      %2905 = vmatprep.subr.bf16.mxu0 0
      %2906 = vmatpush1.bf16.msra.mxu0 %v1283
      %2907 = vmatprep.subr.bf16.mxu0 0
      %2908 = vmatpush1.bf16.msra.mxu0 %v1282
      %2909 = vmatprep.subr.bf16.mxu0 0
      %2910 = vmatpush2.bf16.msra.mxu0 0
      %2911 = vmatprep.subr.bf16.mxu0 0
      %2912 = vmatpush2.bf16.msra.mxu0 0
      %2913 = vmatprep.subr.bf16.mxu0 0
      %2914 = vmatpush2.bf16.msra.mxu0 0
      %2915 = vmatprep.subr.bf16.mxu0 0
      %2916 = vmatpush2.bf16.msra.mxu0 0
      %2917 = vmatprep.subr.bf16.mxu0 0
      %2918 = vmatpush2.bf16.msra.mxu0 0
      %2919 = vmatprep.subr.bf16.mxu0 0
      %2920 = vmatpush2.bf16.msra.mxu0 0
      %2921 = vmatprep.subr.bf16.mxu0 0
      %2922 = vmatpush2.bf16.msra.mxu0 0
      %2923 = vmatprep.subr.bf16.mxu0 0
      %2924 = vmatpush2.bf16.msra.mxu0 0
      %2925 = vmatprep.mubr.bf16.mxu0 0
      %2926 = vmatmul.mubr.bf16.gmra.mxu0 %v2882
      %v2927 = vpop.f32.mrf.mxu0
      %v2928 = vadd.f32 0.0, %v2927
      %v2929 = vpop.f32.mrf.mxu0
      %v2930 = vpop.f32.mrf.mxu0
      %v2931 = vadd.f32 0.0, %v2930
      %v2932 = vpop.f32.mrf.mxu0
      %2933 = vmatprep.mubr.bf16.mxu0 0
      %2934 = vmatmul.mubr.bf16.gmra.mxu0 %v2885
      %v2935 = vpop.f32.mrf.mxu0
      %v2936 = vadd.f32 0.0, %v2935
      %v2937 = vpop.f32.mrf.mxu0
      %v2938 = vpop.f32.mrf.mxu0
      %v2939 = vadd.f32 0.0, %v2938
      %v2940 = vpop.f32.mrf.mxu0
      %2941 = vmatprep.mubr.bf16.mxu0 0
      %2942 = vmatmul.mubr.bf16.gmra.mxu0 %v2888
      %v2943 = vpop.f32.mrf.mxu0
      %v2944 = vadd.f32 0.0, %v2943
      %v2945 = vpop.f32.mrf.mxu0
      %v2946 = vpop.f32.mrf.mxu0
      %v2947 = vadd.f32 0.0, %v2946
      %v2948 = vpop.f32.mrf.mxu0
      %2949 = vmatprep.mubr.bf16.mxu0 0
      %2950 = vmatmul.mubr.bf16.gmra.mxu0 %v2891
      %v2951 = vpop.f32.mrf.mxu0
      %v2952 = vadd.f32 0.0, %v2951
      %v2953 = vpop.f32.mrf.mxu0
      %v2954 = vpop.f32.mrf.mxu0
      %v2955 = vpop.f32.mrf.mxu0
      %2956 = vdwg.mxu0
      %v2957 = vadd.f32 %v2815, %v2928
      %v2958 = vadd.f32 %v2816, %v2931
      %v2959 = vadd.f32 %v2817, %v2936
      %v2960 = vadd.f32 %v2818, %v2939
      %v2961 = vadd.f32 %v2819, %v2944
      %v2962 = vadd.f32 %v2820, %v2947
      %v2963 = vadd.f32 %v2821, %v2952
      %v2964 = vadd.f32 %v2957, %v1373
      %v2965 = vadd.f32 %v2958, %v1373
      %v2966 = vadd.f32 %v2959, %v1373
      %v2967 = vadd.f32 %v2960, %v1373
      %v2968 = vadd.f32 %v2961, %v1373
      %v2969 = vadd.f32 %v2962, %v1373
      %v2970 = vadd.f32 %v2963, %v1373
      %v2971 = vmax.f32 %v2964, 0.0
      %v2972 = vmax.f32 %v2965, 0.0
      %v2973 = vmax.f32 %v2966, 0.0
      %v2974 = vmax.f32 %v2967, 0.0
      %v2975 = vmax.f32 %v2968, 0.0
      %v2976 = vmax.f32 %v2969, 0.0
      %v2977 = vmax.f32 %v2970, 0.0
      %v2978 = vmax.f32 %v2223, %v2971
      %v2979 = vmax.f32 %v2224, %v2972
      %v2980 = vmax.f32 %v2225, %v2973
      %v2981 = vmax.f32 %v2226, %v2974
      %v2982 = vmax.f32 %v2227, %v2975
      %v2983 = vmax.f32 %v2228, %v2976
      %v2984 = vmax.f32 %v2229, %v2977
      %2985 = vmatprep.subr.bf16.mxu0 0
      %2986 = vmatpush1.bf16.msra.mxu0 0
      %2987 = vmatprep.subr.bf16.mxu0 0
      %2988 = vmatpush1.bf16.msra.mxu0 0
      %2989 = vmatprep.subr.bf16.mxu0 0
      %2990 = vmatpush1.bf16.msra.mxu0 0
      %2991 = vmatprep.subr.bf16.mxu0 0
      %2992 = vmatpush1.bf16.msra.mxu0 0
      %2993 = vmatprep.subr.bf16.mxu0 0
      %2994 = vmatpush1.bf16.msra.mxu0 0
      %2995 = vmatprep.subr.bf16.mxu0 0
      %2996 = vmatpush1.bf16.msra.mxu0 0
      %2997 = vmatprep.subr.bf16.mxu0 0
      %2998 = vmatpush1.bf16.msra.mxu0 %v223
      %2999 = vmatprep.subr.bf16.mxu0 0
      %3000 = vmatpush1.bf16.msra.mxu0 %v222
      %3001 = vmatprep.subr.bf16.mxu0 0
      %3002 = vmatpush2.bf16.msra.mxu0 0
      %3003 = vmatprep.subr.bf16.mxu0 0
      %3004 = vmatpush2.bf16.msra.mxu0 0
      %3005 = vmatprep.subr.bf16.mxu0 0
      %3006 = vmatpush2.bf16.msra.mxu0 0
      %3007 = vmatprep.subr.bf16.mxu0 0
      %3008 = vmatpush2.bf16.msra.mxu0 0
      %3009 = vmatprep.subr.bf16.mxu0 0
      %3010 = vmatpush2.bf16.msra.mxu0 0
      %3011 = vmatprep.subr.bf16.mxu0 0
      %3012 = vmatpush2.bf16.msra.mxu0 0
      %3013 = vmatprep.subr.bf16.mxu0 0
      %3014 = vmatpush2.bf16.msra.mxu0 0
      %3015 = vmatprep.subr.bf16.mxu0 0
      %3016 = vmatpush2.bf16.msra.mxu0 0
      %3017 = vmatprep.mubr.bf16.mxu0 0
      %3018 = vmatmul.mubr.bf16.gmra.mxu0 %v896
      %v3019 = vpop.f32.mrf.mxu0
      %v3020 = vadd.f32 0.0, %v3019
      %v3021 = vpop.f32.mrf.mxu0
      %v3022 = vpop.f32.mrf.mxu0
      %v3023 = vadd.f32 0.0, %v3022
      %v3024 = vpop.f32.mrf.mxu0
      %3025 = vmatprep.mubr.bf16.mxu0 0
      %3026 = vmatmul.mubr.bf16.gmra.mxu0 %v899
      %v3027 = vpop.f32.mrf.mxu0
      %v3028 = vadd.f32 0.0, %v3027
      %v3029 = vpop.f32.mrf.mxu0
      %v3030 = vpop.f32.mrf.mxu0
      %v3031 = vadd.f32 0.0, %v3030
      %v3032 = vpop.f32.mrf.mxu0
      %3033 = vmatprep.mubr.bf16.mxu0 0
      %3034 = vmatmul.mubr.bf16.gmra.mxu0 %v902
      %v3035 = vpop.f32.mrf.mxu0
      %v3036 = vadd.f32 0.0, %v3035
      %v3037 = vpop.f32.mrf.mxu0
      %v3038 = vpop.f32.mrf.mxu0
      %v3039 = vadd.f32 0.0, %v3038
      %v3040 = vpop.f32.mrf.mxu0
      %3041 = vmatprep.mubr.bf16.mxu0 0
      %3042 = vmatmul.mubr.bf16.gmra.mxu0 %v905
      %v3043 = vpop.f32.mrf.mxu0
      %v3044 = vadd.f32 0.0, %v3043
      %v3045 = vpop.f32.mrf.mxu0
      %v3046 = vpop.f32.mrf.mxu0
      %v3047 = vpop.f32.mrf.mxu0
      %3048 = vdwg.mxu0
      %3049 = vmatprep.subr.bf16.mxu0 0
      %3050 = vmatpush1.bf16.msra.mxu0 0
      %3051 = vmatprep.subr.bf16.mxu0 0
      %3052 = vmatpush1.bf16.msra.mxu0 0
      %3053 = vmatprep.subr.bf16.mxu0 0
      %3054 = vmatpush1.bf16.msra.mxu0 0
      %3055 = vmatprep.subr.bf16.mxu0 0
      %3056 = vmatpush1.bf16.msra.mxu0 0
      %3057 = vmatprep.subr.bf16.mxu0 0
      %3058 = vmatpush1.bf16.msra.mxu0 0
      %3059 = vmatprep.subr.bf16.mxu0 0
      %3060 = vmatpush1.bf16.msra.mxu0 0
      %3061 = vmatprep.subr.bf16.mxu0 0
      %3062 = vmatpush1.bf16.msra.mxu0 %v330
      %3063 = vmatprep.subr.bf16.mxu0 0
      %3064 = vmatpush1.bf16.msra.mxu0 %v329
      %3065 = vmatprep.subr.bf16.mxu0 0
      %3066 = vmatpush2.bf16.msra.mxu0 0
      %3067 = vmatprep.subr.bf16.mxu0 0
      %3068 = vmatpush2.bf16.msra.mxu0 0
      %3069 = vmatprep.subr.bf16.mxu0 0
      %3070 = vmatpush2.bf16.msra.mxu0 0
      %3071 = vmatprep.subr.bf16.mxu0 0
      %3072 = vmatpush2.bf16.msra.mxu0 0
      %3073 = vmatprep.subr.bf16.mxu0 0
      %3074 = vmatpush2.bf16.msra.mxu0 0
      %3075 = vmatprep.subr.bf16.mxu0 0
      %3076 = vmatpush2.bf16.msra.mxu0 0
      %3077 = vmatprep.subr.bf16.mxu0 0
      %3078 = vmatpush2.bf16.msra.mxu0 0
      %3079 = vmatprep.subr.bf16.mxu0 0
      %3080 = vmatpush2.bf16.msra.mxu0 0
      %3081 = vmatprep.mubr.bf16.mxu0 0
      %3082 = vmatmul.mubr.bf16.gmra.mxu0 %v737
      %v3083 = vpop.f32.mrf.mxu0
      %v3084 = vadd.f32 %v3020, %v3083
      %v3085 = vpop.f32.mrf.mxu0
      %v3086 = vpop.f32.mrf.mxu0
      %v3087 = vadd.f32 %v3023, %v3086
      %v3088 = vpop.f32.mrf.mxu0
      %3089 = vmatprep.mubr.bf16.mxu0 0
      %3090 = vmatmul.mubr.bf16.gmra.mxu0 %v740
      %v3091 = vpop.f32.mrf.mxu0
      %v3092 = vadd.f32 %v3028, %v3091
      %v3093 = vpop.f32.mrf.mxu0
      %v3094 = vpop.f32.mrf.mxu0
      %v3095 = vadd.f32 %v3031, %v3094
      %v3096 = vpop.f32.mrf.mxu0
      %3097 = vmatprep.mubr.bf16.mxu0 0
      %3098 = vmatmul.mubr.bf16.gmra.mxu0 %v743
      %v3099 = vpop.f32.mrf.mxu0
      %v3100 = vadd.f32 %v3036, %v3099
      %v3101 = vpop.f32.mrf.mxu0
      %v3102 = vpop.f32.mrf.mxu0
      %v3103 = vadd.f32 %v3039, %v3102
      %v3104 = vpop.f32.mrf.mxu0
      %3105 = vmatprep.mubr.bf16.mxu0 0
      %3106 = vmatmul.mubr.bf16.gmra.mxu0 %v746
      %v3107 = vpop.f32.mrf.mxu0
      %v3108 = vadd.f32 %v3044, %v3107
      %v3109 = vpop.f32.mrf.mxu0
      %v3110 = vpop.f32.mrf.mxu0
      %v3111 = vpop.f32.mrf.mxu0
      %3112 = vdwg.mxu0
      %3113 = vmatprep.subr.bf16.mxu0 0
      %3114 = vmatpush1.bf16.msra.mxu0 0
      %3115 = vmatprep.subr.bf16.mxu0 0
      %3116 = vmatpush1.bf16.msra.mxu0 0
      %3117 = vmatprep.subr.bf16.mxu0 0
      %3118 = vmatpush1.bf16.msra.mxu0 0
      %3119 = vmatprep.subr.bf16.mxu0 0
      %3120 = vmatpush1.bf16.msra.mxu0 0
      %3121 = vmatprep.subr.bf16.mxu0 0
      %3122 = vmatpush1.bf16.msra.mxu0 0
      %3123 = vmatprep.subr.bf16.mxu0 0
      %3124 = vmatpush1.bf16.msra.mxu0 0
      %3125 = vmatprep.subr.bf16.mxu0 0
      %3126 = vmatpush1.bf16.msra.mxu0 %v483
      %3127 = vmatprep.subr.bf16.mxu0 0
      %3128 = vmatpush1.bf16.msra.mxu0 %v482
      %3129 = vmatprep.subr.bf16.mxu0 0
      %3130 = vmatpush2.bf16.msra.mxu0 0
      %3131 = vmatprep.subr.bf16.mxu0 0
      %3132 = vmatpush2.bf16.msra.mxu0 0
      %3133 = vmatprep.subr.bf16.mxu0 0
      %3134 = vmatpush2.bf16.msra.mxu0 0
      %3135 = vmatprep.subr.bf16.mxu0 0
      %3136 = vmatpush2.bf16.msra.mxu0 0
      %3137 = vmatprep.subr.bf16.mxu0 0
      %3138 = vmatpush2.bf16.msra.mxu0 0
      %3139 = vmatprep.subr.bf16.mxu0 0
      %3140 = vmatpush2.bf16.msra.mxu0 0
      %3141 = vmatprep.subr.bf16.mxu0 0
      %3142 = vmatpush2.bf16.msra.mxu0 0
      %3143 = vmatprep.subr.bf16.mxu0 0
      %3144 = vmatpush2.bf16.msra.mxu0 0
      %3145 = vmatprep.mubr.bf16.mxu0 0
      %3146 = vmatmul.mubr.bf16.gmra.mxu0 %v1843
      %v3147 = vpop.f32.mrf.mxu0
      %v3148 = vadd.f32 0.0, %v3147
      %v3149 = vpop.f32.mrf.mxu0
      %v3150 = vpop.f32.mrf.mxu0
      %v3151 = vadd.f32 0.0, %v3150
      %v3152 = vpop.f32.mrf.mxu0
      %3153 = vmatprep.mubr.bf16.mxu0 0
      %3154 = vmatmul.mubr.bf16.gmra.mxu0 %v1846
      %v3155 = vpop.f32.mrf.mxu0
      %v3156 = vadd.f32 0.0, %v3155
      %v3157 = vpop.f32.mrf.mxu0
      %v3158 = vpop.f32.mrf.mxu0
      %v3159 = vadd.f32 0.0, %v3158
      %v3160 = vpop.f32.mrf.mxu0
      %3161 = vmatprep.mubr.bf16.mxu0 0
      %3162 = vmatmul.mubr.bf16.gmra.mxu0 %v1849
      %v3163 = vpop.f32.mrf.mxu0
      %v3164 = vadd.f32 0.0, %v3163
      %v3165 = vpop.f32.mrf.mxu0
      %v3166 = vpop.f32.mrf.mxu0
      %v3167 = vadd.f32 0.0, %v3166
      %v3168 = vpop.f32.mrf.mxu0
      %3169 = vmatprep.mubr.bf16.mxu0 0
      %3170 = vmatmul.mubr.bf16.gmra.mxu0 %v1852
      %v3171 = vpop.f32.mrf.mxu0
      %v3172 = vadd.f32 0.0, %v3171
      %v3173 = vpop.f32.mrf.mxu0
      %v3174 = vpop.f32.mrf.mxu0
      %v3175 = vpop.f32.mrf.mxu0
      %3176 = vdwg.mxu0
      %v3177 = vadd.f32 %v3084, %v3148
      %v3178 = vadd.f32 %v3087, %v3151
      %v3179 = vadd.f32 %v3092, %v3156
      %v3180 = vadd.f32 %v3095, %v3159
      %v3181 = vadd.f32 %v3100, %v3164
      %v3182 = vadd.f32 %v3103, %v3167
      %v3183 = vadd.f32 %v3108, %v3172
      %3184 = vmatprep.subr.bf16.mxu0 0
      %3185 = vmatpush1.bf16.msra.mxu0 0
      %3186 = vmatprep.subr.bf16.mxu0 0
      %3187 = vmatpush1.bf16.msra.mxu0 0
      %3188 = vmatprep.subr.bf16.mxu0 0
      %3189 = vmatpush1.bf16.msra.mxu0 0
      %3190 = vmatprep.subr.bf16.mxu0 0
      %3191 = vmatpush1.bf16.msra.mxu0 0
      %3192 = vmatprep.subr.bf16.mxu0 0
      %3193 = vmatpush1.bf16.msra.mxu0 0
      %3194 = vmatprep.subr.bf16.mxu0 0
      %3195 = vmatpush1.bf16.msra.mxu0 0
      %3196 = vmatprep.subr.bf16.mxu0 0
      %3197 = vmatpush1.bf16.msra.mxu0 %v608
      %3198 = vmatprep.subr.bf16.mxu0 0
      %3199 = vmatpush1.bf16.msra.mxu0 %v607
      %3200 = vmatprep.subr.bf16.mxu0 0
      %3201 = vmatpush2.bf16.msra.mxu0 0
      %3202 = vmatprep.subr.bf16.mxu0 0
      %3203 = vmatpush2.bf16.msra.mxu0 0
      %3204 = vmatprep.subr.bf16.mxu0 0
      %3205 = vmatpush2.bf16.msra.mxu0 0
      %3206 = vmatprep.subr.bf16.mxu0 0
      %3207 = vmatpush2.bf16.msra.mxu0 0
      %3208 = vmatprep.subr.bf16.mxu0 0
      %3209 = vmatpush2.bf16.msra.mxu0 0
      %3210 = vmatprep.subr.bf16.mxu0 0
      %3211 = vmatpush2.bf16.msra.mxu0 0
      %3212 = vmatprep.subr.bf16.mxu0 0
      %3213 = vmatpush2.bf16.msra.mxu0 0
      %3214 = vmatprep.subr.bf16.mxu0 0
      %3215 = vmatpush2.bf16.msra.mxu0 0
      %3216 = vmatprep.mubr.bf16.mxu0 0
      %3217 = vmatmul.mubr.bf16.gmra.mxu0 %v1128
      %v3218 = vpop.f32.mrf.mxu0
      %v3219 = vadd.f32 0.0, %v3218
      %v3220 = vpop.f32.mrf.mxu0
      %v3221 = vpop.f32.mrf.mxu0
      %v3222 = vadd.f32 0.0, %v3221
      %v3223 = vpop.f32.mrf.mxu0
      %3224 = vmatprep.mubr.bf16.mxu0 0
      %3225 = vmatmul.mubr.bf16.gmra.mxu0 %v1131
      %v3226 = vpop.f32.mrf.mxu0
      %v3227 = vadd.f32 0.0, %v3226
      %v3228 = vpop.f32.mrf.mxu0
      %v3229 = vpop.f32.mrf.mxu0
      %v3230 = vadd.f32 0.0, %v3229
      %v3231 = vpop.f32.mrf.mxu0
      %3232 = vmatprep.mubr.bf16.mxu0 0
      %3233 = vmatmul.mubr.bf16.gmra.mxu0 %v1134
      %v3234 = vpop.f32.mrf.mxu0
      %v3235 = vadd.f32 0.0, %v3234
      %v3236 = vpop.f32.mrf.mxu0
      %v3237 = vpop.f32.mrf.mxu0
      %v3238 = vadd.f32 0.0, %v3237
      %v3239 = vpop.f32.mrf.mxu0
      %3240 = vmatprep.mubr.bf16.mxu0 0
      %3241 = vmatmul.mubr.bf16.gmra.mxu0 %v1137
      %v3242 = vpop.f32.mrf.mxu0
      %v3243 = vadd.f32 0.0, %v3242
      %v3244 = vpop.f32.mrf.mxu0
      %v3245 = vpop.f32.mrf.mxu0
      %v3246 = vpop.f32.mrf.mxu0
      %3247 = vdwg.mxu0
      %v3248 = vadd.f32 %v3177, %v3219
      %v3249 = vadd.f32 %v3178, %v3222
      %v3250 = vadd.f32 %v3179, %v3227
      %v3251 = vadd.f32 %v3180, %v3230
      %v3252 = vadd.f32 %v3181, %v3235
      %v3253 = vadd.f32 %v3182, %v3238
      %v3254 = vadd.f32 %v3183, %v3243
      %3255 = vmatprep.subr.bf16.mxu0 0
      %3256 = vmatpush1.bf16.msra.mxu0 0
      %3257 = vmatprep.subr.bf16.mxu0 0
      %3258 = vmatpush1.bf16.msra.mxu0 0
      %3259 = vmatprep.subr.bf16.mxu0 0
      %3260 = vmatpush1.bf16.msra.mxu0 0
      %3261 = vmatprep.subr.bf16.mxu0 0
      %3262 = vmatpush1.bf16.msra.mxu0 0
      %3263 = vmatprep.subr.bf16.mxu0 0
      %3264 = vmatpush1.bf16.msra.mxu0 0
      %3265 = vmatprep.subr.bf16.mxu0 0
      %3266 = vmatpush1.bf16.msra.mxu0 0
      %3267 = vmatprep.subr.bf16.mxu0 0
      %3268 = vmatpush1.bf16.msra.mxu0 %v733
      %3269 = vmatprep.subr.bf16.mxu0 0
      %3270 = vmatpush1.bf16.msra.mxu0 %v732
      %3271 = vmatprep.subr.bf16.mxu0 0
      %3272 = vmatpush2.bf16.msra.mxu0 0
      %3273 = vmatprep.subr.bf16.mxu0 0
      %3274 = vmatpush2.bf16.msra.mxu0 0
      %3275 = vmatprep.subr.bf16.mxu0 0
      %3276 = vmatpush2.bf16.msra.mxu0 0
      %3277 = vmatprep.subr.bf16.mxu0 0
      %3278 = vmatpush2.bf16.msra.mxu0 0
      %3279 = vmatprep.subr.bf16.mxu0 0
      %3280 = vmatpush2.bf16.msra.mxu0 0
      %3281 = vmatprep.subr.bf16.mxu0 0
      %3282 = vmatpush2.bf16.msra.mxu0 0
      %3283 = vmatprep.subr.bf16.mxu0 0
      %3284 = vmatpush2.bf16.msra.mxu0 0
      %3285 = vmatprep.subr.bf16.mxu0 0
      %3286 = vmatpush2.bf16.msra.mxu0 0
      %3287 = vmatprep.mubr.bf16.mxu0 0
      %3288 = vmatmul.mubr.bf16.gmra.mxu0 %v1287
      %v3289 = vpop.f32.mrf.mxu0
      %v3290 = vadd.f32 0.0, %v3289
      %v3291 = vpop.f32.mrf.mxu0
      %v3292 = vpop.f32.mrf.mxu0
      %v3293 = vadd.f32 0.0, %v3292
      %v3294 = vpop.f32.mrf.mxu0
      %3295 = vmatprep.mubr.bf16.mxu0 0
      %3296 = vmatmul.mubr.bf16.gmra.mxu0 %v1290
      %v3297 = vpop.f32.mrf.mxu0
      %v3298 = vadd.f32 0.0, %v3297
      %v3299 = vpop.f32.mrf.mxu0
      %v3300 = vpop.f32.mrf.mxu0
      %v3301 = vadd.f32 0.0, %v3300
      %v3302 = vpop.f32.mrf.mxu0
      %3303 = vmatprep.mubr.bf16.mxu0 0
      %3304 = vmatmul.mubr.bf16.gmra.mxu0 %v1293
      %v3305 = vpop.f32.mrf.mxu0
      %v3306 = vadd.f32 0.0, %v3305
      %v3307 = vpop.f32.mrf.mxu0
      %v3308 = vpop.f32.mrf.mxu0
      %v3309 = vadd.f32 0.0, %v3308
      %v3310 = vpop.f32.mrf.mxu0
      %3311 = vmatprep.mubr.bf16.mxu0 0
      %3312 = vmatmul.mubr.bf16.gmra.mxu0 %v1296
      %v3313 = vpop.f32.mrf.mxu0
      %v3314 = vadd.f32 0.0, %v3313
      %v3315 = vpop.f32.mrf.mxu0
      %v3316 = vpop.f32.mrf.mxu0
      %v3317 = vpop.f32.mrf.mxu0
      %3318 = vdwg.mxu0
      %v3319 = vadd.f32 %v3248, %v3290
      %v3320 = vadd.f32 %v3249, %v3293
      %v3321 = vadd.f32 %v3250, %v3298
      %v3322 = vadd.f32 %v3251, %v3301
      %v3323 = vadd.f32 %v3252, %v3306
      %v3324 = vadd.f32 %v3253, %v3309
      %v3325 = vadd.f32 %v3254, %v3314
      %3326 = vmatprep.subr.bf16.mxu0 0
      %3327 = vmatpush1.bf16.msra.mxu0 0
      %3328 = vmatprep.subr.bf16.mxu0 0
      %3329 = vmatpush1.bf16.msra.mxu0 0
      %3330 = vmatprep.subr.bf16.mxu0 0
      %3331 = vmatpush1.bf16.msra.mxu0 0
      %3332 = vmatprep.subr.bf16.mxu0 0
      %3333 = vmatpush1.bf16.msra.mxu0 0
      %3334 = vmatprep.subr.bf16.mxu0 0
      %3335 = vmatpush1.bf16.msra.mxu0 0
      %3336 = vmatprep.subr.bf16.mxu0 0
      %3337 = vmatpush1.bf16.msra.mxu0 0
      %3338 = vmatprep.subr.bf16.mxu0 0
      %3339 = vmatpush1.bf16.msra.mxu0 %v892
      %3340 = vmatprep.subr.bf16.mxu0 0
      %3341 = vmatpush1.bf16.msra.mxu0 %v891
      %3342 = vmatprep.subr.bf16.mxu0 0
      %3343 = vmatpush2.bf16.msra.mxu0 0
      %3344 = vmatprep.subr.bf16.mxu0 0
      %3345 = vmatpush2.bf16.msra.mxu0 0
      %3346 = vmatprep.subr.bf16.mxu0 0
      %3347 = vmatpush2.bf16.msra.mxu0 0
      %3348 = vmatprep.subr.bf16.mxu0 0
      %3349 = vmatpush2.bf16.msra.mxu0 0
      %3350 = vmatprep.subr.bf16.mxu0 0
      %3351 = vmatpush2.bf16.msra.mxu0 0
      %3352 = vmatprep.subr.bf16.mxu0 0
      %3353 = vmatpush2.bf16.msra.mxu0 0
      %3354 = vmatprep.subr.bf16.mxu0 0
      %3355 = vmatpush2.bf16.msra.mxu0 0
      %3356 = vmatprep.subr.bf16.mxu0 0
      %3357 = vmatpush2.bf16.msra.mxu0 0
      %3358 = vmatprep.mubr.bf16.mxu0 0
      %3359 = vmatmul.mubr.bf16.gmra.mxu0 %v2127
      %v3360 = vpop.f32.mrf.mxu0
      %v3361 = vadd.f32 0.0, %v3360
      %v3362 = vpop.f32.mrf.mxu0
      %v3363 = vpop.f32.mrf.mxu0
      %v3364 = vadd.f32 0.0, %v3363
      %v3365 = vpop.f32.mrf.mxu0
      %3366 = vmatprep.mubr.bf16.mxu0 0
      %3367 = vmatmul.mubr.bf16.gmra.mxu0 %v2130
      %v3368 = vpop.f32.mrf.mxu0
      %v3369 = vadd.f32 0.0, %v3368
      %v3370 = vpop.f32.mrf.mxu0
      %v3371 = vpop.f32.mrf.mxu0
      %v3372 = vadd.f32 0.0, %v3371
      %v3373 = vpop.f32.mrf.mxu0
      %3374 = vmatprep.mubr.bf16.mxu0 0
      %3375 = vmatmul.mubr.bf16.gmra.mxu0 %v2133
      %v3376 = vpop.f32.mrf.mxu0
      %v3377 = vadd.f32 0.0, %v3376
      %v3378 = vpop.f32.mrf.mxu0
      %v3379 = vpop.f32.mrf.mxu0
      %v3380 = vadd.f32 0.0, %v3379
      %v3381 = vpop.f32.mrf.mxu0
      %3382 = vmatprep.mubr.bf16.mxu0 0
      %3383 = vmatmul.mubr.bf16.gmra.mxu0 %v2136
      %v3384 = vpop.f32.mrf.mxu0
      %v3385 = vadd.f32 0.0, %v3384
      %v3386 = vpop.f32.mrf.mxu0
      %v3387 = vpop.f32.mrf.mxu0
      %v3388 = vpop.f32.mrf.mxu0
      %3389 = vdwg.mxu0
      %v3390 = vadd.f32 %v3319, %v3361
      %v3391 = vadd.f32 %v3320, %v3364
      %v3392 = vadd.f32 %v3321, %v3369
      %v3393 = vadd.f32 %v3322, %v3372
      %v3394 = vadd.f32 %v3323, %v3377
      %v3395 = vadd.f32 %v3324, %v3380
      %v3396 = vadd.f32 %v3325, %v3385
      %3397 = vmatprep.subr.bf16.mxu0 0
      %3398 = vmatpush1.bf16.msra.mxu0 0
      %3399 = vmatprep.subr.bf16.mxu0 0
      %3400 = vmatpush1.bf16.msra.mxu0 0
      %3401 = vmatprep.subr.bf16.mxu0 0
      %3402 = vmatpush1.bf16.msra.mxu0 0
      %3403 = vmatprep.subr.bf16.mxu0 0
      %3404 = vmatpush1.bf16.msra.mxu0 0
      %3405 = vmatprep.subr.bf16.mxu0 0
      %3406 = vmatpush1.bf16.msra.mxu0 0
      %3407 = vmatprep.subr.bf16.mxu0 0
      %3408 = vmatpush1.bf16.msra.mxu0 0
      %3409 = vmatprep.subr.bf16.mxu0 0
      %3410 = vmatpush1.bf16.msra.mxu0 %v999
      %3411 = vmatprep.subr.bf16.mxu0 0
      %3412 = vmatpush1.bf16.msra.mxu0 %v998
      %3413 = vmatprep.subr.bf16.mxu0 0
      %3414 = vmatpush2.bf16.msra.mxu0 0
      %3415 = vmatprep.subr.bf16.mxu0 0
      %3416 = vmatpush2.bf16.msra.mxu0 0
      %3417 = vmatprep.subr.bf16.mxu0 0
      %3418 = vmatpush2.bf16.msra.mxu0 0
      %3419 = vmatprep.subr.bf16.mxu0 0
      %3420 = vmatpush2.bf16.msra.mxu0 0
      %3421 = vmatprep.subr.bf16.mxu0 0
      %3422 = vmatpush2.bf16.msra.mxu0 0
      %3423 = vmatprep.subr.bf16.mxu0 0
      %3424 = vmatpush2.bf16.msra.mxu0 0
      %3425 = vmatprep.subr.bf16.mxu0 0
      %3426 = vmatpush2.bf16.msra.mxu0 0
      %3427 = vmatprep.subr.bf16.mxu0 0
      %3428 = vmatpush2.bf16.msra.mxu0 0
      %3429 = vmatprep.mubr.bf16.mxu0 0
      %3430 = vmatmul.mubr.bf16.gmra.mxu0 %v2740
      %v3431 = vpop.f32.mrf.mxu0
      %v3432 = vadd.f32 0.0, %v3431
      %v3433 = vpop.f32.mrf.mxu0
      %v3434 = vpop.f32.mrf.mxu0
      %v3435 = vadd.f32 0.0, %v3434
      %v3436 = vpop.f32.mrf.mxu0
      %3437 = vmatprep.mubr.bf16.mxu0 0
      %3438 = vmatmul.mubr.bf16.gmra.mxu0 %v2743
      %v3439 = vpop.f32.mrf.mxu0
      %v3440 = vadd.f32 0.0, %v3439
      %v3441 = vpop.f32.mrf.mxu0
      %v3442 = vpop.f32.mrf.mxu0
      %v3443 = vadd.f32 0.0, %v3442
      %v3444 = vpop.f32.mrf.mxu0
      %3445 = vmatprep.mubr.bf16.mxu0 0
      %3446 = vmatmul.mubr.bf16.gmra.mxu0 %v2746
      %v3447 = vpop.f32.mrf.mxu0
      %v3448 = vadd.f32 0.0, %v3447
      %v3449 = vpop.f32.mrf.mxu0
      %v3450 = vpop.f32.mrf.mxu0
      %v3451 = vadd.f32 0.0, %v3450
      %v3452 = vpop.f32.mrf.mxu0
      %3453 = vmatprep.mubr.bf16.mxu0 0
      %3454 = vmatmul.mubr.bf16.gmra.mxu0 %v2749
      %v3455 = vpop.f32.mrf.mxu0
      %v3456 = vadd.f32 0.0, %v3455
      %v3457 = vpop.f32.mrf.mxu0
      %v3458 = vpop.f32.mrf.mxu0
      %v3459 = vpop.f32.mrf.mxu0
      %3460 = vdwg.mxu0
      %v3461 = vadd.f32 %v3390, %v3432
      %v3462 = vadd.f32 %v3391, %v3435
      %v3463 = vadd.f32 %v3392, %v3440
      %v3464 = vadd.f32 %v3393, %v3443
      %v3465 = vadd.f32 %v3394, %v3448
      %v3466 = vadd.f32 %v3395, %v3451
      %v3467 = vadd.f32 %v3396, %v3456
      %3468 = vmatprep.subr.bf16.mxu0 0
      %3469 = vmatpush1.bf16.msra.mxu0 0
      %3470 = vmatprep.subr.bf16.mxu0 0
      %3471 = vmatpush1.bf16.msra.mxu0 0
      %3472 = vmatprep.subr.bf16.mxu0 0
      %3473 = vmatpush1.bf16.msra.mxu0 0
      %3474 = vmatprep.subr.bf16.mxu0 0
      %3475 = vmatpush1.bf16.msra.mxu0 0
      %3476 = vmatprep.subr.bf16.mxu0 0
      %3477 = vmatpush1.bf16.msra.mxu0 0
      %3478 = vmatprep.subr.bf16.mxu0 0
      %3479 = vmatpush1.bf16.msra.mxu0 0
      %3480 = vmatprep.subr.bf16.mxu0 0
      %3481 = vmatpush1.bf16.msra.mxu0 %v1124
      %3482 = vmatprep.subr.bf16.mxu0 0
      %3483 = vmatpush1.bf16.msra.mxu0 %v1123
      %3484 = vmatprep.subr.bf16.mxu0 0
      %3485 = vmatpush2.bf16.msra.mxu0 0
      %3486 = vmatprep.subr.bf16.mxu0 0
      %3487 = vmatpush2.bf16.msra.mxu0 0
      %3488 = vmatprep.subr.bf16.mxu0 0
      %3489 = vmatpush2.bf16.msra.mxu0 0
      %3490 = vmatprep.subr.bf16.mxu0 0
      %3491 = vmatpush2.bf16.msra.mxu0 0
      %3492 = vmatprep.subr.bf16.mxu0 0
      %3493 = vmatpush2.bf16.msra.mxu0 0
      %3494 = vmatprep.subr.bf16.mxu0 0
      %3495 = vmatpush2.bf16.msra.mxu0 0
      %3496 = vmatprep.subr.bf16.mxu0 0
      %3497 = vmatpush2.bf16.msra.mxu0 0
      %3498 = vmatprep.subr.bf16.mxu0 0
      %3499 = vmatpush2.bf16.msra.mxu0 0
      %3500 = vmatprep.mubr.bf16.mxu0 0
      %3501 = vmatmul.mubr.bf16.gmra.mxu0 %v2882
      %v3502 = vpop.f32.mrf.mxu0
      %v3503 = vadd.f32 0.0, %v3502
      %v3504 = vpop.f32.mrf.mxu0
      %v3505 = vpop.f32.mrf.mxu0
      %v3506 = vadd.f32 0.0, %v3505
      %v3507 = vpop.f32.mrf.mxu0
      %3508 = vmatprep.mubr.bf16.mxu0 0
      %3509 = vmatmul.mubr.bf16.gmra.mxu0 %v2885
      %v3510 = vpop.f32.mrf.mxu0
      %v3511 = vadd.f32 0.0, %v3510
      %v3512 = vpop.f32.mrf.mxu0
      %v3513 = vpop.f32.mrf.mxu0
      %v3514 = vadd.f32 0.0, %v3513
      %v3515 = vpop.f32.mrf.mxu0
      %3516 = vmatprep.mubr.bf16.mxu0 0
      %3517 = vmatmul.mubr.bf16.gmra.mxu0 %v2888
      %v3518 = vpop.f32.mrf.mxu0
      %v3519 = vadd.f32 0.0, %v3518
      %v3520 = vpop.f32.mrf.mxu0
      %v3521 = vpop.f32.mrf.mxu0
      %v3522 = vadd.f32 0.0, %v3521
      %v3523 = vpop.f32.mrf.mxu0
      %3524 = vmatprep.mubr.bf16.mxu0 0
      %3525 = vmatmul.mubr.bf16.gmra.mxu0 %v2891
      %v3526 = vpop.f32.mrf.mxu0
      %v3527 = vadd.f32 0.0, %v3526
      %v3528 = vpop.f32.mrf.mxu0
      %v3529 = vpop.f32.mrf.mxu0
      %v3530 = vpop.f32.mrf.mxu0
      %3531 = vdwg.mxu0
      %v3532 = vadd.f32 %v3461, %v3503
      %v3533 = vadd.f32 %v3462, %v3506
      %v3534 = vadd.f32 %v3463, %v3511
      %v3535 = vadd.f32 %v3464, %v3514
      %v3536 = vadd.f32 %v3465, %v3519
      %v3537 = vadd.f32 %v3466, %v3522
      %v3538 = vadd.f32 %v3467, %v3527
      %v3539 = vld [vmem:[%s165 + $0x70] sm:$0xf]
      %v3540 = vld [vmem:[%s165 + $0x74] sm:$0xf]
      %v3541 = vld [vmem:[%s165 + $0x78] sm:$0xf]
      %v3542 = vld [vmem:[%s165 + $0x7c] sm:$0xf]
      %v3543 = vld [vmem:[%s165 + $0x80] sm:$0xf]
      %v3544 = vld [vmem:[%s165 + $0x84] sm:$0xf]
      %v3545 = vld [vmem:[%s165 + $0x88] sm:$0xf]
      %v3546 = vld [vmem:[%s165 + $0x8c] sm:$0x1]
      %v3555 = vunpack.c.l.b16 %v3539
      %v3556 = vunpack.c.l.b16 %v3540
      %v3557 = vunpack.c.l.b16 %v3541
      %v3558 = vunpack.c.l.b16 %v3542
      %v3559 = vunpack.c.l.b16 %v3543
      %v3560 = vunpack.c.l.b16 %v3544
      %v3561 = vunpack.c.l.b16 %v3545
      %v3562 = vunpack.c.l.b16 %v3546
      %v3563 = vpack.c.b16 %v3556, %v3555
      %v3564 = vpack.c.b16 %v3558, %v3557
      %v3565 = vpack.c.b16 %v3560, %v3559
      %v3566 = vpack.c.b16 %v3562, %v3561
      %v3568 = vshrl.u32 %v3563, 16
      %v3570 = vshll.u32 %v3563, 16
      %v3572 = vrot.slane %v3570, 1
      %v3573 = vor.u32 %v3568, %v3572
      %v3575 = vshll.u32 %v3564, 16
      %v3577 = vrot.slane %v3575, 1
      %v3578 = vsel %vm442, %v3573, %v3577
      %v3579 = vshrl.u32 %v3564, 16
      %v3581 = vor.u32 %v3579, %v3577
      %v3583 = vshll.u32 %v3565, 16
      %v3585 = vrot.slane %v3583, 1
      %v3586 = vsel %vm442, %v3581, %v3585
      %v3587 = vshrl.u32 %v3565, 16
      %v3589 = vor.u32 %v3587, %v3585
      %v3591 = vshll.u32 %v3566, 16
      %v3593 = vrot.slane %v3591, 1
      %v3594 = vsel %vm442, %v3589, %v3593
      %v3595 = vshrl.u32 %v3566, 16
      %v3597 = vor.u32 %v3595, %v3593
      %v3599 = vsel %vm226, %v3578, 0
      %v3602 = vsel %vm226, %v3586, 0
      %v3605 = vsel %vm226, %v3594, 0
      %v3608 = vsel %vm226, %v3597, 0
      %3610 = vmatprep.subr.bf16.mxu0 0
      %3611 = vmatpush1.bf16.msra.mxu0 0
      %3612 = vmatprep.subr.bf16.mxu0 0
      %3613 = vmatpush1.bf16.msra.mxu0 0
      %3614 = vmatprep.subr.bf16.mxu0 0
      %3615 = vmatpush1.bf16.msra.mxu0 0
      %3616 = vmatprep.subr.bf16.mxu0 0
      %3617 = vmatpush1.bf16.msra.mxu0 0
      %3618 = vmatprep.subr.bf16.mxu0 0
      %3619 = vmatpush1.bf16.msra.mxu0 0
      %3620 = vmatprep.subr.bf16.mxu0 0
      %3621 = vmatpush1.bf16.msra.mxu0 0
      %3622 = vmatprep.subr.bf16.mxu0 0
      %3623 = vmatpush1.bf16.msra.mxu0 %v1283
      %3624 = vmatprep.subr.bf16.mxu0 0
      %3625 = vmatpush1.bf16.msra.mxu0 %v1282
      %3626 = vmatprep.subr.bf16.mxu0 0
      %3627 = vmatpush2.bf16.msra.mxu0 0
      %3628 = vmatprep.subr.bf16.mxu0 0
      %3629 = vmatpush2.bf16.msra.mxu0 0
      %3630 = vmatprep.subr.bf16.mxu0 0
      %3631 = vmatpush2.bf16.msra.mxu0 0
      %3632 = vmatprep.subr.bf16.mxu0 0
      %3633 = vmatpush2.bf16.msra.mxu0 0
      %3634 = vmatprep.subr.bf16.mxu0 0
      %3635 = vmatpush2.bf16.msra.mxu0 0
      %3636 = vmatprep.subr.bf16.mxu0 0
      %3637 = vmatpush2.bf16.msra.mxu0 0
      %3638 = vmatprep.subr.bf16.mxu0 0
      %3639 = vmatpush2.bf16.msra.mxu0 0
      %3640 = vmatprep.subr.bf16.mxu0 0
      %3641 = vmatpush2.bf16.msra.mxu0 0
      %3642 = vmatprep.mubr.bf16.mxu0 0
      %3643 = vmatmul.mubr.bf16.gmra.mxu0 %v3599
      %v3644 = vpop.f32.mrf.mxu0
      %v3645 = vadd.f32 0.0, %v3644
      %v3646 = vpop.f32.mrf.mxu0
      %v3647 = vpop.f32.mrf.mxu0
      %v3648 = vadd.f32 0.0, %v3647
      %v3649 = vpop.f32.mrf.mxu0
      %3650 = vmatprep.mubr.bf16.mxu0 0
      %3651 = vmatmul.mubr.bf16.gmra.mxu0 %v3602
      %v3652 = vpop.f32.mrf.mxu0
      %v3653 = vadd.f32 0.0, %v3652
      %v3654 = vpop.f32.mrf.mxu0
      %v3655 = vpop.f32.mrf.mxu0
      %v3656 = vadd.f32 0.0, %v3655
      %v3657 = vpop.f32.mrf.mxu0
      %3658 = vmatprep.mubr.bf16.mxu0 0
      %3659 = vmatmul.mubr.bf16.gmra.mxu0 %v3605
      %v3660 = vpop.f32.mrf.mxu0
      %v3661 = vadd.f32 0.0, %v3660
      %v3662 = vpop.f32.mrf.mxu0
      %v3663 = vpop.f32.mrf.mxu0
      %v3664 = vadd.f32 0.0, %v3663
      %v3665 = vpop.f32.mrf.mxu0
      %3666 = vmatprep.mubr.bf16.mxu0 0
      %3667 = vmatmul.mubr.bf16.gmra.mxu0 %v3608
      %v3668 = vpop.f32.mrf.mxu0
      %v3669 = vadd.f32 0.0, %v3668
      %v3670 = vpop.f32.mrf.mxu0
      %v3671 = vpop.f32.mrf.mxu0
      %v3672 = vpop.f32.mrf.mxu0
      %3673 = vdwg.mxu0
      %v3674 = vadd.f32 %v3532, %v3645
      %v3675 = vadd.f32 %v3533, %v3648
      %v3676 = vadd.f32 %v3534, %v3653
      %v3677 = vadd.f32 %v3535, %v3656
      %v3678 = vadd.f32 %v3536, %v3661
      %v3679 = vadd.f32 %v3537, %v3664
      %v3680 = vadd.f32 %v3538, %v3669
      %v3681 = vadd.f32 %v3674, %v1373
      %v3682 = vadd.f32 %v3675, %v1373
      %v3683 = vadd.f32 %v3676, %v1373
      %v3684 = vadd.f32 %v3677, %v1373
      %v3685 = vadd.f32 %v3678, %v1373
      %v3686 = vadd.f32 %v3679, %v1373
      %v3687 = vadd.f32 %v3680, %v1373
      %v3688 = vmax.f32 %v3681, 0.0
      %v3689 = vmax.f32 %v3682, 0.0
      %v3690 = vmax.f32 %v3683, 0.0
      %v3691 = vmax.f32 %v3684, 0.0
      %v3692 = vmax.f32 %v3685, 0.0
      %v3693 = vmax.f32 %v3686, 0.0
      %v3694 = vmax.f32 %v3687, 0.0
      %v3695 = vmax.f32 %v2978, %v3688
      %v3696 = vmax.f32 %v2979, %v3689
      %v3697 = vmax.f32 %v2980, %v3690
      %v3698 = vmax.f32 %v2981, %v3691
      %v3699 = vmax.f32 %v2982, %v3692
      %v3700 = vmax.f32 %v2983, %v3693
      %v3701 = vmax.f32 %v2984, %v3694
      %vm3702 = vcmask 523264
      %3703 = vst.msk [vmem:[%s170] sm:$0xff] %vm3702, %v3695
      %3704 = vst.msk [vmem:[%s170 + $0x8] sm:$0xff] %vm3702, %v3696
      %3705 = vst.msk [vmem:[%s170 + $0x10] sm:$0xff] %vm3702, %v3697
      %3706 = vst.msk [vmem:[%s170 + $0x18] sm:$0xff] %vm3702, %v3698
      %3707 = vst.msk [vmem:[%s170 + $0x20] sm:$0xff] %vm3702, %v3699
      %3708 = vst.msk [vmem:[%s170 + $0x28] sm:$0xff] %vm3702, %v3700
      %3709 = vst.msk [vmem:[%s170 + $0x30] sm:$0xff] %vm3702, %v3701
      %p3710 = scmp.lt.s32.totalorder %s14, 1
      %s3711 = scalar_select %p3710, %s14, 1
      %s3712 = smul.addr %s3711, 7
      %s3713 = smul.addr %s3712, 8
      %s3714 = scalar_lea.vmem %s3, %s3713
      // Predicated region
      $region33: #{simple_model_forward.5} parent=31 // pred_check
        %p3715 = pneg %p100
      $region34: #{simple_model_forward.5} parent=31 // pred_check_branch
        %3717 = sbr.rel (%p3715) target = $region36
      $region35: #{simple_model_forward.5} parent=31 // pred_region
        _
      $region36: #{simple_model_forward.5} parent=31 // pred_fallthru
        _
    $region32: #{simple_model_forward.5} parent=5 // pred_fallthru
      _
    %p3718 = scmp.le.s32.totalorder 2, %s9
    // Predicated region
    $region37: #{simple_model_forward.5} parent=5 // pred_check
      %p3719 = pneg %p3718
    $region38: #{simple_model_forward.5} parent=5 // pred_check_branch
      %3721 = sbr.rel (%p3719) target = $region40
    $region39: #{simple_model_forward.5} parent=5 // pred_region
      %s3722 = ssub.s32 %s9, 2
      // Predicated region
      $region41: #{simple_model_forward.5} parent=39 // pred_check
        %p3723 = pneg %p106
      $region42: #{simple_model_forward.5} parent=39 // pred_check_branch
        %3725 = sbr.rel (%p3723) target = $region44
      $region43: #{simple_model_forward.5} parent=39 // pred_region
        %p3726 = scmp.lt.s32.totalorder %s15, 1
        %s3727 = scalar_select %p3726, %s15, 1
        %s3728 = smul.addr %s3727, 7
        %s3729 = smul.addr %s3728, 8
        %s3730 = scalar_lea.vmem %s3, %s3729
      $region44: #{simple_model_forward.5} parent=39 // pred_fallthru
        _
    $region40: #{simple_model_forward.5} parent=5 // pred_fallthru
      _
  $region6: #{simple_model_forward.5} parent=0 // loop_footer
    %s13 = sadd.s32 1, %s9
  $region7: #{simple_model_forward.5} parent=0 // loop_footer_branch
    %8 = sbr.rel target = $region3
  $region8: #{simple_model_forward.5} parent=0 // loop_exit
    _

// kernel: simple_model_forward.4
$region0: #{simple_model_forward.4}
  #allocation0 [shape = 'u32[]', space=smem, size = 0x4, offset = 0x4, fixed_abs, tag = 'smem constant byte address 0x4 - core index']
  #allocation1 [shape = 'u32[144,128]{1,0:T(1,128)}', space=vmem, size = 0x12000, scoped, tag = 'internal scratch']
  %s0 = inlined_call_operand.vmem [shape: f32[2,928,1], index: 0, kind: input, shape index: {}]
  %s1 = inlined_call_operand.vmem [shape: f32[9,1,32], index: 1, kind: input, shape index: {}]
  %s2 = inlined_call_operand.vmem [shape: f32[1,32], index: 2, kind: input, shape index: {}]
  %s3 = inlined_call_operand.vmem [shape: f32[2,210,32], index: 3, kind: output, shape index: {}]
  %s4 = sld [smem:[#allocation0]]
  $region45: #{simple_model_forward.4} parent=0
    _
  %s6 = ssub.s32 1, %s4
  %s7 = scalar_select 0, %s6, %s4
  loop: start=0, step=1, limit=4
  $region2: #{simple_model_forward.4} parent=0 // loop_pre_header
    _
  $region3: #{simple_model_forward.4} parent=0 // loop_header
    %s9 = sphi 0, %s13
    %p10 = scmp.ge.s32.totalorder %s9, 4
    %s19 = sphi 0, %s21
    %s22 = sphi 0, %s19
    %s23 = sphi 0, %s22
    %s39 = sphi 0, %s23
    %s43 = sphi 0, %s43
    %s45 = sphi 0, %s43
    %s46 = sphi 0, %s45
    %s60 = sphi 0, %s46
    %s64 = sphi 0, %s64
    %s66 = sphi 0, %s64
    %s67 = sphi 0, %s66
    %s81 = sphi 0, %s67
    %s87 = sphi 0, %s89
    %s90 = sphi 0, %s87
    %s91 = sphi 0, %s90
    %s107 = sphi 0, %s91
  $region4: #{simple_model_forward.4} parent=0 // loop_header_branch
    %12 = sbr.rel (%p10) target = $region8
  $region5: #{simple_model_forward.4} parent=0 // loop_body
    %s14 = ssub.s32 %s9, 1
    %s15 = ssub.s32 %s9, 2
    %s16 = sadd.s32 %s9, 1
    %s17 = ssub.s32 %s9, %s16
    %p18 = scmp.eq.s32.totalorder %s17, 0
    %s20 = sadd.s32 %s19, 1
    %s21 = scalar_select %p18, %s19, %s20
    %p24 = pneg %p18
    %p25 = scmp.eq.s32.totalorder %s9, 1
    %p26 = por %p24, %p25
    %p27 = scmp.ne.s32.totalorder %s19, %s22
    %p28 = scmp.eq.s32.totalorder %s9, 0
    %p29 = por %p27, %p28
    %p30 = scmp.ne.s32.totalorder %s19, %s22
    %p31 = scmp.eq.s32.totalorder %s14, 1
    %p32 = por %p30, %p31
    %p33 = scmp.ne.s32.totalorder %s22, %s23
    %p34 = scmp.eq.s32.totalorder %s14, 0
    %p35 = por %p33, %p34
    %p36 = scmp.ne.s32.totalorder %s22, %s23
    %p37 = scmp.eq.s32.totalorder %s15, 1
    %p38 = por %p36, %p37
    %p40 = scmp.ne.s32.totalorder %s23, %s39
    %p41 = scmp.eq.s32.totalorder %s15, 0
    %p42 = por %p40, %p41
    %s44 = sadd.s32 %s43, 1
    %p47 = scmp.eq.s32.totalorder %s9, 1
    %p48 = scmp.ne.s32.totalorder %s43, %s45
    %p49 = scmp.eq.s32.totalorder %s9, 0
    %p50 = por %p48, %p49
    %p51 = scmp.ne.s32.totalorder %s43, %s45
    %p52 = scmp.eq.s32.totalorder %s14, 1
    %p53 = por %p51, %p52
    %p54 = scmp.ne.s32.totalorder %s45, %s46
    %p55 = scmp.eq.s32.totalorder %s14, 0
    %p56 = por %p54, %p55
    %p57 = scmp.ne.s32.totalorder %s45, %s46
    %p58 = scmp.eq.s32.totalorder %s15, 1
    %p59 = por %p57, %p58
    %p61 = scmp.ne.s32.totalorder %s46, %s60
    %p62 = scmp.eq.s32.totalorder %s15, 0
    %p63 = por %p61, %p62
    %s65 = sadd.s32 %s64, 1
    %p68 = scmp.eq.s32.totalorder %s9, 1
    %p69 = scmp.ne.s32.totalorder %s64, %s66
    %p70 = scmp.eq.s32.totalorder %s9, 0
    %p71 = por %p69, %p70
    %p72 = scmp.ne.s32.totalorder %s64, %s66
    %p73 = scmp.eq.s32.totalorder %s14, 1
    %p74 = por %p72, %p73
    %p75 = scmp.ne.s32.totalorder %s66, %s67
    %p76 = scmp.eq.s32.totalorder %s14, 0
    %p77 = por %p75, %p76
    %p78 = scmp.ne.s32.totalorder %s66, %s67
    %p79 = scmp.eq.s32.totalorder %s15, 1
    %p80 = por %p78, %p79
    %p82 = scmp.ne.s32.totalorder %s67, %s81
    %p83 = scmp.eq.s32.totalorder %s15, 0
    %p84 = por %p82, %p83
    %s85 = ssub.s32 %s9, %s16
    %p86 = scmp.eq.s32.totalorder %s85, 0
    %s88 = sadd.s32 %s87, 1
    %s89 = scalar_select %p86, %s87, %s88
    %p92 = pneg %p86
    %p93 = scmp.eq.s32.totalorder %s9, 1
    %p94 = por %p92, %p93
    %p95 = scmp.ne.s32.totalorder %s87, %s90
    %p96 = scmp.eq.s32.totalorder %s9, 0
    %p97 = por %p95, %p96
    %p98 = scmp.ne.s32.totalorder %s87, %s90
    %p99 = scmp.eq.s32.totalorder %s14, 1
    %p100 = por %p98, %p99
    %p101 = scmp.ne.s32.totalorder %s90, %s91
    %p102 = scmp.eq.s32.totalorder %s14, 0
    %p103 = por %p101, %p102
    %p104 = scmp.ne.s32.totalorder %s90, %s91
    %p105 = scmp.eq.s32.totalorder %s15, 1
    %p106 = por %p104, %p105
    %p108 = scmp.ne.s32.totalorder %s91, %s107
    %p109 = scmp.eq.s32.totalorder %s15, 0
    %p110 = por %p108, %p109
    %p111 = scmp.le.s32.totalorder 1, %s9
    %p112 = scmp.lt.s32.totalorder %s9, 3
    %p113 = pnand %p111, %p112
    %p114 = pneg %p113
    // Predicated region
    $region9: #{simple_model_forward.4} parent=5 // pred_check
      _
    $region10: #{simple_model_forward.4} parent=5 // pred_check_branch
      %116 = sbr.rel (%p113) target = $region12
    $region11: #{simple_model_forward.4} parent=5 // pred_region
      %s117 = ssub.s32 %s9, 1
      // Predicated region
      $region13: #{simple_model_forward.4} parent=11 // pred_check
        %p118 = pneg %p56
      $region14: #{simple_model_forward.4} parent=11 // pred_check_branch
        %120 = sbr.rel (%p118) target = $region16
      $region15: #{simple_model_forward.4} parent=11 // pred_region
        _
      $region16: #{simple_model_forward.4} parent=11 // pred_fallthru
        _
      // Predicated region
      $region17: #{simple_model_forward.4} parent=11 // pred_check
        %p121 = pneg %p77
      $region18: #{simple_model_forward.4} parent=11 // pred_check_branch
        %123 = sbr.rel (%p121) target = $region20
      $region19: #{simple_model_forward.4} parent=11 // pred_region
        _
      $region20: #{simple_model_forward.4} parent=11 // pred_fallthru
        _
    $region12: #{simple_model_forward.4} parent=5 // pred_fallthru
      _
    %p124 = scmp.lt.s32.totalorder %s9, 2
    // Predicated region
    $region21: #{simple_model_forward.4} parent=5 // pred_check
      %p125 = pneg %p124
    $region22: #{simple_model_forward.4} parent=5 // pred_check_branch
      %127 = sbr.rel (%p125) target = $region24
    $region23: #{simple_model_forward.4} parent=5 // pred_region
      // Predicated region
      $region25: #{simple_model_forward.4} parent=23 // pred_check
        %p128 = pneg %p29
      $region26: #{simple_model_forward.4} parent=23 // pred_check_branch
        %130 = sbr.rel (%p128) target = $region28
      $region27: #{simple_model_forward.4} parent=23 // pred_region
        %p131 = scmp.lt.s32.totalorder %s9, 1
        %s132 = scalar_select %p131, %s9, 1
        %s133 = smul.addr %s132, 116
        %s134 = smul.addr %s133, 8
        %s135 = scalar_lea.vmem %s0, %s134
      $region28: #{simple_model_forward.4} parent=23 // pred_fallthru
        _
    $region24: #{simple_model_forward.4} parent=5 // pred_fallthru
      _
    %p136 = scmp.le.s32.totalorder 1, %s9
    %p137 = scmp.lt.s32.totalorder %s9, 3
    %p138 = pnand %p136, %p137
    %p139 = pneg %p138
    // Predicated region
    $region29: #{simple_model_forward.4} parent=5 // pred_check
      _
    $region30: #{simple_model_forward.4} parent=5 // pred_check_branch
      %141 = sbr.rel (%p138) target = $region32
    $region31: #{simple_model_forward.4} parent=5 // pred_region
      %s142 = ssub.s32 %s9, 1
      %p143 = scmp.lt.s32.totalorder %s14, 1
      %s144 = scalar_select %p143, %s14, 1
      %s145 = smul.addr %s144, 116
      %s146 = smul.addr %s145, 8
      %s147 = scalar_lea.vmem %s0, %s146
      %p148 = pneg %p35
      %p149 = pneg %p32
      %p150 = pneg %p56
      %p151 = pneg %p53
      %p152 = pneg %p77
      %p153 = pneg %p74
      %p154 = pneg %p103
      %p155 = pneg %p100
      %p156 = scmp.lt.s32.totalorder %s14, 1
      %s157 = scalar_select %p156, %s14, 1
      %s158 = smul.addr %s157, 27
      %s159 = smul.addr %s158, 8
      %s160 = scalar_lea.vmem %s3, %s159
      %p161 = scmp.lt.s32.totalorder %s14, 1
      %s162 = scalar_select %p161, %s14, 1
      %s163 = smul.addr %s162, 116
      %s164 = smul.addr %s163, 8
      %s165 = scalar_lea.vmem %s0, %s164
      %p166 = scmp.lt.s32.totalorder %s14, 1
      %s167 = scalar_select %p166, %s14, 1
      %s168 = smul.addr %s167, 27
      %s169 = smul.addr %s168, 8
      %s170 = scalar_lea.vmem %s3, %s169
      %v171 = vld [vmem:[%s2] sm:$0x1]
      %v172 = vld [vmem:[%s165] sm:$0xff]
      %v173 = vld [vmem:[%s165 + $0x8] sm:$0xff]
      %v174 = vld [vmem:[%s165 + $0x10] sm:$0xff]
      %v175 = vld [vmem:[%s165 + $0x18] sm:$0xff]
      %v176 = vld [vmem:[%s165 + $0x20] sm:$0xff]
      %v177 = vld [vmem:[%s165 + $0x28] sm:$0xff]
      %v178 = vld [vmem:[%s165 + $0x30] sm:$0xff]
      %v179 = vld [vmem:[%s165 + $0x38] sm:$0xff]
      %v180 = vld [vmem:[%s165 + $0x40] sm:$0xff]
      %v181 = vld [vmem:[%s165 + $0x48] sm:$0xff]
      %v182 = vld [vmem:[%s165 + $0x50] sm:$0xff]
      %v183 = vld [vmem:[%s165 + $0x58] sm:$0xff]
      %v184 = vld [vmem:[%s165 + $0x60] sm:$0xff]
      %v185 = vld [vmem:[%s165 + $0x68] sm:$0xff]
      %v186 = vld [vmem:[%s165 + $0x70] sm:$0xff]
      %v187 = vld [vmem:[%s165 + $0x78] sm:$0xff]
      %v188 = vld [vmem:[%s165 + $0x80] sm:$0xff]
      %v189 = vld [vmem:[%s165 + $0x88] sm:$0xff]
      %v190 = vld [vmem:[%s165 + $0x90] sm:$0xff]
      %v191 = vld [vmem:[%s165 + $0x98] sm:$0xff]
      %v192 = vld [vmem:[%s165 + $0xa0] sm:$0xff]
      %v193 = vld [vmem:[%s165 + $0xa8] sm:$0xff]
      %v194 = vld [vmem:[%s165 + $0xb0] sm:$0xff]
      %v195 = vld [vmem:[%s165 + $0xb8] sm:$0xff]
      %v196 = vld [vmem:[%s165 + $0xc0] sm:$0xff]
      %v197 = vld [vmem:[%s165 + $0xc8] sm:$0xff]
      %v198 = vld [vmem:[%s165 + $0xd0] sm:$0x3]
      %v199 = vld [vmem:[%s1] sm:$0x1]
      %201 = vset.pattern.permute.xlu0 0
      %202 = vperm.xlu0 %201, %v172
      %v203 = vpop.permute.xlu0 %202
      %206 = vset.pattern.permute.xlu0 0
      %207 = vperm.xlu0 %206, %v173
      %v208 = vpop.permute.xlu0 %207
      %211 = vset.pattern.permute.xlu0 0
      %212 = vperm.xlu0 %211, %v174
      %v213 = vpop.permute.xlu0 %212
      %216 = vset.pattern.permute.xlu0 0
      %217 = vperm.xlu0 %216, %v175
      %v218 = vpop.permute.xlu0 %217
      %221 = vset.pattern.permute.xlu0 0
      %222 = vperm.xlu0 %221, %v176
      %v223 = vpop.permute.xlu0 %222
      %226 = vset.pattern.permute.xlu0 0
      %227 = vperm.xlu0 %226, %v177
      %v228 = vpop.permute.xlu0 %227
      %231 = vset.pattern.permute.xlu0 0
      %232 = vperm.xlu0 %231, %v178
      %v233 = vpop.permute.xlu0 %232
      %236 = vset.pattern.permute.xlu0 0
      %237 = vperm.xlu0 %236, %v179
      %v238 = vpop.permute.xlu0 %237
      %241 = vset.pattern.permute.xlu0 0
      %242 = vperm.xlu0 %241, %v180
      %v243 = vpop.permute.xlu0 %242
      %246 = vset.pattern.permute.xlu0 0
      %247 = vperm.xlu0 %246, %v181
      %v248 = vpop.permute.xlu0 %247
      %251 = vset.pattern.permute.xlu0 0
      %252 = vperm.xlu0 %251, %v182
      %v253 = vpop.permute.xlu0 %252
      %256 = vset.pattern.permute.xlu0 0
      %257 = vperm.xlu0 %256, %v183
      %v258 = vpop.permute.xlu0 %257
      %261 = vset.pattern.permute.xlu0 0
      %262 = vperm.xlu0 %261, %v184
      %v263 = vpop.permute.xlu0 %262
      %266 = vset.pattern.permute.xlu0 0
      %267 = vperm.xlu0 %266, %v185
      %v268 = vpop.permute.xlu0 %267
      %271 = vset.pattern.permute.xlu0 0
      %272 = vperm.xlu0 %271, %v186
      %v273 = vpop.permute.xlu0 %272
      %276 = vset.pattern.permute.xlu0 0
      %277 = vperm.xlu0 %276, %v187
      %v278 = vpop.permute.xlu0 %277
      %281 = vset.pattern.permute.xlu0 0
      %282 = vperm.xlu0 %281, %v188
      %v283 = vpop.permute.xlu0 %282
      %286 = vset.pattern.permute.xlu0 0
      %287 = vperm.xlu0 %286, %v189
      %v288 = vpop.permute.xlu0 %287
      %291 = vset.pattern.permute.xlu0 0
      %292 = vperm.xlu0 %291, %v190
      %v293 = vpop.permute.xlu0 %292
      %296 = vset.pattern.permute.xlu0 0
      %297 = vperm.xlu0 %296, %v191
      %v298 = vpop.permute.xlu0 %297
      %301 = vset.pattern.permute.xlu0 0
      %302 = vperm.xlu0 %301, %v192
      %v303 = vpop.permute.xlu0 %302
      %306 = vset.pattern.permute.xlu0 0
      %307 = vperm.xlu0 %306, %v193
      %v308 = vpop.permute.xlu0 %307
      %311 = vset.pattern.permute.xlu0 0
      %312 = vperm.xlu0 %311, %v194
      %v313 = vpop.permute.xlu0 %312
      %316 = vset.pattern.permute.xlu0 0
      %317 = vperm.xlu0 %316, %v195
      %v318 = vpop.permute.xlu0 %317
      %321 = vset.pattern.permute.xlu0 0
      %322 = vperm.xlu0 %321, %v196
      %v323 = vpop.permute.xlu0 %322
      %326 = vset.pattern.permute.xlu0 0
      %327 = vperm.xlu0 %326, %v197
      %v328 = vpop.permute.xlu0 %327
      %331 = vset.pattern.permute.xlu0 0
      %332 = vperm.xlu0 %331, %v198
      %v333 = vpop.permute.xlu0 %332
      %v336 = vlaneseq
      %v337 = vshrl.u32 %v336, 7
      %v338 = vsub.s32 0, %v337
      %v339 = vrot.slane %v199, %v338
      %v341 = vmul.f32 %v203, %v339
      %v342 = vmul.f32 %v208, %v339
      %v343 = vmul.f32 %v213, %v339
      %v344 = vmul.f32 %v218, %v339
      %v345 = vmul.f32 %v223, %v339
      %v346 = vmul.f32 %v228, %v339
      %v347 = vmul.f32 %v233, %v339
      %v348 = vmul.f32 %v238, %v339
      %v349 = vmul.f32 %v243, %v339
      %v350 = vmul.f32 %v248, %v339
      %v351 = vmul.f32 %v253, %v339
      %v352 = vmul.f32 %v258, %v339
      %v353 = vmul.f32 %v263, %v339
      %v354 = vmul.f32 %v268, %v339
      %v355 = vmul.f32 %v273, %v339
      %v356 = vmul.f32 %v278, %v339
      %v357 = vmul.f32 %v283, %v339
      %v358 = vmul.f32 %v288, %v339
      %v359 = vmul.f32 %v293, %v339
      %v360 = vmul.f32 %v298, %v339
      %v361 = vmul.f32 %v303, %v339
      %v362 = vmul.f32 %v308, %v339
      %v363 = vmul.f32 %v313, %v339
      %v364 = vmul.f32 %v318, %v339
      %v365 = vmul.f32 %v323, %v339
      %v366 = vmul.f32 %v328, %v339
      %v367 = vmul.f32 %v333, %v339
      %v368 = vld [vmem:[%s165 + $0xe8] sm:$0xff]
      %v369 = vld [vmem:[%s165 + $0xf0] sm:$0xff]
      %v370 = vld [vmem:[%s165 + $0xf8] sm:$0xff]
      %v371 = vld [vmem:[%s165 + $0x100] sm:$0xff]
      %v372 = vld [vmem:[%s165 + $0x108] sm:$0xff]
      %v373 = vld [vmem:[%s165 + $0x110] sm:$0xff]
      %v374 = vld [vmem:[%s165 + $0x118] sm:$0xff]
      %v375 = vld [vmem:[%s165 + $0x120] sm:$0xff]
      %v376 = vld [vmem:[%s165 + $0x128] sm:$0xff]
      %v377 = vld [vmem:[%s165 + $0x130] sm:$0xff]
      %v378 = vld [vmem:[%s165 + $0x138] sm:$0xff]
      %v379 = vld [vmem:[%s165 + $0x140] sm:$0xff]
      %v380 = vld [vmem:[%s165 + $0x148] sm:$0xff]
      %v381 = vld [vmem:[%s165 + $0x150] sm:$0xff]
      %v382 = vld [vmem:[%s165 + $0x158] sm:$0xff]
      %v383 = vld [vmem:[%s165 + $0x160] sm:$0xff]
      %v384 = vld [vmem:[%s165 + $0x168] sm:$0xff]
      %v385 = vld [vmem:[%s165 + $0x170] sm:$0xff]
      %v386 = vld [vmem:[%s165 + $0x178] sm:$0xff]
      %v387 = vld [vmem:[%s165 + $0x180] sm:$0xff]
      %v388 = vld [vmem:[%s165 + $0x188] sm:$0xff]
      %v389 = vld [vmem:[%s165 + $0x190] sm:$0xff]
      %v390 = vld [vmem:[%s165 + $0x198] sm:$0xff]
      %v391 = vld [vmem:[%s165 + $0x1a0] sm:$0xff]
      %v392 = vld [vmem:[%s165 + $0x1a8] sm:$0xff]
      %v393 = vld [vmem:[%s165 + $0x1b0] sm:$0xff]
      %v394 = vld [vmem:[%s165 + $0x1b8] sm:$0x3]
      %s395 = scalar_lea.vmem %s1, 1
      %v396 = vld [vmem:[%s395] sm:$0x1]
      %398 = vset.pattern.permute.xlu0 0
      %399 = vperm.xlu0 %398, %v368
      %v400 = vpop.permute.xlu0 %399
      %403 = vset.pattern.permute.xlu0 0
      %404 = vperm.xlu0 %403, %v369
      %v405 = vpop.permute.xlu0 %404
      %408 = vset.pattern.permute.xlu0 0
      %409 = vperm.xlu0 %408, %v370
      %v410 = vpop.permute.xlu0 %409
      %413 = vset.pattern.permute.xlu0 0
      %414 = vperm.xlu0 %413, %v371
      %v415 = vpop.permute.xlu0 %414
      %418 = vset.pattern.permute.xlu0 0
      %419 = vperm.xlu0 %418, %v372
      %v420 = vpop.permute.xlu0 %419
      %423 = vset.pattern.permute.xlu0 0
      %424 = vperm.xlu0 %423, %v373
      %v425 = vpop.permute.xlu0 %424
      %428 = vset.pattern.permute.xlu0 0
      %429 = vperm.xlu0 %428, %v374
      %v430 = vpop.permute.xlu0 %429
      %433 = vset.pattern.permute.xlu0 0
      %434 = vperm.xlu0 %433, %v375
      %v435 = vpop.permute.xlu0 %434
      %438 = vset.pattern.permute.xlu0 0
      %439 = vperm.xlu0 %438, %v376
      %v440 = vpop.permute.xlu0 %439
      %443 = vset.pattern.permute.xlu0 0
      %444 = vperm.xlu0 %443, %v377
      %v445 = vpop.permute.xlu0 %444
      %448 = vset.pattern.permute.xlu0 0
      %449 = vperm.xlu0 %448, %v378
      %v450 = vpop.permute.xlu0 %449
      %453 = vset.pattern.permute.xlu0 0
      %454 = vperm.xlu0 %453, %v379
      %v455 = vpop.permute.xlu0 %454
      %458 = vset.pattern.permute.xlu0 0
      %459 = vperm.xlu0 %458, %v380
      %v460 = vpop.permute.xlu0 %459
      %463 = vset.pattern.permute.xlu0 0
      %464 = vperm.xlu0 %463, %v381
      %v465 = vpop.permute.xlu0 %464
      %468 = vset.pattern.permute.xlu0 0
      %469 = vperm.xlu0 %468, %v382
      %v470 = vpop.permute.xlu0 %469
      %473 = vset.pattern.permute.xlu0 0
      %474 = vperm.xlu0 %473, %v383
      %v475 = vpop.permute.xlu0 %474
      %478 = vset.pattern.permute.xlu0 0
      %479 = vperm.xlu0 %478, %v384
      %v480 = vpop.permute.xlu0 %479
      %483 = vset.pattern.permute.xlu0 0
      %484 = vperm.xlu0 %483, %v385
      %v485 = vpop.permute.xlu0 %484
      %488 = vset.pattern.permute.xlu0 0
      %489 = vperm.xlu0 %488, %v386
      %v490 = vpop.permute.xlu0 %489
      %493 = vset.pattern.permute.xlu0 0
      %494 = vperm.xlu0 %493, %v387
      %v495 = vpop.permute.xlu0 %494
      %498 = vset.pattern.permute.xlu0 0
      %499 = vperm.xlu0 %498, %v388
      %v500 = vpop.permute.xlu0 %499
      %503 = vset.pattern.permute.xlu0 0
      %504 = vperm.xlu0 %503, %v389
      %v505 = vpop.permute.xlu0 %504
      %508 = vset.pattern.permute.xlu0 0
      %509 = vperm.xlu0 %508, %v390
      %v510 = vpop.permute.xlu0 %509
      %513 = vset.pattern.permute.xlu0 0
      %514 = vperm.xlu0 %513, %v391
      %v515 = vpop.permute.xlu0 %514
      %518 = vset.pattern.permute.xlu0 0
      %519 = vperm.xlu0 %518, %v392
      %v520 = vpop.permute.xlu0 %519
      %523 = vset.pattern.permute.xlu0 0
      %524 = vperm.xlu0 %523, %v393
      %v525 = vpop.permute.xlu0 %524
      %528 = vset.pattern.permute.xlu0 0
      %529 = vperm.xlu0 %528, %v394
      %v530 = vpop.permute.xlu0 %529
      %v533 = vlaneseq
      %v534 = vshrl.u32 %v533, 7
      %v535 = vsub.s32 0, %v534
      %v536 = vrot.slane %v396, %v535
      %v538 = vmul.f32 %v400, %v536
      %v539 = vmul.f32 %v405, %v536
      %v540 = vmul.f32 %v410, %v536
      %v541 = vmul.f32 %v415, %v536
      %v542 = vmul.f32 %v420, %v536
      %v543 = vmul.f32 %v425, %v536
      %v544 = vmul.f32 %v430, %v536
      %v545 = vmul.f32 %v435, %v536
      %v546 = vmul.f32 %v440, %v536
      %v547 = vmul.f32 %v445, %v536
      %v548 = vmul.f32 %v450, %v536
      %v549 = vmul.f32 %v455, %v536
      %v550 = vmul.f32 %v460, %v536
      %v551 = vmul.f32 %v465, %v536
      %v552 = vmul.f32 %v470, %v536
      %v553 = vmul.f32 %v475, %v536
      %v554 = vmul.f32 %v480, %v536
      %v555 = vmul.f32 %v485, %v536
      %v556 = vmul.f32 %v490, %v536
      %v557 = vmul.f32 %v495, %v536
      %v558 = vmul.f32 %v500, %v536
      %v559 = vmul.f32 %v505, %v536
      %v560 = vmul.f32 %v510, %v536
      %v561 = vmul.f32 %v515, %v536
      %v562 = vmul.f32 %v520, %v536
      %v563 = vmul.f32 %v525, %v536
      %v564 = vmul.f32 %v530, %v536
      %v565 = vadd.f32 %v341, %v538
      %v566 = vadd.f32 %v342, %v539
      %v567 = vadd.f32 %v343, %v540
      %v568 = vadd.f32 %v344, %v541
      %v569 = vadd.f32 %v345, %v542
      %v570 = vadd.f32 %v346, %v543
      %v571 = vadd.f32 %v347, %v544
      %v572 = vadd.f32 %v348, %v545
      %v573 = vadd.f32 %v349, %v546
      %v574 = vadd.f32 %v350, %v547
      %v575 = vadd.f32 %v351, %v548
      %v576 = vadd.f32 %v352, %v549
      %v577 = vadd.f32 %v353, %v550
      %v578 = vadd.f32 %v354, %v551
      %v579 = vadd.f32 %v355, %v552
      %v580 = vadd.f32 %v356, %v553
      %v581 = vadd.f32 %v357, %v554
      %v582 = vadd.f32 %v358, %v555
      %v583 = vadd.f32 %v359, %v556
      %v584 = vadd.f32 %v360, %v557
      %v585 = vadd.f32 %v361, %v558
      %v586 = vadd.f32 %v362, %v559
      %v587 = vadd.f32 %v363, %v560
      %v588 = vadd.f32 %v364, %v561
      %v589 = vadd.f32 %v365, %v562
      %v590 = vadd.f32 %v366, %v563
      %v591 = vadd.f32 %v367, %v564
      %v592 = vld [vmem:[%s165 + $0x1] sm:$0xff]
      %v593 = vld [vmem:[%s165 + $0x9] sm:$0xff]
      %v594 = vld [vmem:[%s165 + $0x11] sm:$0xff]
      %v595 = vld [vmem:[%s165 + $0x19] sm:$0xff]
      %v596 = vld [vmem:[%s165 + $0x21] sm:$0xff]
      %v597 = vld [vmem:[%s165 + $0x29] sm:$0xff]
      %v598 = vld [vmem:[%s165 + $0x31] sm:$0xff]
      %v599 = vld [vmem:[%s165 + $0x39] sm:$0xff]
      %v600 = vld [vmem:[%s165 + $0x41] sm:$0xff]
      %v601 = vld [vmem:[%s165 + $0x49] sm:$0xff]
      %v602 = vld [vmem:[%s165 + $0x51] sm:$0xff]
      %v603 = vld [vmem:[%s165 + $0x59] sm:$0xff]
      %v604 = vld [vmem:[%s165 + $0x61] sm:$0xff]
      %v605 = vld [vmem:[%s165 + $0x69] sm:$0xff]
      %v606 = vld [vmem:[%s165 + $0x71] sm:$0xff]
      %v607 = vld [vmem:[%s165 + $0x79] sm:$0xff]
      %v608 = vld [vmem:[%s165 + $0x81] sm:$0xff]
      %v609 = vld [vmem:[%s165 + $0x89] sm:$0xff]
      %v610 = vld [vmem:[%s165 + $0x91] sm:$0xff]
      %v611 = vld [vmem:[%s165 + $0x99] sm:$0xff]
      %v612 = vld [vmem:[%s165 + $0xa1] sm:$0xff]
      %v613 = vld [vmem:[%s165 + $0xa9] sm:$0xff]
      %v614 = vld [vmem:[%s165 + $0xb1] sm:$0xff]
      %v615 = vld [vmem:[%s165 + $0xb9] sm:$0xff]
      %v616 = vld [vmem:[%s165 + $0xc1] sm:$0xff]
      %v617 = vld [vmem:[%s165 + $0xc9] sm:$0xff]
      %v618 = vld [vmem:[%s165 + $0xd1] sm:$0x3]
      %s619 = scalar_lea.vmem %s1, 2
      %v620 = vld [vmem:[%s619] sm:$0x1]
      %622 = vset.pattern.permute.xlu0 0
      %623 = vperm.xlu0 %622, %v592
      %v624 = vpop.permute.xlu0 %623
      %627 = vset.pattern.permute.xlu0 0
      %628 = vperm.xlu0 %627, %v593
      %v629 = vpop.permute.xlu0 %628
      %632 = vset.pattern.permute.xlu0 0
      %633 = vperm.xlu0 %632, %v594
      %v634 = vpop.permute.xlu0 %633
      %637 = vset.pattern.permute.xlu0 0
      %638 = vperm.xlu0 %637, %v595
      %v639 = vpop.permute.xlu0 %638
      %642 = vset.pattern.permute.xlu0 0
      %643 = vperm.xlu0 %642, %v596
      %v644 = vpop.permute.xlu0 %643
      %647 = vset.pattern.permute.xlu0 0
      %648 = vperm.xlu0 %647, %v597
      %v649 = vpop.permute.xlu0 %648
      %652 = vset.pattern.permute.xlu0 0
      %653 = vperm.xlu0 %652, %v598
      %v654 = vpop.permute.xlu0 %653
      %657 = vset.pattern.permute.xlu0 0
      %658 = vperm.xlu0 %657, %v599
      %v659 = vpop.permute.xlu0 %658
      %662 = vset.pattern.permute.xlu0 0
      %663 = vperm.xlu0 %662, %v600
      %v664 = vpop.permute.xlu0 %663
      %667 = vset.pattern.permute.xlu0 0
      %668 = vperm.xlu0 %667, %v601
      %v669 = vpop.permute.xlu0 %668
      %672 = vset.pattern.permute.xlu0 0
      %673 = vperm.xlu0 %672, %v602
      %v674 = vpop.permute.xlu0 %673
      %677 = vset.pattern.permute.xlu0 0
      %678 = vperm.xlu0 %677, %v603
      %v679 = vpop.permute.xlu0 %678
      %682 = vset.pattern.permute.xlu0 0
      %683 = vperm.xlu0 %682, %v604
      %v684 = vpop.permute.xlu0 %683
      %687 = vset.pattern.permute.xlu0 0
      %688 = vperm.xlu0 %687, %v605
      %v689 = vpop.permute.xlu0 %688
      %692 = vset.pattern.permute.xlu0 0
      %693 = vperm.xlu0 %692, %v606
      %v694 = vpop.permute.xlu0 %693
      %697 = vset.pattern.permute.xlu0 0
      %698 = vperm.xlu0 %697, %v607
      %v699 = vpop.permute.xlu0 %698
      %702 = vset.pattern.permute.xlu0 0
      %703 = vperm.xlu0 %702, %v608
      %v704 = vpop.permute.xlu0 %703
      %707 = vset.pattern.permute.xlu0 0
      %708 = vperm.xlu0 %707, %v609
      %v709 = vpop.permute.xlu0 %708
      %712 = vset.pattern.permute.xlu0 0
      %713 = vperm.xlu0 %712, %v610
      %v714 = vpop.permute.xlu0 %713
      %717 = vset.pattern.permute.xlu0 0
      %718 = vperm.xlu0 %717, %v611
      %v719 = vpop.permute.xlu0 %718
      %722 = vset.pattern.permute.xlu0 0
      %723 = vperm.xlu0 %722, %v612
      %v724 = vpop.permute.xlu0 %723
      %727 = vset.pattern.permute.xlu0 0
      %728 = vperm.xlu0 %727, %v613
      %v729 = vpop.permute.xlu0 %728
      %732 = vset.pattern.permute.xlu0 0
      %733 = vperm.xlu0 %732, %v614
      %v734 = vpop.permute.xlu0 %733
      %737 = vset.pattern.permute.xlu0 0
      %738 = vperm.xlu0 %737, %v615
      %v739 = vpop.permute.xlu0 %738
      %742 = vset.pattern.permute.xlu0 0
      %743 = vperm.xlu0 %742, %v616
      %v744 = vpop.permute.xlu0 %743
      %747 = vset.pattern.permute.xlu0 0
      %748 = vperm.xlu0 %747, %v617
      %v749 = vpop.permute.xlu0 %748
      %752 = vset.pattern.permute.xlu0 0
      %753 = vperm.xlu0 %752, %v618
      %v754 = vpop.permute.xlu0 %753
      %v757 = vlaneseq
      %v758 = vshrl.u32 %v757, 7
      %v759 = vsub.s32 0, %v758
      %v760 = vrot.slane %v620, %v759
      %v762 = vmul.f32 %v624, %v760
      %v763 = vmul.f32 %v629, %v760
      %v764 = vmul.f32 %v634, %v760
      %v765 = vmul.f32 %v639, %v760
      %v766 = vmul.f32 %v644, %v760
      %v767 = vmul.f32 %v649, %v760
      %v768 = vmul.f32 %v654, %v760
      %v769 = vmul.f32 %v659, %v760
      %v770 = vmul.f32 %v664, %v760
      %v771 = vmul.f32 %v669, %v760
      %v772 = vmul.f32 %v674, %v760
      %v773 = vmul.f32 %v679, %v760
      %v774 = vmul.f32 %v684, %v760
      %v775 = vmul.f32 %v689, %v760
      %v776 = vmul.f32 %v694, %v760
      %v777 = vmul.f32 %v699, %v760
      %v778 = vmul.f32 %v704, %v760
      %v779 = vmul.f32 %v709, %v760
      %v780 = vmul.f32 %v714, %v760
      %v781 = vmul.f32 %v719, %v760
      %v782 = vmul.f32 %v724, %v760
      %v783 = vmul.f32 %v729, %v760
      %v784 = vmul.f32 %v734, %v760
      %v785 = vmul.f32 %v739, %v760
      %v786 = vmul.f32 %v744, %v760
      %v787 = vmul.f32 %v749, %v760
      %v788 = vmul.f32 %v754, %v760
      %v789 = vadd.f32 %v565, %v762
      %v790 = vadd.f32 %v566, %v763
      %v791 = vadd.f32 %v567, %v764
      %v792 = vadd.f32 %v568, %v765
      %v793 = vadd.f32 %v569, %v766
      %v794 = vadd.f32 %v570, %v767
      %v795 = vadd.f32 %v571, %v768
      %v796 = vadd.f32 %v572, %v769
      %v797 = vadd.f32 %v573, %v770
      %v798 = vadd.f32 %v574, %v771
      %v799 = vadd.f32 %v575, %v772
      %v800 = vadd.f32 %v576, %v773
      %v801 = vadd.f32 %v577, %v774
      %v802 = vadd.f32 %v578, %v775
      %v803 = vadd.f32 %v579, %v776
      %v804 = vadd.f32 %v580, %v777
      %v805 = vadd.f32 %v581, %v778
      %v806 = vadd.f32 %v582, %v779
      %v807 = vadd.f32 %v583, %v780
      %v808 = vadd.f32 %v584, %v781
      %v809 = vadd.f32 %v585, %v782
      %v810 = vadd.f32 %v586, %v783
      %v811 = vadd.f32 %v587, %v784
      %v812 = vadd.f32 %v588, %v785
      %v813 = vadd.f32 %v589, %v786
      %v814 = vadd.f32 %v590, %v787
      %v815 = vadd.f32 %v591, %v788
      %v816 = vld [vmem:[%s165 + $0x1d0] sm:$0xff]
      %v817 = vld [vmem:[%s165 + $0x1d8] sm:$0xff]
      %v818 = vld [vmem:[%s165 + $0x1e0] sm:$0xff]
      %v819 = vld [vmem:[%s165 + $0x1e8] sm:$0xff]
      %v820 = vld [vmem:[%s165 + $0x1f0] sm:$0xff]
      %v821 = vld [vmem:[%s165 + $0x1f8] sm:$0xff]
      %v822 = vld [vmem:[%s165 + $0x200] sm:$0xff]
      %v823 = vld [vmem:[%s165 + $0x208] sm:$0xff]
      %v824 = vld [vmem:[%s165 + $0x210] sm:$0xff]
      %v825 = vld [vmem:[%s165 + $0x218] sm:$0xff]
      %v826 = vld [vmem:[%s165 + $0x220] sm:$0xff]
      %v827 = vld [vmem:[%s165 + $0x228] sm:$0xff]
      %v828 = vld [vmem:[%s165 + $0x230] sm:$0xff]
      %v829 = vld [vmem:[%s165 + $0x238] sm:$0xff]
      %v830 = vld [vmem:[%s165 + $0x240] sm:$0xff]
      %v831 = vld [vmem:[%s165 + $0x248] sm:$0xff]
      %v832 = vld [vmem:[%s165 + $0x250] sm:$0xff]
      %v833 = vld [vmem:[%s165 + $0x258] sm:$0xff]
      %v834 = vld [vmem:[%s165 + $0x260] sm:$0xff]
      %v835 = vld [vmem:[%s165 + $0x268] sm:$0xff]
      %v836 = vld [vmem:[%s165 + $0x270] sm:$0xff]
      %v837 = vld [vmem:[%s165 + $0x278] sm:$0xff]
      %v838 = vld [vmem:[%s165 + $0x280] sm:$0xff]
      %v839 = vld [vmem:[%s165 + $0x288] sm:$0xff]
      %v840 = vld [vmem:[%s165 + $0x290] sm:$0xff]
      %v841 = vld [vmem:[%s165 + $0x298] sm:$0xff]
      %v842 = vld [vmem:[%s165 + $0x2a0] sm:$0x3]
      %s843 = scalar_lea.vmem %s1, 3
      %v844 = vld [vmem:[%s843] sm:$0x1]
      %846 = vset.pattern.permute.xlu0 0
      %847 = vperm.xlu0 %846, %v816
      %v848 = vpop.permute.xlu0 %847
      %851 = vset.pattern.permute.xlu0 0
      %852 = vperm.xlu0 %851, %v817
      %v853 = vpop.permute.xlu0 %852
      %856 = vset.pattern.permute.xlu0 0
      %857 = vperm.xlu0 %856, %v818
      %v858 = vpop.permute.xlu0 %857
      %861 = vset.pattern.permute.xlu0 0
      %862 = vperm.xlu0 %861, %v819
      %v863 = vpop.permute.xlu0 %862
      %866 = vset.pattern.permute.xlu0 0
      %867 = vperm.xlu0 %866, %v820
      %v868 = vpop.permute.xlu0 %867
      %871 = vset.pattern.permute.xlu0 0
      %872 = vperm.xlu0 %871, %v821
      %v873 = vpop.permute.xlu0 %872
      %876 = vset.pattern.permute.xlu0 0
      %877 = vperm.xlu0 %876, %v822
      %v878 = vpop.permute.xlu0 %877
      %881 = vset.pattern.permute.xlu0 0
      %882 = vperm.xlu0 %881, %v823
      %v883 = vpop.permute.xlu0 %882
      %886 = vset.pattern.permute.xlu0 0
      %887 = vperm.xlu0 %886, %v824
      %v888 = vpop.permute.xlu0 %887
      %891 = vset.pattern.permute.xlu0 0
      %892 = vperm.xlu0 %891, %v825
      %v893 = vpop.permute.xlu0 %892
      %896 = vset.pattern.permute.xlu0 0
      %897 = vperm.xlu0 %896, %v826
      %v898 = vpop.permute.xlu0 %897
      %901 = vset.pattern.permute.xlu0 0
      %902 = vperm.xlu0 %901, %v827
      %v903 = vpop.permute.xlu0 %902
      %906 = vset.pattern.permute.xlu0 0
      %907 = vperm.xlu0 %906, %v828
      %v908 = vpop.permute.xlu0 %907
      %911 = vset.pattern.permute.xlu0 0
      %912 = vperm.xlu0 %911, %v829
      %v913 = vpop.permute.xlu0 %912
      %916 = vset.pattern.permute.xlu0 0
      %917 = vperm.xlu0 %916, %v830
      %v918 = vpop.permute.xlu0 %917
      %921 = vset.pattern.permute.xlu0 0
      %922 = vperm.xlu0 %921, %v831
      %v923 = vpop.permute.xlu0 %922
      %926 = vset.pattern.permute.xlu0 0
      %927 = vperm.xlu0 %926, %v832
      %v928 = vpop.permute.xlu0 %927
      %931 = vset.pattern.permute.xlu0 0
      %932 = vperm.xlu0 %931, %v833
      %v933 = vpop.permute.xlu0 %932
      %936 = vset.pattern.permute.xlu0 0
      %937 = vperm.xlu0 %936, %v834
      %v938 = vpop.permute.xlu0 %937
      %941 = vset.pattern.permute.xlu0 0
      %942 = vperm.xlu0 %941, %v835
      %v943 = vpop.permute.xlu0 %942
      %946 = vset.pattern.permute.xlu0 0
      %947 = vperm.xlu0 %946, %v836
      %v948 = vpop.permute.xlu0 %947
      %951 = vset.pattern.permute.xlu0 0
      %952 = vperm.xlu0 %951, %v837
      %v953 = vpop.permute.xlu0 %952
      %956 = vset.pattern.permute.xlu0 0
      %957 = vperm.xlu0 %956, %v838
      %v958 = vpop.permute.xlu0 %957
      %961 = vset.pattern.permute.xlu0 0
      %962 = vperm.xlu0 %961, %v839
      %v963 = vpop.permute.xlu0 %962
      %966 = vset.pattern.permute.xlu0 0
      %967 = vperm.xlu0 %966, %v840
      %v968 = vpop.permute.xlu0 %967
      %971 = vset.pattern.permute.xlu0 0
      %972 = vperm.xlu0 %971, %v841
      %v973 = vpop.permute.xlu0 %972
      %976 = vset.pattern.permute.xlu0 0
      %977 = vperm.xlu0 %976, %v842
      %v978 = vpop.permute.xlu0 %977
      %v981 = vlaneseq
      %v982 = vshrl.u32 %v981, 7
      %v983 = vsub.s32 0, %v982
      %v984 = vrot.slane %v844, %v983
      %v986 = vmul.f32 %v848, %v984
      %v987 = vmul.f32 %v853, %v984
      %v988 = vmul.f32 %v858, %v984
      %v989 = vmul.f32 %v863, %v984
      %v990 = vmul.f32 %v868, %v984
      %v991 = vmul.f32 %v873, %v984
      %v992 = vmul.f32 %v878, %v984
      %v993 = vmul.f32 %v883, %v984
      %v994 = vmul.f32 %v888, %v984
      %v995 = vmul.f32 %v893, %v984
      %v996 = vmul.f32 %v898, %v984
      %v997 = vmul.f32 %v903, %v984
      %v998 = vmul.f32 %v908, %v984
      %v999 = vmul.f32 %v913, %v984
      %v1000 = vmul.f32 %v918, %v984
      %v1001 = vmul.f32 %v923, %v984
      %v1002 = vmul.f32 %v928, %v984
      %v1003 = vmul.f32 %v933, %v984
      %v1004 = vmul.f32 %v938, %v984
      %v1005 = vmul.f32 %v943, %v984
      %v1006 = vmul.f32 %v948, %v984
      %v1007 = vmul.f32 %v953, %v984
      %v1008 = vmul.f32 %v958, %v984
      %v1009 = vmul.f32 %v963, %v984
      %v1010 = vmul.f32 %v968, %v984
      %v1011 = vmul.f32 %v973, %v984
      %v1012 = vmul.f32 %v978, %v984
      %v1013 = vadd.f32 %v789, %v986
      %v1014 = vadd.f32 %v790, %v987
      %v1015 = vadd.f32 %v791, %v988
      %v1016 = vadd.f32 %v792, %v989
      %v1017 = vadd.f32 %v793, %v990
      %v1018 = vadd.f32 %v794, %v991
      %v1019 = vadd.f32 %v795, %v992
      %v1020 = vadd.f32 %v796, %v993
      %v1021 = vadd.f32 %v797, %v994
      %v1022 = vadd.f32 %v798, %v995
      %v1023 = vadd.f32 %v799, %v996
      %v1024 = vadd.f32 %v800, %v997
      %v1025 = vadd.f32 %v801, %v998
      %v1026 = vadd.f32 %v802, %v999
      %v1027 = vadd.f32 %v803, %v1000
      %v1028 = vadd.f32 %v804, %v1001
      %v1029 = vadd.f32 %v805, %v1002
      %v1030 = vadd.f32 %v806, %v1003
      %v1031 = vadd.f32 %v807, %v1004
      %v1032 = vadd.f32 %v808, %v1005
      %v1033 = vadd.f32 %v809, %v1006
      %v1034 = vadd.f32 %v810, %v1007
      %v1035 = vadd.f32 %v811, %v1008
      %v1036 = vadd.f32 %v812, %v1009
      %v1037 = vadd.f32 %v813, %v1010
      %v1038 = vadd.f32 %v814, %v1011
      %v1039 = vadd.f32 %v815, %v1012
      %v1040 = vld [vmem:[%s165 + $0x2b8] sm:$0xff]
      %v1041 = vld [vmem:[%s165 + $0x2c0] sm:$0xff]
      %v1042 = vld [vmem:[%s165 + $0x2c8] sm:$0xff]
      %v1043 = vld [vmem:[%s165 + $0x2d0] sm:$0xff]
      %v1044 = vld [vmem:[%s165 + $0x2d8] sm:$0xff]
      %v1045 = vld [vmem:[%s165 + $0x2e0] sm:$0xff]
      %v1046 = vld [vmem:[%s165 + $0x2e8] sm:$0xff]
      %v1047 = vld [vmem:[%s165 + $0x2f0] sm:$0xff]
      %v1048 = vld [vmem:[%s165 + $0x2f8] sm:$0xff]
      %v1049 = vld [vmem:[%s165 + $0x300] sm:$0xff]
      %v1050 = vld [vmem:[%s165 + $0x308] sm:$0xff]
      %v1051 = vld [vmem:[%s165 + $0x310] sm:$0xff]
      %v1052 = vld [vmem:[%s165 + $0x318] sm:$0xff]
      %v1053 = vld [vmem:[%s165 + $0x320] sm:$0xff]
      %v1054 = vld [vmem:[%s165 + $0x328] sm:$0xff]
      %v1055 = vld [vmem:[%s165 + $0x330] sm:$0xff]
      %v1056 = vld [vmem:[%s165 + $0x338] sm:$0xff]
      %v1057 = vld [vmem:[%s165 + $0x340] sm:$0xff]
      %v1058 = vld [vmem:[%s165 + $0x348] sm:$0xff]
      %v1059 = vld [vmem:[%s165 + $0x350] sm:$0xff]
      %v1060 = vld [vmem:[%s165 + $0x358] sm:$0xff]
      %v1061 = vld [vmem:[%s165 + $0x360] sm:$0xff]
      %v1062 = vld [vmem:[%s165 + $0x368] sm:$0xff]
      %v1063 = vld [vmem:[%s165 + $0x370] sm:$0xff]
      %v1064 = vld [vmem:[%s165 + $0x378] sm:$0xff]
      %v1065 = vld [vmem:[%s165 + $0x380] sm:$0xff]
      %v1066 = vld [vmem:[%s165 + $0x388] sm:$0x3]
      %s1067 = scalar_lea.vmem %s1, 4
      %v1068 = vld [vmem:[%s1067] sm:$0x1]
      %1070 = vset.pattern.permute.xlu0 0
      %1071 = vperm.xlu0 %1070, %v1040
      %v1072 = vpop.permute.xlu0 %1071
      %1075 = vset.pattern.permute.xlu0 0
      %1076 = vperm.xlu0 %1075, %v1041
      %v1077 = vpop.permute.xlu0 %1076
      %1080 = vset.pattern.permute.xlu0 0
      %1081 = vperm.xlu0 %1080, %v1042
      %v1082 = vpop.permute.xlu0 %1081
      %1085 = vset.pattern.permute.xlu0 0
      %1086 = vperm.xlu0 %1085, %v1043
      %v1087 = vpop.permute.xlu0 %1086
      %1090 = vset.pattern.permute.xlu0 0
      %1091 = vperm.xlu0 %1090, %v1044
      %v1092 = vpop.permute.xlu0 %1091
      %1095 = vset.pattern.permute.xlu0 0
      %1096 = vperm.xlu0 %1095, %v1045
      %v1097 = vpop.permute.xlu0 %1096
      %1100 = vset.pattern.permute.xlu0 0
      %1101 = vperm.xlu0 %1100, %v1046
      %v1102 = vpop.permute.xlu0 %1101
      %1105 = vset.pattern.permute.xlu0 0
      %1106 = vperm.xlu0 %1105, %v1047
      %v1107 = vpop.permute.xlu0 %1106
      %1110 = vset.pattern.permute.xlu0 0
      %1111 = vperm.xlu0 %1110, %v1048
      %v1112 = vpop.permute.xlu0 %1111
      %1115 = vset.pattern.permute.xlu0 0
      %1116 = vperm.xlu0 %1115, %v1049
      %v1117 = vpop.permute.xlu0 %1116
      %1120 = vset.pattern.permute.xlu0 0
      %1121 = vperm.xlu0 %1120, %v1050
      %v1122 = vpop.permute.xlu0 %1121
      %1125 = vset.pattern.permute.xlu0 0
      %1126 = vperm.xlu0 %1125, %v1051
      %v1127 = vpop.permute.xlu0 %1126
      %1130 = vset.pattern.permute.xlu0 0
      %1131 = vperm.xlu0 %1130, %v1052
      %v1132 = vpop.permute.xlu0 %1131
      %1135 = vset.pattern.permute.xlu0 0
      %1136 = vperm.xlu0 %1135, %v1053
      %v1137 = vpop.permute.xlu0 %1136
      %1140 = vset.pattern.permute.xlu0 0
      %1141 = vperm.xlu0 %1140, %v1054
      %v1142 = vpop.permute.xlu0 %1141
      %1145 = vset.pattern.permute.xlu0 0
      %1146 = vperm.xlu0 %1145, %v1055
      %v1147 = vpop.permute.xlu0 %1146
      %1150 = vset.pattern.permute.xlu0 0
      %1151 = vperm.xlu0 %1150, %v1056
      %v1152 = vpop.permute.xlu0 %1151
      %1155 = vset.pattern.permute.xlu0 0
      %1156 = vperm.xlu0 %1155, %v1057
      %v1157 = vpop.permute.xlu0 %1156
      %1160 = vset.pattern.permute.xlu0 0
      %1161 = vperm.xlu0 %1160, %v1058
      %v1162 = vpop.permute.xlu0 %1161
      %1165 = vset.pattern.permute.xlu0 0
      %1166 = vperm.xlu0 %1165, %v1059
      %v1167 = vpop.permute.xlu0 %1166
      %1170 = vset.pattern.permute.xlu0 0
      %1171 = vperm.xlu0 %1170, %v1060
      %v1172 = vpop.permute.xlu0 %1171
      %1175 = vset.pattern.permute.xlu0 0
      %1176 = vperm.xlu0 %1175, %v1061
      %v1177 = vpop.permute.xlu0 %1176
      %1180 = vset.pattern.permute.xlu0 0
      %1181 = vperm.xlu0 %1180, %v1062
      %v1182 = vpop.permute.xlu0 %1181
      %1185 = vset.pattern.permute.xlu0 0
      %1186 = vperm.xlu0 %1185, %v1063
      %v1187 = vpop.permute.xlu0 %1186
      %1190 = vset.pattern.permute.xlu0 0
      %1191 = vperm.xlu0 %1190, %v1064
      %v1192 = vpop.permute.xlu0 %1191
      %1195 = vset.pattern.permute.xlu0 0
      %1196 = vperm.xlu0 %1195, %v1065
      %v1197 = vpop.permute.xlu0 %1196
      %1200 = vset.pattern.permute.xlu0 0
      %1201 = vperm.xlu0 %1200, %v1066
      %v1202 = vpop.permute.xlu0 %1201
      %v1205 = vlaneseq
      %v1206 = vshrl.u32 %v1205, 7
      %v1207 = vsub.s32 0, %v1206
      %v1208 = vrot.slane %v1068, %v1207
      %v1210 = vmul.f32 %v1072, %v1208
      %v1211 = vmul.f32 %v1077, %v1208
      %v1212 = vmul.f32 %v1082, %v1208
      %v1213 = vmul.f32 %v1087, %v1208
      %v1214 = vmul.f32 %v1092, %v1208
      %v1215 = vmul.f32 %v1097, %v1208
      %v1216 = vmul.f32 %v1102, %v1208
      %v1217 = vmul.f32 %v1107, %v1208
      %v1218 = vmul.f32 %v1112, %v1208
      %v1219 = vmul.f32 %v1117, %v1208
      %v1220 = vmul.f32 %v1122, %v1208
      %v1221 = vmul.f32 %v1127, %v1208
      %v1222 = vmul.f32 %v1132, %v1208
      %v1223 = vmul.f32 %v1137, %v1208
      %v1224 = vmul.f32 %v1142, %v1208
      %v1225 = vmul.f32 %v1147, %v1208
      %v1226 = vmul.f32 %v1152, %v1208
      %v1227 = vmul.f32 %v1157, %v1208
      %v1228 = vmul.f32 %v1162, %v1208
      %v1229 = vmul.f32 %v1167, %v1208
      %v1230 = vmul.f32 %v1172, %v1208
      %v1231 = vmul.f32 %v1177, %v1208
      %v1232 = vmul.f32 %v1182, %v1208
      %v1233 = vmul.f32 %v1187, %v1208
      %v1234 = vmul.f32 %v1192, %v1208
      %v1235 = vmul.f32 %v1197, %v1208
      %v1236 = vmul.f32 %v1202, %v1208
      %v1237 = vadd.f32 %v1013, %v1210
      %v1238 = vadd.f32 %v1014, %v1211
      %v1239 = vadd.f32 %v1015, %v1212
      %v1240 = vadd.f32 %v1016, %v1213
      %v1241 = vadd.f32 %v1017, %v1214
      %v1242 = vadd.f32 %v1018, %v1215
      %v1243 = vadd.f32 %v1019, %v1216
      %v1244 = vadd.f32 %v1020, %v1217
      %v1245 = vadd.f32 %v1021, %v1218
      %v1246 = vadd.f32 %v1022, %v1219
      %v1247 = vadd.f32 %v1023, %v1220
      %v1248 = vadd.f32 %v1024, %v1221
      %v1249 = vadd.f32 %v1025, %v1222
      %v1250 = vadd.f32 %v1026, %v1223
      %v1251 = vadd.f32 %v1027, %v1224
      %v1252 = vadd.f32 %v1028, %v1225
      %v1253 = vadd.f32 %v1029, %v1226
      %v1254 = vadd.f32 %v1030, %v1227
      %v1255 = vadd.f32 %v1031, %v1228
      %v1256 = vadd.f32 %v1032, %v1229
      %v1257 = vadd.f32 %v1033, %v1230
      %v1258 = vadd.f32 %v1034, %v1231
      %v1259 = vadd.f32 %v1035, %v1232
      %v1260 = vadd.f32 %v1036, %v1233
      %v1261 = vadd.f32 %v1037, %v1234
      %v1262 = vadd.f32 %v1038, %v1235
      %v1263 = vadd.f32 %v1039, %v1236
      %v1264 = vld [vmem:[%s165 + $0x1d1] sm:$0xff]
      %v1265 = vld [vmem:[%s165 + $0x1d9] sm:$0xff]
      %v1266 = vld [vmem:[%s165 + $0x1e1] sm:$0xff]
      %v1267 = vld [vmem:[%s165 + $0x1e9] sm:$0xff]
      %v1268 = vld [vmem:[%s165 + $0x1f1] sm:$0xff]
      %v1269 = vld [vmem:[%s165 + $0x1f9] sm:$0xff]
      %v1270 = vld [vmem:[%s165 + $0x201] sm:$0xff]
      %v1271 = vld [vmem:[%s165 + $0x209] sm:$0xff]
      %v1272 = vld [vmem:[%s165 + $0x211] sm:$0xff]
      %v1273 = vld [vmem:[%s165 + $0x219] sm:$0xff]
      %v1274 = vld [vmem:[%s165 + $0x221] sm:$0xff]
      %v1275 = vld [vmem:[%s165 + $0x229] sm:$0xff]
      %v1276 = vld [vmem:[%s165 + $0x231] sm:$0xff]
      %v1277 = vld [vmem:[%s165 + $0x239] sm:$0xff]
      %v1278 = vld [vmem:[%s165 + $0x241] sm:$0xff]
      %v1279 = vld [vmem:[%s165 + $0x249] sm:$0xff]
      %v1280 = vld [vmem:[%s165 + $0x251] sm:$0xff]
      %v1281 = vld [vmem:[%s165 + $0x259] sm:$0xff]
      %v1282 = vld [vmem:[%s165 + $0x261] sm:$0xff]
      %v1283 = vld [vmem:[%s165 + $0x269] sm:$0xff]
      %v1284 = vld [vmem:[%s165 + $0x271] sm:$0xff]
      %v1285 = vld [vmem:[%s165 + $0x279] sm:$0xff]
      %v1286 = vld [vmem:[%s165 + $0x281] sm:$0xff]
      %v1287 = vld [vmem:[%s165 + $0x289] sm:$0xff]
      %v1288 = vld [vmem:[%s165 + $0x291] sm:$0xff]
      %v1289 = vld [vmem:[%s165 + $0x299] sm:$0xff]
      %v1290 = vld [vmem:[%s165 + $0x2a1] sm:$0x3]
      %s1291 = scalar_lea.vmem %s1, 5
      %v1292 = vld [vmem:[%s1291] sm:$0x1]
      %1294 = vset.pattern.permute.xlu0 0
      %1295 = vperm.xlu0 %1294, %v1264
      %v1296 = vpop.permute.xlu0 %1295
      %1299 = vset.pattern.permute.xlu0 0
      %1300 = vperm.xlu0 %1299, %v1265
      %v1301 = vpop.permute.xlu0 %1300
      %1304 = vset.pattern.permute.xlu0 0
      %1305 = vperm.xlu0 %1304, %v1266
      %v1306 = vpop.permute.xlu0 %1305
      %1309 = vset.pattern.permute.xlu0 0
      %1310 = vperm.xlu0 %1309, %v1267
      %v1311 = vpop.permute.xlu0 %1310
      %1314 = vset.pattern.permute.xlu0 0
      %1315 = vperm.xlu0 %1314, %v1268
      %v1316 = vpop.permute.xlu0 %1315
      %1319 = vset.pattern.permute.xlu0 0
      %1320 = vperm.xlu0 %1319, %v1269
      %v1321 = vpop.permute.xlu0 %1320
      %1324 = vset.pattern.permute.xlu0 0
      %1325 = vperm.xlu0 %1324, %v1270
      %v1326 = vpop.permute.xlu0 %1325
      %1329 = vset.pattern.permute.xlu0 0
      %1330 = vperm.xlu0 %1329, %v1271
      %v1331 = vpop.permute.xlu0 %1330
      %1334 = vset.pattern.permute.xlu0 0
      %1335 = vperm.xlu0 %1334, %v1272
      %v1336 = vpop.permute.xlu0 %1335
      %1339 = vset.pattern.permute.xlu0 0
      %1340 = vperm.xlu0 %1339, %v1273
      %v1341 = vpop.permute.xlu0 %1340
      %1344 = vset.pattern.permute.xlu0 0
      %1345 = vperm.xlu0 %1344, %v1274
      %v1346 = vpop.permute.xlu0 %1345
      %1349 = vset.pattern.permute.xlu0 0
      %1350 = vperm.xlu0 %1349, %v1275
      %v1351 = vpop.permute.xlu0 %1350
      %1354 = vset.pattern.permute.xlu0 0
      %1355 = vperm.xlu0 %1354, %v1276
      %v1356 = vpop.permute.xlu0 %1355
      %1359 = vset.pattern.permute.xlu0 0
      %1360 = vperm.xlu0 %1359, %v1277
      %v1361 = vpop.permute.xlu0 %1360
      %1364 = vset.pattern.permute.xlu0 0
      %1365 = vperm.xlu0 %1364, %v1278
      %v1366 = vpop.permute.xlu0 %1365
      %1369 = vset.pattern.permute.xlu0 0
      %1370 = vperm.xlu0 %1369, %v1279
      %v1371 = vpop.permute.xlu0 %1370
      %1374 = vset.pattern.permute.xlu0 0
      %1375 = vperm.xlu0 %1374, %v1280
      %v1376 = vpop.permute.xlu0 %1375
      %1379 = vset.pattern.permute.xlu0 0
      %1380 = vperm.xlu0 %1379, %v1281
      %v1381 = vpop.permute.xlu0 %1380
      %1384 = vset.pattern.permute.xlu0 0
      %1385 = vperm.xlu0 %1384, %v1282
      %v1386 = vpop.permute.xlu0 %1385
      %1389 = vset.pattern.permute.xlu0 0
      %1390 = vperm.xlu0 %1389, %v1283
      %v1391 = vpop.permute.xlu0 %1390
      %1394 = vset.pattern.permute.xlu0 0
      %1395 = vperm.xlu0 %1394, %v1284
      %v1396 = vpop.permute.xlu0 %1395
      %1399 = vset.pattern.permute.xlu0 0
      %1400 = vperm.xlu0 %1399, %v1285
      %v1401 = vpop.permute.xlu0 %1400
      %1404 = vset.pattern.permute.xlu0 0
      %1405 = vperm.xlu0 %1404, %v1286
      %v1406 = vpop.permute.xlu0 %1405
      %1409 = vset.pattern.permute.xlu0 0
      %1410 = vperm.xlu0 %1409, %v1287
      %v1411 = vpop.permute.xlu0 %1410
      %1414 = vset.pattern.permute.xlu0 0
      %1415 = vperm.xlu0 %1414, %v1288
      %v1416 = vpop.permute.xlu0 %1415
      %1419 = vset.pattern.permute.xlu0 0
      %1420 = vperm.xlu0 %1419, %v1289
      %v1421 = vpop.permute.xlu0 %1420
      %1424 = vset.pattern.permute.xlu0 0
      %1425 = vperm.xlu0 %1424, %v1290
      %v1426 = vpop.permute.xlu0 %1425
      %v1429 = vlaneseq
      %v1430 = vshrl.u32 %v1429, 7
      %v1431 = vsub.s32 0, %v1430
      %v1432 = vrot.slane %v1292, %v1431
      %v1434 = vmul.f32 %v1296, %v1432
      %v1435 = vmul.f32 %v1301, %v1432
      %v1436 = vmul.f32 %v1306, %v1432
      %v1437 = vmul.f32 %v1311, %v1432
      %v1438 = vmul.f32 %v1316, %v1432
      %v1439 = vmul.f32 %v1321, %v1432
      %v1440 = vmul.f32 %v1326, %v1432
      %v1441 = vmul.f32 %v1331, %v1432
      %v1442 = vmul.f32 %v1336, %v1432
      %v1443 = vmul.f32 %v1341, %v1432
      %v1444 = vmul.f32 %v1346, %v1432
      %v1445 = vmul.f32 %v1351, %v1432
      %v1446 = vmul.f32 %v1356, %v1432
      %v1447 = vmul.f32 %v1361, %v1432
      %v1448 = vmul.f32 %v1366, %v1432
      %v1449 = vmul.f32 %v1371, %v1432
      %v1450 = vmul.f32 %v1376, %v1432
      %v1451 = vmul.f32 %v1381, %v1432
      %v1452 = vmul.f32 %v1386, %v1432
      %v1453 = vmul.f32 %v1391, %v1432
      %v1454 = vmul.f32 %v1396, %v1432
      %v1455 = vmul.f32 %v1401, %v1432
      %v1456 = vmul.f32 %v1406, %v1432
      %v1457 = vmul.f32 %v1411, %v1432
      %v1458 = vmul.f32 %v1416, %v1432
      %v1459 = vmul.f32 %v1421, %v1432
      %v1460 = vmul.f32 %v1426, %v1432
      %v1461 = vadd.f32 %v1237, %v1434
      %v1462 = vadd.f32 %v1238, %v1435
      %v1463 = vadd.f32 %v1239, %v1436
      %v1464 = vadd.f32 %v1240, %v1437
      %v1465 = vadd.f32 %v1241, %v1438
      %v1466 = vadd.f32 %v1242, %v1439
      %v1467 = vadd.f32 %v1243, %v1440
      %v1468 = vadd.f32 %v1244, %v1441
      %v1469 = vadd.f32 %v1245, %v1442
      %v1470 = vadd.f32 %v1246, %v1443
      %v1471 = vadd.f32 %v1247, %v1444
      %v1472 = vadd.f32 %v1248, %v1445
      %v1473 = vadd.f32 %v1249, %v1446
      %v1474 = vadd.f32 %v1250, %v1447
      %v1475 = vadd.f32 %v1251, %v1448
      %v1476 = vadd.f32 %v1252, %v1449
      %v1477 = vadd.f32 %v1253, %v1450
      %v1478 = vadd.f32 %v1254, %v1451
      %v1479 = vadd.f32 %v1255, %v1452
      %v1480 = vadd.f32 %v1256, %v1453
      %v1481 = vadd.f32 %v1257, %v1454
      %v1482 = vadd.f32 %v1258, %v1455
      %v1483 = vadd.f32 %v1259, %v1456
      %v1484 = vadd.f32 %v1260, %v1457
      %v1485 = vadd.f32 %v1261, %v1458
      %v1486 = vadd.f32 %v1262, %v1459
      %v1487 = vadd.f32 %v1263, %v1460
      %v1488 = vld [vmem:[%s165 + $0xf] sm:$0xff]
      %v1489 = vld [vmem:[%s165 + $0x17] sm:$0xff]
      %v1490 = vld [vmem:[%s165 + $0x1f] sm:$0xff]
      %v1491 = vld [vmem:[%s165 + $0x27] sm:$0xff]
      %v1492 = vld [vmem:[%s165 + $0x2f] sm:$0xff]
      %v1493 = vld [vmem:[%s165 + $0x37] sm:$0xff]
      %v1494 = vld [vmem:[%s165 + $0x3f] sm:$0xff]
      %v1495 = vld [vmem:[%s165 + $0x47] sm:$0xff]
      %v1496 = vld [vmem:[%s165 + $0x4f] sm:$0xff]
      %v1497 = vld [vmem:[%s165 + $0x57] sm:$0xff]
      %v1498 = vld [vmem:[%s165 + $0x5f] sm:$0xff]
      %v1499 = vld [vmem:[%s165 + $0x67] sm:$0xff]
      %v1500 = vld [vmem:[%s165 + $0x6f] sm:$0xff]
      %v1501 = vld [vmem:[%s165 + $0x77] sm:$0xff]
      %v1502 = vld [vmem:[%s165 + $0x7f] sm:$0xff]
      %v1503 = vld [vmem:[%s165 + $0x87] sm:$0xff]
      %v1504 = vld [vmem:[%s165 + $0x8f] sm:$0xff]
      %v1505 = vld [vmem:[%s165 + $0x97] sm:$0xff]
      %v1506 = vld [vmem:[%s165 + $0x9f] sm:$0xff]
      %v1507 = vld [vmem:[%s165 + $0xa7] sm:$0xff]
      %v1508 = vld [vmem:[%s165 + $0xaf] sm:$0xff]
      %v1509 = vld [vmem:[%s165 + $0xb7] sm:$0xff]
      %v1510 = vld [vmem:[%s165 + $0xbf] sm:$0xff]
      %v1511 = vld [vmem:[%s165 + $0xc7] sm:$0xff]
      %v1512 = vld [vmem:[%s165 + $0xcf] sm:$0xff]
      %v1513 = vld [vmem:[%s165 + $0xd7] sm:$0xff]
      %v1514 = vld [vmem:[%s165 + $0xdf] sm:$0x3]
      %s1515 = scalar_lea.vmem %s1, 6
      %v1516 = vld [vmem:[%s1515] sm:$0x1]
      %1518 = vset.pattern.permute.xlu0 0
      %1519 = vperm.xlu0 %1518, %v1488
      %v1520 = vpop.permute.xlu0 %1519
      %1523 = vset.pattern.permute.xlu0 0
      %1524 = vperm.xlu0 %1523, %v1489
      %v1525 = vpop.permute.xlu0 %1524
      %1528 = vset.pattern.permute.xlu0 0
      %1529 = vperm.xlu0 %1528, %v1490
      %v1530 = vpop.permute.xlu0 %1529
      %1533 = vset.pattern.permute.xlu0 0
      %1534 = vperm.xlu0 %1533, %v1491
      %v1535 = vpop.permute.xlu0 %1534
      %1538 = vset.pattern.permute.xlu0 0
      %1539 = vperm.xlu0 %1538, %v1492
      %v1540 = vpop.permute.xlu0 %1539
      %1543 = vset.pattern.permute.xlu0 0
      %1544 = vperm.xlu0 %1543, %v1493
      %v1545 = vpop.permute.xlu0 %1544
      %1548 = vset.pattern.permute.xlu0 0
      %1549 = vperm.xlu0 %1548, %v1494
      %v1550 = vpop.permute.xlu0 %1549
      %1553 = vset.pattern.permute.xlu0 0
      %1554 = vperm.xlu0 %1553, %v1495
      %v1555 = vpop.permute.xlu0 %1554
      %1558 = vset.pattern.permute.xlu0 0
      %1559 = vperm.xlu0 %1558, %v1496
      %v1560 = vpop.permute.xlu0 %1559
      %1563 = vset.pattern.permute.xlu0 0
      %1564 = vperm.xlu0 %1563, %v1497
      %v1565 = vpop.permute.xlu0 %1564
      %1568 = vset.pattern.permute.xlu0 0
      %1569 = vperm.xlu0 %1568, %v1498
      %v1570 = vpop.permute.xlu0 %1569
      %1573 = vset.pattern.permute.xlu0 0
      %1574 = vperm.xlu0 %1573, %v1499
      %v1575 = vpop.permute.xlu0 %1574
      %1578 = vset.pattern.permute.xlu0 0
      %1579 = vperm.xlu0 %1578, %v1500
      %v1580 = vpop.permute.xlu0 %1579
      %1583 = vset.pattern.permute.xlu0 0
      %1584 = vperm.xlu0 %1583, %v1501
      %v1585 = vpop.permute.xlu0 %1584
      %1588 = vset.pattern.permute.xlu0 0
      %1589 = vperm.xlu0 %1588, %v1502
      %v1590 = vpop.permute.xlu0 %1589
      %1593 = vset.pattern.permute.xlu0 0
      %1594 = vperm.xlu0 %1593, %v1503
      %v1595 = vpop.permute.xlu0 %1594
      %1598 = vset.pattern.permute.xlu0 0
      %1599 = vperm.xlu0 %1598, %v1504
      %v1600 = vpop.permute.xlu0 %1599
      %1603 = vset.pattern.permute.xlu0 0
      %1604 = vperm.xlu0 %1603, %v1505
      %v1605 = vpop.permute.xlu0 %1604
      %1608 = vset.pattern.permute.xlu0 0
      %1609 = vperm.xlu0 %1608, %v1506
      %v1610 = vpop.permute.xlu0 %1609
      %1613 = vset.pattern.permute.xlu0 0
      %1614 = vperm.xlu0 %1613, %v1507
      %v1615 = vpop.permute.xlu0 %1614
      %1618 = vset.pattern.permute.xlu0 0
      %1619 = vperm.xlu0 %1618, %v1508
      %v1620 = vpop.permute.xlu0 %1619
      %1623 = vset.pattern.permute.xlu0 0
      %1624 = vperm.xlu0 %1623, %v1509
      %v1625 = vpop.permute.xlu0 %1624
      %1628 = vset.pattern.permute.xlu0 0
      %1629 = vperm.xlu0 %1628, %v1510
      %v1630 = vpop.permute.xlu0 %1629
      %1633 = vset.pattern.permute.xlu0 0
      %1634 = vperm.xlu0 %1633, %v1511
      %v1635 = vpop.permute.xlu0 %1634
      %1638 = vset.pattern.permute.xlu0 0
      %1639 = vperm.xlu0 %1638, %v1512
      %v1640 = vpop.permute.xlu0 %1639
      %1643 = vset.pattern.permute.xlu0 0
      %1644 = vperm.xlu0 %1643, %v1513
      %v1645 = vpop.permute.xlu0 %1644
      %1648 = vset.pattern.permute.xlu0 0
      %1649 = vperm.xlu0 %1648, %v1514
      %v1650 = vpop.permute.xlu0 %1649
      %v1653 = vlaneseq
      %v1654 = vshrl.u32 %v1653, 7
      %v1655 = vsub.s32 0, %v1654
      %v1656 = vrot.slane %v1516, %v1655
      %v1658 = vmul.f32 %v1520, %v1656
      %v1659 = vmul.f32 %v1525, %v1656
      %v1660 = vmul.f32 %v1530, %v1656
      %v1661 = vmul.f32 %v1535, %v1656
      %v1662 = vmul.f32 %v1540, %v1656
      %v1663 = vmul.f32 %v1545, %v1656
      %v1664 = vmul.f32 %v1550, %v1656
      %v1665 = vmul.f32 %v1555, %v1656
      %v1666 = vmul.f32 %v1560, %v1656
      %v1667 = vmul.f32 %v1565, %v1656
      %v1668 = vmul.f32 %v1570, %v1656
      %v1669 = vmul.f32 %v1575, %v1656
      %v1670 = vmul.f32 %v1580, %v1656
      %v1671 = vmul.f32 %v1585, %v1656
      %v1672 = vmul.f32 %v1590, %v1656
      %v1673 = vmul.f32 %v1595, %v1656
      %v1674 = vmul.f32 %v1600, %v1656
      %v1675 = vmul.f32 %v1605, %v1656
      %v1676 = vmul.f32 %v1610, %v1656
      %v1677 = vmul.f32 %v1615, %v1656
      %v1678 = vmul.f32 %v1620, %v1656
      %v1679 = vmul.f32 %v1625, %v1656
      %v1680 = vmul.f32 %v1630, %v1656
      %v1681 = vmul.f32 %v1635, %v1656
      %v1682 = vmul.f32 %v1640, %v1656
      %v1683 = vmul.f32 %v1645, %v1656
      %v1684 = vmul.f32 %v1650, %v1656
      %v1685 = vadd.f32 %v1461, %v1658
      %v1686 = vadd.f32 %v1462, %v1659
      %v1687 = vadd.f32 %v1463, %v1660
      %v1688 = vadd.f32 %v1464, %v1661
      %v1689 = vadd.f32 %v1465, %v1662
      %v1690 = vadd.f32 %v1466, %v1663
      %v1691 = vadd.f32 %v1467, %v1664
      %v1692 = vadd.f32 %v1468, %v1665
      %v1693 = vadd.f32 %v1469, %v1666
      %v1694 = vadd.f32 %v1470, %v1667
      %v1695 = vadd.f32 %v1471, %v1668
      %v1696 = vadd.f32 %v1472, %v1669
      %v1697 = vadd.f32 %v1473, %v1670
      %v1698 = vadd.f32 %v1474, %v1671
      %v1699 = vadd.f32 %v1475, %v1672
      %v1700 = vadd.f32 %v1476, %v1673
      %v1701 = vadd.f32 %v1477, %v1674
      %v1702 = vadd.f32 %v1478, %v1675
      %v1703 = vadd.f32 %v1479, %v1676
      %v1704 = vadd.f32 %v1480, %v1677
      %v1705 = vadd.f32 %v1481, %v1678
      %v1706 = vadd.f32 %v1482, %v1679
      %v1707 = vadd.f32 %v1483, %v1680
      %v1708 = vadd.f32 %v1484, %v1681
      %v1709 = vadd.f32 %v1485, %v1682
      %v1710 = vadd.f32 %v1486, %v1683
      %v1711 = vadd.f32 %v1487, %v1684
      %v1712 = vld [vmem:[%s165 + $0xf7] sm:$0xff]
      %v1713 = vld [vmem:[%s165 + $0xff] sm:$0xff]
      %v1714 = vld [vmem:[%s165 + $0x107] sm:$0xff]
      %v1715 = vld [vmem:[%s165 + $0x10f] sm:$0xff]
      %v1716 = vld [vmem:[%s165 + $0x117] sm:$0xff]
      %v1717 = vld [vmem:[%s165 + $0x11f] sm:$0xff]
      %v1718 = vld [vmem:[%s165 + $0x127] sm:$0xff]
      %v1719 = vld [vmem:[%s165 + $0x12f] sm:$0xff]
      %v1720 = vld [vmem:[%s165 + $0x137] sm:$0xff]
      %v1721 = vld [vmem:[%s165 + $0x13f] sm:$0xff]
      %v1722 = vld [vmem:[%s165 + $0x147] sm:$0xff]
      %v1723 = vld [vmem:[%s165 + $0x14f] sm:$0xff]
      %v1724 = vld [vmem:[%s165 + $0x157] sm:$0xff]
      %v1725 = vld [vmem:[%s165 + $0x15f] sm:$0xff]
      %v1726 = vld [vmem:[%s165 + $0x167] sm:$0xff]
      %v1727 = vld [vmem:[%s165 + $0x16f] sm:$0xff]
      %v1728 = vld [vmem:[%s165 + $0x177] sm:$0xff]
      %v1729 = vld [vmem:[%s165 + $0x17f] sm:$0xff]
      %v1730 = vld [vmem:[%s165 + $0x187] sm:$0xff]
      %v1731 = vld [vmem:[%s165 + $0x18f] sm:$0xff]
      %v1732 = vld [vmem:[%s165 + $0x197] sm:$0xff]
      %v1733 = vld [vmem:[%s165 + $0x19f] sm:$0xff]
      %v1734 = vld [vmem:[%s165 + $0x1a7] sm:$0xff]
      %v1735 = vld [vmem:[%s165 + $0x1af] sm:$0xff]
      %v1736 = vld [vmem:[%s165 + $0x1b7] sm:$0xff]
      %v1737 = vld [vmem:[%s165 + $0x1bf] sm:$0xff]
      %v1738 = vld [vmem:[%s165 + $0x1c7] sm:$0x3]
      %s1739 = scalar_lea.vmem %s1, 7
      %v1740 = vld [vmem:[%s1739] sm:$0x1]
      %1742 = vset.pattern.permute.xlu0 0
      %1743 = vperm.xlu0 %1742, %v1712
      %v1744 = vpop.permute.xlu0 %1743
      %1747 = vset.pattern.permute.xlu0 0
      %1748 = vperm.xlu0 %1747, %v1713
      %v1749 = vpop.permute.xlu0 %1748
      %1752 = vset.pattern.permute.xlu0 0
      %1753 = vperm.xlu0 %1752, %v1714
      %v1754 = vpop.permute.xlu0 %1753
      %1757 = vset.pattern.permute.xlu0 0
      %1758 = vperm.xlu0 %1757, %v1715
      %v1759 = vpop.permute.xlu0 %1758
      %1762 = vset.pattern.permute.xlu0 0
      %1763 = vperm.xlu0 %1762, %v1716
      %v1764 = vpop.permute.xlu0 %1763
      %1767 = vset.pattern.permute.xlu0 0
      %1768 = vperm.xlu0 %1767, %v1717
      %v1769 = vpop.permute.xlu0 %1768
      %1772 = vset.pattern.permute.xlu0 0
      %1773 = vperm.xlu0 %1772, %v1718
      %v1774 = vpop.permute.xlu0 %1773
      %1777 = vset.pattern.permute.xlu0 0
      %1778 = vperm.xlu0 %1777, %v1719
      %v1779 = vpop.permute.xlu0 %1778
      %1782 = vset.pattern.permute.xlu0 0
      %1783 = vperm.xlu0 %1782, %v1720
      %v1784 = vpop.permute.xlu0 %1783
      %1787 = vset.pattern.permute.xlu0 0
      %1788 = vperm.xlu0 %1787, %v1721
      %v1789 = vpop.permute.xlu0 %1788
      %1792 = vset.pattern.permute.xlu0 0
      %1793 = vperm.xlu0 %1792, %v1722
      %v1794 = vpop.permute.xlu0 %1793
      %1797 = vset.pattern.permute.xlu0 0
      %1798 = vperm.xlu0 %1797, %v1723
      %v1799 = vpop.permute.xlu0 %1798
      %1802 = vset.pattern.permute.xlu0 0
      %1803 = vperm.xlu0 %1802, %v1724
      %v1804 = vpop.permute.xlu0 %1803
      %1807 = vset.pattern.permute.xlu0 0
      %1808 = vperm.xlu0 %1807, %v1725
      %v1809 = vpop.permute.xlu0 %1808
      %1812 = vset.pattern.permute.xlu0 0
      %1813 = vperm.xlu0 %1812, %v1726
      %v1814 = vpop.permute.xlu0 %1813
      %1817 = vset.pattern.permute.xlu0 0
      %1818 = vperm.xlu0 %1817, %v1727
      %v1819 = vpop.permute.xlu0 %1818
      %1822 = vset.pattern.permute.xlu0 0
      %1823 = vperm.xlu0 %1822, %v1728
      %v1824 = vpop.permute.xlu0 %1823
      %1827 = vset.pattern.permute.xlu0 0
      %1828 = vperm.xlu0 %1827, %v1729
      %v1829 = vpop.permute.xlu0 %1828
      %1832 = vset.pattern.permute.xlu0 0
      %1833 = vperm.xlu0 %1832, %v1730
      %v1834 = vpop.permute.xlu0 %1833
      %1837 = vset.pattern.permute.xlu0 0
      %1838 = vperm.xlu0 %1837, %v1731
      %v1839 = vpop.permute.xlu0 %1838
      %1842 = vset.pattern.permute.xlu0 0
      %1843 = vperm.xlu0 %1842, %v1732
      %v1844 = vpop.permute.xlu0 %1843
      %1847 = vset.pattern.permute.xlu0 0
      %1848 = vperm.xlu0 %1847, %v1733
      %v1849 = vpop.permute.xlu0 %1848
      %1852 = vset.pattern.permute.xlu0 0
      %1853 = vperm.xlu0 %1852, %v1734
      %v1854 = vpop.permute.xlu0 %1853
      %1857 = vset.pattern.permute.xlu0 0
      %1858 = vperm.xlu0 %1857, %v1735
      %v1859 = vpop.permute.xlu0 %1858
      %1862 = vset.pattern.permute.xlu0 0
      %1863 = vperm.xlu0 %1862, %v1736
      %v1864 = vpop.permute.xlu0 %1863
      %1867 = vset.pattern.permute.xlu0 0
      %1868 = vperm.xlu0 %1867, %v1737
      %v1869 = vpop.permute.xlu0 %1868
      %1872 = vset.pattern.permute.xlu0 0
      %1873 = vperm.xlu0 %1872, %v1738
      %v1874 = vpop.permute.xlu0 %1873
      %v1877 = vlaneseq
      %v1878 = vshrl.u32 %v1877, 7
      %v1879 = vsub.s32 0, %v1878
      %v1880 = vrot.slane %v1740, %v1879
      %v1882 = vmul.f32 %v1744, %v1880
      %v1883 = vmul.f32 %v1749, %v1880
      %v1884 = vmul.f32 %v1754, %v1880
      %v1885 = vmul.f32 %v1759, %v1880
      %v1886 = vmul.f32 %v1764, %v1880
      %v1887 = vmul.f32 %v1769, %v1880
      %v1888 = vmul.f32 %v1774, %v1880
      %v1889 = vmul.f32 %v1779, %v1880
      %v1890 = vmul.f32 %v1784, %v1880
      %v1891 = vmul.f32 %v1789, %v1880
      %v1892 = vmul.f32 %v1794, %v1880
      %v1893 = vmul.f32 %v1799, %v1880
      %v1894 = vmul.f32 %v1804, %v1880
      %v1895 = vmul.f32 %v1809, %v1880
      %v1896 = vmul.f32 %v1814, %v1880
      %v1897 = vmul.f32 %v1819, %v1880
      %v1898 = vmul.f32 %v1824, %v1880
      %v1899 = vmul.f32 %v1829, %v1880
      %v1900 = vmul.f32 %v1834, %v1880
      %v1901 = vmul.f32 %v1839, %v1880
      %v1902 = vmul.f32 %v1844, %v1880
      %v1903 = vmul.f32 %v1849, %v1880
      %v1904 = vmul.f32 %v1854, %v1880
      %v1905 = vmul.f32 %v1859, %v1880
      %v1906 = vmul.f32 %v1864, %v1880
      %v1907 = vmul.f32 %v1869, %v1880
      %v1908 = vmul.f32 %v1874, %v1880
      %v1909 = vadd.f32 %v1685, %v1882
      %v1910 = vadd.f32 %v1686, %v1883
      %v1911 = vadd.f32 %v1687, %v1884
      %v1912 = vadd.f32 %v1688, %v1885
      %v1913 = vadd.f32 %v1689, %v1886
      %v1914 = vadd.f32 %v1690, %v1887
      %v1915 = vadd.f32 %v1691, %v1888
      %v1916 = vadd.f32 %v1692, %v1889
      %v1917 = vadd.f32 %v1693, %v1890
      %v1918 = vadd.f32 %v1694, %v1891
      %v1919 = vadd.f32 %v1695, %v1892
      %v1920 = vadd.f32 %v1696, %v1893
      %v1921 = vadd.f32 %v1697, %v1894
      %v1922 = vadd.f32 %v1698, %v1895
      %v1923 = vadd.f32 %v1699, %v1896
      %v1924 = vadd.f32 %v1700, %v1897
      %v1925 = vadd.f32 %v1701, %v1898
      %v1926 = vadd.f32 %v1702, %v1899
      %v1927 = vadd.f32 %v1703, %v1900
      %v1928 = vadd.f32 %v1704, %v1901
      %v1929 = vadd.f32 %v1705, %v1902
      %v1930 = vadd.f32 %v1706, %v1903
      %v1931 = vadd.f32 %v1707, %v1904
      %v1932 = vadd.f32 %v1708, %v1905
      %v1933 = vadd.f32 %v1709, %v1906
      %v1934 = vadd.f32 %v1710, %v1907
      %v1935 = vadd.f32 %v1711, %v1908
      %v1936 = vld [vmem:[%s165 + $0x10] sm:$0xff]
      %v1937 = vld [vmem:[%s165 + $0x18] sm:$0xff]
      %v1938 = vld [vmem:[%s165 + $0x20] sm:$0xff]
      %v1939 = vld [vmem:[%s165 + $0x28] sm:$0xff]
      %v1940 = vld [vmem:[%s165 + $0x30] sm:$0xff]
      %v1941 = vld [vmem:[%s165 + $0x38] sm:$0xff]
      %v1942 = vld [vmem:[%s165 + $0x40] sm:$0xff]
      %v1943 = vld [vmem:[%s165 + $0x48] sm:$0xff]
      %v1944 = vld [vmem:[%s165 + $0x50] sm:$0xff]
      %v1945 = vld [vmem:[%s165 + $0x58] sm:$0xff]
      %v1946 = vld [vmem:[%s165 + $0x60] sm:$0xff]
      %v1947 = vld [vmem:[%s165 + $0x68] sm:$0xff]
      %v1948 = vld [vmem:[%s165 + $0x70] sm:$0xff]
      %v1949 = vld [vmem:[%s165 + $0x78] sm:$0xff]
      %v1950 = vld [vmem:[%s165 + $0x80] sm:$0xff]
      %v1951 = vld [vmem:[%s165 + $0x88] sm:$0xff]
      %v1952 = vld [vmem:[%s165 + $0x90] sm:$0xff]
      %v1953 = vld [vmem:[%s165 + $0x98] sm:$0xff]
      %v1954 = vld [vmem:[%s165 + $0xa0] sm:$0xff]
      %v1955 = vld [vmem:[%s165 + $0xa8] sm:$0xff]
      %v1956 = vld [vmem:[%s165 + $0xb0] sm:$0xff]
      %v1957 = vld [vmem:[%s165 + $0xb8] sm:$0xff]
      %v1958 = vld [vmem:[%s165 + $0xc0] sm:$0xff]
      %v1959 = vld [vmem:[%s165 + $0xc8] sm:$0xff]
      %v1960 = vld [vmem:[%s165 + $0xd0] sm:$0xff]
      %v1961 = vld [vmem:[%s165 + $0xd8] sm:$0xff]
      %v1962 = vld [vmem:[%s165 + $0xe0] sm:$0x3]
      %s1963 = scalar_lea.vmem %s1, 8
      %v1964 = vld [vmem:[%s1963] sm:$0x1]
      %1966 = vset.pattern.permute.xlu0 0
      %1967 = vperm.xlu0 %1966, %v1936
      %v1968 = vpop.permute.xlu0 %1967
      %1971 = vset.pattern.permute.xlu0 0
      %1972 = vperm.xlu0 %1971, %v1937
      %v1973 = vpop.permute.xlu0 %1972
      %1976 = vset.pattern.permute.xlu0 0
      %1977 = vperm.xlu0 %1976, %v1938
      %v1978 = vpop.permute.xlu0 %1977
      %1981 = vset.pattern.permute.xlu0 0
      %1982 = vperm.xlu0 %1981, %v1939
      %v1983 = vpop.permute.xlu0 %1982
      %1986 = vset.pattern.permute.xlu0 0
      %1987 = vperm.xlu0 %1986, %v1940
      %v1988 = vpop.permute.xlu0 %1987
      %1991 = vset.pattern.permute.xlu0 0
      %1992 = vperm.xlu0 %1991, %v1941
      %v1993 = vpop.permute.xlu0 %1992
      %1996 = vset.pattern.permute.xlu0 0
      %1997 = vperm.xlu0 %1996, %v1942
      %v1998 = vpop.permute.xlu0 %1997
      %2001 = vset.pattern.permute.xlu0 0
      %2002 = vperm.xlu0 %2001, %v1943
      %v2003 = vpop.permute.xlu0 %2002
      %2006 = vset.pattern.permute.xlu0 0
      %2007 = vperm.xlu0 %2006, %v1944
      %v2008 = vpop.permute.xlu0 %2007
      %2011 = vset.pattern.permute.xlu0 0
      %2012 = vperm.xlu0 %2011, %v1945
      %v2013 = vpop.permute.xlu0 %2012
      %2016 = vset.pattern.permute.xlu0 0
      %2017 = vperm.xlu0 %2016, %v1946
      %v2018 = vpop.permute.xlu0 %2017
      %2021 = vset.pattern.permute.xlu0 0
      %2022 = vperm.xlu0 %2021, %v1947
      %v2023 = vpop.permute.xlu0 %2022
      %2026 = vset.pattern.permute.xlu0 0
      %2027 = vperm.xlu0 %2026, %v1948
      %v2028 = vpop.permute.xlu0 %2027
      %2031 = vset.pattern.permute.xlu0 0
      %2032 = vperm.xlu0 %2031, %v1949
      %v2033 = vpop.permute.xlu0 %2032
      %2036 = vset.pattern.permute.xlu0 0
      %2037 = vperm.xlu0 %2036, %v1950
      %v2038 = vpop.permute.xlu0 %2037
      %2041 = vset.pattern.permute.xlu0 0
      %2042 = vperm.xlu0 %2041, %v1951
      %v2043 = vpop.permute.xlu0 %2042
      %2046 = vset.pattern.permute.xlu0 0
      %2047 = vperm.xlu0 %2046, %v1952
      %v2048 = vpop.permute.xlu0 %2047
      %2051 = vset.pattern.permute.xlu0 0
      %2052 = vperm.xlu0 %2051, %v1953
      %v2053 = vpop.permute.xlu0 %2052
      %2056 = vset.pattern.permute.xlu0 0
      %2057 = vperm.xlu0 %2056, %v1954
      %v2058 = vpop.permute.xlu0 %2057
      %2061 = vset.pattern.permute.xlu0 0
      %2062 = vperm.xlu0 %2061, %v1955
      %v2063 = vpop.permute.xlu0 %2062
      %2066 = vset.pattern.permute.xlu0 0
      %2067 = vperm.xlu0 %2066, %v1956
      %v2068 = vpop.permute.xlu0 %2067
      %2071 = vset.pattern.permute.xlu0 0
      %2072 = vperm.xlu0 %2071, %v1957
      %v2073 = vpop.permute.xlu0 %2072
      %2076 = vset.pattern.permute.xlu0 0
      %2077 = vperm.xlu0 %2076, %v1958
      %v2078 = vpop.permute.xlu0 %2077
      %2081 = vset.pattern.permute.xlu0 0
      %2082 = vperm.xlu0 %2081, %v1959
      %v2083 = vpop.permute.xlu0 %2082
      %2086 = vset.pattern.permute.xlu0 0
      %2087 = vperm.xlu0 %2086, %v1960
      %v2088 = vpop.permute.xlu0 %2087
      %2091 = vset.pattern.permute.xlu0 0
      %2092 = vperm.xlu0 %2091, %v1961
      %v2093 = vpop.permute.xlu0 %2092
      %2096 = vset.pattern.permute.xlu0 0
      %2097 = vperm.xlu0 %2096, %v1962
      %v2098 = vpop.permute.xlu0 %2097
      %v2101 = vlaneseq
      %v2102 = vshrl.u32 %v2101, 7
      %v2103 = vsub.s32 0, %v2102
      %v2104 = vrot.slane %v1964, %v2103
      %v2106 = vmul.f32 %v1968, %v2104
      %v2107 = vmul.f32 %v1973, %v2104
      %v2108 = vmul.f32 %v1978, %v2104
      %v2109 = vmul.f32 %v1983, %v2104
      %v2110 = vmul.f32 %v1988, %v2104
      %v2111 = vmul.f32 %v1993, %v2104
      %v2112 = vmul.f32 %v1998, %v2104
      %v2113 = vmul.f32 %v2003, %v2104
      %v2114 = vmul.f32 %v2008, %v2104
      %v2115 = vmul.f32 %v2013, %v2104
      %v2116 = vmul.f32 %v2018, %v2104
      %v2117 = vmul.f32 %v2023, %v2104
      %v2118 = vmul.f32 %v2028, %v2104
      %v2119 = vmul.f32 %v2033, %v2104
      %v2120 = vmul.f32 %v2038, %v2104
      %v2121 = vmul.f32 %v2043, %v2104
      %v2122 = vmul.f32 %v2048, %v2104
      %v2123 = vmul.f32 %v2053, %v2104
      %v2124 = vmul.f32 %v2058, %v2104
      %v2125 = vmul.f32 %v2063, %v2104
      %v2126 = vmul.f32 %v2068, %v2104
      %v2127 = vmul.f32 %v2073, %v2104
      %v2128 = vmul.f32 %v2078, %v2104
      %v2129 = vmul.f32 %v2083, %v2104
      %v2130 = vmul.f32 %v2088, %v2104
      %v2131 = vmul.f32 %v2093, %v2104
      %v2132 = vmul.f32 %v2098, %v2104
      %v2133 = vadd.f32 %v1909, %v2106
      %v2134 = vadd.f32 %v1910, %v2107
      %v2135 = vadd.f32 %v1911, %v2108
      %v2136 = vadd.f32 %v1912, %v2109
      %v2137 = vadd.f32 %v1913, %v2110
      %v2138 = vadd.f32 %v1914, %v2111
      %v2139 = vadd.f32 %v1915, %v2112
      %v2140 = vadd.f32 %v1916, %v2113
      %v2141 = vadd.f32 %v1917, %v2114
      %v2142 = vadd.f32 %v1918, %v2115
      %v2143 = vadd.f32 %v1919, %v2116
      %v2144 = vadd.f32 %v1920, %v2117
      %v2145 = vadd.f32 %v1921, %v2118
      %v2146 = vadd.f32 %v1922, %v2119
      %v2147 = vadd.f32 %v1923, %v2120
      %v2148 = vadd.f32 %v1924, %v2121
      %v2149 = vadd.f32 %v1925, %v2122
      %v2150 = vadd.f32 %v1926, %v2123
      %v2151 = vadd.f32 %v1927, %v2124
      %v2152 = vadd.f32 %v1928, %v2125
      %v2153 = vadd.f32 %v1929, %v2126
      %v2154 = vadd.f32 %v1930, %v2127
      %v2155 = vadd.f32 %v1931, %v2128
      %v2156 = vadd.f32 %v1932, %v2129
      %v2157 = vadd.f32 %v1933, %v2130
      %v2158 = vadd.f32 %v1934, %v2131
      %v2159 = vadd.f32 %v1935, %v2132
      %v2161 = vlaneseq
      %v2162 = vshrl.u32 %v2161, 7
      %v2163 = vsub.s32 0, %v2162
      %v2164 = vrot.slane %v171, %v2163
      %v2166 = vadd.f32 %v2133, %v2164
      %v2167 = vadd.f32 %v2134, %v2164
      %v2168 = vadd.f32 %v2135, %v2164
      %v2169 = vadd.f32 %v2136, %v2164
      %v2170 = vadd.f32 %v2137, %v2164
      %v2171 = vadd.f32 %v2138, %v2164
      %v2172 = vadd.f32 %v2139, %v2164
      %v2173 = vadd.f32 %v2140, %v2164
      %v2174 = vadd.f32 %v2141, %v2164
      %v2175 = vadd.f32 %v2142, %v2164
      %v2176 = vadd.f32 %v2143, %v2164
      %v2177 = vadd.f32 %v2144, %v2164
      %v2178 = vadd.f32 %v2145, %v2164
      %v2179 = vadd.f32 %v2146, %v2164
      %v2180 = vadd.f32 %v2147, %v2164
      %v2181 = vadd.f32 %v2148, %v2164
      %v2182 = vadd.f32 %v2149, %v2164
      %v2183 = vadd.f32 %v2150, %v2164
      %v2184 = vadd.f32 %v2151, %v2164
      %v2185 = vadd.f32 %v2152, %v2164
      %v2186 = vadd.f32 %v2153, %v2164
      %v2187 = vadd.f32 %v2154, %v2164
      %v2188 = vadd.f32 %v2155, %v2164
      %v2189 = vadd.f32 %v2156, %v2164
      %v2190 = vadd.f32 %v2157, %v2164
      %v2191 = vadd.f32 %v2158, %v2164
      %v2192 = vadd.f32 %v2159, %v2164
      %v2193 = vmax.f32 %v2166, 0.0
      %v2194 = vmax.f32 %v2167, 0.0
      %v2195 = vmax.f32 %v2168, 0.0
      %v2196 = vmax.f32 %v2169, 0.0
      %v2197 = vmax.f32 %v2170, 0.0
      %v2198 = vmax.f32 %v2171, 0.0
      %v2199 = vmax.f32 %v2172, 0.0
      %v2200 = vmax.f32 %v2173, 0.0
      %v2201 = vmax.f32 %v2174, 0.0
      %v2202 = vmax.f32 %v2175, 0.0
      %v2203 = vmax.f32 %v2176, 0.0
      %v2204 = vmax.f32 %v2177, 0.0
      %v2205 = vmax.f32 %v2178, 0.0
      %v2206 = vmax.f32 %v2179, 0.0
      %v2207 = vmax.f32 %v2180, 0.0
      %v2208 = vmax.f32 %v2181, 0.0
      %v2209 = vmax.f32 %v2182, 0.0
      %v2210 = vmax.f32 %v2183, 0.0
      %v2211 = vmax.f32 %v2184, 0.0
      %v2212 = vmax.f32 %v2185, 0.0
      %v2213 = vmax.f32 %v2186, 0.0
      %v2214 = vmax.f32 %v2187, 0.0
      %v2215 = vmax.f32 %v2188, 0.0
      %v2216 = vmax.f32 %v2189, 0.0
      %v2217 = vmax.f32 %v2190, 0.0
      %v2218 = vmax.f32 %v2191, 0.0
      %v2219 = vmax.f32 %v2192, 0.0
      %v2220 = vmul.f32 %v400, %v339
      %v2221 = vmul.f32 %v405, %v339
      %v2222 = vmul.f32 %v410, %v339
      %v2223 = vmul.f32 %v415, %v339
      %v2224 = vmul.f32 %v420, %v339
      %v2225 = vmul.f32 %v425, %v339
      %v2226 = vmul.f32 %v430, %v339
      %v2227 = vmul.f32 %v435, %v339
      %v2228 = vmul.f32 %v440, %v339
      %v2229 = vmul.f32 %v445, %v339
      %v2230 = vmul.f32 %v450, %v339
      %v2231 = vmul.f32 %v455, %v339
      %v2232 = vmul.f32 %v460, %v339
      %v2233 = vmul.f32 %v465, %v339
      %v2234 = vmul.f32 %v470, %v339
      %v2235 = vmul.f32 %v475, %v339
      %v2236 = vmul.f32 %v480, %v339
      %v2237 = vmul.f32 %v485, %v339
      %v2238 = vmul.f32 %v490, %v339
      %v2239 = vmul.f32 %v495, %v339
      %v2240 = vmul.f32 %v500, %v339
      %v2241 = vmul.f32 %v505, %v339
      %v2242 = vmul.f32 %v510, %v339
      %v2243 = vmul.f32 %v515, %v339
      %v2244 = vmul.f32 %v520, %v339
      %v2245 = vmul.f32 %v525, %v339
      %v2246 = vmul.f32 %v530, %v339
      %v2247 = vmul.f32 %v624, %v536
      %v2248 = vmul.f32 %v629, %v536
      %v2249 = vmul.f32 %v634, %v536
      %v2250 = vmul.f32 %v639, %v536
      %v2251 = vmul.f32 %v644, %v536
      %v2252 = vmul.f32 %v649, %v536
      %v2253 = vmul.f32 %v654, %v536
      %v2254 = vmul.f32 %v659, %v536
      %v2255 = vmul.f32 %v664, %v536
      %v2256 = vmul.f32 %v669, %v536
      %v2257 = vmul.f32 %v674, %v536
      %v2258 = vmul.f32 %v679, %v536
      %v2259 = vmul.f32 %v684, %v536
      %v2260 = vmul.f32 %v689, %v536
      %v2261 = vmul.f32 %v694, %v536
      %v2262 = vmul.f32 %v699, %v536
      %v2263 = vmul.f32 %v704, %v536
      %v2264 = vmul.f32 %v709, %v536
      %v2265 = vmul.f32 %v714, %v536
      %v2266 = vmul.f32 %v719, %v536
      %v2267 = vmul.f32 %v724, %v536
      %v2268 = vmul.f32 %v729, %v536
      %v2269 = vmul.f32 %v734, %v536
      %v2270 = vmul.f32 %v739, %v536
      %v2271 = vmul.f32 %v744, %v536
      %v2272 = vmul.f32 %v749, %v536
      %v2273 = vmul.f32 %v754, %v536
      %v2274 = vadd.f32 %v2220, %v2247
      %v2275 = vadd.f32 %v2221, %v2248
      %v2276 = vadd.f32 %v2222, %v2249
      %v2277 = vadd.f32 %v2223, %v2250
      %v2278 = vadd.f32 %v2224, %v2251
      %v2279 = vadd.f32 %v2225, %v2252
      %v2280 = vadd.f32 %v2226, %v2253
      %v2281 = vadd.f32 %v2227, %v2254
      %v2282 = vadd.f32 %v2228, %v2255
      %v2283 = vadd.f32 %v2229, %v2256
      %v2284 = vadd.f32 %v2230, %v2257
      %v2285 = vadd.f32 %v2231, %v2258
      %v2286 = vadd.f32 %v2232, %v2259
      %v2287 = vadd.f32 %v2233, %v2260
      %v2288 = vadd.f32 %v2234, %v2261
      %v2289 = vadd.f32 %v2235, %v2262
      %v2290 = vadd.f32 %v2236, %v2263
      %v2291 = vadd.f32 %v2237, %v2264
      %v2292 = vadd.f32 %v2238, %v2265
      %v2293 = vadd.f32 %v2239, %v2266
      %v2294 = vadd.f32 %v2240, %v2267
      %v2295 = vadd.f32 %v2241, %v2268
      %v2296 = vadd.f32 %v2242, %v2269
      %v2297 = vadd.f32 %v2243, %v2270
      %v2298 = vadd.f32 %v2244, %v2271
      %v2299 = vadd.f32 %v2245, %v2272
      %v2300 = vadd.f32 %v2246, %v2273
      %v2301 = vld [vmem:[%s165 + $0xe9] sm:$0xff]
      %v2302 = vld [vmem:[%s165 + $0xf1] sm:$0xff]
      %v2303 = vld [vmem:[%s165 + $0xf9] sm:$0xff]
      %v2304 = vld [vmem:[%s165 + $0x101] sm:$0xff]
      %v2305 = vld [vmem:[%s165 + $0x109] sm:$0xff]
      %v2306 = vld [vmem:[%s165 + $0x111] sm:$0xff]
      %v2307 = vld [vmem:[%s165 + $0x119] sm:$0xff]
      %v2308 = vld [vmem:[%s165 + $0x121] sm:$0xff]
      %v2309 = vld [vmem:[%s165 + $0x129] sm:$0xff]
      %v2310 = vld [vmem:[%s165 + $0x131] sm:$0xff]
      %v2311 = vld [vmem:[%s165 + $0x139] sm:$0xff]
      %v2312 = vld [vmem:[%s165 + $0x141] sm:$0xff]
      %v2313 = vld [vmem:[%s165 + $0x149] sm:$0xff]
      %v2314 = vld [vmem:[%s165 + $0x151] sm:$0xff]
      %v2315 = vld [vmem:[%s165 + $0x159] sm:$0xff]
      %v2316 = vld [vmem:[%s165 + $0x161] sm:$0xff]
      %v2317 = vld [vmem:[%s165 + $0x169] sm:$0xff]
      %v2318 = vld [vmem:[%s165 + $0x171] sm:$0xff]
      %v2319 = vld [vmem:[%s165 + $0x179] sm:$0xff]
      %v2320 = vld [vmem:[%s165 + $0x181] sm:$0xff]
      %v2321 = vld [vmem:[%s165 + $0x189] sm:$0xff]
      %v2322 = vld [vmem:[%s165 + $0x191] sm:$0xff]
      %v2323 = vld [vmem:[%s165 + $0x199] sm:$0xff]
      %v2324 = vld [vmem:[%s165 + $0x1a1] sm:$0xff]
      %v2325 = vld [vmem:[%s165 + $0x1a9] sm:$0xff]
      %v2326 = vld [vmem:[%s165 + $0x1b1] sm:$0xff]
      %v2327 = vld [vmem:[%s165 + $0x1b9] sm:$0x3]
      %2329 = vset.pattern.permute.xlu0 0
      %2330 = vperm.xlu0 %2329, %v2301
      %v2331 = vpop.permute.xlu0 %2330
      %2334 = vset.pattern.permute.xlu0 0
      %2335 = vperm.xlu0 %2334, %v2302
      %v2336 = vpop.permute.xlu0 %2335
      %2339 = vset.pattern.permute.xlu0 0
      %2340 = vperm.xlu0 %2339, %v2303
      %v2341 = vpop.permute.xlu0 %2340
      %2344 = vset.pattern.permute.xlu0 0
      %2345 = vperm.xlu0 %2344, %v2304
      %v2346 = vpop.permute.xlu0 %2345
      %2349 = vset.pattern.permute.xlu0 0
      %2350 = vperm.xlu0 %2349, %v2305
      %v2351 = vpop.permute.xlu0 %2350
      %2354 = vset.pattern.permute.xlu0 0
      %2355 = vperm.xlu0 %2354, %v2306
      %v2356 = vpop.permute.xlu0 %2355
      %2359 = vset.pattern.permute.xlu0 0
      %2360 = vperm.xlu0 %2359, %v2307
      %v2361 = vpop.permute.xlu0 %2360
      %2364 = vset.pattern.permute.xlu0 0
      %2365 = vperm.xlu0 %2364, %v2308
      %v2366 = vpop.permute.xlu0 %2365
      %2369 = vset.pattern.permute.xlu0 0
      %2370 = vperm.xlu0 %2369, %v2309
      %v2371 = vpop.permute.xlu0 %2370
      %2374 = vset.pattern.permute.xlu0 0
      %2375 = vperm.xlu0 %2374, %v2310
      %v2376 = vpop.permute.xlu0 %2375
      %2379 = vset.pattern.permute.xlu0 0
      %2380 = vperm.xlu0 %2379, %v2311
      %v2381 = vpop.permute.xlu0 %2380
      %2384 = vset.pattern.permute.xlu0 0
      %2385 = vperm.xlu0 %2384, %v2312
      %v2386 = vpop.permute.xlu0 %2385
      %2389 = vset.pattern.permute.xlu0 0
      %2390 = vperm.xlu0 %2389, %v2313
      %v2391 = vpop.permute.xlu0 %2390
      %2394 = vset.pattern.permute.xlu0 0
      %2395 = vperm.xlu0 %2394, %v2314
      %v2396 = vpop.permute.xlu0 %2395
      %2399 = vset.pattern.permute.xlu0 0
      %2400 = vperm.xlu0 %2399, %v2315
      %v2401 = vpop.permute.xlu0 %2400
      %2404 = vset.pattern.permute.xlu0 0
      %2405 = vperm.xlu0 %2404, %v2316
      %v2406 = vpop.permute.xlu0 %2405
      %2409 = vset.pattern.permute.xlu0 0
      %2410 = vperm.xlu0 %2409, %v2317
      %v2411 = vpop.permute.xlu0 %2410
      %2414 = vset.pattern.permute.xlu0 0
      %2415 = vperm.xlu0 %2414, %v2318
      %v2416 = vpop.permute.xlu0 %2415
      %2419 = vset.pattern.permute.xlu0 0
      %2420 = vperm.xlu0 %2419, %v2319
      %v2421 = vpop.permute.xlu0 %2420
      %2424 = vset.pattern.permute.xlu0 0
      %2425 = vperm.xlu0 %2424, %v2320
      %v2426 = vpop.permute.xlu0 %2425
      %2429 = vset.pattern.permute.xlu0 0
      %2430 = vperm.xlu0 %2429, %v2321
      %v2431 = vpop.permute.xlu0 %2430
      %2434 = vset.pattern.permute.xlu0 0
      %2435 = vperm.xlu0 %2434, %v2322
      %v2436 = vpop.permute.xlu0 %2435
      %2439 = vset.pattern.permute.xlu0 0
      %2440 = vperm.xlu0 %2439, %v2323
      %v2441 = vpop.permute.xlu0 %2440
      %2444 = vset.pattern.permute.xlu0 0
      %2445 = vperm.xlu0 %2444, %v2324
      %v2446 = vpop.permute.xlu0 %2445
      %2449 = vset.pattern.permute.xlu0 0
      %2450 = vperm.xlu0 %2449, %v2325
      %v2451 = vpop.permute.xlu0 %2450
      %2454 = vset.pattern.permute.xlu0 0
      %2455 = vperm.xlu0 %2454, %v2326
      %v2456 = vpop.permute.xlu0 %2455
      %2459 = vset.pattern.permute.xlu0 0
      %2460 = vperm.xlu0 %2459, %v2327
      %v2461 = vpop.permute.xlu0 %2460
      %v2463 = vmul.f32 %v2331, %v760
      %v2464 = vmul.f32 %v2336, %v760
      %v2465 = vmul.f32 %v2341, %v760
      %v2466 = vmul.f32 %v2346, %v760
      %v2467 = vmul.f32 %v2351, %v760
      %v2468 = vmul.f32 %v2356, %v760
      %v2469 = vmul.f32 %v2361, %v760
      %v2470 = vmul.f32 %v2366, %v760
      %v2471 = vmul.f32 %v2371, %v760
      %v2472 = vmul.f32 %v2376, %v760
      %v2473 = vmul.f32 %v2381, %v760
      %v2474 = vmul.f32 %v2386, %v760
      %v2475 = vmul.f32 %v2391, %v760
      %v2476 = vmul.f32 %v2396, %v760
      %v2477 = vmul.f32 %v2401, %v760
      %v2478 = vmul.f32 %v2406, %v760
      %v2479 = vmul.f32 %v2411, %v760
      %v2480 = vmul.f32 %v2416, %v760
      %v2481 = vmul.f32 %v2421, %v760
      %v2482 = vmul.f32 %v2426, %v760
      %v2483 = vmul.f32 %v2431, %v760
      %v2484 = vmul.f32 %v2436, %v760
      %v2485 = vmul.f32 %v2441, %v760
      %v2486 = vmul.f32 %v2446, %v760
      %v2487 = vmul.f32 %v2451, %v760
      %v2488 = vmul.f32 %v2456, %v760
      %v2489 = vmul.f32 %v2461, %v760
      %v2490 = vadd.f32 %v2274, %v2463
      %v2491 = vadd.f32 %v2275, %v2464
      %v2492 = vadd.f32 %v2276, %v2465
      %v2493 = vadd.f32 %v2277, %v2466
      %v2494 = vadd.f32 %v2278, %v2467
      %v2495 = vadd.f32 %v2279, %v2468
      %v2496 = vadd.f32 %v2280, %v2469
      %v2497 = vadd.f32 %v2281, %v2470
      %v2498 = vadd.f32 %v2282, %v2471
      %v2499 = vadd.f32 %v2283, %v2472
      %v2500 = vadd.f32 %v2284, %v2473
      %v2501 = vadd.f32 %v2285, %v2474
      %v2502 = vadd.f32 %v2286, %v2475
      %v2503 = vadd.f32 %v2287, %v2476
      %v2504 = vadd.f32 %v2288, %v2477
      %v2505 = vadd.f32 %v2289, %v2478
      %v2506 = vadd.f32 %v2290, %v2479
      %v2507 = vadd.f32 %v2291, %v2480
      %v2508 = vadd.f32 %v2292, %v2481
      %v2509 = vadd.f32 %v2293, %v2482
      %v2510 = vadd.f32 %v2294, %v2483
      %v2511 = vadd.f32 %v2295, %v2484
      %v2512 = vadd.f32 %v2296, %v2485
      %v2513 = vadd.f32 %v2297, %v2486
      %v2514 = vadd.f32 %v2298, %v2487
      %v2515 = vadd.f32 %v2299, %v2488
      %v2516 = vadd.f32 %v2300, %v2489
      %v2517 = vmul.f32 %v1072, %v984
      %v2518 = vmul.f32 %v1077, %v984
      %v2519 = vmul.f32 %v1082, %v984
      %v2520 = vmul.f32 %v1087, %v984
      %v2521 = vmul.f32 %v1092, %v984
      %v2522 = vmul.f32 %v1097, %v984
      %v2523 = vmul.f32 %v1102, %v984
      %v2524 = vmul.f32 %v1107, %v984
      %v2525 = vmul.f32 %v1112, %v984
      %v2526 = vmul.f32 %v1117, %v984
      %v2527 = vmul.f32 %v1122, %v984
      %v2528 = vmul.f32 %v1127, %v984
      %v2529 = vmul.f32 %v1132, %v984
      %v2530 = vmul.f32 %v1137, %v984
      %v2531 = vmul.f32 %v1142, %v984
      %v2532 = vmul.f32 %v1147, %v984
      %v2533 = vmul.f32 %v1152, %v984
      %v2534 = vmul.f32 %v1157, %v984
      %v2535 = vmul.f32 %v1162, %v984
      %v2536 = vmul.f32 %v1167, %v984
      %v2537 = vmul.f32 %v1172, %v984
      %v2538 = vmul.f32 %v1177, %v984
      %v2539 = vmul.f32 %v1182, %v984
      %v2540 = vmul.f32 %v1187, %v984
      %v2541 = vmul.f32 %v1192, %v984
      %v2542 = vmul.f32 %v1197, %v984
      %v2543 = vmul.f32 %v1202, %v984
      %v2544 = vadd.f32 %v2490, %v2517
      %v2545 = vadd.f32 %v2491, %v2518
      %v2546 = vadd.f32 %v2492, %v2519
      %v2547 = vadd.f32 %v2493, %v2520
      %v2548 = vadd.f32 %v2494, %v2521
      %v2549 = vadd.f32 %v2495, %v2522
      %v2550 = vadd.f32 %v2496, %v2523
      %v2551 = vadd.f32 %v2497, %v2524
      %v2552 = vadd.f32 %v2498, %v2525
      %v2553 = vadd.f32 %v2499, %v2526
      %v2554 = vadd.f32 %v2500, %v2527
      %v2555 = vadd.f32 %v2501, %v2528
      %v2556 = vadd.f32 %v2502, %v2529
      %v2557 = vadd.f32 %v2503, %v2530
      %v2558 = vadd.f32 %v2504, %v2531
      %v2559 = vadd.f32 %v2505, %v2532
      %v2560 = vadd.f32 %v2506, %v2533
      %v2561 = vadd.f32 %v2507, %v2534
      %v2562 = vadd.f32 %v2508, %v2535
      %v2563 = vadd.f32 %v2509, %v2536
      %v2564 = vadd.f32 %v2510, %v2537
      %v2565 = vadd.f32 %v2511, %v2538
      %v2566 = vadd.f32 %v2512, %v2539
      %v2567 = vadd.f32 %v2513, %v2540
      %v2568 = vadd.f32 %v2514, %v2541
      %v2569 = vadd.f32 %v2515, %v2542
      %v2570 = vadd.f32 %v2516, %v2543
      %v2571 = vmul.f32 %v1296, %v1208
      %v2572 = vmul.f32 %v1301, %v1208
      %v2573 = vmul.f32 %v1306, %v1208
      %v2574 = vmul.f32 %v1311, %v1208
      %v2575 = vmul.f32 %v1316, %v1208
      %v2576 = vmul.f32 %v1321, %v1208
      %v2577 = vmul.f32 %v1326, %v1208
      %v2578 = vmul.f32 %v1331, %v1208
      %v2579 = vmul.f32 %v1336, %v1208
      %v2580 = vmul.f32 %v1341, %v1208
      %v2581 = vmul.f32 %v1346, %v1208
      %v2582 = vmul.f32 %v1351, %v1208
      %v2583 = vmul.f32 %v1356, %v1208
      %v2584 = vmul.f32 %v1361, %v1208
      %v2585 = vmul.f32 %v1366, %v1208
      %v2586 = vmul.f32 %v1371, %v1208
      %v2587 = vmul.f32 %v1376, %v1208
      %v2588 = vmul.f32 %v1381, %v1208
      %v2589 = vmul.f32 %v1386, %v1208
      %v2590 = vmul.f32 %v1391, %v1208
      %v2591 = vmul.f32 %v1396, %v1208
      %v2592 = vmul.f32 %v1401, %v1208
      %v2593 = vmul.f32 %v1406, %v1208
      %v2594 = vmul.f32 %v1411, %v1208
      %v2595 = vmul.f32 %v1416, %v1208
      %v2596 = vmul.f32 %v1421, %v1208
      %v2597 = vmul.f32 %v1426, %v1208
      %v2598 = vadd.f32 %v2544, %v2571
      %v2599 = vadd.f32 %v2545, %v2572
      %v2600 = vadd.f32 %v2546, %v2573
      %v2601 = vadd.f32 %v2547, %v2574
      %v2602 = vadd.f32 %v2548, %v2575
      %v2603 = vadd.f32 %v2549, %v2576
      %v2604 = vadd.f32 %v2550, %v2577
      %v2605 = vadd.f32 %v2551, %v2578
      %v2606 = vadd.f32 %v2552, %v2579
      %v2607 = vadd.f32 %v2553, %v2580
      %v2608 = vadd.f32 %v2554, %v2581
      %v2609 = vadd.f32 %v2555, %v2582
      %v2610 = vadd.f32 %v2556, %v2583
      %v2611 = vadd.f32 %v2557, %v2584
      %v2612 = vadd.f32 %v2558, %v2585
      %v2613 = vadd.f32 %v2559, %v2586
      %v2614 = vadd.f32 %v2560, %v2587
      %v2615 = vadd.f32 %v2561, %v2588
      %v2616 = vadd.f32 %v2562, %v2589
      %v2617 = vadd.f32 %v2563, %v2590
      %v2618 = vadd.f32 %v2564, %v2591
      %v2619 = vadd.f32 %v2565, %v2592
      %v2620 = vadd.f32 %v2566, %v2593
      %v2621 = vadd.f32 %v2567, %v2594
      %v2622 = vadd.f32 %v2568, %v2595
      %v2623 = vadd.f32 %v2569, %v2596
      %v2624 = vadd.f32 %v2570, %v2597
      %v2625 = vld [vmem:[%s165 + $0x2b9] sm:$0xff]
      %v2626 = vld [vmem:[%s165 + $0x2c1] sm:$0xff]
      %v2627 = vld [vmem:[%s165 + $0x2c9] sm:$0xff]
      %v2628 = vld [vmem:[%s165 + $0x2d1] sm:$0xff]
      %v2629 = vld [vmem:[%s165 + $0x2d9] sm:$0xff]
      %v2630 = vld [vmem:[%s165 + $0x2e1] sm:$0xff]
      %v2631 = vld [vmem:[%s165 + $0x2e9] sm:$0xff]
      %v2632 = vld [vmem:[%s165 + $0x2f1] sm:$0xff]
      %v2633 = vld [vmem:[%s165 + $0x2f9] sm:$0xff]
      %v2634 = vld [vmem:[%s165 + $0x301] sm:$0xff]
      %v2635 = vld [vmem:[%s165 + $0x309] sm:$0xff]
      %v2636 = vld [vmem:[%s165 + $0x311] sm:$0xff]
      %v2637 = vld [vmem:[%s165 + $0x319] sm:$0xff]
      %v2638 = vld [vmem:[%s165 + $0x321] sm:$0xff]
      %v2639 = vld [vmem:[%s165 + $0x329] sm:$0xff]
      %v2640 = vld [vmem:[%s165 + $0x331] sm:$0xff]
      %v2641 = vld [vmem:[%s165 + $0x339] sm:$0xff]
      %v2642 = vld [vmem:[%s165 + $0x341] sm:$0xff]
      %v2643 = vld [vmem:[%s165 + $0x349] sm:$0xff]
      %v2644 = vld [vmem:[%s165 + $0x351] sm:$0xff]
      %v2645 = vld [vmem:[%s165 + $0x359] sm:$0xff]
      %v2646 = vld [vmem:[%s165 + $0x361] sm:$0xff]
      %v2647 = vld [vmem:[%s165 + $0x369] sm:$0xff]
      %v2648 = vld [vmem:[%s165 + $0x371] sm:$0xff]
      %v2649 = vld [vmem:[%s165 + $0x379] sm:$0xff]
      %v2650 = vld [vmem:[%s165 + $0x381] sm:$0xff]
      %v2651 = vld [vmem:[%s165 + $0x389] sm:$0x3]
      %2653 = vset.pattern.permute.xlu0 0
      %2654 = vperm.xlu0 %2653, %v2625
      %v2655 = vpop.permute.xlu0 %2654
      %2658 = vset.pattern.permute.xlu0 0
      %2659 = vperm.xlu0 %2658, %v2626
      %v2660 = vpop.permute.xlu0 %2659
      %2663 = vset.pattern.permute.xlu0 0
      %2664 = vperm.xlu0 %2663, %v2627
      %v2665 = vpop.permute.xlu0 %2664
      %2668 = vset.pattern.permute.xlu0 0
      %2669 = vperm.xlu0 %2668, %v2628
      %v2670 = vpop.permute.xlu0 %2669
      %2673 = vset.pattern.permute.xlu0 0
      %2674 = vperm.xlu0 %2673, %v2629
      %v2675 = vpop.permute.xlu0 %2674
      %2678 = vset.pattern.permute.xlu0 0
      %2679 = vperm.xlu0 %2678, %v2630
      %v2680 = vpop.permute.xlu0 %2679
      %2683 = vset.pattern.permute.xlu0 0
      %2684 = vperm.xlu0 %2683, %v2631
      %v2685 = vpop.permute.xlu0 %2684
      %2688 = vset.pattern.permute.xlu0 0
      %2689 = vperm.xlu0 %2688, %v2632
      %v2690 = vpop.permute.xlu0 %2689
      %2693 = vset.pattern.permute.xlu0 0
      %2694 = vperm.xlu0 %2693, %v2633
      %v2695 = vpop.permute.xlu0 %2694
      %2698 = vset.pattern.permute.xlu0 0
      %2699 = vperm.xlu0 %2698, %v2634
      %v2700 = vpop.permute.xlu0 %2699
      %2703 = vset.pattern.permute.xlu0 0
      %2704 = vperm.xlu0 %2703, %v2635
      %v2705 = vpop.permute.xlu0 %2704
      %2708 = vset.pattern.permute.xlu0 0
      %2709 = vperm.xlu0 %2708, %v2636
      %v2710 = vpop.permute.xlu0 %2709
      %2713 = vset.pattern.permute.xlu0 0
      %2714 = vperm.xlu0 %2713, %v2637
      %v2715 = vpop.permute.xlu0 %2714
      %2718 = vset.pattern.permute.xlu0 0
      %2719 = vperm.xlu0 %2718, %v2638
      %v2720 = vpop.permute.xlu0 %2719
      %2723 = vset.pattern.permute.xlu0 0
      %2724 = vperm.xlu0 %2723, %v2639
      %v2725 = vpop.permute.xlu0 %2724
      %2728 = vset.pattern.permute.xlu0 0
      %2729 = vperm.xlu0 %2728, %v2640
      %v2730 = vpop.permute.xlu0 %2729
      %2733 = vset.pattern.permute.xlu0 0
      %2734 = vperm.xlu0 %2733, %v2641
      %v2735 = vpop.permute.xlu0 %2734
      %2738 = vset.pattern.permute.xlu0 0
      %2739 = vperm.xlu0 %2738, %v2642
      %v2740 = vpop.permute.xlu0 %2739
      %2743 = vset.pattern.permute.xlu0 0
      %2744 = vperm.xlu0 %2743, %v2643
      %v2745 = vpop.permute.xlu0 %2744
      %2748 = vset.pattern.permute.xlu0 0
      %2749 = vperm.xlu0 %2748, %v2644
      %v2750 = vpop.permute.xlu0 %2749
      %2753 = vset.pattern.permute.xlu0 0
      %2754 = vperm.xlu0 %2753, %v2645
      %v2755 = vpop.permute.xlu0 %2754
      %2758 = vset.pattern.permute.xlu0 0
      %2759 = vperm.xlu0 %2758, %v2646
      %v2760 = vpop.permute.xlu0 %2759
      %2763 = vset.pattern.permute.xlu0 0
      %2764 = vperm.xlu0 %2763, %v2647
      %v2765 = vpop.permute.xlu0 %2764
      %2768 = vset.pattern.permute.xlu0 0
      %2769 = vperm.xlu0 %2768, %v2648
      %v2770 = vpop.permute.xlu0 %2769
      %2773 = vset.pattern.permute.xlu0 0
      %2774 = vperm.xlu0 %2773, %v2649
      %v2775 = vpop.permute.xlu0 %2774
      %2778 = vset.pattern.permute.xlu0 0
      %2779 = vperm.xlu0 %2778, %v2650
      %v2780 = vpop.permute.xlu0 %2779
      %2783 = vset.pattern.permute.xlu0 0
      %2784 = vperm.xlu0 %2783, %v2651
      %v2785 = vpop.permute.xlu0 %2784
      %v2787 = vmul.f32 %v2655, %v1432
      %v2788 = vmul.f32 %v2660, %v1432
      %v2789 = vmul.f32 %v2665, %v1432
      %v2790 = vmul.f32 %v2670, %v1432
      %v2791 = vmul.f32 %v2675, %v1432
      %v2792 = vmul.f32 %v2680, %v1432
      %v2793 = vmul.f32 %v2685, %v1432
      %v2794 = vmul.f32 %v2690, %v1432
      %v2795 = vmul.f32 %v2695, %v1432
      %v2796 = vmul.f32 %v2700, %v1432
      %v2797 = vmul.f32 %v2705, %v1432
      %v2798 = vmul.f32 %v2710, %v1432
      %v2799 = vmul.f32 %v2715, %v1432
      %v2800 = vmul.f32 %v2720, %v1432
      %v2801 = vmul.f32 %v2725, %v1432
      %v2802 = vmul.f32 %v2730, %v1432
      %v2803 = vmul.f32 %v2735, %v1432
      %v2804 = vmul.f32 %v2740, %v1432
      %v2805 = vmul.f32 %v2745, %v1432
      %v2806 = vmul.f32 %v2750, %v1432
      %v2807 = vmul.f32 %v2755, %v1432
      %v2808 = vmul.f32 %v2760, %v1432
      %v2809 = vmul.f32 %v2765, %v1432
      %v2810 = vmul.f32 %v2770, %v1432
      %v2811 = vmul.f32 %v2775, %v1432
      %v2812 = vmul.f32 %v2780, %v1432
      %v2813 = vmul.f32 %v2785, %v1432
      %v2814 = vadd.f32 %v2598, %v2787
      %v2815 = vadd.f32 %v2599, %v2788
      %v2816 = vadd.f32 %v2600, %v2789
      %v2817 = vadd.f32 %v2601, %v2790
      %v2818 = vadd.f32 %v2602, %v2791
      %v2819 = vadd.f32 %v2603, %v2792
      %v2820 = vadd.f32 %v2604, %v2793
      %v2821 = vadd.f32 %v2605, %v2794
      %v2822 = vadd.f32 %v2606, %v2795
      %v2823 = vadd.f32 %v2607, %v2796
      %v2824 = vadd.f32 %v2608, %v2797
      %v2825 = vadd.f32 %v2609, %v2798
      %v2826 = vadd.f32 %v2610, %v2799
      %v2827 = vadd.f32 %v2611, %v2800
      %v2828 = vadd.f32 %v2612, %v2801
      %v2829 = vadd.f32 %v2613, %v2802
      %v2830 = vadd.f32 %v2614, %v2803
      %v2831 = vadd.f32 %v2615, %v2804
      %v2832 = vadd.f32 %v2616, %v2805
      %v2833 = vadd.f32 %v2617, %v2806
      %v2834 = vadd.f32 %v2618, %v2807
      %v2835 = vadd.f32 %v2619, %v2808
      %v2836 = vadd.f32 %v2620, %v2809
      %v2837 = vadd.f32 %v2621, %v2810
      %v2838 = vadd.f32 %v2622, %v2811
      %v2839 = vadd.f32 %v2623, %v2812
      %v2840 = vadd.f32 %v2624, %v2813
      %v2841 = vmul.f32 %v1744, %v1656
      %v2842 = vmul.f32 %v1749, %v1656
      %v2843 = vmul.f32 %v1754, %v1656
      %v2844 = vmul.f32 %v1759, %v1656
      %v2845 = vmul.f32 %v1764, %v1656
      %v2846 = vmul.f32 %v1769, %v1656
      %v2847 = vmul.f32 %v1774, %v1656
      %v2848 = vmul.f32 %v1779, %v1656
      %v2849 = vmul.f32 %v1784, %v1656
      %v2850 = vmul.f32 %v1789, %v1656
      %v2851 = vmul.f32 %v1794, %v1656
      %v2852 = vmul.f32 %v1799, %v1656
      %v2853 = vmul.f32 %v1804, %v1656
      %v2854 = vmul.f32 %v1809, %v1656
      %v2855 = vmul.f32 %v1814, %v1656
      %v2856 = vmul.f32 %v1819, %v1656
      %v2857 = vmul.f32 %v1824, %v1656
      %v2858 = vmul.f32 %v1829, %v1656
      %v2859 = vmul.f32 %v1834, %v1656
      %v2860 = vmul.f32 %v1839, %v1656
      %v2861 = vmul.f32 %v1844, %v1656
      %v2862 = vmul.f32 %v1849, %v1656
      %v2863 = vmul.f32 %v1854, %v1656
      %v2864 = vmul.f32 %v1859, %v1656
      %v2865 = vmul.f32 %v1864, %v1656
      %v2866 = vmul.f32 %v1869, %v1656
      %v2867 = vmul.f32 %v1874, %v1656
      %v2868 = vadd.f32 %v2814, %v2841
      %v2869 = vadd.f32 %v2815, %v2842
      %v2870 = vadd.f32 %v2816, %v2843
      %v2871 = vadd.f32 %v2817, %v2844
      %v2872 = vadd.f32 %v2818, %v2845
      %v2873 = vadd.f32 %v2819, %v2846
      %v2874 = vadd.f32 %v2820, %v2847
      %v2875 = vadd.f32 %v2821, %v2848
      %v2876 = vadd.f32 %v2822, %v2849
      %v2877 = vadd.f32 %v2823, %v2850
      %v2878 = vadd.f32 %v2824, %v2851
      %v2879 = vadd.f32 %v2825, %v2852
      %v2880 = vadd.f32 %v2826, %v2853
      %v2881 = vadd.f32 %v2827, %v2854
      %v2882 = vadd.f32 %v2828, %v2855
      %v2883 = vadd.f32 %v2829, %v2856
      %v2884 = vadd.f32 %v2830, %v2857
      %v2885 = vadd.f32 %v2831, %v2858
      %v2886 = vadd.f32 %v2832, %v2859
      %v2887 = vadd.f32 %v2833, %v2860
      %v2888 = vadd.f32 %v2834, %v2861
      %v2889 = vadd.f32 %v2835, %v2862
      %v2890 = vadd.f32 %v2836, %v2863
      %v2891 = vadd.f32 %v2837, %v2864
      %v2892 = vadd.f32 %v2838, %v2865
      %v2893 = vadd.f32 %v2839, %v2866
      %v2894 = vadd.f32 %v2840, %v2867
      %v2895 = vmul.f32 %v1968, %v1880
      %v2896 = vmul.f32 %v1973, %v1880
      %v2897 = vmul.f32 %v1978, %v1880
      %v2898 = vmul.f32 %v1983, %v1880
      %v2899 = vmul.f32 %v1988, %v1880
      %v2900 = vmul.f32 %v1993, %v1880
      %v2901 = vmul.f32 %v1998, %v1880
      %v2902 = vmul.f32 %v2003, %v1880
      %v2903 = vmul.f32 %v2008, %v1880
      %v2904 = vmul.f32 %v2013, %v1880
      %v2905 = vmul.f32 %v2018, %v1880
      %v2906 = vmul.f32 %v2023, %v1880
      %v2907 = vmul.f32 %v2028, %v1880
      %v2908 = vmul.f32 %v2033, %v1880
      %v2909 = vmul.f32 %v2038, %v1880
      %v2910 = vmul.f32 %v2043, %v1880
      %v2911 = vmul.f32 %v2048, %v1880
      %v2912 = vmul.f32 %v2053, %v1880
      %v2913 = vmul.f32 %v2058, %v1880
      %v2914 = vmul.f32 %v2063, %v1880
      %v2915 = vmul.f32 %v2068, %v1880
      %v2916 = vmul.f32 %v2073, %v1880
      %v2917 = vmul.f32 %v2078, %v1880
      %v2918 = vmul.f32 %v2083, %v1880
      %v2919 = vmul.f32 %v2088, %v1880
      %v2920 = vmul.f32 %v2093, %v1880
      %v2921 = vmul.f32 %v2098, %v1880
      %v2922 = vadd.f32 %v2868, %v2895
      %v2923 = vadd.f32 %v2869, %v2896
      %v2924 = vadd.f32 %v2870, %v2897
      %v2925 = vadd.f32 %v2871, %v2898
      %v2926 = vadd.f32 %v2872, %v2899
      %v2927 = vadd.f32 %v2873, %v2900
      %v2928 = vadd.f32 %v2874, %v2901
      %v2929 = vadd.f32 %v2875, %v2902
      %v2930 = vadd.f32 %v2876, %v2903
      %v2931 = vadd.f32 %v2877, %v2904
      %v2932 = vadd.f32 %v2878, %v2905
      %v2933 = vadd.f32 %v2879, %v2906
      %v2934 = vadd.f32 %v2880, %v2907
      %v2935 = vadd.f32 %v2881, %v2908
      %v2936 = vadd.f32 %v2882, %v2909
      %v2937 = vadd.f32 %v2883, %v2910
      %v2938 = vadd.f32 %v2884, %v2911
      %v2939 = vadd.f32 %v2885, %v2912
      %v2940 = vadd.f32 %v2886, %v2913
      %v2941 = vadd.f32 %v2887, %v2914
      %v2942 = vadd.f32 %v2888, %v2915
      %v2943 = vadd.f32 %v2889, %v2916
      %v2944 = vadd.f32 %v2890, %v2917
      %v2945 = vadd.f32 %v2891, %v2918
      %v2946 = vadd.f32 %v2892, %v2919
      %v2947 = vadd.f32 %v2893, %v2920
      %v2948 = vadd.f32 %v2894, %v2921
      %v2949 = vld [vmem:[%s165 + $0xf8] sm:$0xff]
      %v2950 = vld [vmem:[%s165 + $0x100] sm:$0xff]
      %v2951 = vld [vmem:[%s165 + $0x108] sm:$0xff]
      %v2952 = vld [vmem:[%s165 + $0x110] sm:$0xff]
      %v2953 = vld [vmem:[%s165 + $0x118] sm:$0xff]
      %v2954 = vld [vmem:[%s165 + $0x120] sm:$0xff]
      %v2955 = vld [vmem:[%s165 + $0x128] sm:$0xff]
      %v2956 = vld [vmem:[%s165 + $0x130] sm:$0xff]
      %v2957 = vld [vmem:[%s165 + $0x138] sm:$0xff]
      %v2958 = vld [vmem:[%s165 + $0x140] sm:$0xff]
      %v2959 = vld [vmem:[%s165 + $0x148] sm:$0xff]
      %v2960 = vld [vmem:[%s165 + $0x150] sm:$0xff]
      %v2961 = vld [vmem:[%s165 + $0x158] sm:$0xff]
      %v2962 = vld [vmem:[%s165 + $0x160] sm:$0xff]
      %v2963 = vld [vmem:[%s165 + $0x168] sm:$0xff]
      %v2964 = vld [vmem:[%s165 + $0x170] sm:$0xff]
      %v2965 = vld [vmem:[%s165 + $0x178] sm:$0xff]
      %v2966 = vld [vmem:[%s165 + $0x180] sm:$0xff]
      %v2967 = vld [vmem:[%s165 + $0x188] sm:$0xff]
      %v2968 = vld [vmem:[%s165 + $0x190] sm:$0xff]
      %v2969 = vld [vmem:[%s165 + $0x198] sm:$0xff]
      %v2970 = vld [vmem:[%s165 + $0x1a0] sm:$0xff]
      %v2971 = vld [vmem:[%s165 + $0x1a8] sm:$0xff]
      %v2972 = vld [vmem:[%s165 + $0x1b0] sm:$0xff]
      %v2973 = vld [vmem:[%s165 + $0x1b8] sm:$0xff]
      %v2974 = vld [vmem:[%s165 + $0x1c0] sm:$0xff]
      %v2975 = vld [vmem:[%s165 + $0x1c8] sm:$0x3]
      %2977 = vset.pattern.permute.xlu0 0
      %2978 = vperm.xlu0 %2977, %v2949
      %v2979 = vpop.permute.xlu0 %2978
      %2982 = vset.pattern.permute.xlu0 0
      %2983 = vperm.xlu0 %2982, %v2950
      %v2984 = vpop.permute.xlu0 %2983
      %2987 = vset.pattern.permute.xlu0 0
      %2988 = vperm.xlu0 %2987, %v2951
      %v2989 = vpop.permute.xlu0 %2988
      %2992 = vset.pattern.permute.xlu0 0
      %2993 = vperm.xlu0 %2992, %v2952
      %v2994 = vpop.permute.xlu0 %2993
      %2997 = vset.pattern.permute.xlu0 0
      %2998 = vperm.xlu0 %2997, %v2953
      %v2999 = vpop.permute.xlu0 %2998
      %3002 = vset.pattern.permute.xlu0 0
      %3003 = vperm.xlu0 %3002, %v2954
      %v3004 = vpop.permute.xlu0 %3003
      %3007 = vset.pattern.permute.xlu0 0
      %3008 = vperm.xlu0 %3007, %v2955
      %v3009 = vpop.permute.xlu0 %3008
      %3012 = vset.pattern.permute.xlu0 0
      %3013 = vperm.xlu0 %3012, %v2956
      %v3014 = vpop.permute.xlu0 %3013
      %3017 = vset.pattern.permute.xlu0 0
      %3018 = vperm.xlu0 %3017, %v2957
      %v3019 = vpop.permute.xlu0 %3018
      %3022 = vset.pattern.permute.xlu0 0
      %3023 = vperm.xlu0 %3022, %v2958
      %v3024 = vpop.permute.xlu0 %3023
      %3027 = vset.pattern.permute.xlu0 0
      %3028 = vperm.xlu0 %3027, %v2959
      %v3029 = vpop.permute.xlu0 %3028
      %3032 = vset.pattern.permute.xlu0 0
      %3033 = vperm.xlu0 %3032, %v2960
      %v3034 = vpop.permute.xlu0 %3033
      %3037 = vset.pattern.permute.xlu0 0
      %3038 = vperm.xlu0 %3037, %v2961
      %v3039 = vpop.permute.xlu0 %3038
      %3042 = vset.pattern.permute.xlu0 0
      %3043 = vperm.xlu0 %3042, %v2962
      %v3044 = vpop.permute.xlu0 %3043
      %3047 = vset.pattern.permute.xlu0 0
      %3048 = vperm.xlu0 %3047, %v2963
      %v3049 = vpop.permute.xlu0 %3048
      %3052 = vset.pattern.permute.xlu0 0
      %3053 = vperm.xlu0 %3052, %v2964
      %v3054 = vpop.permute.xlu0 %3053
      %3057 = vset.pattern.permute.xlu0 0
      %3058 = vperm.xlu0 %3057, %v2965
      %v3059 = vpop.permute.xlu0 %3058
      %3062 = vset.pattern.permute.xlu0 0
      %3063 = vperm.xlu0 %3062, %v2966
      %v3064 = vpop.permute.xlu0 %3063
      %3067 = vset.pattern.permute.xlu0 0
      %3068 = vperm.xlu0 %3067, %v2967
      %v3069 = vpop.permute.xlu0 %3068
      %3072 = vset.pattern.permute.xlu0 0
      %3073 = vperm.xlu0 %3072, %v2968
      %v3074 = vpop.permute.xlu0 %3073
      %3077 = vset.pattern.permute.xlu0 0
      %3078 = vperm.xlu0 %3077, %v2969
      %v3079 = vpop.permute.xlu0 %3078
      %3082 = vset.pattern.permute.xlu0 0
      %3083 = vperm.xlu0 %3082, %v2970
      %v3084 = vpop.permute.xlu0 %3083
      %3087 = vset.pattern.permute.xlu0 0
      %3088 = vperm.xlu0 %3087, %v2971
      %v3089 = vpop.permute.xlu0 %3088
      %3092 = vset.pattern.permute.xlu0 0
      %3093 = vperm.xlu0 %3092, %v2972
      %v3094 = vpop.permute.xlu0 %3093
      %3097 = vset.pattern.permute.xlu0 0
      %3098 = vperm.xlu0 %3097, %v2973
      %v3099 = vpop.permute.xlu0 %3098
      %3102 = vset.pattern.permute.xlu0 0
      %3103 = vperm.xlu0 %3102, %v2974
      %v3104 = vpop.permute.xlu0 %3103
      %3107 = vset.pattern.permute.xlu0 0
      %3108 = vperm.xlu0 %3107, %v2975
      %v3109 = vpop.permute.xlu0 %3108
      %v3111 = vmul.f32 %v2979, %v2104
      %v3112 = vmul.f32 %v2984, %v2104
      %v3113 = vmul.f32 %v2989, %v2104
      %v3114 = vmul.f32 %v2994, %v2104
      %v3115 = vmul.f32 %v2999, %v2104
      %v3116 = vmul.f32 %v3004, %v2104
      %v3117 = vmul.f32 %v3009, %v2104
      %v3118 = vmul.f32 %v3014, %v2104
      %v3119 = vmul.f32 %v3019, %v2104
      %v3120 = vmul.f32 %v3024, %v2104
      %v3121 = vmul.f32 %v3029, %v2104
      %v3122 = vmul.f32 %v3034, %v2104
      %v3123 = vmul.f32 %v3039, %v2104
      %v3124 = vmul.f32 %v3044, %v2104
      %v3125 = vmul.f32 %v3049, %v2104
      %v3126 = vmul.f32 %v3054, %v2104
      %v3127 = vmul.f32 %v3059, %v2104
      %v3128 = vmul.f32 %v3064, %v2104
      %v3129 = vmul.f32 %v3069, %v2104
      %v3130 = vmul.f32 %v3074, %v2104
      %v3131 = vmul.f32 %v3079, %v2104
      %v3132 = vmul.f32 %v3084, %v2104
      %v3133 = vmul.f32 %v3089, %v2104
      %v3134 = vmul.f32 %v3094, %v2104
      %v3135 = vmul.f32 %v3099, %v2104
      %v3136 = vmul.f32 %v3104, %v2104
      %v3137 = vmul.f32 %v3109, %v2104
      %v3138 = vadd.f32 %v2922, %v3111
      %v3139 = vadd.f32 %v2923, %v3112
      %v3140 = vadd.f32 %v2924, %v3113
      %v3141 = vadd.f32 %v2925, %v3114
      %v3142 = vadd.f32 %v2926, %v3115
      %v3143 = vadd.f32 %v2927, %v3116
      %v3144 = vadd.f32 %v2928, %v3117
      %v3145 = vadd.f32 %v2929, %v3118
      %v3146 = vadd.f32 %v2930, %v3119
      %v3147 = vadd.f32 %v2931, %v3120
      %v3148 = vadd.f32 %v2932, %v3121
      %v3149 = vadd.f32 %v2933, %v3122
      %v3150 = vadd.f32 %v2934, %v3123
      %v3151 = vadd.f32 %v2935, %v3124
      %v3152 = vadd.f32 %v2936, %v3125
      %v3153 = vadd.f32 %v2937, %v3126
      %v3154 = vadd.f32 %v2938, %v3127
      %v3155 = vadd.f32 %v2939, %v3128
      %v3156 = vadd.f32 %v2940, %v3129
      %v3157 = vadd.f32 %v2941, %v3130
      %v3158 = vadd.f32 %v2942, %v3131
      %v3159 = vadd.f32 %v2943, %v3132
      %v3160 = vadd.f32 %v2944, %v3133
      %v3161 = vadd.f32 %v2945, %v3134
      %v3162 = vadd.f32 %v2946, %v3135
      %v3163 = vadd.f32 %v2947, %v3136
      %v3164 = vadd.f32 %v2948, %v3137
      %v3165 = vadd.f32 %v3138, %v2164
      %v3166 = vadd.f32 %v3139, %v2164
      %v3167 = vadd.f32 %v3140, %v2164
      %v3168 = vadd.f32 %v3141, %v2164
      %v3169 = vadd.f32 %v3142, %v2164
      %v3170 = vadd.f32 %v3143, %v2164
      %v3171 = vadd.f32 %v3144, %v2164
      %v3172 = vadd.f32 %v3145, %v2164
      %v3173 = vadd.f32 %v3146, %v2164
      %v3174 = vadd.f32 %v3147, %v2164
      %v3175 = vadd.f32 %v3148, %v2164
      %v3176 = vadd.f32 %v3149, %v2164
      %v3177 = vadd.f32 %v3150, %v2164
      %v3178 = vadd.f32 %v3151, %v2164
      %v3179 = vadd.f32 %v3152, %v2164
      %v3180 = vadd.f32 %v3153, %v2164
      %v3181 = vadd.f32 %v3154, %v2164
      %v3182 = vadd.f32 %v3155, %v2164
      %v3183 = vadd.f32 %v3156, %v2164
      %v3184 = vadd.f32 %v3157, %v2164
      %v3185 = vadd.f32 %v3158, %v2164
      %v3186 = vadd.f32 %v3159, %v2164
      %v3187 = vadd.f32 %v3160, %v2164
      %v3188 = vadd.f32 %v3161, %v2164
      %v3189 = vadd.f32 %v3162, %v2164
      %v3190 = vadd.f32 %v3163, %v2164
      %v3191 = vadd.f32 %v3164, %v2164
      %v3192 = vmax.f32 %v3165, 0.0
      %v3193 = vmax.f32 %v3166, 0.0
      %v3194 = vmax.f32 %v3167, 0.0
      %v3195 = vmax.f32 %v3168, 0.0
      %v3196 = vmax.f32 %v3169, 0.0
      %v3197 = vmax.f32 %v3170, 0.0
      %v3198 = vmax.f32 %v3171, 0.0
      %v3199 = vmax.f32 %v3172, 0.0
      %v3200 = vmax.f32 %v3173, 0.0
      %v3201 = vmax.f32 %v3174, 0.0
      %v3202 = vmax.f32 %v3175, 0.0
      %v3203 = vmax.f32 %v3176, 0.0
      %v3204 = vmax.f32 %v3177, 0.0
      %v3205 = vmax.f32 %v3178, 0.0
      %v3206 = vmax.f32 %v3179, 0.0
      %v3207 = vmax.f32 %v3180, 0.0
      %v3208 = vmax.f32 %v3181, 0.0
      %v3209 = vmax.f32 %v3182, 0.0
      %v3210 = vmax.f32 %v3183, 0.0
      %v3211 = vmax.f32 %v3184, 0.0
      %v3212 = vmax.f32 %v3185, 0.0
      %v3213 = vmax.f32 %v3186, 0.0
      %v3214 = vmax.f32 %v3187, 0.0
      %v3215 = vmax.f32 %v3188, 0.0
      %v3216 = vmax.f32 %v3189, 0.0
      %v3217 = vmax.f32 %v3190, 0.0
      %v3218 = vmax.f32 %v3191, 0.0
      %v3219 = vmax.f32 %v2193, %v3192
      %v3220 = vmax.f32 %v2194, %v3193
      %v3221 = vmax.f32 %v2195, %v3194
      %v3222 = vmax.f32 %v2196, %v3195
      %v3223 = vmax.f32 %v2197, %v3196
      %v3224 = vmax.f32 %v2198, %v3197
      %v3225 = vmax.f32 %v2199, %v3198
      %v3226 = vmax.f32 %v2200, %v3199
      %v3227 = vmax.f32 %v2201, %v3200
      %v3228 = vmax.f32 %v2202, %v3201
      %v3229 = vmax.f32 %v2203, %v3202
      %v3230 = vmax.f32 %v2204, %v3203
      %v3231 = vmax.f32 %v2205, %v3204
      %v3232 = vmax.f32 %v2206, %v3205
      %v3233 = vmax.f32 %v2207, %v3206
      %v3234 = vmax.f32 %v2208, %v3207
      %v3235 = vmax.f32 %v2209, %v3208
      %v3236 = vmax.f32 %v2210, %v3209
      %v3237 = vmax.f32 %v2211, %v3210
      %v3238 = vmax.f32 %v2212, %v3211
      %v3239 = vmax.f32 %v2213, %v3212
      %v3240 = vmax.f32 %v2214, %v3213
      %v3241 = vmax.f32 %v2215, %v3214
      %v3242 = vmax.f32 %v2216, %v3215
      %v3243 = vmax.f32 %v2217, %v3216
      %v3244 = vmax.f32 %v2218, %v3217
      %v3245 = vmax.f32 %v2219, %v3218
      %v3246 = vmul.f32 %v848, %v339
      %v3247 = vmul.f32 %v853, %v339
      %v3248 = vmul.f32 %v858, %v339
      %v3249 = vmul.f32 %v863, %v339
      %v3250 = vmul.f32 %v868, %v339
      %v3251 = vmul.f32 %v873, %v339
      %v3252 = vmul.f32 %v878, %v339
      %v3253 = vmul.f32 %v883, %v339
      %v3254 = vmul.f32 %v888, %v339
      %v3255 = vmul.f32 %v893, %v339
      %v3256 = vmul.f32 %v898, %v339
      %v3257 = vmul.f32 %v903, %v339
      %v3258 = vmul.f32 %v908, %v339
      %v3259 = vmul.f32 %v913, %v339
      %v3260 = vmul.f32 %v918, %v339
      %v3261 = vmul.f32 %v923, %v339
      %v3262 = vmul.f32 %v928, %v339
      %v3263 = vmul.f32 %v933, %v339
      %v3264 = vmul.f32 %v938, %v339
      %v3265 = vmul.f32 %v943, %v339
      %v3266 = vmul.f32 %v948, %v339
      %v3267 = vmul.f32 %v953, %v339
      %v3268 = vmul.f32 %v958, %v339
      %v3269 = vmul.f32 %v963, %v339
      %v3270 = vmul.f32 %v968, %v339
      %v3271 = vmul.f32 %v973, %v339
      %v3272 = vmul.f32 %v978, %v339
      %v3273 = vmul.f32 %v1072, %v536
      %v3274 = vmul.f32 %v1077, %v536
      %v3275 = vmul.f32 %v1082, %v536
      %v3276 = vmul.f32 %v1087, %v536
      %v3277 = vmul.f32 %v1092, %v536
      %v3278 = vmul.f32 %v1097, %v536
      %v3279 = vmul.f32 %v1102, %v536
      %v3280 = vmul.f32 %v1107, %v536
      %v3281 = vmul.f32 %v1112, %v536
      %v3282 = vmul.f32 %v1117, %v536
      %v3283 = vmul.f32 %v1122, %v536
      %v3284 = vmul.f32 %v1127, %v536
      %v3285 = vmul.f32 %v1132, %v536
      %v3286 = vmul.f32 %v1137, %v536
      %v3287 = vmul.f32 %v1142, %v536
      %v3288 = vmul.f32 %v1147, %v536
      %v3289 = vmul.f32 %v1152, %v536
      %v3290 = vmul.f32 %v1157, %v536
      %v3291 = vmul.f32 %v1162, %v536
      %v3292 = vmul.f32 %v1167, %v536
      %v3293 = vmul.f32 %v1172, %v536
      %v3294 = vmul.f32 %v1177, %v536
      %v3295 = vmul.f32 %v1182, %v536
      %v3296 = vmul.f32 %v1187, %v536
      %v3297 = vmul.f32 %v1192, %v536
      %v3298 = vmul.f32 %v1197, %v536
      %v3299 = vmul.f32 %v1202, %v536
      %v3300 = vadd.f32 %v3246, %v3273
      %v3301 = vadd.f32 %v3247, %v3274
      %v3302 = vadd.f32 %v3248, %v3275
      %v3303 = vadd.f32 %v3249, %v3276
      %v3304 = vadd.f32 %v3250, %v3277
      %v3305 = vadd.f32 %v3251, %v3278
      %v3306 = vadd.f32 %v3252, %v3279
      %v3307 = vadd.f32 %v3253, %v3280
      %v3308 = vadd.f32 %v3254, %v3281
      %v3309 = vadd.f32 %v3255, %v3282
      %v3310 = vadd.f32 %v3256, %v3283
      %v3311 = vadd.f32 %v3257, %v3284
      %v3312 = vadd.f32 %v3258, %v3285
      %v3313 = vadd.f32 %v3259, %v3286
      %v3314 = vadd.f32 %v3260, %v3287
      %v3315 = vadd.f32 %v3261, %v3288
      %v3316 = vadd.f32 %v3262, %v3289
      %v3317 = vadd.f32 %v3263, %v3290
      %v3318 = vadd.f32 %v3264, %v3291
      %v3319 = vadd.f32 %v3265, %v3292
      %v3320 = vadd.f32 %v3266, %v3293
      %v3321 = vadd.f32 %v3267, %v3294
      %v3322 = vadd.f32 %v3268, %v3295
      %v3323 = vadd.f32 %v3269, %v3296
      %v3324 = vadd.f32 %v3270, %v3297
      %v3325 = vadd.f32 %v3271, %v3298
      %v3326 = vadd.f32 %v3272, %v3299
      %v3327 = vmul.f32 %v1296, %v760
      %v3328 = vmul.f32 %v1301, %v760
      %v3329 = vmul.f32 %v1306, %v760
      %v3330 = vmul.f32 %v1311, %v760
      %v3331 = vmul.f32 %v1316, %v760
      %v3332 = vmul.f32 %v1321, %v760
      %v3333 = vmul.f32 %v1326, %v760
      %v3334 = vmul.f32 %v1331, %v760
      %v3335 = vmul.f32 %v1336, %v760
      %v3336 = vmul.f32 %v1341, %v760
      %v3337 = vmul.f32 %v1346, %v760
      %v3338 = vmul.f32 %v1351, %v760
      %v3339 = vmul.f32 %v1356, %v760
      %v3340 = vmul.f32 %v1361, %v760
      %v3341 = vmul.f32 %v1366, %v760
      %v3342 = vmul.f32 %v1371, %v760
      %v3343 = vmul.f32 %v1376, %v760
      %v3344 = vmul.f32 %v1381, %v760
      %v3345 = vmul.f32 %v1386, %v760
      %v3346 = vmul.f32 %v1391, %v760
      %v3347 = vmul.f32 %v1396, %v760
      %v3348 = vmul.f32 %v1401, %v760
      %v3349 = vmul.f32 %v1406, %v760
      %v3350 = vmul.f32 %v1411, %v760
      %v3351 = vmul.f32 %v1416, %v760
      %v3352 = vmul.f32 %v1421, %v760
      %v3353 = vmul.f32 %v1426, %v760
      %v3354 = vadd.f32 %v3300, %v3327
      %v3355 = vadd.f32 %v3301, %v3328
      %v3356 = vadd.f32 %v3302, %v3329
      %v3357 = vadd.f32 %v3303, %v3330
      %v3358 = vadd.f32 %v3304, %v3331
      %v3359 = vadd.f32 %v3305, %v3332
      %v3360 = vadd.f32 %v3306, %v3333
      %v3361 = vadd.f32 %v3307, %v3334
      %v3362 = vadd.f32 %v3308, %v3335
      %v3363 = vadd.f32 %v3309, %v3336
      %v3364 = vadd.f32 %v3310, %v3337
      %v3365 = vadd.f32 %v3311, %v3338
      %v3366 = vadd.f32 %v3312, %v3339
      %v3367 = vadd.f32 %v3313, %v3340
      %v3368 = vadd.f32 %v3314, %v3341
      %v3369 = vadd.f32 %v3315, %v3342
      %v3370 = vadd.f32 %v3316, %v3343
      %v3371 = vadd.f32 %v3317, %v3344
      %v3372 = vadd.f32 %v3318, %v3345
      %v3373 = vadd.f32 %v3319, %v3346
      %v3374 = vadd.f32 %v3320, %v3347
      %v3375 = vadd.f32 %v3321, %v3348
      %v3376 = vadd.f32 %v3322, %v3349
      %v3377 = vadd.f32 %v3323, %v3350
      %v3378 = vadd.f32 %v3324, %v3351
      %v3379 = vadd.f32 %v3325, %v3352
      %v3380 = vadd.f32 %v3326, %v3353
      %v3381 = vmul.f32 %v1520, %v984
      %v3382 = vmul.f32 %v1525, %v984
      %v3383 = vmul.f32 %v1530, %v984
      %v3384 = vmul.f32 %v1535, %v984
      %v3385 = vmul.f32 %v1540, %v984
      %v3386 = vmul.f32 %v1545, %v984
      %v3387 = vmul.f32 %v1550, %v984
      %v3388 = vmul.f32 %v1555, %v984
      %v3389 = vmul.f32 %v1560, %v984
      %v3390 = vmul.f32 %v1565, %v984
      %v3391 = vmul.f32 %v1570, %v984
      %v3392 = vmul.f32 %v1575, %v984
      %v3393 = vmul.f32 %v1580, %v984
      %v3394 = vmul.f32 %v1585, %v984
      %v3395 = vmul.f32 %v1590, %v984
      %v3396 = vmul.f32 %v1595, %v984
      %v3397 = vmul.f32 %v1600, %v984
      %v3398 = vmul.f32 %v1605, %v984
      %v3399 = vmul.f32 %v1610, %v984
      %v3400 = vmul.f32 %v1615, %v984
      %v3401 = vmul.f32 %v1620, %v984
      %v3402 = vmul.f32 %v1625, %v984
      %v3403 = vmul.f32 %v1630, %v984
      %v3404 = vmul.f32 %v1635, %v984
      %v3405 = vmul.f32 %v1640, %v984
      %v3406 = vmul.f32 %v1645, %v984
      %v3407 = vmul.f32 %v1650, %v984
      %v3408 = vadd.f32 %v3354, %v3381
      %v3409 = vadd.f32 %v3355, %v3382
      %v3410 = vadd.f32 %v3356, %v3383
      %v3411 = vadd.f32 %v3357, %v3384
      %v3412 = vadd.f32 %v3358, %v3385
      %v3413 = vadd.f32 %v3359, %v3386
      %v3414 = vadd.f32 %v3360, %v3387
      %v3415 = vadd.f32 %v3361, %v3388
      %v3416 = vadd.f32 %v3362, %v3389
      %v3417 = vadd.f32 %v3363, %v3390
      %v3418 = vadd.f32 %v3364, %v3391
      %v3419 = vadd.f32 %v3365, %v3392
      %v3420 = vadd.f32 %v3366, %v3393
      %v3421 = vadd.f32 %v3367, %v3394
      %v3422 = vadd.f32 %v3368, %v3395
      %v3423 = vadd.f32 %v3369, %v3396
      %v3424 = vadd.f32 %v3370, %v3397
      %v3425 = vadd.f32 %v3371, %v3398
      %v3426 = vadd.f32 %v3372, %v3399
      %v3427 = vadd.f32 %v3373, %v3400
      %v3428 = vadd.f32 %v3374, %v3401
      %v3429 = vadd.f32 %v3375, %v3402
      %v3430 = vadd.f32 %v3376, %v3403
      %v3431 = vadd.f32 %v3377, %v3404
      %v3432 = vadd.f32 %v3378, %v3405
      %v3433 = vadd.f32 %v3379, %v3406
      %v3434 = vadd.f32 %v3380, %v3407
      %v3435 = vmul.f32 %v1744, %v1208
      %v3436 = vmul.f32 %v1749, %v1208
      %v3437 = vmul.f32 %v1754, %v1208
      %v3438 = vmul.f32 %v1759, %v1208
      %v3439 = vmul.f32 %v1764, %v1208
      %v3440 = vmul.f32 %v1769, %v1208
      %v3441 = vmul.f32 %v1774, %v1208
      %v3442 = vmul.f32 %v1779, %v1208
      %v3443 = vmul.f32 %v1784, %v1208
      %v3444 = vmul.f32 %v1789, %v1208
      %v3445 = vmul.f32 %v1794, %v1208
      %v3446 = vmul.f32 %v1799, %v1208
      %v3447 = vmul.f32 %v1804, %v1208
      %v3448 = vmul.f32 %v1809, %v1208
      %v3449 = vmul.f32 %v1814, %v1208
      %v3450 = vmul.f32 %v1819, %v1208
      %v3451 = vmul.f32 %v1824, %v1208
      %v3452 = vmul.f32 %v1829, %v1208
      %v3453 = vmul.f32 %v1834, %v1208
      %v3454 = vmul.f32 %v1839, %v1208
      %v3455 = vmul.f32 %v1844, %v1208
      %v3456 = vmul.f32 %v1849, %v1208
      %v3457 = vmul.f32 %v1854, %v1208
      %v3458 = vmul.f32 %v1859, %v1208
      %v3459 = vmul.f32 %v1864, %v1208
      %v3460 = vmul.f32 %v1869, %v1208
      %v3461 = vmul.f32 %v1874, %v1208
      %v3462 = vadd.f32 %v3408, %v3435
      %v3463 = vadd.f32 %v3409, %v3436
      %v3464 = vadd.f32 %v3410, %v3437
      %v3465 = vadd.f32 %v3411, %v3438
      %v3466 = vadd.f32 %v3412, %v3439
      %v3467 = vadd.f32 %v3413, %v3440
      %v3468 = vadd.f32 %v3414, %v3441
      %v3469 = vadd.f32 %v3415, %v3442
      %v3470 = vadd.f32 %v3416, %v3443
      %v3471 = vadd.f32 %v3417, %v3444
      %v3472 = vadd.f32 %v3418, %v3445
      %v3473 = vadd.f32 %v3419, %v3446
      %v3474 = vadd.f32 %v3420, %v3447
      %v3475 = vadd.f32 %v3421, %v3448
      %v3476 = vadd.f32 %v3422, %v3449
      %v3477 = vadd.f32 %v3423, %v3450
      %v3478 = vadd.f32 %v3424, %v3451
      %v3479 = vadd.f32 %v3425, %v3452
      %v3480 = vadd.f32 %v3426, %v3453
      %v3481 = vadd.f32 %v3427, %v3454
      %v3482 = vadd.f32 %v3428, %v3455
      %v3483 = vadd.f32 %v3429, %v3456
      %v3484 = vadd.f32 %v3430, %v3457
      %v3485 = vadd.f32 %v3431, %v3458
      %v3486 = vadd.f32 %v3432, %v3459
      %v3487 = vadd.f32 %v3433, %v3460
      %v3488 = vadd.f32 %v3434, %v3461
      %v3489 = vmul.f32 %v1968, %v1432
      %v3490 = vmul.f32 %v1973, %v1432
      %v3491 = vmul.f32 %v1978, %v1432
      %v3492 = vmul.f32 %v1983, %v1432
      %v3493 = vmul.f32 %v1988, %v1432
      %v3494 = vmul.f32 %v1993, %v1432
      %v3495 = vmul.f32 %v1998, %v1432
      %v3496 = vmul.f32 %v2003, %v1432
      %v3497 = vmul.f32 %v2008, %v1432
      %v3498 = vmul.f32 %v2013, %v1432
      %v3499 = vmul.f32 %v2018, %v1432
      %v3500 = vmul.f32 %v2023, %v1432
      %v3501 = vmul.f32 %v2028, %v1432
      %v3502 = vmul.f32 %v2033, %v1432
      %v3503 = vmul.f32 %v2038, %v1432
      %v3504 = vmul.f32 %v2043, %v1432
      %v3505 = vmul.f32 %v2048, %v1432
      %v3506 = vmul.f32 %v2053, %v1432
      %v3507 = vmul.f32 %v2058, %v1432
      %v3508 = vmul.f32 %v2063, %v1432
      %v3509 = vmul.f32 %v2068, %v1432
      %v3510 = vmul.f32 %v2073, %v1432
      %v3511 = vmul.f32 %v2078, %v1432
      %v3512 = vmul.f32 %v2083, %v1432
      %v3513 = vmul.f32 %v2088, %v1432
      %v3514 = vmul.f32 %v2093, %v1432
      %v3515 = vmul.f32 %v2098, %v1432
      %v3516 = vadd.f32 %v3462, %v3489
      %v3517 = vadd.f32 %v3463, %v3490
      %v3518 = vadd.f32 %v3464, %v3491
      %v3519 = vadd.f32 %v3465, %v3492
      %v3520 = vadd.f32 %v3466, %v3493
      %v3521 = vadd.f32 %v3467, %v3494
      %v3522 = vadd.f32 %v3468, %v3495
      %v3523 = vadd.f32 %v3469, %v3496
      %v3524 = vadd.f32 %v3470, %v3497
      %v3525 = vadd.f32 %v3471, %v3498
      %v3526 = vadd.f32 %v3472, %v3499
      %v3527 = vadd.f32 %v3473, %v3500
      %v3528 = vadd.f32 %v3474, %v3501
      %v3529 = vadd.f32 %v3475, %v3502
      %v3530 = vadd.f32 %v3476, %v3503
      %v3531 = vadd.f32 %v3477, %v3504
      %v3532 = vadd.f32 %v3478, %v3505
      %v3533 = vadd.f32 %v3479, %v3506
      %v3534 = vadd.f32 %v3480, %v3507
      %v3535 = vadd.f32 %v3481, %v3508
      %v3536 = vadd.f32 %v3482, %v3509
      %v3537 = vadd.f32 %v3483, %v3510
      %v3538 = vadd.f32 %v3484, %v3511
      %v3539 = vadd.f32 %v3485, %v3512
      %v3540 = vadd.f32 %v3486, %v3513
      %v3541 = vadd.f32 %v3487, %v3514
      %v3542 = vadd.f32 %v3488, %v3515
      %v3543 = vld [vmem:[%s165 + $0x1df] sm:$0xff]
      %v3544 = vld [vmem:[%s165 + $0x1e7] sm:$0xff]
      %v3545 = vld [vmem:[%s165 + $0x1ef] sm:$0xff]
      %v3546 = vld [vmem:[%s165 + $0x1f7] sm:$0xff]
      %v3547 = vld [vmem:[%s165 + $0x1ff] sm:$0xff]
      %v3548 = vld [vmem:[%s165 + $0x207] sm:$0xff]
      %v3549 = vld [vmem:[%s165 + $0x20f] sm:$0xff]
      %v3550 = vld [vmem:[%s165 + $0x217] sm:$0xff]
      %v3551 = vld [vmem:[%s165 + $0x21f] sm:$0xff]
      %v3552 = vld [vmem:[%s165 + $0x227] sm:$0xff]
      %v3553 = vld [vmem:[%s165 + $0x22f] sm:$0xff]
      %v3554 = vld [vmem:[%s165 + $0x237] sm:$0xff]
      %v3555 = vld [vmem:[%s165 + $0x23f] sm:$0xff]
      %v3556 = vld [vmem:[%s165 + $0x247] sm:$0xff]
      %v3557 = vld [vmem:[%s165 + $0x24f] sm:$0xff]
      %v3558 = vld [vmem:[%s165 + $0x257] sm:$0xff]
      %v3559 = vld [vmem:[%s165 + $0x25f] sm:$0xff]
      %v3560 = vld [vmem:[%s165 + $0x267] sm:$0xff]
      %v3561 = vld [vmem:[%s165 + $0x26f] sm:$0xff]
      %v3562 = vld [vmem:[%s165 + $0x277] sm:$0xff]
      %v3563 = vld [vmem:[%s165 + $0x27f] sm:$0xff]
      %v3564 = vld [vmem:[%s165 + $0x287] sm:$0xff]
      %v3565 = vld [vmem:[%s165 + $0x28f] sm:$0xff]
      %v3566 = vld [vmem:[%s165 + $0x297] sm:$0xff]
      %v3567 = vld [vmem:[%s165 + $0x29f] sm:$0xff]
      %v3568 = vld [vmem:[%s165 + $0x2a7] sm:$0xff]
      %v3569 = vld [vmem:[%s165 + $0x2af] sm:$0x3]
      %3571 = vset.pattern.permute.xlu0 0
      %3572 = vperm.xlu0 %3571, %v3543
      %v3573 = vpop.permute.xlu0 %3572
      %3576 = vset.pattern.permute.xlu0 0
      %3577 = vperm.xlu0 %3576, %v3544
      %v3578 = vpop.permute.xlu0 %3577
      %3581 = vset.pattern.permute.xlu0 0
      %3582 = vperm.xlu0 %3581, %v3545
      %v3583 = vpop.permute.xlu0 %3582
      %3586 = vset.pattern.permute.xlu0 0
      %3587 = vperm.xlu0 %3586, %v3546
      %v3588 = vpop.permute.xlu0 %3587
      %3591 = vset.pattern.permute.xlu0 0
      %3592 = vperm.xlu0 %3591, %v3547
      %v3593 = vpop.permute.xlu0 %3592
      %3596 = vset.pattern.permute.xlu0 0
      %3597 = vperm.xlu0 %3596, %v3548
      %v3598 = vpop.permute.xlu0 %3597
      %3601 = vset.pattern.permute.xlu0 0
      %3602 = vperm.xlu0 %3601, %v3549
      %v3603 = vpop.permute.xlu0 %3602
      %3606 = vset.pattern.permute.xlu0 0
      %3607 = vperm.xlu0 %3606, %v3550
      %v3608 = vpop.permute.xlu0 %3607
      %3611 = vset.pattern.permute.xlu0 0
      %3612 = vperm.xlu0 %3611, %v3551
      %v3613 = vpop.permute.xlu0 %3612
      %3616 = vset.pattern.permute.xlu0 0
      %3617 = vperm.xlu0 %3616, %v3552
      %v3618 = vpop.permute.xlu0 %3617
      %3621 = vset.pattern.permute.xlu0 0
      %3622 = vperm.xlu0 %3621, %v3553
      %v3623 = vpop.permute.xlu0 %3622
      %3626 = vset.pattern.permute.xlu0 0
      %3627 = vperm.xlu0 %3626, %v3554
      %v3628 = vpop.permute.xlu0 %3627
      %3631 = vset.pattern.permute.xlu0 0
      %3632 = vperm.xlu0 %3631, %v3555
      %v3633 = vpop.permute.xlu0 %3632
      %3636 = vset.pattern.permute.xlu0 0
      %3637 = vperm.xlu0 %3636, %v3556
      %v3638 = vpop.permute.xlu0 %3637
      %3641 = vset.pattern.permute.xlu0 0
      %3642 = vperm.xlu0 %3641, %v3557
      %v3643 = vpop.permute.xlu0 %3642
      %3646 = vset.pattern.permute.xlu0 0
      %3647 = vperm.xlu0 %3646, %v3558
      %v3648 = vpop.permute.xlu0 %3647
      %3651 = vset.pattern.permute.xlu0 0
      %3652 = vperm.xlu0 %3651, %v3559
      %v3653 = vpop.permute.xlu0 %3652
      %3656 = vset.pattern.permute.xlu0 0
      %3657 = vperm.xlu0 %3656, %v3560
      %v3658 = vpop.permute.xlu0 %3657
      %3661 = vset.pattern.permute.xlu0 0
      %3662 = vperm.xlu0 %3661, %v3561
      %v3663 = vpop.permute.xlu0 %3662
      %3666 = vset.pattern.permute.xlu0 0
      %3667 = vperm.xlu0 %3666, %v3562
      %v3668 = vpop.permute.xlu0 %3667
      %3671 = vset.pattern.permute.xlu0 0
      %3672 = vperm.xlu0 %3671, %v3563
      %v3673 = vpop.permute.xlu0 %3672
      %3676 = vset.pattern.permute.xlu0 0
      %3677 = vperm.xlu0 %3676, %v3564
      %v3678 = vpop.permute.xlu0 %3677
      %3681 = vset.pattern.permute.xlu0 0
      %3682 = vperm.xlu0 %3681, %v3565
      %v3683 = vpop.permute.xlu0 %3682
      %3686 = vset.pattern.permute.xlu0 0
      %3687 = vperm.xlu0 %3686, %v3566
      %v3688 = vpop.permute.xlu0 %3687
      %3691 = vset.pattern.permute.xlu0 0
      %3692 = vperm.xlu0 %3691, %v3567
      %v3693 = vpop.permute.xlu0 %3692
      %3696 = vset.pattern.permute.xlu0 0
      %3697 = vperm.xlu0 %3696, %v3568
      %v3698 = vpop.permute.xlu0 %3697
      %3701 = vset.pattern.permute.xlu0 0
      %3702 = vperm.xlu0 %3701, %v3569
      %v3703 = vpop.permute.xlu0 %3702
      %v3705 = vmul.f32 %v3573, %v1656
      %v3706 = vmul.f32 %v3578, %v1656
      %v3707 = vmul.f32 %v3583, %v1656
      %v3708 = vmul.f32 %v3588, %v1656
      %v3709 = vmul.f32 %v3593, %v1656
      %v3710 = vmul.f32 %v3598, %v1656
      %v3711 = vmul.f32 %v3603, %v1656
      %v3712 = vmul.f32 %v3608, %v1656
      %v3713 = vmul.f32 %v3613, %v1656
      %v3714 = vmul.f32 %v3618, %v1656
      %v3715 = vmul.f32 %v3623, %v1656
      %v3716 = vmul.f32 %v3628, %v1656
      %v3717 = vmul.f32 %v3633, %v1656
      %v3718 = vmul.f32 %v3638, %v1656
      %v3719 = vmul.f32 %v3643, %v1656
      %v3720 = vmul.f32 %v3648, %v1656
      %v3721 = vmul.f32 %v3653, %v1656
      %v3722 = vmul.f32 %v3658, %v1656
      %v3723 = vmul.f32 %v3663, %v1656
      %v3724 = vmul.f32 %v3668, %v1656
      %v3725 = vmul.f32 %v3673, %v1656
      %v3726 = vmul.f32 %v3678, %v1656
      %v3727 = vmul.f32 %v3683, %v1656
      %v3728 = vmul.f32 %v3688, %v1656
      %v3729 = vmul.f32 %v3693, %v1656
      %v3730 = vmul.f32 %v3698, %v1656
      %v3731 = vmul.f32 %v3703, %v1656
      %v3732 = vadd.f32 %v3516, %v3705
      %v3733 = vadd.f32 %v3517, %v3706
      %v3734 = vadd.f32 %v3518, %v3707
      %v3735 = vadd.f32 %v3519, %v3708
      %v3736 = vadd.f32 %v3520, %v3709
      %v3737 = vadd.f32 %v3521, %v3710
      %v3738 = vadd.f32 %v3522, %v3711
      %v3739 = vadd.f32 %v3523, %v3712
      %v3740 = vadd.f32 %v3524, %v3713
      %v3741 = vadd.f32 %v3525, %v3714
      %v3742 = vadd.f32 %v3526, %v3715
      %v3743 = vadd.f32 %v3527, %v3716
      %v3744 = vadd.f32 %v3528, %v3717
      %v3745 = vadd.f32 %v3529, %v3718
      %v3746 = vadd.f32 %v3530, %v3719
      %v3747 = vadd.f32 %v3531, %v3720
      %v3748 = vadd.f32 %v3532, %v3721
      %v3749 = vadd.f32 %v3533, %v3722
      %v3750 = vadd.f32 %v3534, %v3723
      %v3751 = vadd.f32 %v3535, %v3724
      %v3752 = vadd.f32 %v3536, %v3725
      %v3753 = vadd.f32 %v3537, %v3726
      %v3754 = vadd.f32 %v3538, %v3727
      %v3755 = vadd.f32 %v3539, %v3728
      %v3756 = vadd.f32 %v3540, %v3729
      %v3757 = vadd.f32 %v3541, %v3730
      %v3758 = vadd.f32 %v3542, %v3731
      %v3759 = vld [vmem:[%s165 + $0x2c7] sm:$0xff]
      %v3760 = vld [vmem:[%s165 + $0x2cf] sm:$0xff]
      %v3761 = vld [vmem:[%s165 + $0x2d7] sm:$0xff]
      %v3762 = vld [vmem:[%s165 + $0x2df] sm:$0xff]
      %v3763 = vld [vmem:[%s165 + $0x2e7] sm:$0xff]
      %v3764 = vld [vmem:[%s165 + $0x2ef] sm:$0xff]
      %v3765 = vld [vmem:[%s165 + $0x2f7] sm:$0xff]
      %v3766 = vld [vmem:[%s165 + $0x2ff] sm:$0xff]
      %v3767 = vld [vmem:[%s165 + $0x307] sm:$0xff]
      %v3768 = vld [vmem:[%s165 + $0x30f] sm:$0xff]
      %v3769 = vld [vmem:[%s165 + $0x317] sm:$0xff]
      %v3770 = vld [vmem:[%s165 + $0x31f] sm:$0xff]
      %v3771 = vld [vmem:[%s165 + $0x327] sm:$0xff]
      %v3772 = vld [vmem:[%s165 + $0x32f] sm:$0xff]
      %v3773 = vld [vmem:[%s165 + $0x337] sm:$0xff]
      %v3774 = vld [vmem:[%s165 + $0x33f] sm:$0xff]
      %v3775 = vld [vmem:[%s165 + $0x347] sm:$0xff]
      %v3776 = vld [vmem:[%s165 + $0x34f] sm:$0xff]
      %v3777 = vld [vmem:[%s165 + $0x357] sm:$0xff]
      %v3778 = vld [vmem:[%s165 + $0x35f] sm:$0xff]
      %v3779 = vld [vmem:[%s165 + $0x367] sm:$0xff]
      %v3780 = vld [vmem:[%s165 + $0x36f] sm:$0xff]
      %v3781 = vld [vmem:[%s165 + $0x377] sm:$0xff]
      %v3782 = vld [vmem:[%s165 + $0x37f] sm:$0xff]
      %v3783 = vld [vmem:[%s165 + $0x387] sm:$0xff]
      %v3784 = vld [vmem:[%s165 + $0x38f] sm:$0xff]
      %v3785 = vld [vmem:[%s165 + $0x397] sm:$0x3]
      %3787 = vset.pattern.permute.xlu0 0
      %3788 = vperm.xlu0 %3787, %v3759
      %v3789 = vpop.permute.xlu0 %3788
      %3792 = vset.pattern.permute.xlu0 0
      %3793 = vperm.xlu0 %3792, %v3760
      %v3794 = vpop.permute.xlu0 %3793
      %3797 = vset.pattern.permute.xlu0 0
      %3798 = vperm.xlu0 %3797, %v3761
      %v3799 = vpop.permute.xlu0 %3798
      %3802 = vset.pattern.permute.xlu0 0
      %3803 = vperm.xlu0 %3802, %v3762
      %v3804 = vpop.permute.xlu0 %3803
      %3807 = vset.pattern.permute.xlu0 0
      %3808 = vperm.xlu0 %3807, %v3763
      %v3809 = vpop.permute.xlu0 %3808
      %3812 = vset.pattern.permute.xlu0 0
      %3813 = vperm.xlu0 %3812, %v3764
      %v3814 = vpop.permute.xlu0 %3813
      %3817 = vset.pattern.permute.xlu0 0
      %3818 = vperm.xlu0 %3817, %v3765
      %v3819 = vpop.permute.xlu0 %3818
      %3822 = vset.pattern.permute.xlu0 0
      %3823 = vperm.xlu0 %3822, %v3766
      %v3824 = vpop.permute.xlu0 %3823
      %3827 = vset.pattern.permute.xlu0 0
      %3828 = vperm.xlu0 %3827, %v3767
      %v3829 = vpop.permute.xlu0 %3828
      %3832 = vset.pattern.permute.xlu0 0
      %3833 = vperm.xlu0 %3832, %v3768
      %v3834 = vpop.permute.xlu0 %3833
      %3837 = vset.pattern.permute.xlu0 0
      %3838 = vperm.xlu0 %3837, %v3769
      %v3839 = vpop.permute.xlu0 %3838
      %3842 = vset.pattern.permute.xlu0 0
      %3843 = vperm.xlu0 %3842, %v3770
      %v3844 = vpop.permute.xlu0 %3843
      %3847 = vset.pattern.permute.xlu0 0
      %3848 = vperm.xlu0 %3847, %v3771
      %v3849 = vpop.permute.xlu0 %3848
      %3852 = vset.pattern.permute.xlu0 0
      %3853 = vperm.xlu0 %3852, %v3772
      %v3854 = vpop.permute.xlu0 %3853
      %3857 = vset.pattern.permute.xlu0 0
      %3858 = vperm.xlu0 %3857, %v3773
      %v3859 = vpop.permute.xlu0 %3858
      %3862 = vset.pattern.permute.xlu0 0
      %3863 = vperm.xlu0 %3862, %v3774
      %v3864 = vpop.permute.xlu0 %3863
      %3867 = vset.pattern.permute.xlu0 0
      %3868 = vperm.xlu0 %3867, %v3775
      %v3869 = vpop.permute.xlu0 %3868
      %3872 = vset.pattern.permute.xlu0 0
      %3873 = vperm.xlu0 %3872, %v3776
      %v3874 = vpop.permute.xlu0 %3873
      %3877 = vset.pattern.permute.xlu0 0
      %3878 = vperm.xlu0 %3877, %v3777
      %v3879 = vpop.permute.xlu0 %3878
      %3882 = vset.pattern.permute.xlu0 0
      %3883 = vperm.xlu0 %3882, %v3778
      %v3884 = vpop.permute.xlu0 %3883
      %3887 = vset.pattern.permute.xlu0 0
      %3888 = vperm.xlu0 %3887, %v3779
      %v3889 = vpop.permute.xlu0 %3888
      %3892 = vset.pattern.permute.xlu0 0
      %3893 = vperm.xlu0 %3892, %v3780
      %v3894 = vpop.permute.xlu0 %3893
      %3897 = vset.pattern.permute.xlu0 0
      %3898 = vperm.xlu0 %3897, %v3781
      %v3899 = vpop.permute.xlu0 %3898
      %3902 = vset.pattern.permute.xlu0 0
      %3903 = vperm.xlu0 %3902, %v3782
      %v3904 = vpop.permute.xlu0 %3903
      %3907 = vset.pattern.permute.xlu0 0
      %3908 = vperm.xlu0 %3907, %v3783
      %v3909 = vpop.permute.xlu0 %3908
      %3912 = vset.pattern.permute.xlu0 0
      %3913 = vperm.xlu0 %3912, %v3784
      %v3914 = vpop.permute.xlu0 %3913
      %3917 = vset.pattern.permute.xlu0 0
      %3918 = vperm.xlu0 %3917, %v3785
      %v3919 = vpop.permute.xlu0 %3918
      %v3921 = vmul.f32 %v3789, %v1880
      %v3922 = vmul.f32 %v3794, %v1880
      %v3923 = vmul.f32 %v3799, %v1880
      %v3924 = vmul.f32 %v3804, %v1880
      %v3925 = vmul.f32 %v3809, %v1880
      %v3926 = vmul.f32 %v3814, %v1880
      %v3927 = vmul.f32 %v3819, %v1880
      %v3928 = vmul.f32 %v3824, %v1880
      %v3929 = vmul.f32 %v3829, %v1880
      %v3930 = vmul.f32 %v3834, %v1880
      %v3931 = vmul.f32 %v3839, %v1880
      %v3932 = vmul.f32 %v3844, %v1880
      %v3933 = vmul.f32 %v3849, %v1880
      %v3934 = vmul.f32 %v3854, %v1880
      %v3935 = vmul.f32 %v3859, %v1880
      %v3936 = vmul.f32 %v3864, %v1880
      %v3937 = vmul.f32 %v3869, %v1880
      %v3938 = vmul.f32 %v3874, %v1880
      %v3939 = vmul.f32 %v3879, %v1880
      %v3940 = vmul.f32 %v3884, %v1880
      %v3941 = vmul.f32 %v3889, %v1880
      %v3942 = vmul.f32 %v3894, %v1880
      %v3943 = vmul.f32 %v3899, %v1880
      %v3944 = vmul.f32 %v3904, %v1880
      %v3945 = vmul.f32 %v3909, %v1880
      %v3946 = vmul.f32 %v3914, %v1880
      %v3947 = vmul.f32 %v3919, %v1880
      %v3948 = vadd.f32 %v3732, %v3921
      %v3949 = vadd.f32 %v3733, %v3922
      %v3950 = vadd.f32 %v3734, %v3923
      %v3951 = vadd.f32 %v3735, %v3924
      %v3952 = vadd.f32 %v3736, %v3925
      %v3953 = vadd.f32 %v3737, %v3926
      %v3954 = vadd.f32 %v3738, %v3927
      %v3955 = vadd.f32 %v3739, %v3928
      %v3956 = vadd.f32 %v3740, %v3929
      %v3957 = vadd.f32 %v3741, %v3930
      %v3958 = vadd.f32 %v3742, %v3931
      %v3959 = vadd.f32 %v3743, %v3932
      %v3960 = vadd.f32 %v3744, %v3933
      %v3961 = vadd.f32 %v3745, %v3934
      %v3962 = vadd.f32 %v3746, %v3935
      %v3963 = vadd.f32 %v3747, %v3936
      %v3964 = vadd.f32 %v3748, %v3937
      %v3965 = vadd.f32 %v3749, %v3938
      %v3966 = vadd.f32 %v3750, %v3939
      %v3967 = vadd.f32 %v3751, %v3940
      %v3968 = vadd.f32 %v3752, %v3941
      %v3969 = vadd.f32 %v3753, %v3942
      %v3970 = vadd.f32 %v3754, %v3943
      %v3971 = vadd.f32 %v3755, %v3944
      %v3972 = vadd.f32 %v3756, %v3945
      %v3973 = vadd.f32 %v3757, %v3946
      %v3974 = vadd.f32 %v3758, %v3947
      %v3975 = vld [vmem:[%s165 + $0x1e0] sm:$0xff]
      %v3976 = vld [vmem:[%s165 + $0x1e8] sm:$0xff]
      %v3977 = vld [vmem:[%s165 + $0x1f0] sm:$0xff]
      %v3978 = vld [vmem:[%s165 + $0x1f8] sm:$0xff]
      %v3979 = vld [vmem:[%s165 + $0x200] sm:$0xff]
      %v3980 = vld [vmem:[%s165 + $0x208] sm:$0xff]
      %v3981 = vld [vmem:[%s165 + $0x210] sm:$0xff]
      %v3982 = vld [vmem:[%s165 + $0x218] sm:$0xff]
      %v3983 = vld [vmem:[%s165 + $0x220] sm:$0xff]
      %v3984 = vld [vmem:[%s165 + $0x228] sm:$0xff]
      %v3985 = vld [vmem:[%s165 + $0x230] sm:$0xff]
      %v3986 = vld [vmem:[%s165 + $0x238] sm:$0xff]
      %v3987 = vld [vmem:[%s165 + $0x240] sm:$0xff]
      %v3988 = vld [vmem:[%s165 + $0x248] sm:$0xff]
      %v3989 = vld [vmem:[%s165 + $0x250] sm:$0xff]
      %v3990 = vld [vmem:[%s165 + $0x258] sm:$0xff]
      %v3991 = vld [vmem:[%s165 + $0x260] sm:$0xff]
      %v3992 = vld [vmem:[%s165 + $0x268] sm:$0xff]
      %v3993 = vld [vmem:[%s165 + $0x270] sm:$0xff]
      %v3994 = vld [vmem:[%s165 + $0x278] sm:$0xff]
      %v3995 = vld [vmem:[%s165 + $0x280] sm:$0xff]
      %v3996 = vld [vmem:[%s165 + $0x288] sm:$0xff]
      %v3997 = vld [vmem:[%s165 + $0x290] sm:$0xff]
      %v3998 = vld [vmem:[%s165 + $0x298] sm:$0xff]
      %v3999 = vld [vmem:[%s165 + $0x2a0] sm:$0xff]
      %v4000 = vld [vmem:[%s165 + $0x2a8] sm:$0xff]
      %v4001 = vld [vmem:[%s165 + $0x2b0] sm:$0x3]
      %4003 = vset.pattern.permute.xlu0 0
      %4004 = vperm.xlu0 %4003, %v3975
      %v4005 = vpop.permute.xlu0 %4004
      %4008 = vset.pattern.permute.xlu0 0
      %4009 = vperm.xlu0 %4008, %v3976
      %v4010 = vpop.permute.xlu0 %4009
      %4013 = vset.pattern.permute.xlu0 0
      %4014 = vperm.xlu0 %4013, %v3977
      %v4015 = vpop.permute.xlu0 %4014
      %4018 = vset.pattern.permute.xlu0 0
      %4019 = vperm.xlu0 %4018, %v3978
      %v4020 = vpop.permute.xlu0 %4019
      %4023 = vset.pattern.permute.xlu0 0
      %4024 = vperm.xlu0 %4023, %v3979
      %v4025 = vpop.permute.xlu0 %4024
      %4028 = vset.pattern.permute.xlu0 0
      %4029 = vperm.xlu0 %4028, %v3980
      %v4030 = vpop.permute.xlu0 %4029
      %4033 = vset.pattern.permute.xlu0 0
      %4034 = vperm.xlu0 %4033, %v3981
      %v4035 = vpop.permute.xlu0 %4034
      %4038 = vset.pattern.permute.xlu0 0
      %4039 = vperm.xlu0 %4038, %v3982
      %v4040 = vpop.permute.xlu0 %4039
      %4043 = vset.pattern.permute.xlu0 0
      %4044 = vperm.xlu0 %4043, %v3983
      %v4045 = vpop.permute.xlu0 %4044
      %4048 = vset.pattern.permute.xlu0 0
      %4049 = vperm.xlu0 %4048, %v3984
      %v4050 = vpop.permute.xlu0 %4049
      %4053 = vset.pattern.permute.xlu0 0
      %4054 = vperm.xlu0 %4053, %v3985
      %v4055 = vpop.permute.xlu0 %4054
      %4058 = vset.pattern.permute.xlu0 0
      %4059 = vperm.xlu0 %4058, %v3986
      %v4060 = vpop.permute.xlu0 %4059
      %4063 = vset.pattern.permute.xlu0 0
      %4064 = vperm.xlu0 %4063, %v3987
      %v4065 = vpop.permute.xlu0 %4064
      %4068 = vset.pattern.permute.xlu0 0
      %4069 = vperm.xlu0 %4068, %v3988
      %v4070 = vpop.permute.xlu0 %4069
      %4073 = vset.pattern.permute.xlu0 0
      %4074 = vperm.xlu0 %4073, %v3989
      %v4075 = vpop.permute.xlu0 %4074
      %4078 = vset.pattern.permute.xlu0 0
      %4079 = vperm.xlu0 %4078, %v3990
      %v4080 = vpop.permute.xlu0 %4079
      %4083 = vset.pattern.permute.xlu0 0
      %4084 = vperm.xlu0 %4083, %v3991
      %v4085 = vpop.permute.xlu0 %4084
      %4088 = vset.pattern.permute.xlu0 0
      %4089 = vperm.xlu0 %4088, %v3992
      %v4090 = vpop.permute.xlu0 %4089
      %4093 = vset.pattern.permute.xlu0 0
      %4094 = vperm.xlu0 %4093, %v3993
      %v4095 = vpop.permute.xlu0 %4094
      %4098 = vset.pattern.permute.xlu0 0
      %4099 = vperm.xlu0 %4098, %v3994
      %v4100 = vpop.permute.xlu0 %4099
      %4103 = vset.pattern.permute.xlu0 0
      %4104 = vperm.xlu0 %4103, %v3995
      %v4105 = vpop.permute.xlu0 %4104
      %4108 = vset.pattern.permute.xlu0 0
      %4109 = vperm.xlu0 %4108, %v3996
      %v4110 = vpop.permute.xlu0 %4109
      %4113 = vset.pattern.permute.xlu0 0
      %4114 = vperm.xlu0 %4113, %v3997
      %v4115 = vpop.permute.xlu0 %4114
      %4118 = vset.pattern.permute.xlu0 0
      %4119 = vperm.xlu0 %4118, %v3998
      %v4120 = vpop.permute.xlu0 %4119
      %4123 = vset.pattern.permute.xlu0 0
      %4124 = vperm.xlu0 %4123, %v3999
      %v4125 = vpop.permute.xlu0 %4124
      %4128 = vset.pattern.permute.xlu0 0
      %4129 = vperm.xlu0 %4128, %v4000
      %v4130 = vpop.permute.xlu0 %4129
      %4133 = vset.pattern.permute.xlu0 0
      %4134 = vperm.xlu0 %4133, %v4001
      %v4135 = vpop.permute.xlu0 %4134
      %v4137 = vmul.f32 %v4005, %v2104
      %v4138 = vmul.f32 %v4010, %v2104
      %v4139 = vmul.f32 %v4015, %v2104
      %v4140 = vmul.f32 %v4020, %v2104
      %v4141 = vmul.f32 %v4025, %v2104
      %v4142 = vmul.f32 %v4030, %v2104
      %v4143 = vmul.f32 %v4035, %v2104
      %v4144 = vmul.f32 %v4040, %v2104
      %v4145 = vmul.f32 %v4045, %v2104
      %v4146 = vmul.f32 %v4050, %v2104
      %v4147 = vmul.f32 %v4055, %v2104
      %v4148 = vmul.f32 %v4060, %v2104
      %v4149 = vmul.f32 %v4065, %v2104
      %v4150 = vmul.f32 %v4070, %v2104
      %v4151 = vmul.f32 %v4075, %v2104
      %v4152 = vmul.f32 %v4080, %v2104
      %v4153 = vmul.f32 %v4085, %v2104
      %v4154 = vmul.f32 %v4090, %v2104
      %v4155 = vmul.f32 %v4095, %v2104
      %v4156 = vmul.f32 %v4100, %v2104
      %v4157 = vmul.f32 %v4105, %v2104
      %v4158 = vmul.f32 %v4110, %v2104
      %v4159 = vmul.f32 %v4115, %v2104
      %v4160 = vmul.f32 %v4120, %v2104
      %v4161 = vmul.f32 %v4125, %v2104
      %v4162 = vmul.f32 %v4130, %v2104
      %v4163 = vmul.f32 %v4135, %v2104
      %v4164 = vadd.f32 %v3948, %v4137
      %v4165 = vadd.f32 %v3949, %v4138
      %v4166 = vadd.f32 %v3950, %v4139
      %v4167 = vadd.f32 %v3951, %v4140
      %v4168 = vadd.f32 %v3952, %v4141
      %v4169 = vadd.f32 %v3953, %v4142
      %v4170 = vadd.f32 %v3954, %v4143
      %v4171 = vadd.f32 %v3955, %v4144
      %v4172 = vadd.f32 %v3956, %v4145
      %v4173 = vadd.f32 %v3957, %v4146
      %v4174 = vadd.f32 %v3958, %v4147
      %v4175 = vadd.f32 %v3959, %v4148
      %v4176 = vadd.f32 %v3960, %v4149
      %v4177 = vadd.f32 %v3961, %v4150
      %v4178 = vadd.f32 %v3962, %v4151
      %v4179 = vadd.f32 %v3963, %v4152
      %v4180 = vadd.f32 %v3964, %v4153
      %v4181 = vadd.f32 %v3965, %v4154
      %v4182 = vadd.f32 %v3966, %v4155
      %v4183 = vadd.f32 %v3967, %v4156
      %v4184 = vadd.f32 %v3968, %v4157
      %v4185 = vadd.f32 %v3969, %v4158
      %v4186 = vadd.f32 %v3970, %v4159
      %v4187 = vadd.f32 %v3971, %v4160
      %v4188 = vadd.f32 %v3972, %v4161
      %v4189 = vadd.f32 %v3973, %v4162
      %v4190 = vadd.f32 %v3974, %v4163
      %v4191 = vadd.f32 %v4164, %v2164
      %v4192 = vadd.f32 %v4165, %v2164
      %v4193 = vadd.f32 %v4166, %v2164
      %v4194 = vadd.f32 %v4167, %v2164
      %v4195 = vadd.f32 %v4168, %v2164
      %v4196 = vadd.f32 %v4169, %v2164
      %v4197 = vadd.f32 %v4170, %v2164
      %v4198 = vadd.f32 %v4171, %v2164
      %v4199 = vadd.f32 %v4172, %v2164
      %v4200 = vadd.f32 %v4173, %v2164
      %v4201 = vadd.f32 %v4174, %v2164
      %v4202 = vadd.f32 %v4175, %v2164
      %v4203 = vadd.f32 %v4176, %v2164
      %v4204 = vadd.f32 %v4177, %v2164
      %v4205 = vadd.f32 %v4178, %v2164
      %v4206 = vadd.f32 %v4179, %v2164
      %v4207 = vadd.f32 %v4180, %v2164
      %v4208 = vadd.f32 %v4181, %v2164
      %v4209 = vadd.f32 %v4182, %v2164
      %v4210 = vadd.f32 %v4183, %v2164
      %v4211 = vadd.f32 %v4184, %v2164
      %v4212 = vadd.f32 %v4185, %v2164
      %v4213 = vadd.f32 %v4186, %v2164
      %v4214 = vadd.f32 %v4187, %v2164
      %v4215 = vadd.f32 %v4188, %v2164
      %v4216 = vadd.f32 %v4189, %v2164
      %v4217 = vadd.f32 %v4190, %v2164
      %v4218 = vmax.f32 %v4191, 0.0
      %v4219 = vmax.f32 %v4192, 0.0
      %v4220 = vmax.f32 %v4193, 0.0
      %v4221 = vmax.f32 %v4194, 0.0
      %v4222 = vmax.f32 %v4195, 0.0
      %v4223 = vmax.f32 %v4196, 0.0
      %v4224 = vmax.f32 %v4197, 0.0
      %v4225 = vmax.f32 %v4198, 0.0
      %v4226 = vmax.f32 %v4199, 0.0
      %v4227 = vmax.f32 %v4200, 0.0
      %v4228 = vmax.f32 %v4201, 0.0
      %v4229 = vmax.f32 %v4202, 0.0
      %v4230 = vmax.f32 %v4203, 0.0
      %v4231 = vmax.f32 %v4204, 0.0
      %v4232 = vmax.f32 %v4205, 0.0
      %v4233 = vmax.f32 %v4206, 0.0
      %v4234 = vmax.f32 %v4207, 0.0
      %v4235 = vmax.f32 %v4208, 0.0
      %v4236 = vmax.f32 %v4209, 0.0
      %v4237 = vmax.f32 %v4210, 0.0
      %v4238 = vmax.f32 %v4211, 0.0
      %v4239 = vmax.f32 %v4212, 0.0
      %v4240 = vmax.f32 %v4213, 0.0
      %v4241 = vmax.f32 %v4214, 0.0
      %v4242 = vmax.f32 %v4215, 0.0
      %v4243 = vmax.f32 %v4216, 0.0
      %v4244 = vmax.f32 %v4217, 0.0
      %v4245 = vmax.f32 %v3219, %v4218
      %v4246 = vmax.f32 %v3220, %v4219
      %v4247 = vmax.f32 %v3221, %v4220
      %v4248 = vmax.f32 %v3222, %v4221
      %v4249 = vmax.f32 %v3223, %v4222
      %v4250 = vmax.f32 %v3224, %v4223
      %v4251 = vmax.f32 %v3225, %v4224
      %v4252 = vmax.f32 %v3226, %v4225
      %v4253 = vmax.f32 %v3227, %v4226
      %v4254 = vmax.f32 %v3228, %v4227
      %v4255 = vmax.f32 %v3229, %v4228
      %v4256 = vmax.f32 %v3230, %v4229
      %v4257 = vmax.f32 %v3231, %v4230
      %v4258 = vmax.f32 %v3232, %v4231
      %v4259 = vmax.f32 %v3233, %v4232
      %v4260 = vmax.f32 %v3234, %v4233
      %v4261 = vmax.f32 %v3235, %v4234
      %v4262 = vmax.f32 %v3236, %v4235
      %v4263 = vmax.f32 %v3237, %v4236
      %v4264 = vmax.f32 %v3238, %v4237
      %v4265 = vmax.f32 %v3239, %v4238
      %v4266 = vmax.f32 %v3240, %v4239
      %v4267 = vmax.f32 %v3241, %v4240
      %v4268 = vmax.f32 %v3242, %v4241
      %v4269 = vmax.f32 %v3243, %v4242
      %v4270 = vmax.f32 %v3244, %v4243
      %v4271 = vmax.f32 %v3245, %v4244
      %v4272 = vmul.f32 %v1072, %v339
      %v4273 = vmul.f32 %v1077, %v339
      %v4274 = vmul.f32 %v1082, %v339
      %v4275 = vmul.f32 %v1087, %v339
      %v4276 = vmul.f32 %v1092, %v339
      %v4277 = vmul.f32 %v1097, %v339
      %v4278 = vmul.f32 %v1102, %v339
      %v4279 = vmul.f32 %v1107, %v339
      %v4280 = vmul.f32 %v1112, %v339
      %v4281 = vmul.f32 %v1117, %v339
      %v4282 = vmul.f32 %v1122, %v339
      %v4283 = vmul.f32 %v1127, %v339
      %v4284 = vmul.f32 %v1132, %v339
      %v4285 = vmul.f32 %v1137, %v339
      %v4286 = vmul.f32 %v1142, %v339
      %v4287 = vmul.f32 %v1147, %v339
      %v4288 = vmul.f32 %v1152, %v339
      %v4289 = vmul.f32 %v1157, %v339
      %v4290 = vmul.f32 %v1162, %v339
      %v4291 = vmul.f32 %v1167, %v339
      %v4292 = vmul.f32 %v1172, %v339
      %v4293 = vmul.f32 %v1177, %v339
      %v4294 = vmul.f32 %v1182, %v339
      %v4295 = vmul.f32 %v1187, %v339
      %v4296 = vmul.f32 %v1192, %v339
      %v4297 = vmul.f32 %v1197, %v339
      %v4298 = vmul.f32 %v1202, %v339
      %v4299 = vmul.f32 %v1296, %v536
      %v4300 = vmul.f32 %v1301, %v536
      %v4301 = vmul.f32 %v1306, %v536
      %v4302 = vmul.f32 %v1311, %v536
      %v4303 = vmul.f32 %v1316, %v536
      %v4304 = vmul.f32 %v1321, %v536
      %v4305 = vmul.f32 %v1326, %v536
      %v4306 = vmul.f32 %v1331, %v536
      %v4307 = vmul.f32 %v1336, %v536
      %v4308 = vmul.f32 %v1341, %v536
      %v4309 = vmul.f32 %v1346, %v536
      %v4310 = vmul.f32 %v1351, %v536
      %v4311 = vmul.f32 %v1356, %v536
      %v4312 = vmul.f32 %v1361, %v536
      %v4313 = vmul.f32 %v1366, %v536
      %v4314 = vmul.f32 %v1371, %v536
      %v4315 = vmul.f32 %v1376, %v536
      %v4316 = vmul.f32 %v1381, %v536
      %v4317 = vmul.f32 %v1386, %v536
      %v4318 = vmul.f32 %v1391, %v536
      %v4319 = vmul.f32 %v1396, %v536
      %v4320 = vmul.f32 %v1401, %v536
      %v4321 = vmul.f32 %v1406, %v536
      %v4322 = vmul.f32 %v1411, %v536
      %v4323 = vmul.f32 %v1416, %v536
      %v4324 = vmul.f32 %v1421, %v536
      %v4325 = vmul.f32 %v1426, %v536
      %v4326 = vadd.f32 %v4272, %v4299
      %v4327 = vadd.f32 %v4273, %v4300
      %v4328 = vadd.f32 %v4274, %v4301
      %v4329 = vadd.f32 %v4275, %v4302
      %v4330 = vadd.f32 %v4276, %v4303
      %v4331 = vadd.f32 %v4277, %v4304
      %v4332 = vadd.f32 %v4278, %v4305
      %v4333 = vadd.f32 %v4279, %v4306
      %v4334 = vadd.f32 %v4280, %v4307
      %v4335 = vadd.f32 %v4281, %v4308
      %v4336 = vadd.f32 %v4282, %v4309
      %v4337 = vadd.f32 %v4283, %v4310
      %v4338 = vadd.f32 %v4284, %v4311
      %v4339 = vadd.f32 %v4285, %v4312
      %v4340 = vadd.f32 %v4286, %v4313
      %v4341 = vadd.f32 %v4287, %v4314
      %v4342 = vadd.f32 %v4288, %v4315
      %v4343 = vadd.f32 %v4289, %v4316
      %v4344 = vadd.f32 %v4290, %v4317
      %v4345 = vadd.f32 %v4291, %v4318
      %v4346 = vadd.f32 %v4292, %v4319
      %v4347 = vadd.f32 %v4293, %v4320
      %v4348 = vadd.f32 %v4294, %v4321
      %v4349 = vadd.f32 %v4295, %v4322
      %v4350 = vadd.f32 %v4296, %v4323
      %v4351 = vadd.f32 %v4297, %v4324
      %v4352 = vadd.f32 %v4298, %v4325
      %v4353 = vmul.f32 %v2655, %v760
      %v4354 = vmul.f32 %v2660, %v760
      %v4355 = vmul.f32 %v2665, %v760
      %v4356 = vmul.f32 %v2670, %v760
      %v4357 = vmul.f32 %v2675, %v760
      %v4358 = vmul.f32 %v2680, %v760
      %v4359 = vmul.f32 %v2685, %v760
      %v4360 = vmul.f32 %v2690, %v760
      %v4361 = vmul.f32 %v2695, %v760
      %v4362 = vmul.f32 %v2700, %v760
      %v4363 = vmul.f32 %v2705, %v760
      %v4364 = vmul.f32 %v2710, %v760
      %v4365 = vmul.f32 %v2715, %v760
      %v4366 = vmul.f32 %v2720, %v760
      %v4367 = vmul.f32 %v2725, %v760
      %v4368 = vmul.f32 %v2730, %v760
      %v4369 = vmul.f32 %v2735, %v760
      %v4370 = vmul.f32 %v2740, %v760
      %v4371 = vmul.f32 %v2745, %v760
      %v4372 = vmul.f32 %v2750, %v760
      %v4373 = vmul.f32 %v2755, %v760
      %v4374 = vmul.f32 %v2760, %v760
      %v4375 = vmul.f32 %v2765, %v760
      %v4376 = vmul.f32 %v2770, %v760
      %v4377 = vmul.f32 %v2775, %v760
      %v4378 = vmul.f32 %v2780, %v760
      %v4379 = vmul.f32 %v2785, %v760
      %v4380 = vadd.f32 %v4326, %v4353
      %v4381 = vadd.f32 %v4327, %v4354
      %v4382 = vadd.f32 %v4328, %v4355
      %v4383 = vadd.f32 %v4329, %v4356
      %v4384 = vadd.f32 %v4330, %v4357
      %v4385 = vadd.f32 %v4331, %v4358
      %v4386 = vadd.f32 %v4332, %v4359
      %v4387 = vadd.f32 %v4333, %v4360
      %v4388 = vadd.f32 %v4334, %v4361
      %v4389 = vadd.f32 %v4335, %v4362
      %v4390 = vadd.f32 %v4336, %v4363
      %v4391 = vadd.f32 %v4337, %v4364
      %v4392 = vadd.f32 %v4338, %v4365
      %v4393 = vadd.f32 %v4339, %v4366
      %v4394 = vadd.f32 %v4340, %v4367
      %v4395 = vadd.f32 %v4341, %v4368
      %v4396 = vadd.f32 %v4342, %v4369
      %v4397 = vadd.f32 %v4343, %v4370
      %v4398 = vadd.f32 %v4344, %v4371
      %v4399 = vadd.f32 %v4345, %v4372
      %v4400 = vadd.f32 %v4346, %v4373
      %v4401 = vadd.f32 %v4347, %v4374
      %v4402 = vadd.f32 %v4348, %v4375
      %v4403 = vadd.f32 %v4349, %v4376
      %v4404 = vadd.f32 %v4350, %v4377
      %v4405 = vadd.f32 %v4351, %v4378
      %v4406 = vadd.f32 %v4352, %v4379
      %v4407 = vmul.f32 %v1744, %v984
      %v4408 = vmul.f32 %v1749, %v984
      %v4409 = vmul.f32 %v1754, %v984
      %v4410 = vmul.f32 %v1759, %v984
      %v4411 = vmul.f32 %v1764, %v984
      %v4412 = vmul.f32 %v1769, %v984
      %v4413 = vmul.f32 %v1774, %v984
      %v4414 = vmul.f32 %v1779, %v984
      %v4415 = vmul.f32 %v1784, %v984
      %v4416 = vmul.f32 %v1789, %v984
      %v4417 = vmul.f32 %v1794, %v984
      %v4418 = vmul.f32 %v1799, %v984
      %v4419 = vmul.f32 %v1804, %v984
      %v4420 = vmul.f32 %v1809, %v984
      %v4421 = vmul.f32 %v1814, %v984
      %v4422 = vmul.f32 %v1819, %v984
      %v4423 = vmul.f32 %v1824, %v984
      %v4424 = vmul.f32 %v1829, %v984
      %v4425 = vmul.f32 %v1834, %v984
      %v4426 = vmul.f32 %v1839, %v984
      %v4427 = vmul.f32 %v1844, %v984
      %v4428 = vmul.f32 %v1849, %v984
      %v4429 = vmul.f32 %v1854, %v984
      %v4430 = vmul.f32 %v1859, %v984
      %v4431 = vmul.f32 %v1864, %v984
      %v4432 = vmul.f32 %v1869, %v984
      %v4433 = vmul.f32 %v1874, %v984
      %v4434 = vadd.f32 %v4380, %v4407
      %v4435 = vadd.f32 %v4381, %v4408
      %v4436 = vadd.f32 %v4382, %v4409
      %v4437 = vadd.f32 %v4383, %v4410
      %v4438 = vadd.f32 %v4384, %v4411
      %v4439 = vadd.f32 %v4385, %v4412
      %v4440 = vadd.f32 %v4386, %v4413
      %v4441 = vadd.f32 %v4387, %v4414
      %v4442 = vadd.f32 %v4388, %v4415
      %v4443 = vadd.f32 %v4389, %v4416
      %v4444 = vadd.f32 %v4390, %v4417
      %v4445 = vadd.f32 %v4391, %v4418
      %v4446 = vadd.f32 %v4392, %v4419
      %v4447 = vadd.f32 %v4393, %v4420
      %v4448 = vadd.f32 %v4394, %v4421
      %v4449 = vadd.f32 %v4395, %v4422
      %v4450 = vadd.f32 %v4396, %v4423
      %v4451 = vadd.f32 %v4397, %v4424
      %v4452 = vadd.f32 %v4398, %v4425
      %v4453 = vadd.f32 %v4399, %v4426
      %v4454 = vadd.f32 %v4400, %v4427
      %v4455 = vadd.f32 %v4401, %v4428
      %v4456 = vadd.f32 %v4402, %v4429
      %v4457 = vadd.f32 %v4403, %v4430
      %v4458 = vadd.f32 %v4404, %v4431
      %v4459 = vadd.f32 %v4405, %v4432
      %v4460 = vadd.f32 %v4406, %v4433
      %v4461 = vmul.f32 %v1968, %v1208
      %v4462 = vmul.f32 %v1973, %v1208
      %v4463 = vmul.f32 %v1978, %v1208
      %v4464 = vmul.f32 %v1983, %v1208
      %v4465 = vmul.f32 %v1988, %v1208
      %v4466 = vmul.f32 %v1993, %v1208
      %v4467 = vmul.f32 %v1998, %v1208
      %v4468 = vmul.f32 %v2003, %v1208
      %v4469 = vmul.f32 %v2008, %v1208
      %v4470 = vmul.f32 %v2013, %v1208
      %v4471 = vmul.f32 %v2018, %v1208
      %v4472 = vmul.f32 %v2023, %v1208
      %v4473 = vmul.f32 %v2028, %v1208
      %v4474 = vmul.f32 %v2033, %v1208
      %v4475 = vmul.f32 %v2038, %v1208
      %v4476 = vmul.f32 %v2043, %v1208
      %v4477 = vmul.f32 %v2048, %v1208
      %v4478 = vmul.f32 %v2053, %v1208
      %v4479 = vmul.f32 %v2058, %v1208
      %v4480 = vmul.f32 %v2063, %v1208
      %v4481 = vmul.f32 %v2068, %v1208
      %v4482 = vmul.f32 %v2073, %v1208
      %v4483 = vmul.f32 %v2078, %v1208
      %v4484 = vmul.f32 %v2083, %v1208
      %v4485 = vmul.f32 %v2088, %v1208
      %v4486 = vmul.f32 %v2093, %v1208
      %v4487 = vmul.f32 %v2098, %v1208
      %v4488 = vadd.f32 %v4434, %v4461
      %v4489 = vadd.f32 %v4435, %v4462
      %v4490 = vadd.f32 %v4436, %v4463
      %v4491 = vadd.f32 %v4437, %v4464
      %v4492 = vadd.f32 %v4438, %v4465
      %v4493 = vadd.f32 %v4439, %v4466
      %v4494 = vadd.f32 %v4440, %v4467
      %v4495 = vadd.f32 %v4441, %v4468
      %v4496 = vadd.f32 %v4442, %v4469
      %v4497 = vadd.f32 %v4443, %v4470
      %v4498 = vadd.f32 %v4444, %v4471
      %v4499 = vadd.f32 %v4445, %v4472
      %v4500 = vadd.f32 %v4446, %v4473
      %v4501 = vadd.f32 %v4447, %v4474
      %v4502 = vadd.f32 %v4448, %v4475
      %v4503 = vadd.f32 %v4449, %v4476
      %v4504 = vadd.f32 %v4450, %v4477
      %v4505 = vadd.f32 %v4451, %v4478
      %v4506 = vadd.f32 %v4452, %v4479
      %v4507 = vadd.f32 %v4453, %v4480
      %v4508 = vadd.f32 %v4454, %v4481
      %v4509 = vadd.f32 %v4455, %v4482
      %v4510 = vadd.f32 %v4456, %v4483
      %v4511 = vadd.f32 %v4457, %v4484
      %v4512 = vadd.f32 %v4458, %v4485
      %v4513 = vadd.f32 %v4459, %v4486
      %v4514 = vadd.f32 %v4460, %v4487
      %v4515 = vmul.f32 %v2979, %v1432
      %v4516 = vmul.f32 %v2984, %v1432
      %v4517 = vmul.f32 %v2989, %v1432
      %v4518 = vmul.f32 %v2994, %v1432
      %v4519 = vmul.f32 %v2999, %v1432
      %v4520 = vmul.f32 %v3004, %v1432
      %v4521 = vmul.f32 %v3009, %v1432
      %v4522 = vmul.f32 %v3014, %v1432
      %v4523 = vmul.f32 %v3019, %v1432
      %v4524 = vmul.f32 %v3024, %v1432
      %v4525 = vmul.f32 %v3029, %v1432
      %v4526 = vmul.f32 %v3034, %v1432
      %v4527 = vmul.f32 %v3039, %v1432
      %v4528 = vmul.f32 %v3044, %v1432
      %v4529 = vmul.f32 %v3049, %v1432
      %v4530 = vmul.f32 %v3054, %v1432
      %v4531 = vmul.f32 %v3059, %v1432
      %v4532 = vmul.f32 %v3064, %v1432
      %v4533 = vmul.f32 %v3069, %v1432
      %v4534 = vmul.f32 %v3074, %v1432
      %v4535 = vmul.f32 %v3079, %v1432
      %v4536 = vmul.f32 %v3084, %v1432
      %v4537 = vmul.f32 %v3089, %v1432
      %v4538 = vmul.f32 %v3094, %v1432
      %v4539 = vmul.f32 %v3099, %v1432
      %v4540 = vmul.f32 %v3104, %v1432
      %v4541 = vmul.f32 %v3109, %v1432
      %v4542 = vadd.f32 %v4488, %v4515
      %v4543 = vadd.f32 %v4489, %v4516
      %v4544 = vadd.f32 %v4490, %v4517
      %v4545 = vadd.f32 %v4491, %v4518
      %v4546 = vadd.f32 %v4492, %v4519
      %v4547 = vadd.f32 %v4493, %v4520
      %v4548 = vadd.f32 %v4494, %v4521
      %v4549 = vadd.f32 %v4495, %v4522
      %v4550 = vadd.f32 %v4496, %v4523
      %v4551 = vadd.f32 %v4497, %v4524
      %v4552 = vadd.f32 %v4498, %v4525
      %v4553 = vadd.f32 %v4499, %v4526
      %v4554 = vadd.f32 %v4500, %v4527
      %v4555 = vadd.f32 %v4501, %v4528
      %v4556 = vadd.f32 %v4502, %v4529
      %v4557 = vadd.f32 %v4503, %v4530
      %v4558 = vadd.f32 %v4504, %v4531
      %v4559 = vadd.f32 %v4505, %v4532
      %v4560 = vadd.f32 %v4506, %v4533
      %v4561 = vadd.f32 %v4507, %v4534
      %v4562 = vadd.f32 %v4508, %v4535
      %v4563 = vadd.f32 %v4509, %v4536
      %v4564 = vadd.f32 %v4510, %v4537
      %v4565 = vadd.f32 %v4511, %v4538
      %v4566 = vadd.f32 %v4512, %v4539
      %v4567 = vadd.f32 %v4513, %v4540
      %v4568 = vadd.f32 %v4514, %v4541
      %v4569 = vmul.f32 %v3789, %v1656
      %v4570 = vmul.f32 %v3794, %v1656
      %v4571 = vmul.f32 %v3799, %v1656
      %v4572 = vmul.f32 %v3804, %v1656
      %v4573 = vmul.f32 %v3809, %v1656
      %v4574 = vmul.f32 %v3814, %v1656
      %v4575 = vmul.f32 %v3819, %v1656
      %v4576 = vmul.f32 %v3824, %v1656
      %v4577 = vmul.f32 %v3829, %v1656
      %v4578 = vmul.f32 %v3834, %v1656
      %v4579 = vmul.f32 %v3839, %v1656
      %v4580 = vmul.f32 %v3844, %v1656
      %v4581 = vmul.f32 %v3849, %v1656
      %v4582 = vmul.f32 %v3854, %v1656
      %v4583 = vmul.f32 %v3859, %v1656
      %v4584 = vmul.f32 %v3864, %v1656
      %v4585 = vmul.f32 %v3869, %v1656
      %v4586 = vmul.f32 %v3874, %v1656
      %v4587 = vmul.f32 %v3879, %v1656
      %v4588 = vmul.f32 %v3884, %v1656
      %v4589 = vmul.f32 %v3889, %v1656
      %v4590 = vmul.f32 %v3894, %v1656
      %v4591 = vmul.f32 %v3899, %v1656
      %v4592 = vmul.f32 %v3904, %v1656
      %v4593 = vmul.f32 %v3909, %v1656
      %v4594 = vmul.f32 %v3914, %v1656
      %v4595 = vmul.f32 %v3919, %v1656
      %v4596 = vadd.f32 %v4542, %v4569
      %v4597 = vadd.f32 %v4543, %v4570
      %v4598 = vadd.f32 %v4544, %v4571
      %v4599 = vadd.f32 %v4545, %v4572
      %v4600 = vadd.f32 %v4546, %v4573
      %v4601 = vadd.f32 %v4547, %v4574
      %v4602 = vadd.f32 %v4548, %v4575
      %v4603 = vadd.f32 %v4549, %v4576
      %v4604 = vadd.f32 %v4550, %v4577
      %v4605 = vadd.f32 %v4551, %v4578
      %v4606 = vadd.f32 %v4552, %v4579
      %v4607 = vadd.f32 %v4553, %v4580
      %v4608 = vadd.f32 %v4554, %v4581
      %v4609 = vadd.f32 %v4555, %v4582
      %v4610 = vadd.f32 %v4556, %v4583
      %v4611 = vadd.f32 %v4557, %v4584
      %v4612 = vadd.f32 %v4558, %v4585
      %v4613 = vadd.f32 %v4559, %v4586
      %v4614 = vadd.f32 %v4560, %v4587
      %v4615 = vadd.f32 %v4561, %v4588
      %v4616 = vadd.f32 %v4562, %v4589
      %v4617 = vadd.f32 %v4563, %v4590
      %v4618 = vadd.f32 %v4564, %v4591
      %v4619 = vadd.f32 %v4565, %v4592
      %v4620 = vadd.f32 %v4566, %v4593
      %v4621 = vadd.f32 %v4567, %v4594
      %v4622 = vadd.f32 %v4568, %v4595
      %v4623 = vmul.f32 %v4005, %v1880
      %v4624 = vmul.f32 %v4010, %v1880
      %v4625 = vmul.f32 %v4015, %v1880
      %v4626 = vmul.f32 %v4020, %v1880
      %v4627 = vmul.f32 %v4025, %v1880
      %v4628 = vmul.f32 %v4030, %v1880
      %v4629 = vmul.f32 %v4035, %v1880
      %v4630 = vmul.f32 %v4040, %v1880
      %v4631 = vmul.f32 %v4045, %v1880
      %v4632 = vmul.f32 %v4050, %v1880
      %v4633 = vmul.f32 %v4055, %v1880
      %v4634 = vmul.f32 %v4060, %v1880
      %v4635 = vmul.f32 %v4065, %v1880
      %v4636 = vmul.f32 %v4070, %v1880
      %v4637 = vmul.f32 %v4075, %v1880
      %v4638 = vmul.f32 %v4080, %v1880
      %v4639 = vmul.f32 %v4085, %v1880
      %v4640 = vmul.f32 %v4090, %v1880
      %v4641 = vmul.f32 %v4095, %v1880
      %v4642 = vmul.f32 %v4100, %v1880
      %v4643 = vmul.f32 %v4105, %v1880
      %v4644 = vmul.f32 %v4110, %v1880
      %v4645 = vmul.f32 %v4115, %v1880
      %v4646 = vmul.f32 %v4120, %v1880
      %v4647 = vmul.f32 %v4125, %v1880
      %v4648 = vmul.f32 %v4130, %v1880
      %v4649 = vmul.f32 %v4135, %v1880
      %v4650 = vadd.f32 %v4596, %v4623
      %v4651 = vadd.f32 %v4597, %v4624
      %v4652 = vadd.f32 %v4598, %v4625
      %v4653 = vadd.f32 %v4599, %v4626
      %v4654 = vadd.f32 %v4600, %v4627
      %v4655 = vadd.f32 %v4601, %v4628
      %v4656 = vadd.f32 %v4602, %v4629
      %v4657 = vadd.f32 %v4603, %v4630
      %v4658 = vadd.f32 %v4604, %v4631
      %v4659 = vadd.f32 %v4605, %v4632
      %v4660 = vadd.f32 %v4606, %v4633
      %v4661 = vadd.f32 %v4607, %v4634
      %v4662 = vadd.f32 %v4608, %v4635
      %v4663 = vadd.f32 %v4609, %v4636
      %v4664 = vadd.f32 %v4610, %v4637
      %v4665 = vadd.f32 %v4611, %v4638
      %v4666 = vadd.f32 %v4612, %v4639
      %v4667 = vadd.f32 %v4613, %v4640
      %v4668 = vadd.f32 %v4614, %v4641
      %v4669 = vadd.f32 %v4615, %v4642
      %v4670 = vadd.f32 %v4616, %v4643
      %v4671 = vadd.f32 %v4617, %v4644
      %v4672 = vadd.f32 %v4618, %v4645
      %v4673 = vadd.f32 %v4619, %v4646
      %v4674 = vadd.f32 %v4620, %v4647
      %v4675 = vadd.f32 %v4621, %v4648
      %v4676 = vadd.f32 %v4622, %v4649
      %v4677 = vld [vmem:[%s165 + $0x2c8] sm:$0xff]
      %v4678 = vld [vmem:[%s165 + $0x2d0] sm:$0xff]
      %v4679 = vld [vmem:[%s165 + $0x2d8] sm:$0xff]
      %v4680 = vld [vmem:[%s165 + $0x2e0] sm:$0xff]
      %v4681 = vld [vmem:[%s165 + $0x2e8] sm:$0xff]
      %v4682 = vld [vmem:[%s165 + $0x2f0] sm:$0xff]
      %v4683 = vld [vmem:[%s165 + $0x2f8] sm:$0xff]
      %v4684 = vld [vmem:[%s165 + $0x300] sm:$0xff]
      %v4685 = vld [vmem:[%s165 + $0x308] sm:$0xff]
      %v4686 = vld [vmem:[%s165 + $0x310] sm:$0xff]
      %v4687 = vld [vmem:[%s165 + $0x318] sm:$0xff]
      %v4688 = vld [vmem:[%s165 + $0x320] sm:$0xff]
      %v4689 = vld [vmem:[%s165 + $0x328] sm:$0xff]
      %v4690 = vld [vmem:[%s165 + $0x330] sm:$0xff]
      %v4691 = vld [vmem:[%s165 + $0x338] sm:$0xff]
      %v4692 = vld [vmem:[%s165 + $0x340] sm:$0xff]
      %v4693 = vld [vmem:[%s165 + $0x348] sm:$0xff]
      %v4694 = vld [vmem:[%s165 + $0x350] sm:$0xff]
      %v4695 = vld [vmem:[%s165 + $0x358] sm:$0xff]
      %v4696 = vld [vmem:[%s165 + $0x360] sm:$0xff]
      %v4697 = vld [vmem:[%s165 + $0x368] sm:$0xff]
      %v4698 = vld [vmem:[%s165 + $0x370] sm:$0xff]
      %v4699 = vld [vmem:[%s165 + $0x378] sm:$0xff]
      %v4700 = vld [vmem:[%s165 + $0x380] sm:$0xff]
      %v4701 = vld [vmem:[%s165 + $0x388] sm:$0xff]
      %v4702 = vld [vmem:[%s165 + $0x390] sm:$0xff]
      %v4703 = vld [vmem:[%s165 + $0x398] sm:$0x3]
      %4705 = vset.pattern.permute.xlu0 0
      %4706 = vperm.xlu0 %4705, %v4677
      %v4707 = vpop.permute.xlu0 %4706
      %4710 = vset.pattern.permute.xlu0 0
      %4711 = vperm.xlu0 %4710, %v4678
      %v4712 = vpop.permute.xlu0 %4711
      %4715 = vset.pattern.permute.xlu0 0
      %4716 = vperm.xlu0 %4715, %v4679
      %v4717 = vpop.permute.xlu0 %4716
      %4720 = vset.pattern.permute.xlu0 0
      %4721 = vperm.xlu0 %4720, %v4680
      %v4722 = vpop.permute.xlu0 %4721
      %4725 = vset.pattern.permute.xlu0 0
      %4726 = vperm.xlu0 %4725, %v4681
      %v4727 = vpop.permute.xlu0 %4726
      %4730 = vset.pattern.permute.xlu0 0
      %4731 = vperm.xlu0 %4730, %v4682
      %v4732 = vpop.permute.xlu0 %4731
      %4735 = vset.pattern.permute.xlu0 0
      %4736 = vperm.xlu0 %4735, %v4683
      %v4737 = vpop.permute.xlu0 %4736
      %4740 = vset.pattern.permute.xlu0 0
      %4741 = vperm.xlu0 %4740, %v4684
      %v4742 = vpop.permute.xlu0 %4741
      %4745 = vset.pattern.permute.xlu0 0
      %4746 = vperm.xlu0 %4745, %v4685
      %v4747 = vpop.permute.xlu0 %4746
      %4750 = vset.pattern.permute.xlu0 0
      %4751 = vperm.xlu0 %4750, %v4686
      %v4752 = vpop.permute.xlu0 %4751
      %4755 = vset.pattern.permute.xlu0 0
      %4756 = vperm.xlu0 %4755, %v4687
      %v4757 = vpop.permute.xlu0 %4756
      %4760 = vset.pattern.permute.xlu0 0
      %4761 = vperm.xlu0 %4760, %v4688
      %v4762 = vpop.permute.xlu0 %4761
      %4765 = vset.pattern.permute.xlu0 0
      %4766 = vperm.xlu0 %4765, %v4689
      %v4767 = vpop.permute.xlu0 %4766
      %4770 = vset.pattern.permute.xlu0 0
      %4771 = vperm.xlu0 %4770, %v4690
      %v4772 = vpop.permute.xlu0 %4771
      %4775 = vset.pattern.permute.xlu0 0
      %4776 = vperm.xlu0 %4775, %v4691
      %v4777 = vpop.permute.xlu0 %4776
      %4780 = vset.pattern.permute.xlu0 0
      %4781 = vperm.xlu0 %4780, %v4692
      %v4782 = vpop.permute.xlu0 %4781
      %4785 = vset.pattern.permute.xlu0 0
      %4786 = vperm.xlu0 %4785, %v4693
      %v4787 = vpop.permute.xlu0 %4786
      %4790 = vset.pattern.permute.xlu0 0
      %4791 = vperm.xlu0 %4790, %v4694
      %v4792 = vpop.permute.xlu0 %4791
      %4795 = vset.pattern.permute.xlu0 0
      %4796 = vperm.xlu0 %4795, %v4695
      %v4797 = vpop.permute.xlu0 %4796
      %4800 = vset.pattern.permute.xlu0 0
      %4801 = vperm.xlu0 %4800, %v4696
      %v4802 = vpop.permute.xlu0 %4801
      %4805 = vset.pattern.permute.xlu0 0
      %4806 = vperm.xlu0 %4805, %v4697
      %v4807 = vpop.permute.xlu0 %4806
      %4810 = vset.pattern.permute.xlu0 0
      %4811 = vperm.xlu0 %4810, %v4698
      %v4812 = vpop.permute.xlu0 %4811
      %4815 = vset.pattern.permute.xlu0 0
      %4816 = vperm.xlu0 %4815, %v4699
      %v4817 = vpop.permute.xlu0 %4816
      %4820 = vset.pattern.permute.xlu0 0
      %4821 = vperm.xlu0 %4820, %v4700
      %v4822 = vpop.permute.xlu0 %4821
      %4825 = vset.pattern.permute.xlu0 0
      %4826 = vperm.xlu0 %4825, %v4701
      %v4827 = vpop.permute.xlu0 %4826
      %4830 = vset.pattern.permute.xlu0 0
      %4831 = vperm.xlu0 %4830, %v4702
      %v4832 = vpop.permute.xlu0 %4831
      %4835 = vset.pattern.permute.xlu0 0
      %4836 = vperm.xlu0 %4835, %v4703
      %v4837 = vpop.permute.xlu0 %4836
      %v4839 = vmul.f32 %v4707, %v2104
      %v4840 = vmul.f32 %v4712, %v2104
      %v4841 = vmul.f32 %v4717, %v2104
      %v4842 = vmul.f32 %v4722, %v2104
      %v4843 = vmul.f32 %v4727, %v2104
      %v4844 = vmul.f32 %v4732, %v2104
      %v4845 = vmul.f32 %v4737, %v2104
      %v4846 = vmul.f32 %v4742, %v2104
      %v4847 = vmul.f32 %v4747, %v2104
      %v4848 = vmul.f32 %v4752, %v2104
      %v4849 = vmul.f32 %v4757, %v2104
      %v4850 = vmul.f32 %v4762, %v2104
      %v4851 = vmul.f32 %v4767, %v2104
      %v4852 = vmul.f32 %v4772, %v2104
      %v4853 = vmul.f32 %v4777, %v2104
      %v4854 = vmul.f32 %v4782, %v2104
      %v4855 = vmul.f32 %v4787, %v2104
      %v4856 = vmul.f32 %v4792, %v2104
      %v4857 = vmul.f32 %v4797, %v2104
      %v4858 = vmul.f32 %v4802, %v2104
      %v4859 = vmul.f32 %v4807, %v2104
      %v4860 = vmul.f32 %v4812, %v2104
      %v4861 = vmul.f32 %v4817, %v2104
      %v4862 = vmul.f32 %v4822, %v2104
      %v4863 = vmul.f32 %v4827, %v2104
      %v4864 = vmul.f32 %v4832, %v2104
      %v4865 = vmul.f32 %v4837, %v2104
      %v4866 = vadd.f32 %v4650, %v4839
      %v4867 = vadd.f32 %v4651, %v4840
      %v4868 = vadd.f32 %v4652, %v4841
      %v4869 = vadd.f32 %v4653, %v4842
      %v4870 = vadd.f32 %v4654, %v4843
      %v4871 = vadd.f32 %v4655, %v4844
      %v4872 = vadd.f32 %v4656, %v4845
      %v4873 = vadd.f32 %v4657, %v4846
      %v4874 = vadd.f32 %v4658, %v4847
      %v4875 = vadd.f32 %v4659, %v4848
      %v4876 = vadd.f32 %v4660, %v4849
      %v4877 = vadd.f32 %v4661, %v4850
      %v4878 = vadd.f32 %v4662, %v4851
      %v4879 = vadd.f32 %v4663, %v4852
      %v4880 = vadd.f32 %v4664, %v4853
      %v4881 = vadd.f32 %v4665, %v4854
      %v4882 = vadd.f32 %v4666, %v4855
      %v4883 = vadd.f32 %v4667, %v4856
      %v4884 = vadd.f32 %v4668, %v4857
      %v4885 = vadd.f32 %v4669, %v4858
      %v4886 = vadd.f32 %v4670, %v4859
      %v4887 = vadd.f32 %v4671, %v4860
      %v4888 = vadd.f32 %v4672, %v4861
      %v4889 = vadd.f32 %v4673, %v4862
      %v4890 = vadd.f32 %v4674, %v4863
      %v4891 = vadd.f32 %v4675, %v4864
      %v4892 = vadd.f32 %v4676, %v4865
      %v4893 = vadd.f32 %v4866, %v2164
      %v4894 = vadd.f32 %v4867, %v2164
      %v4895 = vadd.f32 %v4868, %v2164
      %v4896 = vadd.f32 %v4869, %v2164
      %v4897 = vadd.f32 %v4870, %v2164
      %v4898 = vadd.f32 %v4871, %v2164
      %v4899 = vadd.f32 %v4872, %v2164
      %v4900 = vadd.f32 %v4873, %v2164
      %v4901 = vadd.f32 %v4874, %v2164
      %v4902 = vadd.f32 %v4875, %v2164
      %v4903 = vadd.f32 %v4876, %v2164
      %v4904 = vadd.f32 %v4877, %v2164
      %v4905 = vadd.f32 %v4878, %v2164
      %v4906 = vadd.f32 %v4879, %v2164
      %v4907 = vadd.f32 %v4880, %v2164
      %v4908 = vadd.f32 %v4881, %v2164
      %v4909 = vadd.f32 %v4882, %v2164
      %v4910 = vadd.f32 %v4883, %v2164
      %v4911 = vadd.f32 %v4884, %v2164
      %v4912 = vadd.f32 %v4885, %v2164
      %v4913 = vadd.f32 %v4886, %v2164
      %v4914 = vadd.f32 %v4887, %v2164
      %v4915 = vadd.f32 %v4888, %v2164
      %v4916 = vadd.f32 %v4889, %v2164
      %v4917 = vadd.f32 %v4890, %v2164
      %v4918 = vadd.f32 %v4891, %v2164
      %v4919 = vadd.f32 %v4892, %v2164
      %v4920 = vmax.f32 %v4893, 0.0
      %v4921 = vmax.f32 %v4894, 0.0
      %v4922 = vmax.f32 %v4895, 0.0
      %v4923 = vmax.f32 %v4896, 0.0
      %v4924 = vmax.f32 %v4897, 0.0
      %v4925 = vmax.f32 %v4898, 0.0
      %v4926 = vmax.f32 %v4899, 0.0
      %v4927 = vmax.f32 %v4900, 0.0
      %v4928 = vmax.f32 %v4901, 0.0
      %v4929 = vmax.f32 %v4902, 0.0
      %v4930 = vmax.f32 %v4903, 0.0
      %v4931 = vmax.f32 %v4904, 0.0
      %v4932 = vmax.f32 %v4905, 0.0
      %v4933 = vmax.f32 %v4906, 0.0
      %v4934 = vmax.f32 %v4907, 0.0
      %v4935 = vmax.f32 %v4908, 0.0
      %v4936 = vmax.f32 %v4909, 0.0
      %v4937 = vmax.f32 %v4910, 0.0
      %v4938 = vmax.f32 %v4911, 0.0
      %v4939 = vmax.f32 %v4912, 0.0
      %v4940 = vmax.f32 %v4913, 0.0
      %v4941 = vmax.f32 %v4914, 0.0
      %v4942 = vmax.f32 %v4915, 0.0
      %v4943 = vmax.f32 %v4916, 0.0
      %v4944 = vmax.f32 %v4917, 0.0
      %v4945 = vmax.f32 %v4918, 0.0
      %v4946 = vmax.f32 %v4919, 0.0
      %v4947 = vmax.f32 %v4245, %v4920
      %v4948 = vmax.f32 %v4246, %v4921
      %v4949 = vmax.f32 %v4247, %v4922
      %v4950 = vmax.f32 %v4248, %v4923
      %v4951 = vmax.f32 %v4249, %v4924
      %v4952 = vmax.f32 %v4250, %v4925
      %v4953 = vmax.f32 %v4251, %v4926
      %v4954 = vmax.f32 %v4252, %v4927
      %v4955 = vmax.f32 %v4253, %v4928
      %v4956 = vmax.f32 %v4254, %v4929
      %v4957 = vmax.f32 %v4255, %v4930
      %v4958 = vmax.f32 %v4256, %v4931
      %v4959 = vmax.f32 %v4257, %v4932
      %v4960 = vmax.f32 %v4258, %v4933
      %v4961 = vmax.f32 %v4259, %v4934
      %v4962 = vmax.f32 %v4260, %v4935
      %v4963 = vmax.f32 %v4261, %v4936
      %v4964 = vmax.f32 %v4262, %v4937
      %v4965 = vmax.f32 %v4263, %v4938
      %v4966 = vmax.f32 %v4264, %v4939
      %v4967 = vmax.f32 %v4265, %v4940
      %v4968 = vmax.f32 %v4266, %v4941
      %v4969 = vmax.f32 %v4267, %v4942
      %v4970 = vmax.f32 %v4268, %v4943
      %v4971 = vmax.f32 %v4269, %v4944
      %v4972 = vmax.f32 %v4270, %v4945
      %v4973 = vmax.f32 %v4271, %v4946
      %vm4974 = vcmask 261120
      %4975 = vst.msk [vmem:[%s170] sm:$0xff] %vm4974, %v4947
      %4976 = vst.msk [vmem:[%s170 + $0x8] sm:$0xff] %vm4974, %v4948
      %4977 = vst.msk [vmem:[%s170 + $0x10] sm:$0xff] %vm4974, %v4949
      %4978 = vst.msk [vmem:[%s170 + $0x18] sm:$0xff] %vm4974, %v4950
      %4979 = vst.msk [vmem:[%s170 + $0x20] sm:$0xff] %vm4974, %v4951
      %4980 = vst.msk [vmem:[%s170 + $0x28] sm:$0xff] %vm4974, %v4952
      %4981 = vst.msk [vmem:[%s170 + $0x30] sm:$0xff] %vm4974, %v4953
      %4982 = vst.msk [vmem:[%s170 + $0x38] sm:$0xff] %vm4974, %v4954
      %4983 = vst.msk [vmem:[%s170 + $0x40] sm:$0xff] %vm4974, %v4955
      %4984 = vst.msk [vmem:[%s170 + $0x48] sm:$0xff] %vm4974, %v4956
      %4985 = vst.msk [vmem:[%s170 + $0x50] sm:$0xff] %vm4974, %v4957
      %4986 = vst.msk [vmem:[%s170 + $0x58] sm:$0xff] %vm4974, %v4958
      %4987 = vst.msk [vmem:[%s170 + $0x60] sm:$0xff] %vm4974, %v4959
      %4988 = vst.msk [vmem:[%s170 + $0x68] sm:$0xff] %vm4974, %v4960
      %4989 = vst.msk [vmem:[%s170 + $0x70] sm:$0xff] %vm4974, %v4961
      %4990 = vst.msk [vmem:[%s170 + $0x78] sm:$0xff] %vm4974, %v4962
      %4991 = vst.msk [vmem:[%s170 + $0x80] sm:$0xff] %vm4974, %v4963
      %4992 = vst.msk [vmem:[%s170 + $0x88] sm:$0xff] %vm4974, %v4964
      %4993 = vst.msk [vmem:[%s170 + $0x90] sm:$0xff] %vm4974, %v4965
      %4994 = vst.msk [vmem:[%s170 + $0x98] sm:$0xff] %vm4974, %v4966
      %4995 = vst.msk [vmem:[%s170 + $0xa0] sm:$0xff] %vm4974, %v4967
      %4996 = vst.msk [vmem:[%s170 + $0xa8] sm:$0xff] %vm4974, %v4968
      %4997 = vst.msk [vmem:[%s170 + $0xb0] sm:$0xff] %vm4974, %v4969
      %4998 = vst.msk [vmem:[%s170 + $0xb8] sm:$0xff] %vm4974, %v4970
      %4999 = vst.msk [vmem:[%s170 + $0xc0] sm:$0xff] %vm4974, %v4971
      %5000 = vst.msk [vmem:[%s170 + $0xc8] sm:$0xff] %vm4974, %v4972
      %vm5001 = vcmask 254976
      %5002 = vst.msk [vmem:[%s170 + $0xd0] sm:$0x3] %vm5001, %v4973
      %p5003 = scmp.lt.s32.totalorder %s14, 1
      %s5004 = scalar_select %p5003, %s14, 1
      %s5005 = smul.addr %s5004, 27
      %s5006 = smul.addr %s5005, 8
      %s5007 = scalar_lea.vmem %s3, %s5006
      // Predicated region
      $region33: #{simple_model_forward.4} parent=31 // pred_check
        %p5008 = pneg %p100
      $region34: #{simple_model_forward.4} parent=31 // pred_check_branch
        %5010 = sbr.rel (%p5008) target = $region36
      $region35: #{simple_model_forward.4} parent=31 // pred_region
        _
      $region36: #{simple_model_forward.4} parent=31 // pred_fallthru
        _
    $region32: #{simple_model_forward.4} parent=5 // pred_fallthru
      _
    %p5011 = scmp.le.s32.totalorder 2, %s9
    // Predicated region
    $region37: #{simple_model_forward.4} parent=5 // pred_check
      %p5012 = pneg %p5011
    $region38: #{simple_model_forward.4} parent=5 // pred_check_branch
      %5014 = sbr.rel (%p5012) target = $region40
    $region39: #{simple_model_forward.4} parent=5 // pred_region
      %s5015 = ssub.s32 %s9, 2
      // Predicated region
      $region41: #{simple_model_forward.4} parent=39 // pred_check
        %p5016 = pneg %p106
      $region42: #{simple_model_forward.4} parent=39 // pred_check_branch
        %5018 = sbr.rel (%p5016) target = $region44
      $region43: #{simple_model_forward.4} parent=39 // pred_region
        %p5019 = scmp.lt.s32.totalorder %s15, 1
        %s5020 = scalar_select %p5019, %s15, 1
        %s5021 = smul.addr %s5020, 27
        %s5022 = smul.addr %s5021, 8
        %s5023 = scalar_lea.vmem %s3, %s5022
      $region44: #{simple_model_forward.4} parent=39 // pred_fallthru
        _
    $region40: #{simple_model_forward.4} parent=5 // pred_fallthru
      _
  $region6: #{simple_model_forward.4} parent=0 // loop_footer
    %s13 = sadd.s32 1, %s9
  $region7: #{simple_model_forward.4} parent=0 // loop_footer_branch
    %8 = sbr.rel target = $region3
  $region8: #{simple_model_forward.4} parent=0 // loop_exit
    _

</llo_original>
